<compile_context>
chip_gen: v5e
topology: v5e:2x2
jax: 0.10.0
libtpu: 0.0.40
codegen_flags: <defaults>
</compile_context>

<pallas_src>
import functools

import jax
import jax.numpy as jnp
from jax.experimental import pallas as pl
from jax.experimental.pallas import tpu as pltpu


# ----------------------------------------------------------------------------
# Fused conv (+bias +ReLU) + 2x2 max-pool kernel
# ----------------------------------------------------------------------------

def _conv_pool_kernel(w_ref, p_ref, b_ref, o_ref, *, r_out):
    """o = maxpool2x2(relu(W^T @ patches^T + b)).

    w_ref : (co, k*k*ci)       bf16  transposed conv weight, rows (kh,kw,ci)
    p_ref : (k*k*ci, 4*r_out)  bf16  im2col patches, columns tap-major
                                     ((hb,wb), n, y, x): the 2x2-pool taps are
                                     four lane-aligned column slabs.
    b_ref : (co, 1)            f32
    o_ref : (co, r_out)        bf16  channel-major pooled activation
    """
    r = jnp.dot(w_ref[...], p_ref[...], preferred_element_type=jnp.float32)
    r = jnp.maximum(r + b_ref[...], 0.0)
    m = jnp.maximum(
        jnp.maximum(r[:, 0 * r_out:1 * r_out], r[:, 1 * r_out:2 * r_out]),
        jnp.maximum(r[:, 2 * r_out:3 * r_out], r[:, 3 * r_out:4 * r_out]))
    o_ref[...] = m.astype(o_ref.dtype)


def conv2d_relu_pool(act, w_t, b, *, k=4, pad=2):
    """Conv2d(stride 1, `pad`) + ReLU + MaxPool2d(2) in one Pallas kernel.

    act : (ci, n, h, w) bf16 channel-major activation
    w_t : (co, k*k*ci)  bf16, rows ordered (kh, kw, ci)
    b   : (co, 1)       f32
    returns (co, n, ph, pw) bf16 with ph = conv_oh // 2, pw = conv_ow // 2.
    """
    ci, n, h, w = act.shape
    oh, ow = h + 2 * pad - k + 1, w + 2 * pad - k + 1
    ph, pw = oh // 2, ow // 2                 # MaxPool2d floor mode
    co = w_t.shape[0]
    r_out = n * ph * pw                       # multiple of 128 (ph*pw >= 256)

    # TODO(synk): im2col is still XLA glue (bf16, ~1 MiB for conv2 at B=2); a
    # fully in-kernel window walk would need in-kernel reshapes across the
    # lane dim (ow is not a multiple of 128), so it is left in the wrapper.
    xp = jnp.pad(act, ((0, 0), (0, 0), (pad, pad), (pad, pad)))
    taps = []
    for kh in range(k):
        for kw in range(k):
            v = xp[:, :, kh:kh + 2 * ph, kw:kw + 2 * pw]     # (ci, n, 2ph, 2pw)
            taps.append(v.reshape(ci, n, ph, 2, pw, 2))
    pt = jnp.stack(taps, axis=0)                             # (kk, ci, n, ph, hb, pw, wb)
    pt = jnp.transpose(pt, (0, 1, 4, 6, 2, 3, 5))            # (kk, ci, hb, wb, n, ph, pw)
    patches_t = pt.reshape(k * k * ci, 4 * r_out)

    out = pl.pallas_call(
        functools.partial(_conv_pool_kernel, r_out=r_out),
        out_shape=jax.ShapeDtypeStruct((co, r_out), jnp.bfloat16),
        grid_spec=pltpu.PrefetchScalarGridSpec(
            num_scalar_prefetch=0,
            grid=(1,),
            in_specs=[
                pl.BlockSpec((co, k * k * ci), lambda i: (0, 0)),
                pl.BlockSpec((k * k * ci, 4 * r_out), lambda i: (0, 0)),
                pl.BlockSpec((co, 1), lambda i: (0, 0)),
            ],
            out_specs=pl.BlockSpec((co, r_out), lambda i: (0, 0)),
        ),
        compiler_params=pltpu.CompilerParams(
            dimension_semantics=("arbitrary",)),
    )(w_t, patches_t, b)
    return out.reshape(co, n, ph, pw)


# ----------------------------------------------------------------------------
# Fused dense block: fc1 + bias + ReLU + fc2 in a single kernel
# ----------------------------------------------------------------------------

def _fc_fused_simple_kernel(a_ref, w1_ref, b1_ref, w2_ref, o_ref):
    """Single K block: o = relu(a @ w1 + b1) @ w2 (fc2 bias added by caller)."""
    h = jnp.dot(a_ref[...], w1_ref[...], preferred_element_type=jnp.float32)
    h = jnp.maximum(h + b1_ref[...], 0.0)
    o_ref[...] = jnp.dot(h.astype(jnp.bfloat16), w2_ref[...],
                         preferred_element_type=jnp.float32)


def _fc_fused_acc_kernel(a_ref, w1_ref, b1_ref, w2_ref, o_ref, acc_ref):
    """K-tiled fc1 accumulation; fc2 fused into the finalize step."""
    @pl.when(pl.program_id(1) == 0)
    def _():
        acc_ref[...] = jnp.zeros_like(acc_ref)

    acc_ref[...] += jnp.dot(a_ref[...], w1_ref[...],
                            preferred_element_type=jnp.float32)

    @pl.when(pl.program_id(1) == pl.num_programs(1) - 1)
    def _():
        h = jnp.maximum(acc_ref[...] + b1_ref[...], 0.0)
        o_ref[...] = jnp.dot(h.astype(jnp.bfloat16), w2_ref[...],
                             preferred_element_type=jnp.float32)


def _fc1_tiling(K, N):
    """Generation-dependent fc1 tiling: (tn, tk, vmem_limit_bytes or None)."""
    kind = ""
    try:
        kind = jax.devices()[0].device_kind.lower()
    except Exception:
        pass
    if "7" in kind:                   # v7x: 2 TCs -> N-parallel split, small blocks
        tn, tk, vmem = 256, 4096, None
    elif "v6" in kind:                # v6e: 1 TC -> one 8 MiB weight block, nk=1
        tn, tk, vmem = 512, 8192, 64 * 1024 * 1024
    else:                             # v5e / unknown: fit 16 MiB default scoped VMEM
        tn, tk, vmem = 512, 4096, None
    if N % tn:
        tn = N
    if K % tk:
        tk = K
    return tn, tk, vmem


def dense_fused(a, w1, b1, w2):
    """Per-N-block partials of relu(a @ w1 + b1) @ w2, shape (nn, M, C) f32.

    a:(M,K) bf16, w1:(K,N) bf16, b1:(1,N) f32, w2:(N,C) bf16.
    The caller sums over axis 0 and adds the fc2 bias.
    """
    M, K = a.shape
    K2, N = w1.shape
    N2, C = w2.shape
    assert K == K2 and N == N2
    tn, tk, vmem = _fc1_tiling(K, N)
    nn, nk = N // tn, K // tk
    extra = {"vmem_limit_bytes": vmem} if vmem else {}

    if nk == 1:
        return pl.pallas_call(
            _fc_fused_simple_kernel,
            out_shape=jax.ShapeDtypeStruct((nn, M, C), jnp.float32),
            grid_spec=pltpu.PrefetchScalarGridSpec(
                num_scalar_prefetch=0,
                grid=(nn,),
                in_specs=[
                    pl.BlockSpec((M, K), lambda j: (0, 0)),
                    pl.BlockSpec((K, tn), lambda j: (0, j)),
                    pl.BlockSpec((1, tn), lambda j: (0, j)),
                    pl.BlockSpec((tn, C), lambda j: (j, 0)),
                ],
                out_specs=pl.BlockSpec((None, M, C), lambda j: (j, 0, 0)),
            ),
            compiler_params=pltpu.CompilerParams(
                dimension_semantics=("parallel",), **extra),
        )(a, w1, b1, w2)

    return pl.pallas_call(
        _fc_fused_acc_kernel,
        out_shape=jax.ShapeDtypeStruct((nn, M, C), jnp.float32),
        grid_spec=pltpu.PrefetchScalarGridSpec(
            num_scalar_prefetch=0,
            grid=(nn, nk),
            in_specs=[
                pl.BlockSpec((M, tk), lambda j, k: (0, k)),
                pl.BlockSpec((tk, tn), lambda j, k: (k, j)),
                pl.BlockSpec((1, tn), lambda j, k: (0, j)),
                pl.BlockSpec((tn, C), lambda j, k: (j, 0)),
            ],
            out_specs=pl.BlockSpec((None, M, C), lambda j, k: (j, 0, 0)),
            scratch_shapes=[pltpu.VMEM((M, tn), jnp.float32)],
        ),
        compiler_params=pltpu.CompilerParams(
            dimension_semantics=("parallel", "arbitrary"), **extra),
    )(a, w1, b1, w2)


# ----------------------------------------------------------------------------
# Full forward pass
# ----------------------------------------------------------------------------

@functools.partial(jax.jit, static_argnames=("num_class",))
def net_forward(x_nchw, params, num_class=10):
    # NCHW -> channel-major (C, N, H, W) bf16
    x = jnp.transpose(x_nchw, (1, 0, 2, 3)).astype(jnp.bfloat16)

    # conv1: Conv2d(1, 16, 4, 1, 2) + ReLU + MaxPool2d(2)  -> (16, B, 32, 32)
    y = conv2d_relu_pool(x, params["conv1_wt"], params["conv1_b"])
    # conv2: Conv2d(16, 32, 4, 1, 2) + ReLU + MaxPool2d(2) -> (32, B, 16, 16)
    y = conv2d_relu_pool(y, params["conv2_wt"], params["conv2_b"])

    # torch flatten x.view(B, -1) over (C, H, W): the channel-major layout means
    # only the (tiny) batch axis has to move in front.
    co, bsz, ph, pw = y.shape
    yf = jnp.transpose(y, (1, 0, 2, 3)).reshape(bsz, co * ph * pw)   # (B, 8192)

    # pad batch rows to a full bf16 sublane tile (16); sliced off at the end
    bp = max(16, ((bsz + 15) // 16) * 16)
    if bp != bsz:
        yf = jnp.pad(yf, ((0, bp - bsz), (0, 0)))

    # dense: Linear(8192,512) + Dropout(0.5) + ReLU + Linear(512,num_class),
    # fc1/ReLU/fc2 fused in one kernel (per-N-block partials summed here).
    # TODO(synk): nn.Dropout(0.5) is inference-mode identity; training-mode
    # stochastic masking / 1/p scaling is not reproduced.
    parts = dense_fused(yf, params["fc1_wt"], params["fc1_b"], params["fc2_wt"])
    out = parts.sum(axis=0)[:bsz, :num_class] + params["fc2_b"]
    return out


# ----------------------------------------------------------------------------
# Parameters: PyTorch-layout init + one-time conversion to kernel layouts
# ----------------------------------------------------------------------------

def init_params(key, num_class=10):
    """PyTorch-layout f32 params: conv (co,ci,kh,kw), linear (out,in)."""
    ks = jax.random.split(key, 8)

    def u(k, shape, fan_in):
        bound = 1.0 / jnp.sqrt(float(fan_in))
        return jax.random.uniform(k, shape, jnp.float32, -bound, bound)

    return {
        "conv1_w": u(ks[0], (16, 1, 4, 4), 1 * 4 * 4),
        "conv1_b": u(ks[1], (16,), 1 * 4 * 4),
        "conv2_w": u(ks[2], (32, 16, 4, 4), 16 * 4 * 4),
        "conv2_b": u(ks[3], (32,), 16 * 4 * 4),
        "fc1_w":   u(ks[4], (512, 32 * 16 * 16), 32 * 16 * 16),
        "fc1_b":   u(ks[5], (512,), 32 * 16 * 16),
        "fc2_w":   u(ks[6], (num_class, 512), 512),
        "fc2_b":   u(ks[7], (num_class,), 512),
    }


def prepare_params(p):
    """One-time conversion to kernel layouts (bf16 weights, f32 biases).

    conv weights (co,ci,kh,kw) -> (co, kh*kw*ci); linear weights transposed to
    (in, out); fc2 columns zero-padded to a 128-lane multiple.  fc1 input rows
    are ordered (c, h, w), matching torch's NCHW flatten.
    """
    def conv_wt(w):
        co, ci, kh, kw = w.shape
        return (jnp.transpose(w, (0, 2, 3, 1))
                .reshape(co, kh * kw * ci).astype(jnp.bfloat16))

    fc2_wt = jnp.transpose(p["fc2_w"]).astype(jnp.bfloat16)          # (512, nc)
    nc = fc2_wt.shape[1]
    nc_pad = ((nc + 127) // 128) * 128
    fc2_wt = jnp.pad(fc2_wt, ((0, 0), (0, nc_pad - nc)))

    return {
        "conv1_wt": conv_wt(p["conv1_w"]),
        "conv1_b":  p["conv1_b"].astype(jnp.float32).reshape(-1, 1),
        "conv2_wt": conv_wt(p["conv2_w"]),
        "conv2_b":  p["conv2_b"].astype(jnp.float32).reshape(-1, 1),
        "fc1_wt":   jnp.transpose(p["fc1_w"]).astype(jnp.bfloat16),  # (8192, 512)
        "fc1_b":    p["fc1_b"].astype(jnp.float32).reshape(1, -1),
        "fc2_wt":   fc2_wt,                                          # (512, 128)
        "fc2_b":    p["fc2_b"].astype(jnp.float32),
    }


if __name__ == "__main__":
    key = jax.random.PRNGKey(0)
    pkey, xkey = jax.random.split(key)
    params = prepare_params(init_params(pkey, num_class=10))

    # (B=2, C=1, H=64, W=64): conv1(p2,k4) -> 65 -> pool -> 32 -> conv2 -> 33
    # -> pool -> 16, so the flatten is 32*16*16 = 8192, matching the module.
    x = jax.random.normal(xkey, (2, 1, 64, 64), jnp.float32)

    out = net_forward(x, params, num_class=10)
    out = jax.block_until_ready(out)
    assert out.shape == (2, 10), out.shape
    assert bool(jnp.all(jnp.isfinite(out)))
    print("KERNEL_OK")
</pallas_src>

<mosaic_0001>
module attributes {stable_mosaic.version = 11 : i64} {
  func.func @_conv_pool_kernel(%arg0: i32, %arg1: memref<16x16xbf16, #tpu.memory_space<vmem>>, %arg2: memref<16x8192xbf16, #tpu.memory_space<vmem>>, %arg3: memref<16x1xf32, #tpu.memory_space<vmem>>, %arg4: memref<16x2048xbf16, #tpu.memory_space<vmem>>) attributes {dimension_semantics = [#tpu.dimension_semantics<arbitrary>], iteration_bounds = array<i64: 1>, scalar_prefetch = 0 : i64, scratch_operands = 0 : i64, tpu.core_type = #tpu.core_type<tc>, window_params = [{pipeline_mode = #tpu.pipeline_mode<synchronous>, transform_indices = @transform_0, window_bounds = array<i64: 16, 16>}, {pipeline_mode = #tpu.pipeline_mode<synchronous>, transform_indices = @transform_1, window_bounds = array<i64: 16, 8192>}, {pipeline_mode = #tpu.pipeline_mode<synchronous>, transform_indices = @transform_2, window_bounds = array<i64: 16, 1>}, {pipeline_mode = #tpu.pipeline_mode<synchronous>, transform_indices = @transform_3, window_bounds = array<i64: 16, 2048>}]} {
    %c0 = arith.constant 0 : index
    %c0_0 = arith.constant 0 : index
    %0 = vector.load %arg1[%c0, %c0_0] : memref<16x16xbf16, #tpu.memory_space<vmem>>, vector<16x16xbf16>
    %c0_1 = arith.constant 0 : index
    %c0_2 = arith.constant 0 : index
    %1 = vector.load %arg2[%c0_1, %c0_2] : memref<16x8192xbf16, #tpu.memory_space<vmem>>, vector<16x8192xbf16>
    %cst = arith.constant dense<0.000000e+00> : vector<16x8192xf32>
    %2 = tpu.matmul %0, %1, %cst {dimension_numbers = #tpu.dot_dimension_numbers<[1], [0], [0], [1], [0, 0, 1, 1], [], []>} : vector<16x16xbf16>, vector<16x8192xbf16>, vector<16x8192xf32> -> vector<16x8192xf32>
    %c0_3 = arith.constant 0 : index
    %c0_4 = arith.constant 0 : index
    %3 = vector.load %arg3[%c0_3, %c0_4] : memref<16x1xf32, #tpu.memory_space<vmem>>, vector<16x1xf32>
    %4 = vector.broadcast %3 : vector<16x1xf32> to vector<16x8192xf32>
    %5 = arith.addf %2, %4 : vector<16x8192xf32>
    %cst_5 = arith.constant 0.000000e+00 : f32
    %6 = vector.broadcast %cst_5 : f32 to vector<16x8192xf32>
    %7 = arith.maximumf %5, %6 : vector<16x8192xf32>
    %8 = vector.extract_strided_slice %7 {offsets = [0, 0], sizes = [16, 2048], strides = [1, 1]} : vector<16x8192xf32> to vector<16x2048xf32>
    %9 = vector.extract_strided_slice %7 {offsets = [0, 2048], sizes = [16, 2048], strides = [1, 1]} : vector<16x8192xf32> to vector<16x2048xf32>
    %10 = arith.maximumf %8, %9 : vector<16x2048xf32>
    %11 = vector.extract_strided_slice %7 {offsets = [0, 4096], sizes = [16, 2048], strides = [1, 1]} : vector<16x8192xf32> to vector<16x2048xf32>
    %12 = vector.extract_strided_slice %7 {offsets = [0, 6144], sizes = [16, 2048], strides = [1, 1]} : vector<16x8192xf32> to vector<16x2048xf32>
    %13 = arith.maximumf %11, %12 : vector<16x2048xf32>
    %14 = arith.maximumf %10, %13 : vector<16x2048xf32>
    %15 = arith.truncf %14 : vector<16x2048xf32> to vector<16x2048xbf16>
    %c0_6 = arith.constant 0 : index
    %c0_7 = arith.constant 0 : index
    %16 = vector.load %arg4[%c0_6, %c0_7] : memref<16x2048xbf16, #tpu.memory_space<vmem>>, vector<16x2048xbf16>
    tpu.vector_store %arg4[%c0_6, %c0_7], %15 {strides = array<i32>} : memref<16x2048xbf16, #tpu.memory_space<vmem>>, vector<16x2048xbf16>,
    return
  }
  func.func @transform_0(%arg0: i32) -> (i32, i32) {
    %c0_i32 = arith.constant 0 : i32
    %c0_i32_0 = arith.constant 0 : i32
    %c0_i32_1 = arith.constant 0 : i32
    return %c0_i32, %c0_i32_0 : i32, i32
  }
  func.func @transform_1(%arg0: i32) -> (i32, i32) {
    %c0_i32 = arith.constant 0 : i32
    %c0_i32_0 = arith.constant 0 : i32
    %c0_i32_1 = arith.constant 0 : i32
    return %c0_i32, %c0_i32_0 : i32, i32
  }
  func.func @transform_2(%arg0: i32) -> (i32, i32) {
    %c0_i32 = arith.constant 0 : i32
    %c0_i32_0 = arith.constant 0 : i32
    %c0_i32_1 = arith.constant 0 : i32
    return %c0_i32, %c0_i32_0 : i32, i32
  }
  func.func @transform_3(%arg0: i32) -> (i32, i32) {
    %c0_i32 = arith.constant 0 : i32
    %c0_i32_0 = arith.constant 0 : i32
    %c0_i32_1 = arith.constant 0 : i32
    return %c0_i32, %c0_i32_0 : i32, i32
  }
}

module attributes {stable_mosaic.version = 11 : i64} {
  func.func @_conv_pool_kernel(%arg0: i32, %arg1: memref<32x256xbf16, #tpu.memory_space<vmem>>, %arg2: memref<256x2048xbf16, #tpu.memory_space<vmem>>, %arg3: memref<32x1xf32, #tpu.memory_space<vmem>>, %arg4: memref<32x512xbf16, #tpu.memory_space<vmem>>) attributes {dimension_semantics = [#tpu.dimension_semantics<arbitrary>], iteration_bounds = array<i64: 1>, scalar_prefetch = 0 : i64, scratch_operands = 0 : i64, tpu.core_type = #tpu.core_type<tc>, window_params = [{pipeline_mode = #tpu.pipeline_mode<synchronous>, transform_indices = @transform_0, window_bounds = array<i64: 32, 256>}, {pipeline_mode = #tpu.pipeline_mode<synchronous>, transform_indices = @transform_1, window_bounds = array<i64: 256, 2048>}, {pipeline_mode = #tpu.pipeline_mode<synchronous>, transform_indices = @transform_2, window_bounds = array<i64: 32, 1>}, {pipeline_mode = #tpu.pipeline_mode<synchronous>, transform_indices = @transform_3, window_bounds = array<i64: 32, 512>}]} {
    %c0 = arith.constant 0 : index
    %c0_0 = arith.constant 0 : index
    %0 = vector.load %arg1[%c0, %c0_0] : memref<32x256xbf16, #tpu.memory_space<vmem>>, vector<32x256xbf16>
    %c0_1 = arith.constant 0 : index
    %c0_2 = arith.constant 0 : index
    %1 = vector.load %arg2[%c0_1, %c0_2] : memref<256x2048xbf16, #tpu.memory_space<vmem>>, vector<256x2048xbf16>
    %cst = arith.constant dense<0.000000e+00> : vector<32x2048xf32>
    %2 = tpu.matmul %0, %1, %cst {dimension_numbers = #tpu.dot_dimension_numbers<[1], [0], [0], [1], [0, 0, 1, 1], [], []>} : vector<32x256xbf16>, vector<256x2048xbf16>, vector<32x2048xf32> -> vector<32x2048xf32>
    %c0_3 = arith.constant 0 : index
    %c0_4 = arith.constant 0 : index
    %3 = vector.load %arg3[%c0_3, %c0_4] : memref<32x1xf32, #tpu.memory_space<vmem>>, vector<32x1xf32>
    %4 = vector.broadcast %3 : vector<32x1xf32> to vector<32x2048xf32>
    %5 = arith.addf %2, %4 : vector<32x2048xf32>
    %cst_5 = arith.constant 0.000000e+00 : f32
    %6 = vector.broadcast %cst_5 : f32 to vector<32x2048xf32>
    %7 = arith.maximumf %5, %6 : vector<32x2048xf32>
    %8 = vector.extract_strided_slice %7 {offsets = [0, 0], sizes = [32, 512], strides = [1, 1]} : vector<32x2048xf32> to vector<32x512xf32>
    %9 = vector.extract_strided_slice %7 {offsets = [0, 512], sizes = [32, 512], strides = [1, 1]} : vector<32x2048xf32> to vector<32x512xf32>
    %10 = arith.maximumf %8, %9 : vector<32x512xf32>
    %11 = vector.extract_strided_slice %7 {offsets = [0, 1024], sizes = [32, 512], strides = [1, 1]} : vector<32x2048xf32> to vector<32x512xf32>
    %12 = vector.extract_strided_slice %7 {offsets = [0, 1536], sizes = [32, 512], strides = [1, 1]} : vector<32x2048xf32> to vector<32x512xf32>
    %13 = arith.maximumf %11, %12 : vector<32x512xf32>
    %14 = arith.maximumf %10, %13 : vector<32x512xf32>
    %15 = arith.truncf %14 : vector<32x512xf32> to vector<32x512xbf16>
    %c0_6 = arith.constant 0 : index
    %c0_7 = arith.constant 0 : index
    %16 = vector.load %arg4[%c0_6, %c0_7] : memref<32x512xbf16, #tpu.memory_space<vmem>>, vector<32x512xbf16>
    tpu.vector_store %arg4[%c0_6, %c0_7], %15 {strides = array<i32>} : memref<32x512xbf16, #tpu.memory_space<vmem>>, vector<32x512xbf16>,
    return
  }
  func.func @transform_0(%arg0: i32) -> (i32, i32) {
    %c0_i32 = arith.constant 0 : i32
    %c0_i32_0 = arith.constant 0 : i32
    %c0_i32_1 = arith.constant 0 : i32
    return %c0_i32, %c0_i32_0 : i32, i32
  }
  func.func @transform_1(%arg0: i32) -> (i32, i32) {
    %c0_i32 = arith.constant 0 : i32
    %c0_i32_0 = arith.constant 0 : i32
    %c0_i32_1 = arith.constant 0 : i32
    return %c0_i32, %c0_i32_0 : i32, i32
  }
  func.func @transform_2(%arg0: i32) -> (i32, i32) {
    %c0_i32 = arith.constant 0 : i32
    %c0_i32_0 = arith.constant 0 : i32
    %c0_i32_1 = arith.constant 0 : i32
    return %c0_i32, %c0_i32_0 : i32, i32
  }
  func.func @transform_3(%arg0: i32) -> (i32, i32) {
    %c0_i32 = arith.constant 0 : i32
    %c0_i32_0 = arith.constant 0 : i32
    %c0_i32_1 = arith.constant 0 : i32
    return %c0_i32, %c0_i32_0 : i32, i32
  }
}

module attributes {stable_mosaic.version = 11 : i64} {
  func.func @_fc_fused_acc_kernel(%arg0: i32, %arg1: i32, %arg2: memref<16x4096xbf16, #tpu.memory_space<vmem>>, %arg3: memref<4096x512xbf16, #tpu.memory_space<vmem>>, %arg4: memref<1x512xf32, #tpu.memory_space<vmem>>, %arg5: memref<512x128xbf16, #tpu.memory_space<vmem>>, %arg6: memref<1x16x128xf32, #tpu.memory_space<vmem>>, %arg7: memref<16x512xf32, #tpu.memory_space<vmem>>) attributes {dimension_semantics = [#tpu.dimension_semantics<parallel>, #tpu.dimension_semantics<arbitrary>], iteration_bounds = array<i64: 1, 2>, scalar_prefetch = 0 : i64, scratch_operands = 1 : i64, tpu.core_type = #tpu.core_type<tc>, window_params = [{transform_indices = @transform_0, window_bounds = array<i64: 16, 4096>}, {transform_indices = @transform_1, window_bounds = array<i64: 4096, 512>}, {transform_indices = @transform_2, window_bounds = array<i64: 1, 512>}, {transform_indices = @transform_3, window_bounds = array<i64: 512, 128>}, {transform_indices = @transform_4, window_bounds = array<i64: 1, 16, 128>}]} {
    %c0_i32 = arith.constant 0 : i32
    %0 = arith.cmpi eq, %arg1, %c0_i32 : i32
    %1 = arith.extui %0 : i1 to i32
    %c0_i32_0 = arith.constant 0 : i32
    %2 = arith.cmpi ne, %1, %c0_i32_0 : i32
    scf.if %2 {
      %cst_9 = arith.constant 0.000000e+00 : f32
      %12 = vector.broadcast %cst_9 : f32 to vector<16x512xf32>
      %c0_10 = arith.constant 0 : index
      %c0_11 = arith.constant 0 : index
      %13 = vector.load %arg7[%c0_10, %c0_11] : memref<16x512xf32, #tpu.memory_space<vmem>>, vector<16x512xf32>
      tpu.vector_store %arg7[%c0_10, %c0_11], %12 {strides = array<i32>} : memref<16x512xf32, #tpu.memory_space<vmem>>, vector<16x512xf32>,
    } else {
    }
    %c0 = arith.constant 0 : index
    %c0_1 = arith.constant 0 : index
    %3 = vector.load %arg7[%c0, %c0_1] : memref<16x512xf32, #tpu.memory_space<vmem>>, vector<16x512xf32>
    %c0_2 = arith.constant 0 : index
    %c0_3 = arith.constant 0 : index
    %4 = vector.load %arg2[%c0_2, %c0_3] : memref<16x4096xbf16, #tpu.memory_space<vmem>>, vector<16x4096xbf16>
    %c0_4 = arith.constant 0 : index
    %c0_5 = arith.constant 0 : index
    %5 = vector.load %arg3[%c0_4, %c0_5] : memref<4096x512xbf16, #tpu.memory_space<vmem>>, vector<4096x512xbf16>
    %cst = arith.constant dense<0.000000e+00> : vector<16x512xf32>
    %6 = tpu.matmul %4, %5, %cst {dimension_numbers = #tpu.dot_dimension_numbers<[1], [0], [0], [1], [0, 0, 1, 1], [], []>} : vector<16x4096xbf16>, vector<4096x512xbf16>, vector<16x512xf32> -> vector<16x512xf32>
    %7 = arith.addf %3, %6 : vector<16x512xf32>
    %c0_6 = arith.constant 0 : index
    %c0_7 = arith.constant 0 : index
    %8 = vector.load %arg7[%c0_6, %c0_7] : memref<16x512xf32, #tpu.memory_space<vmem>>, vector<16x512xf32>
    tpu.vector_store %arg7[%c0_6, %c0_7], %7 {strides = array<i32>} : memref<16x512xf32, #tpu.memory_space<vmem>>, vector<16x512xf32>,
    %c1_i32 = arith.constant 1 : i32
    %9 = arith.cmpi eq, %arg1, %c1_i32 : i32
    %10 = arith.extui %9 : i1 to i32
    %c0_i32_8 = arith.constant 0 : i32
    %11 = arith.cmpi ne, %10, %c0_i32_8 : i32
    scf.if %11 {
      %c0_9 = arith.constant 0 : index
      %c0_10 = arith.constant 0 : index
      %12 = vector.load %arg7[%c0_9, %c0_10] : memref<16x512xf32, #tpu.memory_space<vmem>>, vector<16x512xf32>
      %c0_11 = arith.constant 0 : index
      %c0_12 = arith.constant 0 : index
      %13 = vector.load %arg4[%c0_11, %c0_12] : memref<1x512xf32, #tpu.memory_space<vmem>>, vector<1x512xf32>
      %14 = vector.broadcast %13 : vector<1x512xf32> to vector<16x512xf32>
      %15 = arith.addf %12, %14 : vector<16x512xf32>
      %cst_13 = arith.constant 0.000000e+00 : f32
      %16 = vector.broadcast %cst_13 : f32 to vector<16x512xf32>
      %17 = arith.maximumf %15, %16 : vector<16x512xf32>
      %18 = arith.truncf %17 : vector<16x512xf32> to vector<16x512xbf16>
      %c0_14 = arith.constant 0 : index
      %c0_15 = arith.constant 0 : index
      %19 = vector.load %arg5[%c0_14, %c0_15] : memref<512x128xbf16, #tpu.memory_space<vmem>>, vector<512x128xbf16>
      %cst_16 = arith.constant dense<0.000000e+00> : vector<16x128xf32>
      %20 = tpu.matmul %18, %19, %cst_16 {dimension_numbers = #tpu.dot_dimension_numbers<[1], [0], [0], [1], [0, 0, 1, 1], [], []>} : vector<16x512xbf16>, vector<512x128xbf16>, vector<16x128xf32> -> vector<16x128xf32>
      %c0_17 = arith.constant 0 : index
      %c0_18 = arith.constant 0 : index
      %c0_19 = arith.constant 0 : index
      %21 = vector.load %arg6[%c0_17, %c0_18, %c0_19] : memref<1x16x128xf32, #tpu.memory_space<vmem>>, vector<1x16x128xf32>
      %22 = vector.shape_cast %21 : vector<1x16x128xf32> to vector<16x128xf32>
      %23 = vector.shape_cast %20 : vector<16x128xf32> to vector<1x16x128xf32>
      tpu.vector_store %arg6[%c0_17, %c0_18, %c0_19], %23 {strides = array<i32>} : memref<1x16x128xf32, #tpu.memory_space<vmem>>, vector<1x16x128xf32>,
    } else {
    }
    return
  }
  func.func @transform_0(%arg0: i32, %arg1: i32) -> (i32, i32) {
    %c0_i32 = arith.constant 0 : i32
    %c0_i32_0 = arith.constant 0 : i32
    return %c0_i32, %arg1 : i32, i32
  }
  func.func @transform_1(%arg0: i32, %arg1: i32) -> (i32, i32) {
    %c0_i32 = arith.constant 0 : i32
    return %arg1, %arg0 : i32, i32
  }
  func.func @transform_2(%arg0: i32, %arg1: i32) -> (i32, i32) {
    %c0_i32 = arith.constant 0 : i32
    %c0_i32_0 = arith.constant 0 : i32
    return %c0_i32, %arg0 : i32, i32
  }
  func.func @transform_3(%arg0: i32, %arg1: i32) -> (i32, i32) {
    %c0_i32 = arith.constant 0 : i32
    %c0_i32_0 = arith.constant 0 : i32
    return %arg0, %c0_i32 : i32, i32
  }
  func.func @transform_4(%arg0: i32, %arg1: i32) -> (i32, i32, i32) {
    %c0_i32 = arith.constant 0 : i32
    %c0_i32_0 = arith.constant 0 : i32
    %c0_i32_1 = arith.constant 0 : i32
    return %arg0, %c0_i32, %c0_i32_0 : i32, i32, i32
  }
}

</mosaic_0001>

<llo_original>
// kernel: net_forward.3
$region0: #{net_forward.3}
  #allocation0 [shape = 'u32[]', space=smem, size = 0x4, offset = 0x4, fixed_abs, tag = 'smem constant byte address 0x4 - core index']
  #allocation1 [shape = 'u32[72,128]{1,0:T(1,128)}', space=vmem, size = 0x9000, scoped, tag = 'internal scratch']
  %s0 = inlined_call_operand.vmem [shape: bf16[16,16], index: 0, kind: input, shape index: {}]
  %s1 = inlined_call_operand.vmem [shape: bf16[16,8192], index: 1, kind: input, shape index: {}]
  %s2 = inlined_call_operand.vmem [shape: f32[16,1], index: 2, kind: input, shape index: {}]
  %s3 = inlined_call_operand.vmem [shape: bf16[16,2048], index: 3, kind: output, shape index: {}]
  %s4 = sld [smem:[#allocation0]]
  $region22: #{net_forward.3} parent=0
    _
  %s6 = ssub.s32 1, %s4
  %s7 = scalar_select 0, %s6, %s4
  // Predicated region
  $region2: #{net_forward.3} parent=0 // pred_check
    _
  $region3: #{net_forward.3} parent=0 // pred_check_branch
    %9 = sbr.rel (0) target = $region5
  $region4: #{net_forward.3} parent=0 // pred_region
    _
  $region5: #{net_forward.3} parent=0 // pred_fallthru
    _
  // Predicated region
  $region6: #{net_forward.3} parent=0 // pred_check
    _
  $region7: #{net_forward.3} parent=0 // pred_check_branch
    %11 = sbr.rel (0) target = $region9
  $region8: #{net_forward.3} parent=0 // pred_region
    _
  $region9: #{net_forward.3} parent=0 // pred_fallthru
    _
  // Predicated region
  $region10: #{net_forward.3} parent=0 // pred_check
    _
  $region11: #{net_forward.3} parent=0 // pred_check_branch
    %13 = sbr.rel (0) target = $region13
  $region12: #{net_forward.3} parent=0 // pred_region
    _
  $region13: #{net_forward.3} parent=0 // pred_fallthru
    _
  %v15 = vld [vmem:[%s0] sm:$0xf]
  %v16 = vld [vmem:[%s0 + $0x4] sm:$0xf]
  %v17 = vld [vmem:[%s1] sm:$0xff]
  %v18 = vld [vmem:[%s1 + $0x8] sm:$0xff]
  %v19 = vld [vmem:[%s1 + $0x10] sm:$0xff]
  %v20 = vld [vmem:[%s1 + $0x18] sm:$0xff]
  %v21 = vld [vmem:[%s1 + $0x20] sm:$0xff]
  %v22 = vld [vmem:[%s1 + $0x28] sm:$0xff]
  %v23 = vld [vmem:[%s1 + $0x30] sm:$0xff]
  %v24 = vld [vmem:[%s1 + $0x38] sm:$0xff]
  %v25 = vld [vmem:[%s1 + $0x40] sm:$0xff]
  %v26 = vld [vmem:[%s1 + $0x48] sm:$0xff]
  %v27 = vld [vmem:[%s1 + $0x50] sm:$0xff]
  %v28 = vld [vmem:[%s1 + $0x58] sm:$0xff]
  %v29 = vld [vmem:[%s1 + $0x60] sm:$0xff]
  %v30 = vld [vmem:[%s1 + $0x68] sm:$0xff]
  %v31 = vld [vmem:[%s1 + $0x70] sm:$0xff]
  %v32 = vld [vmem:[%s1 + $0x78] sm:$0xff]
  %v33 = vld [vmem:[%s1 + $0x80] sm:$0xff]
  %v34 = vld [vmem:[%s1 + $0x88] sm:$0xff]
  %v35 = vld [vmem:[%s1 + $0x90] sm:$0xff]
  %v36 = vld [vmem:[%s1 + $0x98] sm:$0xff]
  %v37 = vld [vmem:[%s1 + $0xa0] sm:$0xff]
  %v38 = vld [vmem:[%s1 + $0xa8] sm:$0xff]
  %v39 = vld [vmem:[%s1 + $0xb0] sm:$0xff]
  %v40 = vld [vmem:[%s1 + $0xb8] sm:$0xff]
  %v41 = vld [vmem:[%s1 + $0xc0] sm:$0xff]
  %v42 = vld [vmem:[%s1 + $0xc8] sm:$0xff]
  %v43 = vld [vmem:[%s1 + $0xd0] sm:$0xff]
  %v44 = vld [vmem:[%s1 + $0xd8] sm:$0xff]
  %v45 = vld [vmem:[%s1 + $0xe0] sm:$0xff]
  %v46 = vld [vmem:[%s1 + $0xe8] sm:$0xff]
  %v47 = vld [vmem:[%s1 + $0xf0] sm:$0xff]
  %v48 = vld [vmem:[%s1 + $0xf8] sm:$0xff]
  %v49 = vld [vmem:[%s1 + $0x100] sm:$0xff]
  %v50 = vld [vmem:[%s1 + $0x108] sm:$0xff]
  %v51 = vld [vmem:[%s1 + $0x110] sm:$0xff]
  %v52 = vld [vmem:[%s1 + $0x118] sm:$0xff]
  %v53 = vld [vmem:[%s1 + $0x120] sm:$0xff]
  %v54 = vld [vmem:[%s1 + $0x128] sm:$0xff]
  %v55 = vld [vmem:[%s1 + $0x130] sm:$0xff]
  %v56 = vld [vmem:[%s1 + $0x138] sm:$0xff]
  %v57 = vld [vmem:[%s1 + $0x140] sm:$0xff]
  %v58 = vld [vmem:[%s1 + $0x148] sm:$0xff]
  %v59 = vld [vmem:[%s1 + $0x150] sm:$0xff]
  %v60 = vld [vmem:[%s1 + $0x158] sm:$0xff]
  %v61 = vld [vmem:[%s1 + $0x160] sm:$0xff]
  %v62 = vld [vmem:[%s1 + $0x168] sm:$0xff]
  %v63 = vld [vmem:[%s1 + $0x170] sm:$0xff]
  %v64 = vld [vmem:[%s1 + $0x178] sm:$0xff]
  %v65 = vld [vmem:[%s1 + $0x180] sm:$0xff]
  %v66 = vld [vmem:[%s1 + $0x188] sm:$0xff]
  %v67 = vld [vmem:[%s1 + $0x190] sm:$0xff]
  %v68 = vld [vmem:[%s1 + $0x198] sm:$0xff]
  %v69 = vld [vmem:[%s1 + $0x1a0] sm:$0xff]
  %v70 = vld [vmem:[%s1 + $0x1a8] sm:$0xff]
  %v71 = vld [vmem:[%s1 + $0x1b0] sm:$0xff]
  %v72 = vld [vmem:[%s1 + $0x1b8] sm:$0xff]
  %v73 = vld [vmem:[%s1 + $0x1c0] sm:$0xff]
  %v74 = vld [vmem:[%s1 + $0x1c8] sm:$0xff]
  %v75 = vld [vmem:[%s1 + $0x1d0] sm:$0xff]
  %v76 = vld [vmem:[%s1 + $0x1d8] sm:$0xff]
  %v77 = vld [vmem:[%s1 + $0x1e0] sm:$0xff]
  %v78 = vld [vmem:[%s1 + $0x1e8] sm:$0xff]
  %v79 = vld [vmem:[%s1 + $0x1f0] sm:$0xff]
  %v80 = vld [vmem:[%s1 + $0x1f8] sm:$0xff]
  %v81 = vld [vmem:[%s2] sm:$0xff]
  %v82 = vld [vmem:[%s2 + $0x8] sm:$0xff]
  %84 = vset.pattern.permute.xlu0 0
  %85 = vperm.xlu0 %84, %v81
  %v86 = vpop.permute.xlu0 %85
  %89 = vset.pattern.permute.xlu0 0
  %90 = vperm.xlu0 %89, %v82
  %v91 = vpop.permute.xlu0 %90
  %v95 = vunpack.c.l.b16 %v15
  %v96 = vunpack.c.l.b16 %v16
  %v97 = vpack.c.b16 %v96, %v95
  %v162 = vunpack.c.l.b16 %v17
  %v163 = vunpack.c.h.b16 %v17
  %v164 = vunpack.c.l.b16 %v18
  %v165 = vunpack.c.h.b16 %v18
  %v166 = vunpack.c.l.b16 %v19
  %v167 = vunpack.c.h.b16 %v19
  %v168 = vunpack.c.l.b16 %v20
  %v169 = vunpack.c.h.b16 %v20
  %v170 = vunpack.c.l.b16 %v21
  %v171 = vunpack.c.h.b16 %v21
  %v172 = vunpack.c.l.b16 %v22
  %v173 = vunpack.c.h.b16 %v22
  %v174 = vunpack.c.l.b16 %v23
  %v175 = vunpack.c.h.b16 %v23
  %v176 = vunpack.c.l.b16 %v24
  %v177 = vunpack.c.h.b16 %v24
  %v178 = vunpack.c.l.b16 %v25
  %v179 = vunpack.c.h.b16 %v25
  %v180 = vunpack.c.l.b16 %v26
  %v181 = vunpack.c.h.b16 %v26
  %v182 = vunpack.c.l.b16 %v27
  %v183 = vunpack.c.h.b16 %v27
  %v184 = vunpack.c.l.b16 %v28
  %v185 = vunpack.c.h.b16 %v28
  %v186 = vunpack.c.l.b16 %v29
  %v187 = vunpack.c.h.b16 %v29
  %v188 = vunpack.c.l.b16 %v30
  %v189 = vunpack.c.h.b16 %v30
  %v190 = vunpack.c.l.b16 %v31
  %v191 = vunpack.c.h.b16 %v31
  %v192 = vunpack.c.l.b16 %v32
  %v193 = vunpack.c.h.b16 %v32
  %v194 = vunpack.c.l.b16 %v33
  %v195 = vunpack.c.h.b16 %v33
  %v196 = vunpack.c.l.b16 %v34
  %v197 = vunpack.c.h.b16 %v34
  %v198 = vunpack.c.l.b16 %v35
  %v199 = vunpack.c.h.b16 %v35
  %v200 = vunpack.c.l.b16 %v36
  %v201 = vunpack.c.h.b16 %v36
  %v202 = vunpack.c.l.b16 %v37
  %v203 = vunpack.c.h.b16 %v37
  %v204 = vunpack.c.l.b16 %v38
  %v205 = vunpack.c.h.b16 %v38
  %v206 = vunpack.c.l.b16 %v39
  %v207 = vunpack.c.h.b16 %v39
  %v208 = vunpack.c.l.b16 %v40
  %v209 = vunpack.c.h.b16 %v40
  %v210 = vunpack.c.l.b16 %v41
  %v211 = vunpack.c.h.b16 %v41
  %v212 = vunpack.c.l.b16 %v42
  %v213 = vunpack.c.h.b16 %v42
  %v214 = vunpack.c.l.b16 %v43
  %v215 = vunpack.c.h.b16 %v43
  %v216 = vunpack.c.l.b16 %v44
  %v217 = vunpack.c.h.b16 %v44
  %v218 = vunpack.c.l.b16 %v45
  %v219 = vunpack.c.h.b16 %v45
  %v220 = vunpack.c.l.b16 %v46
  %v221 = vunpack.c.h.b16 %v46
  %v222 = vunpack.c.l.b16 %v47
  %v223 = vunpack.c.h.b16 %v47
  %v224 = vunpack.c.l.b16 %v48
  %v225 = vunpack.c.h.b16 %v48
  %v226 = vunpack.c.l.b16 %v49
  %v227 = vunpack.c.h.b16 %v49
  %v228 = vunpack.c.l.b16 %v50
  %v229 = vunpack.c.h.b16 %v50
  %v230 = vunpack.c.l.b16 %v51
  %v231 = vunpack.c.h.b16 %v51
  %v232 = vunpack.c.l.b16 %v52
  %v233 = vunpack.c.h.b16 %v52
  %v234 = vunpack.c.l.b16 %v53
  %v235 = vunpack.c.h.b16 %v53
  %v236 = vunpack.c.l.b16 %v54
  %v237 = vunpack.c.h.b16 %v54
  %v238 = vunpack.c.l.b16 %v55
  %v239 = vunpack.c.h.b16 %v55
  %v240 = vunpack.c.l.b16 %v56
  %v241 = vunpack.c.h.b16 %v56
  %v242 = vunpack.c.l.b16 %v57
  %v243 = vunpack.c.h.b16 %v57
  %v244 = vunpack.c.l.b16 %v58
  %v245 = vunpack.c.h.b16 %v58
  %v246 = vunpack.c.l.b16 %v59
  %v247 = vunpack.c.h.b16 %v59
  %v248 = vunpack.c.l.b16 %v60
  %v249 = vunpack.c.h.b16 %v60
  %v250 = vunpack.c.l.b16 %v61
  %v251 = vunpack.c.h.b16 %v61
  %v252 = vunpack.c.l.b16 %v62
  %v253 = vunpack.c.h.b16 %v62
  %v254 = vunpack.c.l.b16 %v63
  %v255 = vunpack.c.h.b16 %v63
  %v256 = vunpack.c.l.b16 %v64
  %v257 = vunpack.c.h.b16 %v64
  %v258 = vunpack.c.l.b16 %v65
  %v259 = vunpack.c.h.b16 %v65
  %v260 = vunpack.c.l.b16 %v66
  %v261 = vunpack.c.h.b16 %v66
  %v262 = vunpack.c.l.b16 %v67
  %v263 = vunpack.c.h.b16 %v67
  %v264 = vunpack.c.l.b16 %v68
  %v265 = vunpack.c.h.b16 %v68
  %v266 = vunpack.c.l.b16 %v69
  %v267 = vunpack.c.h.b16 %v69
  %v268 = vunpack.c.l.b16 %v70
  %v269 = vunpack.c.h.b16 %v70
  %v270 = vunpack.c.l.b16 %v71
  %v271 = vunpack.c.h.b16 %v71
  %v272 = vunpack.c.l.b16 %v72
  %v273 = vunpack.c.h.b16 %v72
  %v274 = vunpack.c.l.b16 %v73
  %v275 = vunpack.c.h.b16 %v73
  %v276 = vunpack.c.l.b16 %v74
  %v277 = vunpack.c.h.b16 %v74
  %v278 = vunpack.c.l.b16 %v75
  %v279 = vunpack.c.h.b16 %v75
  %v280 = vunpack.c.l.b16 %v76
  %v281 = vunpack.c.h.b16 %v76
  %v282 = vunpack.c.l.b16 %v77
  %v283 = vunpack.c.h.b16 %v77
  %v284 = vunpack.c.l.b16 %v78
  %v285 = vunpack.c.h.b16 %v78
  %v286 = vunpack.c.l.b16 %v79
  %v287 = vunpack.c.h.b16 %v79
  %v288 = vunpack.c.l.b16 %v80
  %v289 = vunpack.c.h.b16 %v80
  %v290 = vpack.c.b16 %v226, %v162
  %v291 = vpack.c.b16 %v227, %v163
  %v292 = vpack.c.b16 %v228, %v164
  %v293 = vpack.c.b16 %v229, %v165
  %v294 = vpack.c.b16 %v230, %v166
  %v295 = vpack.c.b16 %v231, %v167
  %v296 = vpack.c.b16 %v232, %v168
  %v297 = vpack.c.b16 %v233, %v169
  %v298 = vpack.c.b16 %v234, %v170
  %v299 = vpack.c.b16 %v235, %v171
  %v300 = vpack.c.b16 %v236, %v172
  %v301 = vpack.c.b16 %v237, %v173
  %v302 = vpack.c.b16 %v238, %v174
  %v303 = vpack.c.b16 %v239, %v175
  %v304 = vpack.c.b16 %v240, %v176
  %v305 = vpack.c.b16 %v241, %v177
  %v306 = vpack.c.b16 %v242, %v178
  %v307 = vpack.c.b16 %v243, %v179
  %v308 = vpack.c.b16 %v244, %v180
  %v309 = vpack.c.b16 %v245, %v181
  %v310 = vpack.c.b16 %v246, %v182
  %v311 = vpack.c.b16 %v247, %v183
  %v312 = vpack.c.b16 %v248, %v184
  %v313 = vpack.c.b16 %v249, %v185
  %v314 = vpack.c.b16 %v250, %v186
  %v315 = vpack.c.b16 %v251, %v187
  %v316 = vpack.c.b16 %v252, %v188
  %v317 = vpack.c.b16 %v253, %v189
  %v318 = vpack.c.b16 %v254, %v190
  %v319 = vpack.c.b16 %v255, %v191
  %v320 = vpack.c.b16 %v256, %v192
  %v321 = vpack.c.b16 %v257, %v193
  %v322 = vpack.c.b16 %v258, %v194
  %v323 = vpack.c.b16 %v259, %v195
  %v324 = vpack.c.b16 %v260, %v196
  %v325 = vpack.c.b16 %v261, %v197
  %v326 = vpack.c.b16 %v262, %v198
  %v327 = vpack.c.b16 %v263, %v199
  %v328 = vpack.c.b16 %v264, %v200
  %v329 = vpack.c.b16 %v265, %v201
  %v330 = vpack.c.b16 %v266, %v202
  %v331 = vpack.c.b16 %v267, %v203
  %v332 = vpack.c.b16 %v268, %v204
  %v333 = vpack.c.b16 %v269, %v205
  %v334 = vpack.c.b16 %v270, %v206
  %v335 = vpack.c.b16 %v271, %v207
  %v336 = vpack.c.b16 %v272, %v208
  %v337 = vpack.c.b16 %v273, %v209
  %v338 = vpack.c.b16 %v274, %v210
  %v339 = vpack.c.b16 %v275, %v211
  %v340 = vpack.c.b16 %v276, %v212
  %v341 = vpack.c.b16 %v277, %v213
  %v342 = vpack.c.b16 %v278, %v214
  %v343 = vpack.c.b16 %v279, %v215
  %v344 = vpack.c.b16 %v280, %v216
  %v345 = vpack.c.b16 %v281, %v217
  %v346 = vpack.c.b16 %v282, %v218
  %v347 = vpack.c.b16 %v283, %v219
  %v348 = vpack.c.b16 %v284, %v220
  %v349 = vpack.c.b16 %v285, %v221
  %v350 = vpack.c.b16 %v286, %v222
  %v351 = vpack.c.b16 %v287, %v223
  %v352 = vpack.c.b16 %v288, %v224
  %v353 = vpack.c.b16 %v289, %v225
  %vm418 = vcmask 130048
  %v420 = vsel %vm418, %v97, 0
  %422 = vmatpush.bf16.msra.mxu0 0
  %423 = vmatpush.bf16.msra.mxu0 0
  %424 = vmatpush.bf16.msra.mxu0 0
  %425 = vmatpush.bf16.msra.mxu0 0
  %426 = vmatpush.bf16.msra.mxu0 0
  %427 = vmatpush.bf16.msra.mxu0 0
  %428 = vmatpush.bf16.msra.mxu0 0
  %429 = vmatpush.bf16.msra.mxu0 %v290
  %430 = vmatmul.bf16.gmra.mxu0 %v420
  %v431 = vpop.f32.mrf.mxu0
  %v432 = vadd.f32 %v86, %v431
  %v433 = vpop.f32.mrf.mxu0
  %v434 = vadd.f32 %v91, %v433
  %435 = vdwg.mxu0
  %436 = vmatpush.bf16.msra.mxu0 0
  %437 = vmatpush.bf16.msra.mxu0 0
  %438 = vmatpush.bf16.msra.mxu0 0
  %439 = vmatpush.bf16.msra.mxu0 0
  %440 = vmatpush.bf16.msra.mxu0 0
  %441 = vmatpush.bf16.msra.mxu0 0
  %442 = vmatpush.bf16.msra.mxu0 0
  %443 = vmatpush.bf16.msra.mxu0 %v291
  %444 = vmatmul.bf16.gmra.mxu0 %v420
  %v445 = vpop.f32.mrf.mxu0
  %v446 = vadd.f32 %v86, %v445
  %v447 = vpop.f32.mrf.mxu0
  %v448 = vadd.f32 %v91, %v447
  %449 = vdwg.mxu0
  %450 = vmatpush.bf16.msra.mxu0 0
  %451 = vmatpush.bf16.msra.mxu0 0
  %452 = vmatpush.bf16.msra.mxu0 0
  %453 = vmatpush.bf16.msra.mxu0 0
  %454 = vmatpush.bf16.msra.mxu0 0
  %455 = vmatpush.bf16.msra.mxu0 0
  %456 = vmatpush.bf16.msra.mxu0 0
  %457 = vmatpush.bf16.msra.mxu0 %v292
  %458 = vmatmul.bf16.gmra.mxu0 %v420
  %v459 = vpop.f32.mrf.mxu0
  %v460 = vadd.f32 %v86, %v459
  %v461 = vpop.f32.mrf.mxu0
  %v462 = vadd.f32 %v91, %v461
  %463 = vdwg.mxu0
  %464 = vmatpush.bf16.msra.mxu0 0
  %465 = vmatpush.bf16.msra.mxu0 0
  %466 = vmatpush.bf16.msra.mxu0 0
  %467 = vmatpush.bf16.msra.mxu0 0
  %468 = vmatpush.bf16.msra.mxu0 0
  %469 = vmatpush.bf16.msra.mxu0 0
  %470 = vmatpush.bf16.msra.mxu0 0
  %471 = vmatpush.bf16.msra.mxu0 %v293
  %472 = vmatmul.bf16.gmra.mxu0 %v420
  %v473 = vpop.f32.mrf.mxu0
  %v474 = vadd.f32 %v86, %v473
  %v475 = vpop.f32.mrf.mxu0
  %v476 = vadd.f32 %v91, %v475
  %477 = vdwg.mxu0
  %478 = vmatpush.bf16.msra.mxu0 0
  %479 = vmatpush.bf16.msra.mxu0 0
  %480 = vmatpush.bf16.msra.mxu0 0
  %481 = vmatpush.bf16.msra.mxu0 0
  %482 = vmatpush.bf16.msra.mxu0 0
  %483 = vmatpush.bf16.msra.mxu0 0
  %484 = vmatpush.bf16.msra.mxu0 0
  %485 = vmatpush.bf16.msra.mxu0 %v294
  %486 = vmatmul.bf16.gmra.mxu0 %v420
  %v487 = vpop.f32.mrf.mxu0
  %v488 = vadd.f32 %v86, %v487
  %v489 = vpop.f32.mrf.mxu0
  %v490 = vadd.f32 %v91, %v489
  %491 = vdwg.mxu0
  %492 = vmatpush.bf16.msra.mxu0 0
  %493 = vmatpush.bf16.msra.mxu0 0
  %494 = vmatpush.bf16.msra.mxu0 0
  %495 = vmatpush.bf16.msra.mxu0 0
  %496 = vmatpush.bf16.msra.mxu0 0
  %497 = vmatpush.bf16.msra.mxu0 0
  %498 = vmatpush.bf16.msra.mxu0 0
  %499 = vmatpush.bf16.msra.mxu0 %v295
  %500 = vmatmul.bf16.gmra.mxu0 %v420
  %v501 = vpop.f32.mrf.mxu0
  %v502 = vadd.f32 %v86, %v501
  %v503 = vpop.f32.mrf.mxu0
  %v504 = vadd.f32 %v91, %v503
  %505 = vdwg.mxu0
  %506 = vmatpush.bf16.msra.mxu0 0
  %507 = vmatpush.bf16.msra.mxu0 0
  %508 = vmatpush.bf16.msra.mxu0 0
  %509 = vmatpush.bf16.msra.mxu0 0
  %510 = vmatpush.bf16.msra.mxu0 0
  %511 = vmatpush.bf16.msra.mxu0 0
  %512 = vmatpush.bf16.msra.mxu0 0
  %513 = vmatpush.bf16.msra.mxu0 %v296
  %514 = vmatmul.bf16.gmra.mxu0 %v420
  %v515 = vpop.f32.mrf.mxu0
  %v516 = vadd.f32 %v86, %v515
  %v517 = vpop.f32.mrf.mxu0
  %v518 = vadd.f32 %v91, %v517
  %519 = vdwg.mxu0
  %520 = vmatpush.bf16.msra.mxu0 0
  %521 = vmatpush.bf16.msra.mxu0 0
  %522 = vmatpush.bf16.msra.mxu0 0
  %523 = vmatpush.bf16.msra.mxu0 0
  %524 = vmatpush.bf16.msra.mxu0 0
  %525 = vmatpush.bf16.msra.mxu0 0
  %526 = vmatpush.bf16.msra.mxu0 0
  %527 = vmatpush.bf16.msra.mxu0 %v297
  %528 = vmatmul.bf16.gmra.mxu0 %v420
  %v529 = vpop.f32.mrf.mxu0
  %v530 = vadd.f32 %v86, %v529
  %v531 = vpop.f32.mrf.mxu0
  %v532 = vadd.f32 %v91, %v531
  %533 = vdwg.mxu0
  %534 = vmatpush.bf16.msra.mxu0 0
  %535 = vmatpush.bf16.msra.mxu0 0
  %536 = vmatpush.bf16.msra.mxu0 0
  %537 = vmatpush.bf16.msra.mxu0 0
  %538 = vmatpush.bf16.msra.mxu0 0
  %539 = vmatpush.bf16.msra.mxu0 0
  %540 = vmatpush.bf16.msra.mxu0 0
  %541 = vmatpush.bf16.msra.mxu0 %v298
  %542 = vmatmul.bf16.gmra.mxu0 %v420
  %v543 = vpop.f32.mrf.mxu0
  %v544 = vadd.f32 %v86, %v543
  %v545 = vpop.f32.mrf.mxu0
  %v546 = vadd.f32 %v91, %v545
  %547 = vdwg.mxu0
  %548 = vmatpush.bf16.msra.mxu0 0
  %549 = vmatpush.bf16.msra.mxu0 0
  %550 = vmatpush.bf16.msra.mxu0 0
  %551 = vmatpush.bf16.msra.mxu0 0
  %552 = vmatpush.bf16.msra.mxu0 0
  %553 = vmatpush.bf16.msra.mxu0 0
  %554 = vmatpush.bf16.msra.mxu0 0
  %555 = vmatpush.bf16.msra.mxu0 %v299
  %556 = vmatmul.bf16.gmra.mxu0 %v420
  %v557 = vpop.f32.mrf.mxu0
  %v558 = vadd.f32 %v86, %v557
  %v559 = vpop.f32.mrf.mxu0
  %v560 = vadd.f32 %v91, %v559
  %561 = vdwg.mxu0
  %562 = vmatpush.bf16.msra.mxu0 0
  %563 = vmatpush.bf16.msra.mxu0 0
  %564 = vmatpush.bf16.msra.mxu0 0
  %565 = vmatpush.bf16.msra.mxu0 0
  %566 = vmatpush.bf16.msra.mxu0 0
  %567 = vmatpush.bf16.msra.mxu0 0
  %568 = vmatpush.bf16.msra.mxu0 0
  %569 = vmatpush.bf16.msra.mxu0 %v300
  %570 = vmatmul.bf16.gmra.mxu0 %v420
  %v571 = vpop.f32.mrf.mxu0
  %v572 = vadd.f32 %v86, %v571
  %v573 = vpop.f32.mrf.mxu0
  %v574 = vadd.f32 %v91, %v573
  %575 = vdwg.mxu0
  %576 = vmatpush.bf16.msra.mxu0 0
  %577 = vmatpush.bf16.msra.mxu0 0
  %578 = vmatpush.bf16.msra.mxu0 0
  %579 = vmatpush.bf16.msra.mxu0 0
  %580 = vmatpush.bf16.msra.mxu0 0
  %581 = vmatpush.bf16.msra.mxu0 0
  %582 = vmatpush.bf16.msra.mxu0 0
  %583 = vmatpush.bf16.msra.mxu0 %v301
  %584 = vmatmul.bf16.gmra.mxu0 %v420
  %v585 = vpop.f32.mrf.mxu0
  %v586 = vadd.f32 %v86, %v585
  %v587 = vpop.f32.mrf.mxu0
  %v588 = vadd.f32 %v91, %v587
  %589 = vdwg.mxu0
  %590 = vmatpush.bf16.msra.mxu0 0
  %591 = vmatpush.bf16.msra.mxu0 0
  %592 = vmatpush.bf16.msra.mxu0 0
  %593 = vmatpush.bf16.msra.mxu0 0
  %594 = vmatpush.bf16.msra.mxu0 0
  %595 = vmatpush.bf16.msra.mxu0 0
  %596 = vmatpush.bf16.msra.mxu0 0
  %597 = vmatpush.bf16.msra.mxu0 %v302
  %598 = vmatmul.bf16.gmra.mxu0 %v420
  %v599 = vpop.f32.mrf.mxu0
  %v600 = vadd.f32 %v86, %v599
  %v601 = vpop.f32.mrf.mxu0
  %v602 = vadd.f32 %v91, %v601
  %603 = vdwg.mxu0
  %604 = vmatpush.bf16.msra.mxu0 0
  %605 = vmatpush.bf16.msra.mxu0 0
  %606 = vmatpush.bf16.msra.mxu0 0
  %607 = vmatpush.bf16.msra.mxu0 0
  %608 = vmatpush.bf16.msra.mxu0 0
  %609 = vmatpush.bf16.msra.mxu0 0
  %610 = vmatpush.bf16.msra.mxu0 0
  %611 = vmatpush.bf16.msra.mxu0 %v303
  %612 = vmatmul.bf16.gmra.mxu0 %v420
  %v613 = vpop.f32.mrf.mxu0
  %v614 = vadd.f32 %v86, %v613
  %v615 = vpop.f32.mrf.mxu0
  %v616 = vadd.f32 %v91, %v615
  %617 = vdwg.mxu0
  %618 = vmatpush.bf16.msra.mxu0 0
  %619 = vmatpush.bf16.msra.mxu0 0
  %620 = vmatpush.bf16.msra.mxu0 0
  %621 = vmatpush.bf16.msra.mxu0 0
  %622 = vmatpush.bf16.msra.mxu0 0
  %623 = vmatpush.bf16.msra.mxu0 0
  %624 = vmatpush.bf16.msra.mxu0 0
  %625 = vmatpush.bf16.msra.mxu0 %v304
  %626 = vmatmul.bf16.gmra.mxu0 %v420
  %v627 = vpop.f32.mrf.mxu0
  %v628 = vadd.f32 %v86, %v627
  %v629 = vpop.f32.mrf.mxu0
  %v630 = vadd.f32 %v91, %v629
  %631 = vdwg.mxu0
  %632 = vmatpush.bf16.msra.mxu0 0
  %633 = vmatpush.bf16.msra.mxu0 0
  %634 = vmatpush.bf16.msra.mxu0 0
  %635 = vmatpush.bf16.msra.mxu0 0
  %636 = vmatpush.bf16.msra.mxu0 0
  %637 = vmatpush.bf16.msra.mxu0 0
  %638 = vmatpush.bf16.msra.mxu0 0
  %639 = vmatpush.bf16.msra.mxu0 %v305
  %640 = vmatmul.bf16.gmra.mxu0 %v420
  %v641 = vpop.f32.mrf.mxu0
  %v642 = vadd.f32 %v86, %v641
  %v643 = vpop.f32.mrf.mxu0
  %v644 = vadd.f32 %v91, %v643
  %645 = vdwg.mxu0
  %646 = vmatpush.bf16.msra.mxu0 0
  %647 = vmatpush.bf16.msra.mxu0 0
  %648 = vmatpush.bf16.msra.mxu0 0
  %649 = vmatpush.bf16.msra.mxu0 0
  %650 = vmatpush.bf16.msra.mxu0 0
  %651 = vmatpush.bf16.msra.mxu0 0
  %652 = vmatpush.bf16.msra.mxu0 0
  %653 = vmatpush.bf16.msra.mxu0 %v306
  %654 = vmatmul.bf16.gmra.mxu0 %v420
  %v655 = vpop.f32.mrf.mxu0
  %v656 = vadd.f32 %v86, %v655
  %v657 = vpop.f32.mrf.mxu0
  %v658 = vadd.f32 %v91, %v657
  %659 = vdwg.mxu0
  %660 = vmatpush.bf16.msra.mxu0 0
  %661 = vmatpush.bf16.msra.mxu0 0
  %662 = vmatpush.bf16.msra.mxu0 0
  %663 = vmatpush.bf16.msra.mxu0 0
  %664 = vmatpush.bf16.msra.mxu0 0
  %665 = vmatpush.bf16.msra.mxu0 0
  %666 = vmatpush.bf16.msra.mxu0 0
  %667 = vmatpush.bf16.msra.mxu0 %v307
  %668 = vmatmul.bf16.gmra.mxu0 %v420
  %v669 = vpop.f32.mrf.mxu0
  %v670 = vadd.f32 %v86, %v669
  %v671 = vpop.f32.mrf.mxu0
  %v672 = vadd.f32 %v91, %v671
  %673 = vdwg.mxu0
  %674 = vmatpush.bf16.msra.mxu0 0
  %675 = vmatpush.bf16.msra.mxu0 0
  %676 = vmatpush.bf16.msra.mxu0 0
  %677 = vmatpush.bf16.msra.mxu0 0
  %678 = vmatpush.bf16.msra.mxu0 0
  %679 = vmatpush.bf16.msra.mxu0 0
  %680 = vmatpush.bf16.msra.mxu0 0
  %681 = vmatpush.bf16.msra.mxu0 %v308
  %682 = vmatmul.bf16.gmra.mxu0 %v420
  %v683 = vpop.f32.mrf.mxu0
  %v684 = vadd.f32 %v86, %v683
  %v685 = vpop.f32.mrf.mxu0
  %v686 = vadd.f32 %v91, %v685
  %687 = vdwg.mxu0
  %688 = vmatpush.bf16.msra.mxu0 0
  %689 = vmatpush.bf16.msra.mxu0 0
  %690 = vmatpush.bf16.msra.mxu0 0
  %691 = vmatpush.bf16.msra.mxu0 0
  %692 = vmatpush.bf16.msra.mxu0 0
  %693 = vmatpush.bf16.msra.mxu0 0
  %694 = vmatpush.bf16.msra.mxu0 0
  %695 = vmatpush.bf16.msra.mxu0 %v309
  %696 = vmatmul.bf16.gmra.mxu0 %v420
  %v697 = vpop.f32.mrf.mxu0
  %v698 = vadd.f32 %v86, %v697
  %v699 = vpop.f32.mrf.mxu0
  %v700 = vadd.f32 %v91, %v699
  %701 = vdwg.mxu0
  %702 = vmatpush.bf16.msra.mxu0 0
  %703 = vmatpush.bf16.msra.mxu0 0
  %704 = vmatpush.bf16.msra.mxu0 0
  %705 = vmatpush.bf16.msra.mxu0 0
  %706 = vmatpush.bf16.msra.mxu0 0
  %707 = vmatpush.bf16.msra.mxu0 0
  %708 = vmatpush.bf16.msra.mxu0 0
  %709 = vmatpush.bf16.msra.mxu0 %v310
  %710 = vmatmul.bf16.gmra.mxu0 %v420
  %v711 = vpop.f32.mrf.mxu0
  %v712 = vadd.f32 %v86, %v711
  %v713 = vpop.f32.mrf.mxu0
  %v714 = vadd.f32 %v91, %v713
  %715 = vdwg.mxu0
  %716 = vmatpush.bf16.msra.mxu0 0
  %717 = vmatpush.bf16.msra.mxu0 0
  %718 = vmatpush.bf16.msra.mxu0 0
  %719 = vmatpush.bf16.msra.mxu0 0
  %720 = vmatpush.bf16.msra.mxu0 0
  %721 = vmatpush.bf16.msra.mxu0 0
  %722 = vmatpush.bf16.msra.mxu0 0
  %723 = vmatpush.bf16.msra.mxu0 %v311
  %724 = vmatmul.bf16.gmra.mxu0 %v420
  %v725 = vpop.f32.mrf.mxu0
  %v726 = vadd.f32 %v86, %v725
  %v727 = vpop.f32.mrf.mxu0
  %v728 = vadd.f32 %v91, %v727
  %729 = vdwg.mxu0
  %730 = vmatpush.bf16.msra.mxu0 0
  %731 = vmatpush.bf16.msra.mxu0 0
  %732 = vmatpush.bf16.msra.mxu0 0
  %733 = vmatpush.bf16.msra.mxu0 0
  %734 = vmatpush.bf16.msra.mxu0 0
  %735 = vmatpush.bf16.msra.mxu0 0
  %736 = vmatpush.bf16.msra.mxu0 0
  %737 = vmatpush.bf16.msra.mxu0 %v312
  %738 = vmatmul.bf16.gmra.mxu0 %v420
  %v739 = vpop.f32.mrf.mxu0
  %v740 = vadd.f32 %v86, %v739
  %v741 = vpop.f32.mrf.mxu0
  %v742 = vadd.f32 %v91, %v741
  %743 = vdwg.mxu0
  %744 = vmatpush.bf16.msra.mxu0 0
  %745 = vmatpush.bf16.msra.mxu0 0
  %746 = vmatpush.bf16.msra.mxu0 0
  %747 = vmatpush.bf16.msra.mxu0 0
  %748 = vmatpush.bf16.msra.mxu0 0
  %749 = vmatpush.bf16.msra.mxu0 0
  %750 = vmatpush.bf16.msra.mxu0 0
  %751 = vmatpush.bf16.msra.mxu0 %v313
  %752 = vmatmul.bf16.gmra.mxu0 %v420
  %v753 = vpop.f32.mrf.mxu0
  %v754 = vadd.f32 %v86, %v753
  %v755 = vpop.f32.mrf.mxu0
  %v756 = vadd.f32 %v91, %v755
  %757 = vdwg.mxu0
  %758 = vmatpush.bf16.msra.mxu0 0
  %759 = vmatpush.bf16.msra.mxu0 0
  %760 = vmatpush.bf16.msra.mxu0 0
  %761 = vmatpush.bf16.msra.mxu0 0
  %762 = vmatpush.bf16.msra.mxu0 0
  %763 = vmatpush.bf16.msra.mxu0 0
  %764 = vmatpush.bf16.msra.mxu0 0
  %765 = vmatpush.bf16.msra.mxu0 %v314
  %766 = vmatmul.bf16.gmra.mxu0 %v420
  %v767 = vpop.f32.mrf.mxu0
  %v768 = vadd.f32 %v86, %v767
  %v769 = vpop.f32.mrf.mxu0
  %v770 = vadd.f32 %v91, %v769
  %771 = vdwg.mxu0
  %772 = vmatpush.bf16.msra.mxu0 0
  %773 = vmatpush.bf16.msra.mxu0 0
  %774 = vmatpush.bf16.msra.mxu0 0
  %775 = vmatpush.bf16.msra.mxu0 0
  %776 = vmatpush.bf16.msra.mxu0 0
  %777 = vmatpush.bf16.msra.mxu0 0
  %778 = vmatpush.bf16.msra.mxu0 0
  %779 = vmatpush.bf16.msra.mxu0 %v315
  %780 = vmatmul.bf16.gmra.mxu0 %v420
  %v781 = vpop.f32.mrf.mxu0
  %v782 = vadd.f32 %v86, %v781
  %v783 = vpop.f32.mrf.mxu0
  %v784 = vadd.f32 %v91, %v783
  %785 = vdwg.mxu0
  %786 = vmatpush.bf16.msra.mxu0 0
  %787 = vmatpush.bf16.msra.mxu0 0
  %788 = vmatpush.bf16.msra.mxu0 0
  %789 = vmatpush.bf16.msra.mxu0 0
  %790 = vmatpush.bf16.msra.mxu0 0
  %791 = vmatpush.bf16.msra.mxu0 0
  %792 = vmatpush.bf16.msra.mxu0 0
  %793 = vmatpush.bf16.msra.mxu0 %v316
  %794 = vmatmul.bf16.gmra.mxu0 %v420
  %v795 = vpop.f32.mrf.mxu0
  %v796 = vadd.f32 %v86, %v795
  %v797 = vpop.f32.mrf.mxu0
  %v798 = vadd.f32 %v91, %v797
  %799 = vdwg.mxu0
  %800 = vmatpush.bf16.msra.mxu0 0
  %801 = vmatpush.bf16.msra.mxu0 0
  %802 = vmatpush.bf16.msra.mxu0 0
  %803 = vmatpush.bf16.msra.mxu0 0
  %804 = vmatpush.bf16.msra.mxu0 0
  %805 = vmatpush.bf16.msra.mxu0 0
  %806 = vmatpush.bf16.msra.mxu0 0
  %807 = vmatpush.bf16.msra.mxu0 %v317
  %808 = vmatmul.bf16.gmra.mxu0 %v420
  %v809 = vpop.f32.mrf.mxu0
  %v810 = vadd.f32 %v86, %v809
  %v811 = vpop.f32.mrf.mxu0
  %v812 = vadd.f32 %v91, %v811
  %813 = vdwg.mxu0
  %814 = vmatpush.bf16.msra.mxu0 0
  %815 = vmatpush.bf16.msra.mxu0 0
  %816 = vmatpush.bf16.msra.mxu0 0
  %817 = vmatpush.bf16.msra.mxu0 0
  %818 = vmatpush.bf16.msra.mxu0 0
  %819 = vmatpush.bf16.msra.mxu0 0
  %820 = vmatpush.bf16.msra.mxu0 0
  %821 = vmatpush.bf16.msra.mxu0 %v318
  %822 = vmatmul.bf16.gmra.mxu0 %v420
  %v823 = vpop.f32.mrf.mxu0
  %v824 = vadd.f32 %v86, %v823
  %v825 = vpop.f32.mrf.mxu0
  %v826 = vadd.f32 %v91, %v825
  %827 = vdwg.mxu0
  %828 = vmatpush.bf16.msra.mxu0 0
  %829 = vmatpush.bf16.msra.mxu0 0
  %830 = vmatpush.bf16.msra.mxu0 0
  %831 = vmatpush.bf16.msra.mxu0 0
  %832 = vmatpush.bf16.msra.mxu0 0
  %833 = vmatpush.bf16.msra.mxu0 0
  %834 = vmatpush.bf16.msra.mxu0 0
  %835 = vmatpush.bf16.msra.mxu0 %v319
  %836 = vmatmul.bf16.gmra.mxu0 %v420
  %v837 = vpop.f32.mrf.mxu0
  %v838 = vadd.f32 %v86, %v837
  %v839 = vpop.f32.mrf.mxu0
  %v840 = vadd.f32 %v91, %v839
  %841 = vdwg.mxu0
  %842 = vmatpush.bf16.msra.mxu0 0
  %843 = vmatpush.bf16.msra.mxu0 0
  %844 = vmatpush.bf16.msra.mxu0 0
  %845 = vmatpush.bf16.msra.mxu0 0
  %846 = vmatpush.bf16.msra.mxu0 0
  %847 = vmatpush.bf16.msra.mxu0 0
  %848 = vmatpush.bf16.msra.mxu0 0
  %849 = vmatpush.bf16.msra.mxu0 %v320
  %850 = vmatmul.bf16.gmra.mxu0 %v420
  %v851 = vpop.f32.mrf.mxu0
  %v852 = vadd.f32 %v86, %v851
  %v853 = vpop.f32.mrf.mxu0
  %v854 = vadd.f32 %v91, %v853
  %855 = vdwg.mxu0
  %856 = vmatpush.bf16.msra.mxu0 0
  %857 = vmatpush.bf16.msra.mxu0 0
  %858 = vmatpush.bf16.msra.mxu0 0
  %859 = vmatpush.bf16.msra.mxu0 0
  %860 = vmatpush.bf16.msra.mxu0 0
  %861 = vmatpush.bf16.msra.mxu0 0
  %862 = vmatpush.bf16.msra.mxu0 0
  %863 = vmatpush.bf16.msra.mxu0 %v321
  %864 = vmatmul.bf16.gmra.mxu0 %v420
  %v865 = vpop.f32.mrf.mxu0
  %v866 = vadd.f32 %v86, %v865
  %v867 = vpop.f32.mrf.mxu0
  %v868 = vadd.f32 %v91, %v867
  %869 = vdwg.mxu0
  %870 = vmatpush.bf16.msra.mxu0 0
  %871 = vmatpush.bf16.msra.mxu0 0
  %872 = vmatpush.bf16.msra.mxu0 0
  %873 = vmatpush.bf16.msra.mxu0 0
  %874 = vmatpush.bf16.msra.mxu0 0
  %875 = vmatpush.bf16.msra.mxu0 0
  %876 = vmatpush.bf16.msra.mxu0 0
  %877 = vmatpush.bf16.msra.mxu0 %v322
  %878 = vmatmul.bf16.gmra.mxu0 %v420
  %v879 = vpop.f32.mrf.mxu0
  %v880 = vadd.f32 %v86, %v879
  %v881 = vpop.f32.mrf.mxu0
  %v882 = vadd.f32 %v91, %v881
  %883 = vdwg.mxu0
  %884 = vmatpush.bf16.msra.mxu0 0
  %885 = vmatpush.bf16.msra.mxu0 0
  %886 = vmatpush.bf16.msra.mxu0 0
  %887 = vmatpush.bf16.msra.mxu0 0
  %888 = vmatpush.bf16.msra.mxu0 0
  %889 = vmatpush.bf16.msra.mxu0 0
  %890 = vmatpush.bf16.msra.mxu0 0
  %891 = vmatpush.bf16.msra.mxu0 %v323
  %892 = vmatmul.bf16.gmra.mxu0 %v420
  %v893 = vpop.f32.mrf.mxu0
  %v894 = vadd.f32 %v86, %v893
  %v895 = vpop.f32.mrf.mxu0
  %v896 = vadd.f32 %v91, %v895
  %897 = vdwg.mxu0
  %898 = vmatpush.bf16.msra.mxu0 0
  %899 = vmatpush.bf16.msra.mxu0 0
  %900 = vmatpush.bf16.msra.mxu0 0
  %901 = vmatpush.bf16.msra.mxu0 0
  %902 = vmatpush.bf16.msra.mxu0 0
  %903 = vmatpush.bf16.msra.mxu0 0
  %904 = vmatpush.bf16.msra.mxu0 0
  %905 = vmatpush.bf16.msra.mxu0 %v324
  %906 = vmatmul.bf16.gmra.mxu0 %v420
  %v907 = vpop.f32.mrf.mxu0
  %v908 = vadd.f32 %v86, %v907
  %v909 = vpop.f32.mrf.mxu0
  %v910 = vadd.f32 %v91, %v909
  %911 = vdwg.mxu0
  %912 = vmatpush.bf16.msra.mxu0 0
  %913 = vmatpush.bf16.msra.mxu0 0
  %914 = vmatpush.bf16.msra.mxu0 0
  %915 = vmatpush.bf16.msra.mxu0 0
  %916 = vmatpush.bf16.msra.mxu0 0
  %917 = vmatpush.bf16.msra.mxu0 0
  %918 = vmatpush.bf16.msra.mxu0 0
  %919 = vmatpush.bf16.msra.mxu0 %v325
  %920 = vmatmul.bf16.gmra.mxu0 %v420
  %v921 = vpop.f32.mrf.mxu0
  %v922 = vadd.f32 %v86, %v921
  %v923 = vpop.f32.mrf.mxu0
  %v924 = vadd.f32 %v91, %v923
  %925 = vdwg.mxu0
  %926 = vmatpush.bf16.msra.mxu0 0
  %927 = vmatpush.bf16.msra.mxu0 0
  %928 = vmatpush.bf16.msra.mxu0 0
  %929 = vmatpush.bf16.msra.mxu0 0
  %930 = vmatpush.bf16.msra.mxu0 0
  %931 = vmatpush.bf16.msra.mxu0 0
  %932 = vmatpush.bf16.msra.mxu0 0
  %933 = vmatpush.bf16.msra.mxu0 %v326
  %934 = vmatmul.bf16.gmra.mxu0 %v420
  %v935 = vpop.f32.mrf.mxu0
  %v936 = vadd.f32 %v86, %v935
  %v937 = vpop.f32.mrf.mxu0
  %v938 = vadd.f32 %v91, %v937
  %939 = vdwg.mxu0
  %940 = vmatpush.bf16.msra.mxu0 0
  %941 = vmatpush.bf16.msra.mxu0 0
  %942 = vmatpush.bf16.msra.mxu0 0
  %943 = vmatpush.bf16.msra.mxu0 0
  %944 = vmatpush.bf16.msra.mxu0 0
  %945 = vmatpush.bf16.msra.mxu0 0
  %946 = vmatpush.bf16.msra.mxu0 0
  %947 = vmatpush.bf16.msra.mxu0 %v327
  %948 = vmatmul.bf16.gmra.mxu0 %v420
  %v949 = vpop.f32.mrf.mxu0
  %v950 = vadd.f32 %v86, %v949
  %v951 = vpop.f32.mrf.mxu0
  %v952 = vadd.f32 %v91, %v951
  %953 = vdwg.mxu0
  %954 = vmatpush.bf16.msra.mxu0 0
  %955 = vmatpush.bf16.msra.mxu0 0
  %956 = vmatpush.bf16.msra.mxu0 0
  %957 = vmatpush.bf16.msra.mxu0 0
  %958 = vmatpush.bf16.msra.mxu0 0
  %959 = vmatpush.bf16.msra.mxu0 0
  %960 = vmatpush.bf16.msra.mxu0 0
  %961 = vmatpush.bf16.msra.mxu0 %v328
  %962 = vmatmul.bf16.gmra.mxu0 %v420
  %v963 = vpop.f32.mrf.mxu0
  %v964 = vadd.f32 %v86, %v963
  %v965 = vpop.f32.mrf.mxu0
  %v966 = vadd.f32 %v91, %v965
  %967 = vdwg.mxu0
  %968 = vmatpush.bf16.msra.mxu0 0
  %969 = vmatpush.bf16.msra.mxu0 0
  %970 = vmatpush.bf16.msra.mxu0 0
  %971 = vmatpush.bf16.msra.mxu0 0
  %972 = vmatpush.bf16.msra.mxu0 0
  %973 = vmatpush.bf16.msra.mxu0 0
  %974 = vmatpush.bf16.msra.mxu0 0
  %975 = vmatpush.bf16.msra.mxu0 %v329
  %976 = vmatmul.bf16.gmra.mxu0 %v420
  %v977 = vpop.f32.mrf.mxu0
  %v978 = vadd.f32 %v86, %v977
  %v979 = vpop.f32.mrf.mxu0
  %v980 = vadd.f32 %v91, %v979
  %981 = vdwg.mxu0
  %982 = vmatpush.bf16.msra.mxu0 0
  %983 = vmatpush.bf16.msra.mxu0 0
  %984 = vmatpush.bf16.msra.mxu0 0
  %985 = vmatpush.bf16.msra.mxu0 0
  %986 = vmatpush.bf16.msra.mxu0 0
  %987 = vmatpush.bf16.msra.mxu0 0
  %988 = vmatpush.bf16.msra.mxu0 0
  %989 = vmatpush.bf16.msra.mxu0 %v330
  %990 = vmatmul.bf16.gmra.mxu0 %v420
  %v991 = vpop.f32.mrf.mxu0
  %v992 = vadd.f32 %v86, %v991
  %v993 = vpop.f32.mrf.mxu0
  %v994 = vadd.f32 %v91, %v993
  %995 = vdwg.mxu0
  %996 = vmatpush.bf16.msra.mxu0 0
  %997 = vmatpush.bf16.msra.mxu0 0
  %998 = vmatpush.bf16.msra.mxu0 0
  %999 = vmatpush.bf16.msra.mxu0 0
  %1000 = vmatpush.bf16.msra.mxu0 0
  %1001 = vmatpush.bf16.msra.mxu0 0
  %1002 = vmatpush.bf16.msra.mxu0 0
  %1003 = vmatpush.bf16.msra.mxu0 %v331
  %1004 = vmatmul.bf16.gmra.mxu0 %v420
  %v1005 = vpop.f32.mrf.mxu0
  %v1006 = vadd.f32 %v86, %v1005
  %v1007 = vpop.f32.mrf.mxu0
  %v1008 = vadd.f32 %v91, %v1007
  %1009 = vdwg.mxu0
  %1010 = vmatpush.bf16.msra.mxu0 0
  %1011 = vmatpush.bf16.msra.mxu0 0
  %1012 = vmatpush.bf16.msra.mxu0 0
  %1013 = vmatpush.bf16.msra.mxu0 0
  %1014 = vmatpush.bf16.msra.mxu0 0
  %1015 = vmatpush.bf16.msra.mxu0 0
  %1016 = vmatpush.bf16.msra.mxu0 0
  %1017 = vmatpush.bf16.msra.mxu0 %v332
  %1018 = vmatmul.bf16.gmra.mxu0 %v420
  %v1019 = vpop.f32.mrf.mxu0
  %v1020 = vadd.f32 %v86, %v1019
  %v1021 = vpop.f32.mrf.mxu0
  %v1022 = vadd.f32 %v91, %v1021
  %1023 = vdwg.mxu0
  %1024 = vmatpush.bf16.msra.mxu0 0
  %1025 = vmatpush.bf16.msra.mxu0 0
  %1026 = vmatpush.bf16.msra.mxu0 0
  %1027 = vmatpush.bf16.msra.mxu0 0
  %1028 = vmatpush.bf16.msra.mxu0 0
  %1029 = vmatpush.bf16.msra.mxu0 0
  %1030 = vmatpush.bf16.msra.mxu0 0
  %1031 = vmatpush.bf16.msra.mxu0 %v333
  %1032 = vmatmul.bf16.gmra.mxu0 %v420
  %v1033 = vpop.f32.mrf.mxu0
  %v1034 = vadd.f32 %v86, %v1033
  %v1035 = vpop.f32.mrf.mxu0
  %v1036 = vadd.f32 %v91, %v1035
  %1037 = vdwg.mxu0
  %1038 = vmatpush.bf16.msra.mxu0 0
  %1039 = vmatpush.bf16.msra.mxu0 0
  %1040 = vmatpush.bf16.msra.mxu0 0
  %1041 = vmatpush.bf16.msra.mxu0 0
  %1042 = vmatpush.bf16.msra.mxu0 0
  %1043 = vmatpush.bf16.msra.mxu0 0
  %1044 = vmatpush.bf16.msra.mxu0 0
  %1045 = vmatpush.bf16.msra.mxu0 %v334
  %1046 = vmatmul.bf16.gmra.mxu0 %v420
  %v1047 = vpop.f32.mrf.mxu0
  %v1048 = vadd.f32 %v86, %v1047
  %v1049 = vpop.f32.mrf.mxu0
  %v1050 = vadd.f32 %v91, %v1049
  %1051 = vdwg.mxu0
  %1052 = vmatpush.bf16.msra.mxu0 0
  %1053 = vmatpush.bf16.msra.mxu0 0
  %1054 = vmatpush.bf16.msra.mxu0 0
  %1055 = vmatpush.bf16.msra.mxu0 0
  %1056 = vmatpush.bf16.msra.mxu0 0
  %1057 = vmatpush.bf16.msra.mxu0 0
  %1058 = vmatpush.bf16.msra.mxu0 0
  %1059 = vmatpush.bf16.msra.mxu0 %v335
  %1060 = vmatmul.bf16.gmra.mxu0 %v420
  %v1061 = vpop.f32.mrf.mxu0
  %v1062 = vadd.f32 %v86, %v1061
  %v1063 = vpop.f32.mrf.mxu0
  %v1064 = vadd.f32 %v91, %v1063
  %1065 = vdwg.mxu0
  %1066 = vmatpush.bf16.msra.mxu0 0
  %1067 = vmatpush.bf16.msra.mxu0 0
  %1068 = vmatpush.bf16.msra.mxu0 0
  %1069 = vmatpush.bf16.msra.mxu0 0
  %1070 = vmatpush.bf16.msra.mxu0 0
  %1071 = vmatpush.bf16.msra.mxu0 0
  %1072 = vmatpush.bf16.msra.mxu0 0
  %1073 = vmatpush.bf16.msra.mxu0 %v336
  %1074 = vmatmul.bf16.gmra.mxu0 %v420
  %v1075 = vpop.f32.mrf.mxu0
  %v1076 = vadd.f32 %v86, %v1075
  %v1077 = vpop.f32.mrf.mxu0
  %v1078 = vadd.f32 %v91, %v1077
  %1079 = vdwg.mxu0
  %1080 = vmatpush.bf16.msra.mxu0 0
  %1081 = vmatpush.bf16.msra.mxu0 0
  %1082 = vmatpush.bf16.msra.mxu0 0
  %1083 = vmatpush.bf16.msra.mxu0 0
  %1084 = vmatpush.bf16.msra.mxu0 0
  %1085 = vmatpush.bf16.msra.mxu0 0
  %1086 = vmatpush.bf16.msra.mxu0 0
  %1087 = vmatpush.bf16.msra.mxu0 %v337
  %1088 = vmatmul.bf16.gmra.mxu0 %v420
  %v1089 = vpop.f32.mrf.mxu0
  %v1090 = vadd.f32 %v86, %v1089
  %v1091 = vpop.f32.mrf.mxu0
  %v1092 = vadd.f32 %v91, %v1091
  %1093 = vdwg.mxu0
  %1094 = vmatpush.bf16.msra.mxu0 0
  %1095 = vmatpush.bf16.msra.mxu0 0
  %1096 = vmatpush.bf16.msra.mxu0 0
  %1097 = vmatpush.bf16.msra.mxu0 0
  %1098 = vmatpush.bf16.msra.mxu0 0
  %1099 = vmatpush.bf16.msra.mxu0 0
  %1100 = vmatpush.bf16.msra.mxu0 0
  %1101 = vmatpush.bf16.msra.mxu0 %v338
  %1102 = vmatmul.bf16.gmra.mxu0 %v420
  %v1103 = vpop.f32.mrf.mxu0
  %v1104 = vadd.f32 %v86, %v1103
  %v1105 = vpop.f32.mrf.mxu0
  %v1106 = vadd.f32 %v91, %v1105
  %1107 = vdwg.mxu0
  %1108 = vmatpush.bf16.msra.mxu0 0
  %1109 = vmatpush.bf16.msra.mxu0 0
  %1110 = vmatpush.bf16.msra.mxu0 0
  %1111 = vmatpush.bf16.msra.mxu0 0
  %1112 = vmatpush.bf16.msra.mxu0 0
  %1113 = vmatpush.bf16.msra.mxu0 0
  %1114 = vmatpush.bf16.msra.mxu0 0
  %1115 = vmatpush.bf16.msra.mxu0 %v339
  %1116 = vmatmul.bf16.gmra.mxu0 %v420
  %v1117 = vpop.f32.mrf.mxu0
  %v1118 = vadd.f32 %v86, %v1117
  %v1119 = vpop.f32.mrf.mxu0
  %v1120 = vadd.f32 %v91, %v1119
  %1121 = vdwg.mxu0
  %1122 = vmatpush.bf16.msra.mxu0 0
  %1123 = vmatpush.bf16.msra.mxu0 0
  %1124 = vmatpush.bf16.msra.mxu0 0
  %1125 = vmatpush.bf16.msra.mxu0 0
  %1126 = vmatpush.bf16.msra.mxu0 0
  %1127 = vmatpush.bf16.msra.mxu0 0
  %1128 = vmatpush.bf16.msra.mxu0 0
  %1129 = vmatpush.bf16.msra.mxu0 %v340
  %1130 = vmatmul.bf16.gmra.mxu0 %v420
  %v1131 = vpop.f32.mrf.mxu0
  %v1132 = vadd.f32 %v86, %v1131
  %v1133 = vpop.f32.mrf.mxu0
  %v1134 = vadd.f32 %v91, %v1133
  %1135 = vdwg.mxu0
  %1136 = vmatpush.bf16.msra.mxu0 0
  %1137 = vmatpush.bf16.msra.mxu0 0
  %1138 = vmatpush.bf16.msra.mxu0 0
  %1139 = vmatpush.bf16.msra.mxu0 0
  %1140 = vmatpush.bf16.msra.mxu0 0
  %1141 = vmatpush.bf16.msra.mxu0 0
  %1142 = vmatpush.bf16.msra.mxu0 0
  %1143 = vmatpush.bf16.msra.mxu0 %v341
  %1144 = vmatmul.bf16.gmra.mxu0 %v420
  %v1145 = vpop.f32.mrf.mxu0
  %v1146 = vadd.f32 %v86, %v1145
  %v1147 = vpop.f32.mrf.mxu0
  %v1148 = vadd.f32 %v91, %v1147
  %1149 = vdwg.mxu0
  %1150 = vmatpush.bf16.msra.mxu0 0
  %1151 = vmatpush.bf16.msra.mxu0 0
  %1152 = vmatpush.bf16.msra.mxu0 0
  %1153 = vmatpush.bf16.msra.mxu0 0
  %1154 = vmatpush.bf16.msra.mxu0 0
  %1155 = vmatpush.bf16.msra.mxu0 0
  %1156 = vmatpush.bf16.msra.mxu0 0
  %1157 = vmatpush.bf16.msra.mxu0 %v342
  %1158 = vmatmul.bf16.gmra.mxu0 %v420
  %v1159 = vpop.f32.mrf.mxu0
  %v1160 = vadd.f32 %v86, %v1159
  %v1161 = vpop.f32.mrf.mxu0
  %v1162 = vadd.f32 %v91, %v1161
  %1163 = vdwg.mxu0
  %1164 = vmatpush.bf16.msra.mxu0 0
  %1165 = vmatpush.bf16.msra.mxu0 0
  %1166 = vmatpush.bf16.msra.mxu0 0
  %1167 = vmatpush.bf16.msra.mxu0 0
  %1168 = vmatpush.bf16.msra.mxu0 0
  %1169 = vmatpush.bf16.msra.mxu0 0
  %1170 = vmatpush.bf16.msra.mxu0 0
  %1171 = vmatpush.bf16.msra.mxu0 %v343
  %1172 = vmatmul.bf16.gmra.mxu0 %v420
  %v1173 = vpop.f32.mrf.mxu0
  %v1174 = vadd.f32 %v86, %v1173
  %v1175 = vpop.f32.mrf.mxu0
  %v1176 = vadd.f32 %v91, %v1175
  %1177 = vdwg.mxu0
  %1178 = vmatpush.bf16.msra.mxu0 0
  %1179 = vmatpush.bf16.msra.mxu0 0
  %1180 = vmatpush.bf16.msra.mxu0 0
  %1181 = vmatpush.bf16.msra.mxu0 0
  %1182 = vmatpush.bf16.msra.mxu0 0
  %1183 = vmatpush.bf16.msra.mxu0 0
  %1184 = vmatpush.bf16.msra.mxu0 0
  %1185 = vmatpush.bf16.msra.mxu0 %v344
  %1186 = vmatmul.bf16.gmra.mxu0 %v420
  %v1187 = vpop.f32.mrf.mxu0
  %v1188 = vadd.f32 %v86, %v1187
  %v1189 = vpop.f32.mrf.mxu0
  %v1190 = vadd.f32 %v91, %v1189
  %1191 = vdwg.mxu0
  %1192 = vmatpush.bf16.msra.mxu0 0
  %1193 = vmatpush.bf16.msra.mxu0 0
  %1194 = vmatpush.bf16.msra.mxu0 0
  %1195 = vmatpush.bf16.msra.mxu0 0
  %1196 = vmatpush.bf16.msra.mxu0 0
  %1197 = vmatpush.bf16.msra.mxu0 0
  %1198 = vmatpush.bf16.msra.mxu0 0
  %1199 = vmatpush.bf16.msra.mxu0 %v345
  %1200 = vmatmul.bf16.gmra.mxu0 %v420
  %v1201 = vpop.f32.mrf.mxu0
  %v1202 = vadd.f32 %v86, %v1201
  %v1203 = vpop.f32.mrf.mxu0
  %v1204 = vadd.f32 %v91, %v1203
  %1205 = vdwg.mxu0
  %1206 = vmatpush.bf16.msra.mxu0 0
  %1207 = vmatpush.bf16.msra.mxu0 0
  %1208 = vmatpush.bf16.msra.mxu0 0
  %1209 = vmatpush.bf16.msra.mxu0 0
  %1210 = vmatpush.bf16.msra.mxu0 0
  %1211 = vmatpush.bf16.msra.mxu0 0
  %1212 = vmatpush.bf16.msra.mxu0 0
  %1213 = vmatpush.bf16.msra.mxu0 %v346
  %1214 = vmatmul.bf16.gmra.mxu0 %v420
  %v1215 = vpop.f32.mrf.mxu0
  %v1216 = vadd.f32 %v86, %v1215
  %v1217 = vpop.f32.mrf.mxu0
  %v1218 = vadd.f32 %v91, %v1217
  %1219 = vdwg.mxu0
  %1220 = vmatpush.bf16.msra.mxu0 0
  %1221 = vmatpush.bf16.msra.mxu0 0
  %1222 = vmatpush.bf16.msra.mxu0 0
  %1223 = vmatpush.bf16.msra.mxu0 0
  %1224 = vmatpush.bf16.msra.mxu0 0
  %1225 = vmatpush.bf16.msra.mxu0 0
  %1226 = vmatpush.bf16.msra.mxu0 0
  %1227 = vmatpush.bf16.msra.mxu0 %v347
  %1228 = vmatmul.bf16.gmra.mxu0 %v420
  %v1229 = vpop.f32.mrf.mxu0
  %v1230 = vadd.f32 %v86, %v1229
  %v1231 = vpop.f32.mrf.mxu0
  %v1232 = vadd.f32 %v91, %v1231
  %1233 = vdwg.mxu0
  %1234 = vmatpush.bf16.msra.mxu0 0
  %1235 = vmatpush.bf16.msra.mxu0 0
  %1236 = vmatpush.bf16.msra.mxu0 0
  %1237 = vmatpush.bf16.msra.mxu0 0
  %1238 = vmatpush.bf16.msra.mxu0 0
  %1239 = vmatpush.bf16.msra.mxu0 0
  %1240 = vmatpush.bf16.msra.mxu0 0
  %1241 = vmatpush.bf16.msra.mxu0 %v348
  %1242 = vmatmul.bf16.gmra.mxu0 %v420
  %v1243 = vpop.f32.mrf.mxu0
  %v1244 = vadd.f32 %v86, %v1243
  %v1245 = vpop.f32.mrf.mxu0
  %v1246 = vadd.f32 %v91, %v1245
  %1247 = vdwg.mxu0
  %1248 = vmatpush.bf16.msra.mxu0 0
  %1249 = vmatpush.bf16.msra.mxu0 0
  %1250 = vmatpush.bf16.msra.mxu0 0
  %1251 = vmatpush.bf16.msra.mxu0 0
  %1252 = vmatpush.bf16.msra.mxu0 0
  %1253 = vmatpush.bf16.msra.mxu0 0
  %1254 = vmatpush.bf16.msra.mxu0 0
  %1255 = vmatpush.bf16.msra.mxu0 %v349
  %1256 = vmatmul.bf16.gmra.mxu0 %v420
  %v1257 = vpop.f32.mrf.mxu0
  %v1258 = vadd.f32 %v86, %v1257
  %v1259 = vpop.f32.mrf.mxu0
  %v1260 = vadd.f32 %v91, %v1259
  %1261 = vdwg.mxu0
  %1262 = vmatpush.bf16.msra.mxu0 0
  %1263 = vmatpush.bf16.msra.mxu0 0
  %1264 = vmatpush.bf16.msra.mxu0 0
  %1265 = vmatpush.bf16.msra.mxu0 0
  %1266 = vmatpush.bf16.msra.mxu0 0
  %1267 = vmatpush.bf16.msra.mxu0 0
  %1268 = vmatpush.bf16.msra.mxu0 0
  %1269 = vmatpush.bf16.msra.mxu0 %v350
  %1270 = vmatmul.bf16.gmra.mxu0 %v420
  %v1271 = vpop.f32.mrf.mxu0
  %v1272 = vadd.f32 %v86, %v1271
  %v1273 = vpop.f32.mrf.mxu0
  %v1274 = vadd.f32 %v91, %v1273
  %1275 = vdwg.mxu0
  %1276 = vmatpush.bf16.msra.mxu0 0
  %1277 = vmatpush.bf16.msra.mxu0 0
  %1278 = vmatpush.bf16.msra.mxu0 0
  %1279 = vmatpush.bf16.msra.mxu0 0
  %1280 = vmatpush.bf16.msra.mxu0 0
  %1281 = vmatpush.bf16.msra.mxu0 0
  %1282 = vmatpush.bf16.msra.mxu0 0
  %1283 = vmatpush.bf16.msra.mxu0 %v351
  %1284 = vmatmul.bf16.gmra.mxu0 %v420
  %v1285 = vpop.f32.mrf.mxu0
  %v1286 = vadd.f32 %v86, %v1285
  %v1287 = vpop.f32.mrf.mxu0
  %v1288 = vadd.f32 %v91, %v1287
  %1289 = vdwg.mxu0
  %1290 = vmatpush.bf16.msra.mxu0 0
  %1291 = vmatpush.bf16.msra.mxu0 0
  %1292 = vmatpush.bf16.msra.mxu0 0
  %1293 = vmatpush.bf16.msra.mxu0 0
  %1294 = vmatpush.bf16.msra.mxu0 0
  %1295 = vmatpush.bf16.msra.mxu0 0
  %1296 = vmatpush.bf16.msra.mxu0 0
  %1297 = vmatpush.bf16.msra.mxu0 %v352
  %1298 = vmatmul.bf16.gmra.mxu0 %v420
  %v1299 = vpop.f32.mrf.mxu0
  %v1300 = vadd.f32 %v86, %v1299
  %v1301 = vpop.f32.mrf.mxu0
  %v1302 = vadd.f32 %v91, %v1301
  %1303 = vdwg.mxu0
  %1304 = vmatpush.bf16.msra.mxu0 0
  %1305 = vmatpush.bf16.msra.mxu0 0
  %1306 = vmatpush.bf16.msra.mxu0 0
  %1307 = vmatpush.bf16.msra.mxu0 0
  %1308 = vmatpush.bf16.msra.mxu0 0
  %1309 = vmatpush.bf16.msra.mxu0 0
  %1310 = vmatpush.bf16.msra.mxu0 0
  %1311 = vmatpush.bf16.msra.mxu0 %v353
  %1312 = vmatmul.bf16.gmra.mxu0 %v420
  %v1313 = vpop.f32.mrf.mxu0
  %v1314 = vadd.f32 %v86, %v1313
  %v1315 = vpop.f32.mrf.mxu0
  %v1316 = vadd.f32 %v91, %v1315
  %1317 = vdwg.mxu0
  %v1318 = vmax.f32 %v432, 0.0
  %v1319 = vmax.f32 %v446, 0.0
  %v1320 = vmax.f32 %v460, 0.0
  %v1321 = vmax.f32 %v474, 0.0
  %v1322 = vmax.f32 %v488, 0.0
  %v1323 = vmax.f32 %v502, 0.0
  %v1324 = vmax.f32 %v516, 0.0
  %v1325 = vmax.f32 %v530, 0.0
  %v1326 = vmax.f32 %v544, 0.0
  %v1327 = vmax.f32 %v558, 0.0
  %v1328 = vmax.f32 %v572, 0.0
  %v1329 = vmax.f32 %v586, 0.0
  %v1330 = vmax.f32 %v600, 0.0
  %v1331 = vmax.f32 %v614, 0.0
  %v1332 = vmax.f32 %v628, 0.0
  %v1333 = vmax.f32 %v642, 0.0
  %v1334 = vmax.f32 %v656, 0.0
  %v1335 = vmax.f32 %v670, 0.0
  %v1336 = vmax.f32 %v684, 0.0
  %v1337 = vmax.f32 %v698, 0.0
  %v1338 = vmax.f32 %v712, 0.0
  %v1339 = vmax.f32 %v726, 0.0
  %v1340 = vmax.f32 %v740, 0.0
  %v1341 = vmax.f32 %v754, 0.0
  %v1342 = vmax.f32 %v768, 0.0
  %v1343 = vmax.f32 %v782, 0.0
  %v1344 = vmax.f32 %v796, 0.0
  %v1345 = vmax.f32 %v810, 0.0
  %v1346 = vmax.f32 %v824, 0.0
  %v1347 = vmax.f32 %v838, 0.0
  %v1348 = vmax.f32 %v852, 0.0
  %v1349 = vmax.f32 %v866, 0.0
  %v1350 = vmax.f32 %v880, 0.0
  %v1351 = vmax.f32 %v894, 0.0
  %v1352 = vmax.f32 %v908, 0.0
  %v1353 = vmax.f32 %v922, 0.0
  %v1354 = vmax.f32 %v936, 0.0
  %v1355 = vmax.f32 %v950, 0.0
  %v1356 = vmax.f32 %v964, 0.0
  %v1357 = vmax.f32 %v978, 0.0
  %v1358 = vmax.f32 %v992, 0.0
  %v1359 = vmax.f32 %v1006, 0.0
  %v1360 = vmax.f32 %v1020, 0.0
  %v1361 = vmax.f32 %v1034, 0.0
  %v1362 = vmax.f32 %v1048, 0.0
  %v1363 = vmax.f32 %v1062, 0.0
  %v1364 = vmax.f32 %v1076, 0.0
  %v1365 = vmax.f32 %v1090, 0.0
  %v1366 = vmax.f32 %v1104, 0.0
  %v1367 = vmax.f32 %v1118, 0.0
  %v1368 = vmax.f32 %v1132, 0.0
  %v1369 = vmax.f32 %v1146, 0.0
  %v1370 = vmax.f32 %v1160, 0.0
  %v1371 = vmax.f32 %v1174, 0.0
  %v1372 = vmax.f32 %v1188, 0.0
  %v1373 = vmax.f32 %v1202, 0.0
  %v1374 = vmax.f32 %v1216, 0.0
  %v1375 = vmax.f32 %v1230, 0.0
  %v1376 = vmax.f32 %v1244, 0.0
  %v1377 = vmax.f32 %v1258, 0.0
  %v1378 = vmax.f32 %v1272, 0.0
  %v1379 = vmax.f32 %v1286, 0.0
  %v1380 = vmax.f32 %v1300, 0.0
  %v1381 = vmax.f32 %v1314, 0.0
  %v1382 = vmax.f32 %v434, 0.0
  %v1383 = vmax.f32 %v448, 0.0
  %v1384 = vmax.f32 %v462, 0.0
  %v1385 = vmax.f32 %v476, 0.0
  %v1386 = vmax.f32 %v490, 0.0
  %v1387 = vmax.f32 %v504, 0.0
  %v1388 = vmax.f32 %v518, 0.0
  %v1389 = vmax.f32 %v532, 0.0
  %v1390 = vmax.f32 %v546, 0.0
  %v1391 = vmax.f32 %v560, 0.0
  %v1392 = vmax.f32 %v574, 0.0
  %v1393 = vmax.f32 %v588, 0.0
  %v1394 = vmax.f32 %v602, 0.0
  %v1395 = vmax.f32 %v616, 0.0
  %v1396 = vmax.f32 %v630, 0.0
  %v1397 = vmax.f32 %v644, 0.0
  %v1398 = vmax.f32 %v658, 0.0
  %v1399 = vmax.f32 %v672, 0.0
  %v1400 = vmax.f32 %v686, 0.0
  %v1401 = vmax.f32 %v700, 0.0
  %v1402 = vmax.f32 %v714, 0.0
  %v1403 = vmax.f32 %v728, 0.0
  %v1404 = vmax.f32 %v742, 0.0
  %v1405 = vmax.f32 %v756, 0.0
  %v1406 = vmax.f32 %v770, 0.0
  %v1407 = vmax.f32 %v784, 0.0
  %v1408 = vmax.f32 %v798, 0.0
  %v1409 = vmax.f32 %v812, 0.0
  %v1410 = vmax.f32 %v826, 0.0
  %v1411 = vmax.f32 %v840, 0.0
  %v1412 = vmax.f32 %v854, 0.0
  %v1413 = vmax.f32 %v868, 0.0
  %v1414 = vmax.f32 %v882, 0.0
  %v1415 = vmax.f32 %v896, 0.0
  %v1416 = vmax.f32 %v910, 0.0
  %v1417 = vmax.f32 %v924, 0.0
  %v1418 = vmax.f32 %v938, 0.0
  %v1419 = vmax.f32 %v952, 0.0
  %v1420 = vmax.f32 %v966, 0.0
  %v1421 = vmax.f32 %v980, 0.0
  %v1422 = vmax.f32 %v994, 0.0
  %v1423 = vmax.f32 %v1008, 0.0
  %v1424 = vmax.f32 %v1022, 0.0
  %v1425 = vmax.f32 %v1036, 0.0
  %v1426 = vmax.f32 %v1050, 0.0
  %v1427 = vmax.f32 %v1064, 0.0
  %v1428 = vmax.f32 %v1078, 0.0
  %v1429 = vmax.f32 %v1092, 0.0
  %v1430 = vmax.f32 %v1106, 0.0
  %v1431 = vmax.f32 %v1120, 0.0
  %v1432 = vmax.f32 %v1134, 0.0
  %v1433 = vmax.f32 %v1148, 0.0
  %v1434 = vmax.f32 %v1162, 0.0
  %v1435 = vmax.f32 %v1176, 0.0
  %v1436 = vmax.f32 %v1190, 0.0
  %v1437 = vmax.f32 %v1204, 0.0
  %v1438 = vmax.f32 %v1218, 0.0
  %v1439 = vmax.f32 %v1232, 0.0
  %v1440 = vmax.f32 %v1246, 0.0
  %v1441 = vmax.f32 %v1260, 0.0
  %v1442 = vmax.f32 %v1274, 0.0
  %v1443 = vmax.f32 %v1288, 0.0
  %v1444 = vmax.f32 %v1302, 0.0
  %v1445 = vmax.f32 %v1316, 0.0
  %v1446 = vmax.f32 %v1318, %v1334
  %v1447 = vmax.f32 %v1319, %v1335
  %v1448 = vmax.f32 %v1320, %v1336
  %v1449 = vmax.f32 %v1321, %v1337
  %v1450 = vmax.f32 %v1322, %v1338
  %v1451 = vmax.f32 %v1323, %v1339
  %v1452 = vmax.f32 %v1324, %v1340
  %v1453 = vmax.f32 %v1325, %v1341
  %v1454 = vmax.f32 %v1326, %v1342
  %v1455 = vmax.f32 %v1327, %v1343
  %v1456 = vmax.f32 %v1328, %v1344
  %v1457 = vmax.f32 %v1329, %v1345
  %v1458 = vmax.f32 %v1330, %v1346
  %v1459 = vmax.f32 %v1331, %v1347
  %v1460 = vmax.f32 %v1332, %v1348
  %v1461 = vmax.f32 %v1333, %v1349
  %v1462 = vmax.f32 %v1382, %v1398
  %v1463 = vmax.f32 %v1383, %v1399
  %v1464 = vmax.f32 %v1384, %v1400
  %v1465 = vmax.f32 %v1385, %v1401
  %v1466 = vmax.f32 %v1386, %v1402
  %v1467 = vmax.f32 %v1387, %v1403
  %v1468 = vmax.f32 %v1388, %v1404
  %v1469 = vmax.f32 %v1389, %v1405
  %v1470 = vmax.f32 %v1390, %v1406
  %v1471 = vmax.f32 %v1391, %v1407
  %v1472 = vmax.f32 %v1392, %v1408
  %v1473 = vmax.f32 %v1393, %v1409
  %v1474 = vmax.f32 %v1394, %v1410
  %v1475 = vmax.f32 %v1395, %v1411
  %v1476 = vmax.f32 %v1396, %v1412
  %v1477 = vmax.f32 %v1397, %v1413
  %v1478 = vmax.f32 %v1350, %v1366
  %v1479 = vmax.f32 %v1351, %v1367
  %v1480 = vmax.f32 %v1352, %v1368
  %v1481 = vmax.f32 %v1353, %v1369
  %v1482 = vmax.f32 %v1354, %v1370
  %v1483 = vmax.f32 %v1355, %v1371
  %v1484 = vmax.f32 %v1356, %v1372
  %v1485 = vmax.f32 %v1357, %v1373
  %v1486 = vmax.f32 %v1358, %v1374
  %v1487 = vmax.f32 %v1359, %v1375
  %v1488 = vmax.f32 %v1360, %v1376
  %v1489 = vmax.f32 %v1361, %v1377
  %v1490 = vmax.f32 %v1362, %v1378
  %v1491 = vmax.f32 %v1363, %v1379
  %v1492 = vmax.f32 %v1364, %v1380
  %v1493 = vmax.f32 %v1365, %v1381
  %v1494 = vmax.f32 %v1414, %v1430
  %v1495 = vmax.f32 %v1415, %v1431
  %v1496 = vmax.f32 %v1416, %v1432
  %v1497 = vmax.f32 %v1417, %v1433
  %v1498 = vmax.f32 %v1418, %v1434
  %v1499 = vmax.f32 %v1419, %v1435
  %v1500 = vmax.f32 %v1420, %v1436
  %v1501 = vmax.f32 %v1421, %v1437
  %v1502 = vmax.f32 %v1422, %v1438
  %v1503 = vmax.f32 %v1423, %v1439
  %v1504 = vmax.f32 %v1424, %v1440
  %v1505 = vmax.f32 %v1425, %v1441
  %v1506 = vmax.f32 %v1426, %v1442
  %v1507 = vmax.f32 %v1427, %v1443
  %v1508 = vmax.f32 %v1428, %v1444
  %v1509 = vmax.f32 %v1429, %v1445
  %v1510 = vmax.f32 %v1446, %v1478
  %v1511 = vmax.f32 %v1447, %v1479
  %v1512 = vmax.f32 %v1448, %v1480
  %v1513 = vmax.f32 %v1449, %v1481
  %v1514 = vmax.f32 %v1450, %v1482
  %v1515 = vmax.f32 %v1451, %v1483
  %v1516 = vmax.f32 %v1452, %v1484
  %v1517 = vmax.f32 %v1453, %v1485
  %v1518 = vmax.f32 %v1454, %v1486
  %v1519 = vmax.f32 %v1455, %v1487
  %v1520 = vmax.f32 %v1456, %v1488
  %v1521 = vmax.f32 %v1457, %v1489
  %v1522 = vmax.f32 %v1458, %v1490
  %v1523 = vmax.f32 %v1459, %v1491
  %v1524 = vmax.f32 %v1460, %v1492
  %v1525 = vmax.f32 %v1461, %v1493
  %v1526 = vmax.f32 %v1462, %v1494
  %v1527 = vmax.f32 %v1463, %v1495
  %v1528 = vmax.f32 %v1464, %v1496
  %v1529 = vmax.f32 %v1465, %v1497
  %v1530 = vmax.f32 %v1466, %v1498
  %v1531 = vmax.f32 %v1467, %v1499
  %v1532 = vmax.f32 %v1468, %v1500
  %v1533 = vmax.f32 %v1469, %v1501
  %v1534 = vmax.f32 %v1470, %v1502
  %v1535 = vmax.f32 %v1471, %v1503
  %v1536 = vmax.f32 %v1472, %v1504
  %v1537 = vmax.f32 %v1473, %v1505
  %v1538 = vmax.f32 %v1474, %v1506
  %v1539 = vmax.f32 %v1475, %v1507
  %v1540 = vmax.f32 %v1476, %v1508
  %v1541 = vmax.f32 %v1477, %v1509
  %v1542 = vpack.c.bf16 %v1511, %v1510
  %v1543 = vpack.c.bf16 %v1513, %v1512
  %v1544 = vpack.c.bf16 %v1515, %v1514
  %v1545 = vpack.c.bf16 %v1517, %v1516
  %v1546 = vpack.c.bf16 %v1519, %v1518
  %v1547 = vpack.c.bf16 %v1521, %v1520
  %v1548 = vpack.c.bf16 %v1523, %v1522
  %v1549 = vpack.c.bf16 %v1525, %v1524
  %v1550 = vpack.c.bf16 %v1527, %v1526
  %v1551 = vpack.c.bf16 %v1529, %v1528
  %v1552 = vpack.c.bf16 %v1531, %v1530
  %v1553 = vpack.c.bf16 %v1533, %v1532
  %v1554 = vpack.c.bf16 %v1535, %v1534
  %v1555 = vpack.c.bf16 %v1537, %v1536
  %v1556 = vpack.c.bf16 %v1539, %v1538
  %v1557 = vpack.c.bf16 %v1541, %v1540
  %1558 = vst [vmem:[%s3] sm:$0xff] %v1542
  %1559 = vst [vmem:[%s3 + $0x8] sm:$0xff] %v1543
  %1560 = vst [vmem:[%s3 + $0x10] sm:$0xff] %v1544
  %1561 = vst [vmem:[%s3 + $0x18] sm:$0xff] %v1545
  %1562 = vst [vmem:[%s3 + $0x20] sm:$0xff] %v1546
  %1563 = vst [vmem:[%s3 + $0x28] sm:$0xff] %v1547
  %1564 = vst [vmem:[%s3 + $0x30] sm:$0xff] %v1548
  %1565 = vst [vmem:[%s3 + $0x38] sm:$0xff] %v1549
  %1566 = vst [vmem:[%s3 + $0x40] sm:$0xff] %v1550
  %1567 = vst [vmem:[%s3 + $0x48] sm:$0xff] %v1551
  %1568 = vst [vmem:[%s3 + $0x50] sm:$0xff] %v1552
  %1569 = vst [vmem:[%s3 + $0x58] sm:$0xff] %v1553
  %1570 = vst [vmem:[%s3 + $0x60] sm:$0xff] %v1554
  %1571 = vst [vmem:[%s3 + $0x68] sm:$0xff] %v1555
  %1572 = vst [vmem:[%s3 + $0x70] sm:$0xff] %v1556
  %1573 = vst [vmem:[%s3 + $0x78] sm:$0xff] %v1557
  // Predicated region
  $region14: #{net_forward.3} parent=0 // pred_check
    _
  $region15: #{net_forward.3} parent=0 // pred_check_branch
    %1575 = sbr.rel (0) target = $region17
  $region16: #{net_forward.3} parent=0 // pred_region
    _
  $region17: #{net_forward.3} parent=0 // pred_fallthru
    _
  // Predicated region
  $region18: #{net_forward.3} parent=0 // pred_check
    _
  $region19: #{net_forward.3} parent=0 // pred_check_branch
    %1577 = sbr.rel (0) target = $region21
  $region20: #{net_forward.3} parent=0 // pred_region
    _
  $region21: #{net_forward.3} parent=0 // pred_fallthru
    _

// kernel: net_forward.4
$region0: #{net_forward.4}
  #allocation0 [shape = 'u32[]', space=smem, size = 0x4, offset = 0x4, fixed_abs, tag = 'smem constant byte address 0x4 - core index']
  #allocation1 [shape = 'u32[72,128]{1,0:T(1,128)}', space=vmem, size = 0x9000, scoped, tag = 'internal scratch']
  %s0 = inlined_call_operand.vmem [shape: bf16[32,256], index: 0, kind: input, shape index: {}]
  %s1 = inlined_call_operand.vmem [shape: bf16[256,2048], index: 1, kind: input, shape index: {}]
  %s2 = inlined_call_operand.vmem [shape: f32[32,1], index: 2, kind: input, shape index: {}]
  %s3 = inlined_call_operand.vmem [shape: bf16[32,512], index: 3, kind: output, shape index: {}]
  %s4 = sld [smem:[#allocation0]]
  $region22: #{net_forward.4} parent=0
    _
  %s6 = ssub.s32 1, %s4
  %s7 = scalar_select 0, %s6, %s4
  // Predicated region
  $region2: #{net_forward.4} parent=0 // pred_check
    _
  $region3: #{net_forward.4} parent=0 // pred_check_branch
    %9 = sbr.rel (0) target = $region5
  $region4: #{net_forward.4} parent=0 // pred_region
    _
  $region5: #{net_forward.4} parent=0 // pred_fallthru
    _
  // Predicated region
  $region6: #{net_forward.4} parent=0 // pred_check
    _
  $region7: #{net_forward.4} parent=0 // pred_check_branch
    %11 = sbr.rel (0) target = $region9
  $region8: #{net_forward.4} parent=0 // pred_region
    _
  $region9: #{net_forward.4} parent=0 // pred_fallthru
    _
  // Predicated region
  $region10: #{net_forward.4} parent=0 // pred_check
    _
  $region11: #{net_forward.4} parent=0 // pred_check_branch
    %13 = sbr.rel (0) target = $region13
  $region12: #{net_forward.4} parent=0 // pred_region
    _
  $region13: #{net_forward.4} parent=0 // pred_fallthru
    _
  %v14 = vld [vmem:[%s0] sm:$0xff]
  %v15 = vld [vmem:[%s0 + $0x8] sm:$0xff]
  %v16 = vld [vmem:[%s0 + $0x10] sm:$0xff]
  %v17 = vld [vmem:[%s0 + $0x18] sm:$0xff]
  %v18 = vld [vmem:[%s1] sm:$0xff]
  %v19 = vld [vmem:[%s1 + $0x8] sm:$0xff]
  %v20 = vld [vmem:[%s1 + $0x10] sm:$0xff]
  %v21 = vld [vmem:[%s1 + $0x18] sm:$0xff]
  %v22 = vld [vmem:[%s1 + $0x20] sm:$0xff]
  %v23 = vld [vmem:[%s1 + $0x28] sm:$0xff]
  %v24 = vld [vmem:[%s1 + $0x30] sm:$0xff]
  %v25 = vld [vmem:[%s1 + $0x38] sm:$0xff]
  %v26 = vld [vmem:[%s1 + $0x40] sm:$0xff]
  %v27 = vld [vmem:[%s1 + $0x48] sm:$0xff]
  %v28 = vld [vmem:[%s1 + $0x50] sm:$0xff]
  %v29 = vld [vmem:[%s1 + $0x58] sm:$0xff]
  %v30 = vld [vmem:[%s1 + $0x60] sm:$0xff]
  %v31 = vld [vmem:[%s1 + $0x68] sm:$0xff]
  %v32 = vld [vmem:[%s1 + $0x70] sm:$0xff]
  %v33 = vld [vmem:[%s1 + $0x78] sm:$0xff]
  %v34 = vld [vmem:[%s1 + $0x80] sm:$0xff]
  %v35 = vld [vmem:[%s1 + $0x88] sm:$0xff]
  %v36 = vld [vmem:[%s1 + $0x90] sm:$0xff]
  %v37 = vld [vmem:[%s1 + $0x98] sm:$0xff]
  %v38 = vld [vmem:[%s1 + $0xa0] sm:$0xff]
  %v39 = vld [vmem:[%s1 + $0xa8] sm:$0xff]
  %v40 = vld [vmem:[%s1 + $0xb0] sm:$0xff]
  %v41 = vld [vmem:[%s1 + $0xb8] sm:$0xff]
  %v42 = vld [vmem:[%s1 + $0xc0] sm:$0xff]
  %v43 = vld [vmem:[%s1 + $0xc8] sm:$0xff]
  %v44 = vld [vmem:[%s1 + $0xd0] sm:$0xff]
  %v45 = vld [vmem:[%s1 + $0xd8] sm:$0xff]
  %v46 = vld [vmem:[%s1 + $0xe0] sm:$0xff]
  %v47 = vld [vmem:[%s1 + $0xe8] sm:$0xff]
  %v48 = vld [vmem:[%s1 + $0xf0] sm:$0xff]
  %v49 = vld [vmem:[%s1 + $0xf8] sm:$0xff]
  %v50 = vld [vmem:[%s1 + $0x100] sm:$0xff]
  %v51 = vld [vmem:[%s1 + $0x108] sm:$0xff]
  %v52 = vld [vmem:[%s1 + $0x110] sm:$0xff]
  %v53 = vld [vmem:[%s1 + $0x118] sm:$0xff]
  %v54 = vld [vmem:[%s1 + $0x120] sm:$0xff]
  %v55 = vld [vmem:[%s1 + $0x128] sm:$0xff]
  %v56 = vld [vmem:[%s1 + $0x130] sm:$0xff]
  %v57 = vld [vmem:[%s1 + $0x138] sm:$0xff]
  %v58 = vld [vmem:[%s1 + $0x140] sm:$0xff]
  %v59 = vld [vmem:[%s1 + $0x148] sm:$0xff]
  %v60 = vld [vmem:[%s1 + $0x150] sm:$0xff]
  %v61 = vld [vmem:[%s1 + $0x158] sm:$0xff]
  %v62 = vld [vmem:[%s1 + $0x160] sm:$0xff]
  %v63 = vld [vmem:[%s1 + $0x168] sm:$0xff]
  %v64 = vld [vmem:[%s1 + $0x170] sm:$0xff]
  %v65 = vld [vmem:[%s1 + $0x178] sm:$0xff]
  %v66 = vld [vmem:[%s1 + $0x180] sm:$0xff]
  %v67 = vld [vmem:[%s1 + $0x188] sm:$0xff]
  %v68 = vld [vmem:[%s1 + $0x190] sm:$0xff]
  %v69 = vld [vmem:[%s1 + $0x198] sm:$0xff]
  %v70 = vld [vmem:[%s1 + $0x1a0] sm:$0xff]
  %v71 = vld [vmem:[%s1 + $0x1a8] sm:$0xff]
  %v72 = vld [vmem:[%s1 + $0x1b0] sm:$0xff]
  %v73 = vld [vmem:[%s1 + $0x1b8] sm:$0xff]
  %v74 = vld [vmem:[%s1 + $0x1c0] sm:$0xff]
  %v75 = vld [vmem:[%s1 + $0x1c8] sm:$0xff]
  %v76 = vld [vmem:[%s1 + $0x1d0] sm:$0xff]
  %v77 = vld [vmem:[%s1 + $0x1d8] sm:$0xff]
  %v78 = vld [vmem:[%s1 + $0x1e0] sm:$0xff]
  %v79 = vld [vmem:[%s1 + $0x1e8] sm:$0xff]
  %v80 = vld [vmem:[%s1 + $0x1f0] sm:$0xff]
  %v81 = vld [vmem:[%s1 + $0x1f8] sm:$0xff]
  %v82 = vld [vmem:[%s1 + $0x200] sm:$0xff]
  %v83 = vld [vmem:[%s1 + $0x208] sm:$0xff]
  %v84 = vld [vmem:[%s1 + $0x210] sm:$0xff]
  %v85 = vld [vmem:[%s1 + $0x218] sm:$0xff]
  %v86 = vld [vmem:[%s1 + $0x220] sm:$0xff]
  %v87 = vld [vmem:[%s1 + $0x228] sm:$0xff]
  %v88 = vld [vmem:[%s1 + $0x230] sm:$0xff]
  %v89 = vld [vmem:[%s1 + $0x238] sm:$0xff]
  %v90 = vld [vmem:[%s1 + $0x240] sm:$0xff]
  %v91 = vld [vmem:[%s1 + $0x248] sm:$0xff]
  %v92 = vld [vmem:[%s1 + $0x250] sm:$0xff]
  %v93 = vld [vmem:[%s1 + $0x258] sm:$0xff]
  %v94 = vld [vmem:[%s1 + $0x260] sm:$0xff]
  %v95 = vld [vmem:[%s1 + $0x268] sm:$0xff]
  %v96 = vld [vmem:[%s1 + $0x270] sm:$0xff]
  %v97 = vld [vmem:[%s1 + $0x278] sm:$0xff]
  %v98 = vld [vmem:[%s1 + $0x280] sm:$0xff]
  %v99 = vld [vmem:[%s1 + $0x288] sm:$0xff]
  %v100 = vld [vmem:[%s1 + $0x290] sm:$0xff]
  %v101 = vld [vmem:[%s1 + $0x298] sm:$0xff]
  %v102 = vld [vmem:[%s1 + $0x2a0] sm:$0xff]
  %v103 = vld [vmem:[%s1 + $0x2a8] sm:$0xff]
  %v104 = vld [vmem:[%s1 + $0x2b0] sm:$0xff]
  %v105 = vld [vmem:[%s1 + $0x2b8] sm:$0xff]
  %v106 = vld [vmem:[%s1 + $0x2c0] sm:$0xff]
  %v107 = vld [vmem:[%s1 + $0x2c8] sm:$0xff]
  %v108 = vld [vmem:[%s1 + $0x2d0] sm:$0xff]
  %v109 = vld [vmem:[%s1 + $0x2d8] sm:$0xff]
  %v110 = vld [vmem:[%s1 + $0x2e0] sm:$0xff]
  %v111 = vld [vmem:[%s1 + $0x2e8] sm:$0xff]
  %v112 = vld [vmem:[%s1 + $0x2f0] sm:$0xff]
  %v113 = vld [vmem:[%s1 + $0x2f8] sm:$0xff]
  %v114 = vld [vmem:[%s1 + $0x300] sm:$0xff]
  %v115 = vld [vmem:[%s1 + $0x308] sm:$0xff]
  %v116 = vld [vmem:[%s1 + $0x310] sm:$0xff]
  %v117 = vld [vmem:[%s1 + $0x318] sm:$0xff]
  %v118 = vld [vmem:[%s1 + $0x320] sm:$0xff]
  %v119 = vld [vmem:[%s1 + $0x328] sm:$0xff]
  %v120 = vld [vmem:[%s1 + $0x330] sm:$0xff]
  %v121 = vld [vmem:[%s1 + $0x338] sm:$0xff]
  %v122 = vld [vmem:[%s1 + $0x340] sm:$0xff]
  %v123 = vld [vmem:[%s1 + $0x348] sm:$0xff]
  %v124 = vld [vmem:[%s1 + $0x350] sm:$0xff]
  %v125 = vld [vmem:[%s1 + $0x358] sm:$0xff]
  %v126 = vld [vmem:[%s1 + $0x360] sm:$0xff]
  %v127 = vld [vmem:[%s1 + $0x368] sm:$0xff]
  %v128 = vld [vmem:[%s1 + $0x370] sm:$0xff]
  %v129 = vld [vmem:[%s1 + $0x378] sm:$0xff]
  %v130 = vld [vmem:[%s1 + $0x380] sm:$0xff]
  %v131 = vld [vmem:[%s1 + $0x388] sm:$0xff]
  %v132 = vld [vmem:[%s1 + $0x390] sm:$0xff]
  %v133 = vld [vmem:[%s1 + $0x398] sm:$0xff]
  %v134 = vld [vmem:[%s1 + $0x3a0] sm:$0xff]
  %v135 = vld [vmem:[%s1 + $0x3a8] sm:$0xff]
  %v136 = vld [vmem:[%s1 + $0x3b0] sm:$0xff]
  %v137 = vld [vmem:[%s1 + $0x3b8] sm:$0xff]
  %v138 = vld [vmem:[%s1 + $0x3c0] sm:$0xff]
  %v139 = vld [vmem:[%s1 + $0x3c8] sm:$0xff]
  %v140 = vld [vmem:[%s1 + $0x3d0] sm:$0xff]
  %v141 = vld [vmem:[%s1 + $0x3d8] sm:$0xff]
  %v142 = vld [vmem:[%s1 + $0x3e0] sm:$0xff]
  %v143 = vld [vmem:[%s1 + $0x3e8] sm:$0xff]
  %v144 = vld [vmem:[%s1 + $0x3f0] sm:$0xff]
  %v145 = vld [vmem:[%s1 + $0x3f8] sm:$0xff]
  %v146 = vld [vmem:[%s1 + $0x400] sm:$0xff]
  %v147 = vld [vmem:[%s1 + $0x408] sm:$0xff]
  %v148 = vld [vmem:[%s1 + $0x410] sm:$0xff]
  %v149 = vld [vmem:[%s1 + $0x418] sm:$0xff]
  %v150 = vld [vmem:[%s1 + $0x420] sm:$0xff]
  %v151 = vld [vmem:[%s1 + $0x428] sm:$0xff]
  %v152 = vld [vmem:[%s1 + $0x430] sm:$0xff]
  %v153 = vld [vmem:[%s1 + $0x438] sm:$0xff]
  %v154 = vld [vmem:[%s1 + $0x440] sm:$0xff]
  %v155 = vld [vmem:[%s1 + $0x448] sm:$0xff]
  %v156 = vld [vmem:[%s1 + $0x450] sm:$0xff]
  %v157 = vld [vmem:[%s1 + $0x458] sm:$0xff]
  %v158 = vld [vmem:[%s1 + $0x460] sm:$0xff]
  %v159 = vld [vmem:[%s1 + $0x468] sm:$0xff]
  %v160 = vld [vmem:[%s1 + $0x470] sm:$0xff]
  %v161 = vld [vmem:[%s1 + $0x478] sm:$0xff]
  %v162 = vld [vmem:[%s1 + $0x480] sm:$0xff]
  %v163 = vld [vmem:[%s1 + $0x488] sm:$0xff]
  %v164 = vld [vmem:[%s1 + $0x490] sm:$0xff]
  %v165 = vld [vmem:[%s1 + $0x498] sm:$0xff]
  %v166 = vld [vmem:[%s1 + $0x4a0] sm:$0xff]
  %v167 = vld [vmem:[%s1 + $0x4a8] sm:$0xff]
  %v168 = vld [vmem:[%s1 + $0x4b0] sm:$0xff]
  %v169 = vld [vmem:[%s1 + $0x4b8] sm:$0xff]
  %v170 = vld [vmem:[%s1 + $0x4c0] sm:$0xff]
  %v171 = vld [vmem:[%s1 + $0x4c8] sm:$0xff]
  %v172 = vld [vmem:[%s1 + $0x4d0] sm:$0xff]
  %v173 = vld [vmem:[%s1 + $0x4d8] sm:$0xff]
  %v174 = vld [vmem:[%s1 + $0x4e0] sm:$0xff]
  %v175 = vld [vmem:[%s1 + $0x4e8] sm:$0xff]
  %v176 = vld [vmem:[%s1 + $0x4f0] sm:$0xff]
  %v177 = vld [vmem:[%s1 + $0x4f8] sm:$0xff]
  %v178 = vld [vmem:[%s1 + $0x500] sm:$0xff]
  %v179 = vld [vmem:[%s1 + $0x508] sm:$0xff]
  %v180 = vld [vmem:[%s1 + $0x510] sm:$0xff]
  %v181 = vld [vmem:[%s1 + $0x518] sm:$0xff]
  %v182 = vld [vmem:[%s1 + $0x520] sm:$0xff]
  %v183 = vld [vmem:[%s1 + $0x528] sm:$0xff]
  %v184 = vld [vmem:[%s1 + $0x530] sm:$0xff]
  %v185 = vld [vmem:[%s1 + $0x538] sm:$0xff]
  %v186 = vld [vmem:[%s1 + $0x540] sm:$0xff]
  %v187 = vld [vmem:[%s1 + $0x548] sm:$0xff]
  %v188 = vld [vmem:[%s1 + $0x550] sm:$0xff]
  %v189 = vld [vmem:[%s1 + $0x558] sm:$0xff]
  %v190 = vld [vmem:[%s1 + $0x560] sm:$0xff]
  %v191 = vld [vmem:[%s1 + $0x568] sm:$0xff]
  %v192 = vld [vmem:[%s1 + $0x570] sm:$0xff]
  %v193 = vld [vmem:[%s1 + $0x578] sm:$0xff]
  %v194 = vld [vmem:[%s1 + $0x580] sm:$0xff]
  %v195 = vld [vmem:[%s1 + $0x588] sm:$0xff]
  %v196 = vld [vmem:[%s1 + $0x590] sm:$0xff]
  %v197 = vld [vmem:[%s1 + $0x598] sm:$0xff]
  %v198 = vld [vmem:[%s1 + $0x5a0] sm:$0xff]
  %v199 = vld [vmem:[%s1 + $0x5a8] sm:$0xff]
  %v200 = vld [vmem:[%s1 + $0x5b0] sm:$0xff]
  %v201 = vld [vmem:[%s1 + $0x5b8] sm:$0xff]
  %v202 = vld [vmem:[%s1 + $0x5c0] sm:$0xff]
  %v203 = vld [vmem:[%s1 + $0x5c8] sm:$0xff]
  %v204 = vld [vmem:[%s1 + $0x5d0] sm:$0xff]
  %v205 = vld [vmem:[%s1 + $0x5d8] sm:$0xff]
  %v206 = vld [vmem:[%s1 + $0x5e0] sm:$0xff]
  %v207 = vld [vmem:[%s1 + $0x5e8] sm:$0xff]
  %v208 = vld [vmem:[%s1 + $0x5f0] sm:$0xff]
  %v209 = vld [vmem:[%s1 + $0x5f8] sm:$0xff]
  %v210 = vld [vmem:[%s1 + $0x600] sm:$0xff]
  %v211 = vld [vmem:[%s1 + $0x608] sm:$0xff]
  %v212 = vld [vmem:[%s1 + $0x610] sm:$0xff]
  %v213 = vld [vmem:[%s1 + $0x618] sm:$0xff]
  %v214 = vld [vmem:[%s1 + $0x620] sm:$0xff]
  %v215 = vld [vmem:[%s1 + $0x628] sm:$0xff]
  %v216 = vld [vmem:[%s1 + $0x630] sm:$0xff]
  %v217 = vld [vmem:[%s1 + $0x638] sm:$0xff]
  %v218 = vld [vmem:[%s1 + $0x640] sm:$0xff]
  %v219 = vld [vmem:[%s1 + $0x648] sm:$0xff]
  %v220 = vld [vmem:[%s1 + $0x650] sm:$0xff]
  %v221 = vld [vmem:[%s1 + $0x658] sm:$0xff]
  %v222 = vld [vmem:[%s1 + $0x660] sm:$0xff]
  %v223 = vld [vmem:[%s1 + $0x668] sm:$0xff]
  %v224 = vld [vmem:[%s1 + $0x670] sm:$0xff]
  %v225 = vld [vmem:[%s1 + $0x678] sm:$0xff]
  %v226 = vld [vmem:[%s1 + $0x680] sm:$0xff]
  %v227 = vld [vmem:[%s1 + $0x688] sm:$0xff]
  %v228 = vld [vmem:[%s1 + $0x690] sm:$0xff]
  %v229 = vld [vmem:[%s1 + $0x698] sm:$0xff]
  %v230 = vld [vmem:[%s1 + $0x6a0] sm:$0xff]
  %v231 = vld [vmem:[%s1 + $0x6a8] sm:$0xff]
  %v232 = vld [vmem:[%s1 + $0x6b0] sm:$0xff]
  %v233 = vld [vmem:[%s1 + $0x6b8] sm:$0xff]
  %v234 = vld [vmem:[%s1 + $0x6c0] sm:$0xff]
  %v235 = vld [vmem:[%s1 + $0x6c8] sm:$0xff]
  %v236 = vld [vmem:[%s1 + $0x6d0] sm:$0xff]
  %v237 = vld [vmem:[%s1 + $0x6d8] sm:$0xff]
  %v238 = vld [vmem:[%s1 + $0x6e0] sm:$0xff]
  %v239 = vld [vmem:[%s1 + $0x6e8] sm:$0xff]
  %v240 = vld [vmem:[%s1 + $0x6f0] sm:$0xff]
  %v241 = vld [vmem:[%s1 + $0x6f8] sm:$0xff]
  %v242 = vld [vmem:[%s1 + $0x700] sm:$0xff]
  %v243 = vld [vmem:[%s1 + $0x708] sm:$0xff]
  %v244 = vld [vmem:[%s1 + $0x710] sm:$0xff]
  %v245 = vld [vmem:[%s1 + $0x718] sm:$0xff]
  %v246 = vld [vmem:[%s1 + $0x720] sm:$0xff]
  %v247 = vld [vmem:[%s1 + $0x728] sm:$0xff]
  %v248 = vld [vmem:[%s1 + $0x730] sm:$0xff]
  %v249 = vld [vmem:[%s1 + $0x738] sm:$0xff]
  %v250 = vld [vmem:[%s1 + $0x740] sm:$0xff]
  %v251 = vld [vmem:[%s1 + $0x748] sm:$0xff]
  %v252 = vld [vmem:[%s1 + $0x750] sm:$0xff]
  %v253 = vld [vmem:[%s1 + $0x758] sm:$0xff]
  %v254 = vld [vmem:[%s1 + $0x760] sm:$0xff]
  %v255 = vld [vmem:[%s1 + $0x768] sm:$0xff]
  %v256 = vld [vmem:[%s1 + $0x770] sm:$0xff]
  %v257 = vld [vmem:[%s1 + $0x778] sm:$0xff]
  %v258 = vld [vmem:[%s1 + $0x780] sm:$0xff]
  %v259 = vld [vmem:[%s1 + $0x788] sm:$0xff]
  %v260 = vld [vmem:[%s1 + $0x790] sm:$0xff]
  %v261 = vld [vmem:[%s1 + $0x798] sm:$0xff]
  %v262 = vld [vmem:[%s1 + $0x7a0] sm:$0xff]
  %v263 = vld [vmem:[%s1 + $0x7a8] sm:$0xff]
  %v264 = vld [vmem:[%s1 + $0x7b0] sm:$0xff]
  %v265 = vld [vmem:[%s1 + $0x7b8] sm:$0xff]
  %v266 = vld [vmem:[%s1 + $0x7c0] sm:$0xff]
  %v267 = vld [vmem:[%s1 + $0x7c8] sm:$0xff]
  %v268 = vld [vmem:[%s1 + $0x7d0] sm:$0xff]
  %v269 = vld [vmem:[%s1 + $0x7d8] sm:$0xff]
  %v270 = vld [vmem:[%s1 + $0x7e0] sm:$0xff]
  %v271 = vld [vmem:[%s1 + $0x7e8] sm:$0xff]
  %v272 = vld [vmem:[%s1 + $0x7f0] sm:$0xff]
  %v273 = vld [vmem:[%s1 + $0x7f8] sm:$0xff]
  %v274 = vld [vmem:[%s2] sm:$0xff]
  %v275 = vld [vmem:[%s2 + $0x8] sm:$0xff]
  %v276 = vld [vmem:[%s2 + $0x10] sm:$0xff]
  %v277 = vld [vmem:[%s2 + $0x18] sm:$0xff]
  %279 = vset.pattern.permute.xlu0 0
  %280 = vperm.xlu0 %279, %v274
  %v281 = vpop.permute.xlu0 %280
  %284 = vset.pattern.permute.xlu0 0
  %285 = vperm.xlu0 %284, %v275
  %v286 = vpop.permute.xlu0 %285
  %289 = vset.pattern.permute.xlu0 0
  %290 = vperm.xlu0 %289, %v276
  %v291 = vpop.permute.xlu0 %290
  %294 = vset.pattern.permute.xlu0 0
  %295 = vperm.xlu0 %294, %v277
  %v296 = vpop.permute.xlu0 %295
  %v302 = vunpack.c.l.b16 %v14
  %v303 = vunpack.c.h.b16 %v14
  %v304 = vunpack.c.l.b16 %v15
  %v305 = vunpack.c.h.b16 %v15
  %v306 = vunpack.c.l.b16 %v16
  %v307 = vunpack.c.h.b16 %v16
  %v308 = vunpack.c.l.b16 %v17
  %v309 = vunpack.c.h.b16 %v17
  %v310 = vpack.c.b16 %v304, %v302
  %v311 = vpack.c.b16 %v305, %v303
  %v312 = vpack.c.b16 %v308, %v306
  %v313 = vpack.c.b16 %v309, %v307
  %v574 = vunpack.c.l.b16 %v18
  %v575 = vunpack.c.h.b16 %v18
  %v576 = vunpack.c.l.b16 %v19
  %v577 = vunpack.c.h.b16 %v19
  %v578 = vunpack.c.l.b16 %v20
  %v579 = vunpack.c.h.b16 %v20
  %v580 = vunpack.c.l.b16 %v21
  %v581 = vunpack.c.h.b16 %v21
  %v582 = vunpack.c.l.b16 %v22
  %v583 = vunpack.c.h.b16 %v22
  %v584 = vunpack.c.l.b16 %v23
  %v585 = vunpack.c.h.b16 %v23
  %v586 = vunpack.c.l.b16 %v24
  %v587 = vunpack.c.h.b16 %v24
  %v588 = vunpack.c.l.b16 %v25
  %v589 = vunpack.c.h.b16 %v25
  %v590 = vunpack.c.l.b16 %v26
  %v591 = vunpack.c.h.b16 %v26
  %v592 = vunpack.c.l.b16 %v27
  %v593 = vunpack.c.h.b16 %v27
  %v594 = vunpack.c.l.b16 %v28
  %v595 = vunpack.c.h.b16 %v28
  %v596 = vunpack.c.l.b16 %v29
  %v597 = vunpack.c.h.b16 %v29
  %v598 = vunpack.c.l.b16 %v30
  %v599 = vunpack.c.h.b16 %v30
  %v600 = vunpack.c.l.b16 %v31
  %v601 = vunpack.c.h.b16 %v31
  %v602 = vunpack.c.l.b16 %v32
  %v603 = vunpack.c.h.b16 %v32
  %v604 = vunpack.c.l.b16 %v33
  %v605 = vunpack.c.h.b16 %v33
  %v606 = vunpack.c.l.b16 %v34
  %v607 = vunpack.c.h.b16 %v34
  %v608 = vunpack.c.l.b16 %v35
  %v609 = vunpack.c.h.b16 %v35
  %v610 = vunpack.c.l.b16 %v36
  %v611 = vunpack.c.h.b16 %v36
  %v612 = vunpack.c.l.b16 %v37
  %v613 = vunpack.c.h.b16 %v37
  %v614 = vunpack.c.l.b16 %v38
  %v615 = vunpack.c.h.b16 %v38
  %v616 = vunpack.c.l.b16 %v39
  %v617 = vunpack.c.h.b16 %v39
  %v618 = vunpack.c.l.b16 %v40
  %v619 = vunpack.c.h.b16 %v40
  %v620 = vunpack.c.l.b16 %v41
  %v621 = vunpack.c.h.b16 %v41
  %v622 = vunpack.c.l.b16 %v42
  %v623 = vunpack.c.h.b16 %v42
  %v624 = vunpack.c.l.b16 %v43
  %v625 = vunpack.c.h.b16 %v43
  %v626 = vunpack.c.l.b16 %v44
  %v627 = vunpack.c.h.b16 %v44
  %v628 = vunpack.c.l.b16 %v45
  %v629 = vunpack.c.h.b16 %v45
  %v630 = vunpack.c.l.b16 %v46
  %v631 = vunpack.c.h.b16 %v46
  %v632 = vunpack.c.l.b16 %v47
  %v633 = vunpack.c.h.b16 %v47
  %v634 = vunpack.c.l.b16 %v48
  %v635 = vunpack.c.h.b16 %v48
  %v636 = vunpack.c.l.b16 %v49
  %v637 = vunpack.c.h.b16 %v49
  %v638 = vunpack.c.l.b16 %v50
  %v639 = vunpack.c.h.b16 %v50
  %v640 = vunpack.c.l.b16 %v51
  %v641 = vunpack.c.h.b16 %v51
  %v642 = vunpack.c.l.b16 %v52
  %v643 = vunpack.c.h.b16 %v52
  %v644 = vunpack.c.l.b16 %v53
  %v645 = vunpack.c.h.b16 %v53
  %v646 = vunpack.c.l.b16 %v54
  %v647 = vunpack.c.h.b16 %v54
  %v648 = vunpack.c.l.b16 %v55
  %v649 = vunpack.c.h.b16 %v55
  %v650 = vunpack.c.l.b16 %v56
  %v651 = vunpack.c.h.b16 %v56
  %v652 = vunpack.c.l.b16 %v57
  %v653 = vunpack.c.h.b16 %v57
  %v654 = vunpack.c.l.b16 %v58
  %v655 = vunpack.c.h.b16 %v58
  %v656 = vunpack.c.l.b16 %v59
  %v657 = vunpack.c.h.b16 %v59
  %v658 = vunpack.c.l.b16 %v60
  %v659 = vunpack.c.h.b16 %v60
  %v660 = vunpack.c.l.b16 %v61
  %v661 = vunpack.c.h.b16 %v61
  %v662 = vunpack.c.l.b16 %v62
  %v663 = vunpack.c.h.b16 %v62
  %v664 = vunpack.c.l.b16 %v63
  %v665 = vunpack.c.h.b16 %v63
  %v666 = vunpack.c.l.b16 %v64
  %v667 = vunpack.c.h.b16 %v64
  %v668 = vunpack.c.l.b16 %v65
  %v669 = vunpack.c.h.b16 %v65
  %v670 = vunpack.c.l.b16 %v66
  %v671 = vunpack.c.h.b16 %v66
  %v672 = vunpack.c.l.b16 %v67
  %v673 = vunpack.c.h.b16 %v67
  %v674 = vunpack.c.l.b16 %v68
  %v675 = vunpack.c.h.b16 %v68
  %v676 = vunpack.c.l.b16 %v69
  %v677 = vunpack.c.h.b16 %v69
  %v678 = vunpack.c.l.b16 %v70
  %v679 = vunpack.c.h.b16 %v70
  %v680 = vunpack.c.l.b16 %v71
  %v681 = vunpack.c.h.b16 %v71
  %v682 = vunpack.c.l.b16 %v72
  %v683 = vunpack.c.h.b16 %v72
  %v684 = vunpack.c.l.b16 %v73
  %v685 = vunpack.c.h.b16 %v73
  %v686 = vunpack.c.l.b16 %v74
  %v687 = vunpack.c.h.b16 %v74
  %v688 = vunpack.c.l.b16 %v75
  %v689 = vunpack.c.h.b16 %v75
  %v690 = vunpack.c.l.b16 %v76
  %v691 = vunpack.c.h.b16 %v76
  %v692 = vunpack.c.l.b16 %v77
  %v693 = vunpack.c.h.b16 %v77
  %v694 = vunpack.c.l.b16 %v78
  %v695 = vunpack.c.h.b16 %v78
  %v696 = vunpack.c.l.b16 %v79
  %v697 = vunpack.c.h.b16 %v79
  %v698 = vunpack.c.l.b16 %v80
  %v699 = vunpack.c.h.b16 %v80
  %v700 = vunpack.c.l.b16 %v81
  %v701 = vunpack.c.h.b16 %v81
  %v702 = vunpack.c.l.b16 %v82
  %v703 = vunpack.c.h.b16 %v82
  %v704 = vunpack.c.l.b16 %v83
  %v705 = vunpack.c.h.b16 %v83
  %v706 = vunpack.c.l.b16 %v84
  %v707 = vunpack.c.h.b16 %v84
  %v708 = vunpack.c.l.b16 %v85
  %v709 = vunpack.c.h.b16 %v85
  %v710 = vunpack.c.l.b16 %v86
  %v711 = vunpack.c.h.b16 %v86
  %v712 = vunpack.c.l.b16 %v87
  %v713 = vunpack.c.h.b16 %v87
  %v714 = vunpack.c.l.b16 %v88
  %v715 = vunpack.c.h.b16 %v88
  %v716 = vunpack.c.l.b16 %v89
  %v717 = vunpack.c.h.b16 %v89
  %v718 = vunpack.c.l.b16 %v90
  %v719 = vunpack.c.h.b16 %v90
  %v720 = vunpack.c.l.b16 %v91
  %v721 = vunpack.c.h.b16 %v91
  %v722 = vunpack.c.l.b16 %v92
  %v723 = vunpack.c.h.b16 %v92
  %v724 = vunpack.c.l.b16 %v93
  %v725 = vunpack.c.h.b16 %v93
  %v726 = vunpack.c.l.b16 %v94
  %v727 = vunpack.c.h.b16 %v94
  %v728 = vunpack.c.l.b16 %v95
  %v729 = vunpack.c.h.b16 %v95
  %v730 = vunpack.c.l.b16 %v96
  %v731 = vunpack.c.h.b16 %v96
  %v732 = vunpack.c.l.b16 %v97
  %v733 = vunpack.c.h.b16 %v97
  %v734 = vunpack.c.l.b16 %v98
  %v735 = vunpack.c.h.b16 %v98
  %v736 = vunpack.c.l.b16 %v99
  %v737 = vunpack.c.h.b16 %v99
  %v738 = vunpack.c.l.b16 %v100
  %v739 = vunpack.c.h.b16 %v100
  %v740 = vunpack.c.l.b16 %v101
  %v741 = vunpack.c.h.b16 %v101
  %v742 = vunpack.c.l.b16 %v102
  %v743 = vunpack.c.h.b16 %v102
  %v744 = vunpack.c.l.b16 %v103
  %v745 = vunpack.c.h.b16 %v103
  %v746 = vunpack.c.l.b16 %v104
  %v747 = vunpack.c.h.b16 %v104
  %v748 = vunpack.c.l.b16 %v105
  %v749 = vunpack.c.h.b16 %v105
  %v750 = vunpack.c.l.b16 %v106
  %v751 = vunpack.c.h.b16 %v106
  %v752 = vunpack.c.l.b16 %v107
  %v753 = vunpack.c.h.b16 %v107
  %v754 = vunpack.c.l.b16 %v108
  %v755 = vunpack.c.h.b16 %v108
  %v756 = vunpack.c.l.b16 %v109
  %v757 = vunpack.c.h.b16 %v109
  %v758 = vunpack.c.l.b16 %v110
  %v759 = vunpack.c.h.b16 %v110
  %v760 = vunpack.c.l.b16 %v111
  %v761 = vunpack.c.h.b16 %v111
  %v762 = vunpack.c.l.b16 %v112
  %v763 = vunpack.c.h.b16 %v112
  %v764 = vunpack.c.l.b16 %v113
  %v765 = vunpack.c.h.b16 %v113
  %v766 = vunpack.c.l.b16 %v114
  %v767 = vunpack.c.h.b16 %v114
  %v768 = vunpack.c.l.b16 %v115
  %v769 = vunpack.c.h.b16 %v115
  %v770 = vunpack.c.l.b16 %v116
  %v771 = vunpack.c.h.b16 %v116
  %v772 = vunpack.c.l.b16 %v117
  %v773 = vunpack.c.h.b16 %v117
  %v774 = vunpack.c.l.b16 %v118
  %v775 = vunpack.c.h.b16 %v118
  %v776 = vunpack.c.l.b16 %v119
  %v777 = vunpack.c.h.b16 %v119
  %v778 = vunpack.c.l.b16 %v120
  %v779 = vunpack.c.h.b16 %v120
  %v780 = vunpack.c.l.b16 %v121
  %v781 = vunpack.c.h.b16 %v121
  %v782 = vunpack.c.l.b16 %v122
  %v783 = vunpack.c.h.b16 %v122
  %v784 = vunpack.c.l.b16 %v123
  %v785 = vunpack.c.h.b16 %v123
  %v786 = vunpack.c.l.b16 %v124
  %v787 = vunpack.c.h.b16 %v124
  %v788 = vunpack.c.l.b16 %v125
  %v789 = vunpack.c.h.b16 %v125
  %v790 = vunpack.c.l.b16 %v126
  %v791 = vunpack.c.h.b16 %v126
  %v792 = vunpack.c.l.b16 %v127
  %v793 = vunpack.c.h.b16 %v127
  %v794 = vunpack.c.l.b16 %v128
  %v795 = vunpack.c.h.b16 %v128
  %v796 = vunpack.c.l.b16 %v129
  %v797 = vunpack.c.h.b16 %v129
  %v798 = vunpack.c.l.b16 %v130
  %v799 = vunpack.c.h.b16 %v130
  %v800 = vunpack.c.l.b16 %v131
  %v801 = vunpack.c.h.b16 %v131
  %v802 = vunpack.c.l.b16 %v132
  %v803 = vunpack.c.h.b16 %v132
  %v804 = vunpack.c.l.b16 %v133
  %v805 = vunpack.c.h.b16 %v133
  %v806 = vunpack.c.l.b16 %v134
  %v807 = vunpack.c.h.b16 %v134
  %v808 = vunpack.c.l.b16 %v135
  %v809 = vunpack.c.h.b16 %v135
  %v810 = vunpack.c.l.b16 %v136
  %v811 = vunpack.c.h.b16 %v136
  %v812 = vunpack.c.l.b16 %v137
  %v813 = vunpack.c.h.b16 %v137
  %v814 = vunpack.c.l.b16 %v138
  %v815 = vunpack.c.h.b16 %v138
  %v816 = vunpack.c.l.b16 %v139
  %v817 = vunpack.c.h.b16 %v139
  %v818 = vunpack.c.l.b16 %v140
  %v819 = vunpack.c.h.b16 %v140
  %v820 = vunpack.c.l.b16 %v141
  %v821 = vunpack.c.h.b16 %v141
  %v822 = vunpack.c.l.b16 %v142
  %v823 = vunpack.c.h.b16 %v142
  %v824 = vunpack.c.l.b16 %v143
  %v825 = vunpack.c.h.b16 %v143
  %v826 = vunpack.c.l.b16 %v144
  %v827 = vunpack.c.h.b16 %v144
  %v828 = vunpack.c.l.b16 %v145
  %v829 = vunpack.c.h.b16 %v145
  %v830 = vunpack.c.l.b16 %v146
  %v831 = vunpack.c.h.b16 %v146
  %v832 = vunpack.c.l.b16 %v147
  %v833 = vunpack.c.h.b16 %v147
  %v834 = vunpack.c.l.b16 %v148
  %v835 = vunpack.c.h.b16 %v148
  %v836 = vunpack.c.l.b16 %v149
  %v837 = vunpack.c.h.b16 %v149
  %v838 = vunpack.c.l.b16 %v150
  %v839 = vunpack.c.h.b16 %v150
  %v840 = vunpack.c.l.b16 %v151
  %v841 = vunpack.c.h.b16 %v151
  %v842 = vunpack.c.l.b16 %v152
  %v843 = vunpack.c.h.b16 %v152
  %v844 = vunpack.c.l.b16 %v153
  %v845 = vunpack.c.h.b16 %v153
  %v846 = vunpack.c.l.b16 %v154
  %v847 = vunpack.c.h.b16 %v154
  %v848 = vunpack.c.l.b16 %v155
  %v849 = vunpack.c.h.b16 %v155
  %v850 = vunpack.c.l.b16 %v156
  %v851 = vunpack.c.h.b16 %v156
  %v852 = vunpack.c.l.b16 %v157
  %v853 = vunpack.c.h.b16 %v157
  %v854 = vunpack.c.l.b16 %v158
  %v855 = vunpack.c.h.b16 %v158
  %v856 = vunpack.c.l.b16 %v159
  %v857 = vunpack.c.h.b16 %v159
  %v858 = vunpack.c.l.b16 %v160
  %v859 = vunpack.c.h.b16 %v160
  %v860 = vunpack.c.l.b16 %v161
  %v861 = vunpack.c.h.b16 %v161
  %v862 = vunpack.c.l.b16 %v162
  %v863 = vunpack.c.h.b16 %v162
  %v864 = vunpack.c.l.b16 %v163
  %v865 = vunpack.c.h.b16 %v163
  %v866 = vunpack.c.l.b16 %v164
  %v867 = vunpack.c.h.b16 %v164
  %v868 = vunpack.c.l.b16 %v165
  %v869 = vunpack.c.h.b16 %v165
  %v870 = vunpack.c.l.b16 %v166
  %v871 = vunpack.c.h.b16 %v166
  %v872 = vunpack.c.l.b16 %v167
  %v873 = vunpack.c.h.b16 %v167
  %v874 = vunpack.c.l.b16 %v168
  %v875 = vunpack.c.h.b16 %v168
  %v876 = vunpack.c.l.b16 %v169
  %v877 = vunpack.c.h.b16 %v169
  %v878 = vunpack.c.l.b16 %v170
  %v879 = vunpack.c.h.b16 %v170
  %v880 = vunpack.c.l.b16 %v171
  %v881 = vunpack.c.h.b16 %v171
  %v882 = vunpack.c.l.b16 %v172
  %v883 = vunpack.c.h.b16 %v172
  %v884 = vunpack.c.l.b16 %v173
  %v885 = vunpack.c.h.b16 %v173
  %v886 = vunpack.c.l.b16 %v174
  %v887 = vunpack.c.h.b16 %v174
  %v888 = vunpack.c.l.b16 %v175
  %v889 = vunpack.c.h.b16 %v175
  %v890 = vunpack.c.l.b16 %v176
  %v891 = vunpack.c.h.b16 %v176
  %v892 = vunpack.c.l.b16 %v177
  %v893 = vunpack.c.h.b16 %v177
  %v894 = vunpack.c.l.b16 %v178
  %v895 = vunpack.c.h.b16 %v178
  %v896 = vunpack.c.l.b16 %v179
  %v897 = vunpack.c.h.b16 %v179
  %v898 = vunpack.c.l.b16 %v180
  %v899 = vunpack.c.h.b16 %v180
  %v900 = vunpack.c.l.b16 %v181
  %v901 = vunpack.c.h.b16 %v181
  %v902 = vunpack.c.l.b16 %v182
  %v903 = vunpack.c.h.b16 %v182
  %v904 = vunpack.c.l.b16 %v183
  %v905 = vunpack.c.h.b16 %v183
  %v906 = vunpack.c.l.b16 %v184
  %v907 = vunpack.c.h.b16 %v184
  %v908 = vunpack.c.l.b16 %v185
  %v909 = vunpack.c.h.b16 %v185
  %v910 = vunpack.c.l.b16 %v186
  %v911 = vunpack.c.h.b16 %v186
  %v912 = vunpack.c.l.b16 %v187
  %v913 = vunpack.c.h.b16 %v187
  %v914 = vunpack.c.l.b16 %v188
  %v915 = vunpack.c.h.b16 %v188
  %v916 = vunpack.c.l.b16 %v189
  %v917 = vunpack.c.h.b16 %v189
  %v918 = vunpack.c.l.b16 %v190
  %v919 = vunpack.c.h.b16 %v190
  %v920 = vunpack.c.l.b16 %v191
  %v921 = vunpack.c.h.b16 %v191
  %v922 = vunpack.c.l.b16 %v192
  %v923 = vunpack.c.h.b16 %v192
  %v924 = vunpack.c.l.b16 %v193
  %v925 = vunpack.c.h.b16 %v193
  %v926 = vunpack.c.l.b16 %v194
  %v927 = vunpack.c.h.b16 %v194
  %v928 = vunpack.c.l.b16 %v195
  %v929 = vunpack.c.h.b16 %v195
  %v930 = vunpack.c.l.b16 %v196
  %v931 = vunpack.c.h.b16 %v196
  %v932 = vunpack.c.l.b16 %v197
  %v933 = vunpack.c.h.b16 %v197
  %v934 = vunpack.c.l.b16 %v198
  %v935 = vunpack.c.h.b16 %v198
  %v936 = vunpack.c.l.b16 %v199
  %v937 = vunpack.c.h.b16 %v199
  %v938 = vunpack.c.l.b16 %v200
  %v939 = vunpack.c.h.b16 %v200
  %v940 = vunpack.c.l.b16 %v201
  %v941 = vunpack.c.h.b16 %v201
  %v942 = vunpack.c.l.b16 %v202
  %v943 = vunpack.c.h.b16 %v202
  %v944 = vunpack.c.l.b16 %v203
  %v945 = vunpack.c.h.b16 %v203
  %v946 = vunpack.c.l.b16 %v204
  %v947 = vunpack.c.h.b16 %v204
  %v948 = vunpack.c.l.b16 %v205
  %v949 = vunpack.c.h.b16 %v205
  %v950 = vunpack.c.l.b16 %v206
  %v951 = vunpack.c.h.b16 %v206
  %v952 = vunpack.c.l.b16 %v207
  %v953 = vunpack.c.h.b16 %v207
  %v954 = vunpack.c.l.b16 %v208
  %v955 = vunpack.c.h.b16 %v208
  %v956 = vunpack.c.l.b16 %v209
  %v957 = vunpack.c.h.b16 %v209
  %v958 = vunpack.c.l.b16 %v210
  %v959 = vunpack.c.h.b16 %v210
  %v960 = vunpack.c.l.b16 %v211
  %v961 = vunpack.c.h.b16 %v211
  %v962 = vunpack.c.l.b16 %v212
  %v963 = vunpack.c.h.b16 %v212
  %v964 = vunpack.c.l.b16 %v213
  %v965 = vunpack.c.h.b16 %v213
  %v966 = vunpack.c.l.b16 %v214
  %v967 = vunpack.c.h.b16 %v214
  %v968 = vunpack.c.l.b16 %v215
  %v969 = vunpack.c.h.b16 %v215
  %v970 = vunpack.c.l.b16 %v216
  %v971 = vunpack.c.h.b16 %v216
  %v972 = vunpack.c.l.b16 %v217
  %v973 = vunpack.c.h.b16 %v217
  %v974 = vunpack.c.l.b16 %v218
  %v975 = vunpack.c.h.b16 %v218
  %v976 = vunpack.c.l.b16 %v219
  %v977 = vunpack.c.h.b16 %v219
  %v978 = vunpack.c.l.b16 %v220
  %v979 = vunpack.c.h.b16 %v220
  %v980 = vunpack.c.l.b16 %v221
  %v981 = vunpack.c.h.b16 %v221
  %v982 = vunpack.c.l.b16 %v222
  %v983 = vunpack.c.h.b16 %v222
  %v984 = vunpack.c.l.b16 %v223
  %v985 = vunpack.c.h.b16 %v223
  %v986 = vunpack.c.l.b16 %v224
  %v987 = vunpack.c.h.b16 %v224
  %v988 = vunpack.c.l.b16 %v225
  %v989 = vunpack.c.h.b16 %v225
  %v990 = vunpack.c.l.b16 %v226
  %v991 = vunpack.c.h.b16 %v226
  %v992 = vunpack.c.l.b16 %v227
  %v993 = vunpack.c.h.b16 %v227
  %v994 = vunpack.c.l.b16 %v228
  %v995 = vunpack.c.h.b16 %v228
  %v996 = vunpack.c.l.b16 %v229
  %v997 = vunpack.c.h.b16 %v229
  %v998 = vunpack.c.l.b16 %v230
  %v999 = vunpack.c.h.b16 %v230
  %v1000 = vunpack.c.l.b16 %v231
  %v1001 = vunpack.c.h.b16 %v231
  %v1002 = vunpack.c.l.b16 %v232
  %v1003 = vunpack.c.h.b16 %v232
  %v1004 = vunpack.c.l.b16 %v233
  %v1005 = vunpack.c.h.b16 %v233
  %v1006 = vunpack.c.l.b16 %v234
  %v1007 = vunpack.c.h.b16 %v234
  %v1008 = vunpack.c.l.b16 %v235
  %v1009 = vunpack.c.h.b16 %v235
  %v1010 = vunpack.c.l.b16 %v236
  %v1011 = vunpack.c.h.b16 %v236
  %v1012 = vunpack.c.l.b16 %v237
  %v1013 = vunpack.c.h.b16 %v237
  %v1014 = vunpack.c.l.b16 %v238
  %v1015 = vunpack.c.h.b16 %v238
  %v1016 = vunpack.c.l.b16 %v239
  %v1017 = vunpack.c.h.b16 %v239
  %v1018 = vunpack.c.l.b16 %v240
  %v1019 = vunpack.c.h.b16 %v240
  %v1020 = vunpack.c.l.b16 %v241
  %v1021 = vunpack.c.h.b16 %v241
  %v1022 = vunpack.c.l.b16 %v242
  %v1023 = vunpack.c.h.b16 %v242
  %v1024 = vunpack.c.l.b16 %v243
  %v1025 = vunpack.c.h.b16 %v243
  %v1026 = vunpack.c.l.b16 %v244
  %v1027 = vunpack.c.h.b16 %v244
  %v1028 = vunpack.c.l.b16 %v245
  %v1029 = vunpack.c.h.b16 %v245
  %v1030 = vunpack.c.l.b16 %v246
  %v1031 = vunpack.c.h.b16 %v246
  %v1032 = vunpack.c.l.b16 %v247
  %v1033 = vunpack.c.h.b16 %v247
  %v1034 = vunpack.c.l.b16 %v248
  %v1035 = vunpack.c.h.b16 %v248
  %v1036 = vunpack.c.l.b16 %v249
  %v1037 = vunpack.c.h.b16 %v249
  %v1038 = vunpack.c.l.b16 %v250
  %v1039 = vunpack.c.h.b16 %v250
  %v1040 = vunpack.c.l.b16 %v251
  %v1041 = vunpack.c.h.b16 %v251
  %v1042 = vunpack.c.l.b16 %v252
  %v1043 = vunpack.c.h.b16 %v252
  %v1044 = vunpack.c.l.b16 %v253
  %v1045 = vunpack.c.h.b16 %v253
  %v1046 = vunpack.c.l.b16 %v254
  %v1047 = vunpack.c.h.b16 %v254
  %v1048 = vunpack.c.l.b16 %v255
  %v1049 = vunpack.c.h.b16 %v255
  %v1050 = vunpack.c.l.b16 %v256
  %v1051 = vunpack.c.h.b16 %v256
  %v1052 = vunpack.c.l.b16 %v257
  %v1053 = vunpack.c.h.b16 %v257
  %v1054 = vunpack.c.l.b16 %v258
  %v1055 = vunpack.c.h.b16 %v258
  %v1056 = vunpack.c.l.b16 %v259
  %v1057 = vunpack.c.h.b16 %v259
  %v1058 = vunpack.c.l.b16 %v260
  %v1059 = vunpack.c.h.b16 %v260
  %v1060 = vunpack.c.l.b16 %v261
  %v1061 = vunpack.c.h.b16 %v261
  %v1062 = vunpack.c.l.b16 %v262
  %v1063 = vunpack.c.h.b16 %v262
  %v1064 = vunpack.c.l.b16 %v263
  %v1065 = vunpack.c.h.b16 %v263
  %v1066 = vunpack.c.l.b16 %v264
  %v1067 = vunpack.c.h.b16 %v264
  %v1068 = vunpack.c.l.b16 %v265
  %v1069 = vunpack.c.h.b16 %v265
  %v1070 = vunpack.c.l.b16 %v266
  %v1071 = vunpack.c.h.b16 %v266
  %v1072 = vunpack.c.l.b16 %v267
  %v1073 = vunpack.c.h.b16 %v267
  %v1074 = vunpack.c.l.b16 %v268
  %v1075 = vunpack.c.h.b16 %v268
  %v1076 = vunpack.c.l.b16 %v269
  %v1077 = vunpack.c.h.b16 %v269
  %v1078 = vunpack.c.l.b16 %v270
  %v1079 = vunpack.c.h.b16 %v270
  %v1080 = vunpack.c.l.b16 %v271
  %v1081 = vunpack.c.h.b16 %v271
  %v1082 = vunpack.c.l.b16 %v272
  %v1083 = vunpack.c.h.b16 %v272
  %v1084 = vunpack.c.l.b16 %v273
  %v1085 = vunpack.c.h.b16 %v273
  %v1086 = vpack.c.b16 %v590, %v574
  %v1087 = vpack.c.b16 %v591, %v575
  %v1088 = vpack.c.b16 %v592, %v576
  %v1089 = vpack.c.b16 %v593, %v577
  %v1090 = vpack.c.b16 %v594, %v578
  %v1091 = vpack.c.b16 %v595, %v579
  %v1092 = vpack.c.b16 %v596, %v580
  %v1093 = vpack.c.b16 %v597, %v581
  %v1094 = vpack.c.b16 %v598, %v582
  %v1095 = vpack.c.b16 %v599, %v583
  %v1096 = vpack.c.b16 %v600, %v584
  %v1097 = vpack.c.b16 %v601, %v585
  %v1098 = vpack.c.b16 %v602, %v586
  %v1099 = vpack.c.b16 %v603, %v587
  %v1100 = vpack.c.b16 %v604, %v588
  %v1101 = vpack.c.b16 %v605, %v589
  %v1102 = vpack.c.b16 %v622, %v606
  %v1103 = vpack.c.b16 %v623, %v607
  %v1104 = vpack.c.b16 %v624, %v608
  %v1105 = vpack.c.b16 %v625, %v609
  %v1106 = vpack.c.b16 %v626, %v610
  %v1107 = vpack.c.b16 %v627, %v611
  %v1108 = vpack.c.b16 %v628, %v612
  %v1109 = vpack.c.b16 %v629, %v613
  %v1110 = vpack.c.b16 %v630, %v614
  %v1111 = vpack.c.b16 %v631, %v615
  %v1112 = vpack.c.b16 %v632, %v616
  %v1113 = vpack.c.b16 %v633, %v617
  %v1114 = vpack.c.b16 %v634, %v618
  %v1115 = vpack.c.b16 %v635, %v619
  %v1116 = vpack.c.b16 %v636, %v620
  %v1117 = vpack.c.b16 %v637, %v621
  %v1118 = vpack.c.b16 %v654, %v638
  %v1119 = vpack.c.b16 %v655, %v639
  %v1120 = vpack.c.b16 %v656, %v640
  %v1121 = vpack.c.b16 %v657, %v641
  %v1122 = vpack.c.b16 %v658, %v642
  %v1123 = vpack.c.b16 %v659, %v643
  %v1124 = vpack.c.b16 %v660, %v644
  %v1125 = vpack.c.b16 %v661, %v645
  %v1126 = vpack.c.b16 %v662, %v646
  %v1127 = vpack.c.b16 %v663, %v647
  %v1128 = vpack.c.b16 %v664, %v648
  %v1129 = vpack.c.b16 %v665, %v649
  %v1130 = vpack.c.b16 %v666, %v650
  %v1131 = vpack.c.b16 %v667, %v651
  %v1132 = vpack.c.b16 %v668, %v652
  %v1133 = vpack.c.b16 %v669, %v653
  %v1134 = vpack.c.b16 %v686, %v670
  %v1135 = vpack.c.b16 %v687, %v671
  %v1136 = vpack.c.b16 %v688, %v672
  %v1137 = vpack.c.b16 %v689, %v673
  %v1138 = vpack.c.b16 %v690, %v674
  %v1139 = vpack.c.b16 %v691, %v675
  %v1140 = vpack.c.b16 %v692, %v676
  %v1141 = vpack.c.b16 %v693, %v677
  %v1142 = vpack.c.b16 %v694, %v678
  %v1143 = vpack.c.b16 %v695, %v679
  %v1144 = vpack.c.b16 %v696, %v680
  %v1145 = vpack.c.b16 %v697, %v681
  %v1146 = vpack.c.b16 %v698, %v682
  %v1147 = vpack.c.b16 %v699, %v683
  %v1148 = vpack.c.b16 %v700, %v684
  %v1149 = vpack.c.b16 %v701, %v685
  %v1150 = vpack.c.b16 %v718, %v702
  %v1151 = vpack.c.b16 %v719, %v703
  %v1152 = vpack.c.b16 %v720, %v704
  %v1153 = vpack.c.b16 %v721, %v705
  %v1154 = vpack.c.b16 %v722, %v706
  %v1155 = vpack.c.b16 %v723, %v707
  %v1156 = vpack.c.b16 %v724, %v708
  %v1157 = vpack.c.b16 %v725, %v709
  %v1158 = vpack.c.b16 %v726, %v710
  %v1159 = vpack.c.b16 %v727, %v711
  %v1160 = vpack.c.b16 %v728, %v712
  %v1161 = vpack.c.b16 %v729, %v713
  %v1162 = vpack.c.b16 %v730, %v714
  %v1163 = vpack.c.b16 %v731, %v715
  %v1164 = vpack.c.b16 %v732, %v716
  %v1165 = vpack.c.b16 %v733, %v717
  %v1166 = vpack.c.b16 %v750, %v734
  %v1167 = vpack.c.b16 %v751, %v735
  %v1168 = vpack.c.b16 %v752, %v736
  %v1169 = vpack.c.b16 %v753, %v737
  %v1170 = vpack.c.b16 %v754, %v738
  %v1171 = vpack.c.b16 %v755, %v739
  %v1172 = vpack.c.b16 %v756, %v740
  %v1173 = vpack.c.b16 %v757, %v741
  %v1174 = vpack.c.b16 %v758, %v742
  %v1175 = vpack.c.b16 %v759, %v743
  %v1176 = vpack.c.b16 %v760, %v744
  %v1177 = vpack.c.b16 %v761, %v745
  %v1178 = vpack.c.b16 %v762, %v746
  %v1179 = vpack.c.b16 %v763, %v747
  %v1180 = vpack.c.b16 %v764, %v748
  %v1181 = vpack.c.b16 %v765, %v749
  %v1182 = vpack.c.b16 %v782, %v766
  %v1183 = vpack.c.b16 %v783, %v767
  %v1184 = vpack.c.b16 %v784, %v768
  %v1185 = vpack.c.b16 %v785, %v769
  %v1186 = vpack.c.b16 %v786, %v770
  %v1187 = vpack.c.b16 %v787, %v771
  %v1188 = vpack.c.b16 %v788, %v772
  %v1189 = vpack.c.b16 %v789, %v773
  %v1190 = vpack.c.b16 %v790, %v774
  %v1191 = vpack.c.b16 %v791, %v775
  %v1192 = vpack.c.b16 %v792, %v776
  %v1193 = vpack.c.b16 %v793, %v777
  %v1194 = vpack.c.b16 %v794, %v778
  %v1195 = vpack.c.b16 %v795, %v779
  %v1196 = vpack.c.b16 %v796, %v780
  %v1197 = vpack.c.b16 %v797, %v781
  %v1198 = vpack.c.b16 %v814, %v798
  %v1199 = vpack.c.b16 %v815, %v799
  %v1200 = vpack.c.b16 %v816, %v800
  %v1201 = vpack.c.b16 %v817, %v801
  %v1202 = vpack.c.b16 %v818, %v802
  %v1203 = vpack.c.b16 %v819, %v803
  %v1204 = vpack.c.b16 %v820, %v804
  %v1205 = vpack.c.b16 %v821, %v805
  %v1206 = vpack.c.b16 %v822, %v806
  %v1207 = vpack.c.b16 %v823, %v807
  %v1208 = vpack.c.b16 %v824, %v808
  %v1209 = vpack.c.b16 %v825, %v809
  %v1210 = vpack.c.b16 %v826, %v810
  %v1211 = vpack.c.b16 %v827, %v811
  %v1212 = vpack.c.b16 %v828, %v812
  %v1213 = vpack.c.b16 %v829, %v813
  %v1214 = vpack.c.b16 %v846, %v830
  %v1215 = vpack.c.b16 %v847, %v831
  %v1216 = vpack.c.b16 %v848, %v832
  %v1217 = vpack.c.b16 %v849, %v833
  %v1218 = vpack.c.b16 %v850, %v834
  %v1219 = vpack.c.b16 %v851, %v835
  %v1220 = vpack.c.b16 %v852, %v836
  %v1221 = vpack.c.b16 %v853, %v837
  %v1222 = vpack.c.b16 %v854, %v838
  %v1223 = vpack.c.b16 %v855, %v839
  %v1224 = vpack.c.b16 %v856, %v840
  %v1225 = vpack.c.b16 %v857, %v841
  %v1226 = vpack.c.b16 %v858, %v842
  %v1227 = vpack.c.b16 %v859, %v843
  %v1228 = vpack.c.b16 %v860, %v844
  %v1229 = vpack.c.b16 %v861, %v845
  %v1230 = vpack.c.b16 %v878, %v862
  %v1231 = vpack.c.b16 %v879, %v863
  %v1232 = vpack.c.b16 %v880, %v864
  %v1233 = vpack.c.b16 %v881, %v865
  %v1234 = vpack.c.b16 %v882, %v866
  %v1235 = vpack.c.b16 %v883, %v867
  %v1236 = vpack.c.b16 %v884, %v868
  %v1237 = vpack.c.b16 %v885, %v869
  %v1238 = vpack.c.b16 %v886, %v870
  %v1239 = vpack.c.b16 %v887, %v871
  %v1240 = vpack.c.b16 %v888, %v872
  %v1241 = vpack.c.b16 %v889, %v873
  %v1242 = vpack.c.b16 %v890, %v874
  %v1243 = vpack.c.b16 %v891, %v875
  %v1244 = vpack.c.b16 %v892, %v876
  %v1245 = vpack.c.b16 %v893, %v877
  %v1246 = vpack.c.b16 %v910, %v894
  %v1247 = vpack.c.b16 %v911, %v895
  %v1248 = vpack.c.b16 %v912, %v896
  %v1249 = vpack.c.b16 %v913, %v897
  %v1250 = vpack.c.b16 %v914, %v898
  %v1251 = vpack.c.b16 %v915, %v899
  %v1252 = vpack.c.b16 %v916, %v900
  %v1253 = vpack.c.b16 %v917, %v901
  %v1254 = vpack.c.b16 %v918, %v902
  %v1255 = vpack.c.b16 %v919, %v903
  %v1256 = vpack.c.b16 %v920, %v904
  %v1257 = vpack.c.b16 %v921, %v905
  %v1258 = vpack.c.b16 %v922, %v906
  %v1259 = vpack.c.b16 %v923, %v907
  %v1260 = vpack.c.b16 %v924, %v908
  %v1261 = vpack.c.b16 %v925, %v909
  %v1262 = vpack.c.b16 %v942, %v926
  %v1263 = vpack.c.b16 %v943, %v927
  %v1264 = vpack.c.b16 %v944, %v928
  %v1265 = vpack.c.b16 %v945, %v929
  %v1266 = vpack.c.b16 %v946, %v930
  %v1267 = vpack.c.b16 %v947, %v931
  %v1268 = vpack.c.b16 %v948, %v932
  %v1269 = vpack.c.b16 %v949, %v933
  %v1270 = vpack.c.b16 %v950, %v934
  %v1271 = vpack.c.b16 %v951, %v935
  %v1272 = vpack.c.b16 %v952, %v936
  %v1273 = vpack.c.b16 %v953, %v937
  %v1274 = vpack.c.b16 %v954, %v938
  %v1275 = vpack.c.b16 %v955, %v939
  %v1276 = vpack.c.b16 %v956, %v940
  %v1277 = vpack.c.b16 %v957, %v941
  %v1278 = vpack.c.b16 %v974, %v958
  %v1279 = vpack.c.b16 %v975, %v959
  %v1280 = vpack.c.b16 %v976, %v960
  %v1281 = vpack.c.b16 %v977, %v961
  %v1282 = vpack.c.b16 %v978, %v962
  %v1283 = vpack.c.b16 %v979, %v963
  %v1284 = vpack.c.b16 %v980, %v964
  %v1285 = vpack.c.b16 %v981, %v965
  %v1286 = vpack.c.b16 %v982, %v966
  %v1287 = vpack.c.b16 %v983, %v967
  %v1288 = vpack.c.b16 %v984, %v968
  %v1289 = vpack.c.b16 %v985, %v969
  %v1290 = vpack.c.b16 %v986, %v970
  %v1291 = vpack.c.b16 %v987, %v971
  %v1292 = vpack.c.b16 %v988, %v972
  %v1293 = vpack.c.b16 %v989, %v973
  %v1294 = vpack.c.b16 %v1006, %v990
  %v1295 = vpack.c.b16 %v1007, %v991
  %v1296 = vpack.c.b16 %v1008, %v992
  %v1297 = vpack.c.b16 %v1009, %v993
  %v1298 = vpack.c.b16 %v1010, %v994
  %v1299 = vpack.c.b16 %v1011, %v995
  %v1300 = vpack.c.b16 %v1012, %v996
  %v1301 = vpack.c.b16 %v1013, %v997
  %v1302 = vpack.c.b16 %v1014, %v998
  %v1303 = vpack.c.b16 %v1015, %v999
  %v1304 = vpack.c.b16 %v1016, %v1000
  %v1305 = vpack.c.b16 %v1017, %v1001
  %v1306 = vpack.c.b16 %v1018, %v1002
  %v1307 = vpack.c.b16 %v1019, %v1003
  %v1308 = vpack.c.b16 %v1020, %v1004
  %v1309 = vpack.c.b16 %v1021, %v1005
  %v1310 = vpack.c.b16 %v1038, %v1022
  %v1311 = vpack.c.b16 %v1039, %v1023
  %v1312 = vpack.c.b16 %v1040, %v1024
  %v1313 = vpack.c.b16 %v1041, %v1025
  %v1314 = vpack.c.b16 %v1042, %v1026
  %v1315 = vpack.c.b16 %v1043, %v1027
  %v1316 = vpack.c.b16 %v1044, %v1028
  %v1317 = vpack.c.b16 %v1045, %v1029
  %v1318 = vpack.c.b16 %v1046, %v1030
  %v1319 = vpack.c.b16 %v1047, %v1031
  %v1320 = vpack.c.b16 %v1048, %v1032
  %v1321 = vpack.c.b16 %v1049, %v1033
  %v1322 = vpack.c.b16 %v1050, %v1034
  %v1323 = vpack.c.b16 %v1051, %v1035
  %v1324 = vpack.c.b16 %v1052, %v1036
  %v1325 = vpack.c.b16 %v1053, %v1037
  %v1326 = vpack.c.b16 %v1070, %v1054
  %v1327 = vpack.c.b16 %v1071, %v1055
  %v1328 = vpack.c.b16 %v1072, %v1056
  %v1329 = vpack.c.b16 %v1073, %v1057
  %v1330 = vpack.c.b16 %v1074, %v1058
  %v1331 = vpack.c.b16 %v1075, %v1059
  %v1332 = vpack.c.b16 %v1076, %v1060
  %v1333 = vpack.c.b16 %v1077, %v1061
  %v1334 = vpack.c.b16 %v1078, %v1062
  %v1335 = vpack.c.b16 %v1079, %v1063
  %v1336 = vpack.c.b16 %v1080, %v1064
  %v1337 = vpack.c.b16 %v1081, %v1065
  %v1338 = vpack.c.b16 %v1082, %v1066
  %v1339 = vpack.c.b16 %v1083, %v1067
  %v1340 = vpack.c.b16 %v1084, %v1068
  %v1341 = vpack.c.b16 %v1085, %v1069
  %1598 = vmatpush.bf16.msra.mxu0 %v1198
  %1599 = vmatpush.bf16.msra.mxu0 %v1182
  %1600 = vmatpush.bf16.msra.mxu0 %v1166
  %1601 = vmatpush.bf16.msra.mxu0 %v1150
  %1602 = vmatpush.bf16.msra.mxu0 %v1134
  %1603 = vmatpush.bf16.msra.mxu0 %v1118
  %1604 = vmatpush.bf16.msra.mxu0 %v1102
  %1605 = vmatpush.bf16.msra.mxu0 %v1086
  %1606 = vmatmul.bf16.gmra.mxu0 %v310
  %v1607 = vpop.f32.mrf.mxu0
  %v1608 = vadd.f32 %v281, %v1607
  %v1609 = vpop.f32.mrf.mxu0
  %v1610 = vadd.f32 %v286, %v1609
  %1611 = vmatmul.bf16.gmra.mxu0 %v312
  %v1612 = vpop.f32.mrf.mxu0
  %v1613 = vadd.f32 %v291, %v1612
  %v1614 = vpop.f32.mrf.mxu0
  %v1615 = vadd.f32 %v296, %v1614
  %1616 = vdwg.mxu0
  %1617 = vmatpush.bf16.msra.mxu0 %v1326
  %1618 = vmatpush.bf16.msra.mxu0 %v1310
  %1619 = vmatpush.bf16.msra.mxu0 %v1294
  %1620 = vmatpush.bf16.msra.mxu0 %v1278
  %1621 = vmatpush.bf16.msra.mxu0 %v1262
  %1622 = vmatpush.bf16.msra.mxu0 %v1246
  %1623 = vmatpush.bf16.msra.mxu0 %v1230
  %1624 = vmatpush.bf16.msra.mxu0 %v1214
  %1625 = vmatmul.bf16.gmra.mxu0 %v311
  %v1626 = vpop.f32.mrf.mxu0
  %v1627 = vadd.f32 %v1608, %v1626
  %v1628 = vpop.f32.mrf.mxu0
  %v1629 = vadd.f32 %v1610, %v1628
  %1630 = vmatmul.bf16.gmra.mxu0 %v313
  %v1631 = vpop.f32.mrf.mxu0
  %v1632 = vadd.f32 %v1613, %v1631
  %v1633 = vpop.f32.mrf.mxu0
  %v1634 = vadd.f32 %v1615, %v1633
  %1635 = vdwg.mxu0
  %1636 = vmatpush.bf16.msra.mxu0 %v1199
  %1637 = vmatpush.bf16.msra.mxu0 %v1183
  %1638 = vmatpush.bf16.msra.mxu0 %v1167
  %1639 = vmatpush.bf16.msra.mxu0 %v1151
  %1640 = vmatpush.bf16.msra.mxu0 %v1135
  %1641 = vmatpush.bf16.msra.mxu0 %v1119
  %1642 = vmatpush.bf16.msra.mxu0 %v1103
  %1643 = vmatpush.bf16.msra.mxu0 %v1087
  %1644 = vmatmul.bf16.gmra.mxu0 %v310
  %v1645 = vpop.f32.mrf.mxu0
  %v1646 = vadd.f32 %v281, %v1645
  %v1647 = vpop.f32.mrf.mxu0
  %v1648 = vadd.f32 %v286, %v1647
  %1649 = vmatmul.bf16.gmra.mxu0 %v312
  %v1650 = vpop.f32.mrf.mxu0
  %v1651 = vadd.f32 %v291, %v1650
  %v1652 = vpop.f32.mrf.mxu0
  %v1653 = vadd.f32 %v296, %v1652
  %1654 = vdwg.mxu0
  %1655 = vmatpush.bf16.msra.mxu0 %v1327
  %1656 = vmatpush.bf16.msra.mxu0 %v1311
  %1657 = vmatpush.bf16.msra.mxu0 %v1295
  %1658 = vmatpush.bf16.msra.mxu0 %v1279
  %1659 = vmatpush.bf16.msra.mxu0 %v1263
  %1660 = vmatpush.bf16.msra.mxu0 %v1247
  %1661 = vmatpush.bf16.msra.mxu0 %v1231
  %1662 = vmatpush.bf16.msra.mxu0 %v1215
  %1663 = vmatmul.bf16.gmra.mxu0 %v311
  %v1664 = vpop.f32.mrf.mxu0
  %v1665 = vadd.f32 %v1646, %v1664
  %v1666 = vpop.f32.mrf.mxu0
  %v1667 = vadd.f32 %v1648, %v1666
  %1668 = vmatmul.bf16.gmra.mxu0 %v313
  %v1669 = vpop.f32.mrf.mxu0
  %v1670 = vadd.f32 %v1651, %v1669
  %v1671 = vpop.f32.mrf.mxu0
  %v1672 = vadd.f32 %v1653, %v1671
  %1673 = vdwg.mxu0
  %1674 = vmatpush.bf16.msra.mxu0 %v1200
  %1675 = vmatpush.bf16.msra.mxu0 %v1184
  %1676 = vmatpush.bf16.msra.mxu0 %v1168
  %1677 = vmatpush.bf16.msra.mxu0 %v1152
  %1678 = vmatpush.bf16.msra.mxu0 %v1136
  %1679 = vmatpush.bf16.msra.mxu0 %v1120
  %1680 = vmatpush.bf16.msra.mxu0 %v1104
  %1681 = vmatpush.bf16.msra.mxu0 %v1088
  %1682 = vmatmul.bf16.gmra.mxu0 %v310
  %v1683 = vpop.f32.mrf.mxu0
  %v1684 = vadd.f32 %v281, %v1683
  %v1685 = vpop.f32.mrf.mxu0
  %v1686 = vadd.f32 %v286, %v1685
  %1687 = vmatmul.bf16.gmra.mxu0 %v312
  %v1688 = vpop.f32.mrf.mxu0
  %v1689 = vadd.f32 %v291, %v1688
  %v1690 = vpop.f32.mrf.mxu0
  %v1691 = vadd.f32 %v296, %v1690
  %1692 = vdwg.mxu0
  %1693 = vmatpush.bf16.msra.mxu0 %v1328
  %1694 = vmatpush.bf16.msra.mxu0 %v1312
  %1695 = vmatpush.bf16.msra.mxu0 %v1296
  %1696 = vmatpush.bf16.msra.mxu0 %v1280
  %1697 = vmatpush.bf16.msra.mxu0 %v1264
  %1698 = vmatpush.bf16.msra.mxu0 %v1248
  %1699 = vmatpush.bf16.msra.mxu0 %v1232
  %1700 = vmatpush.bf16.msra.mxu0 %v1216
  %1701 = vmatmul.bf16.gmra.mxu0 %v311
  %v1702 = vpop.f32.mrf.mxu0
  %v1703 = vadd.f32 %v1684, %v1702
  %v1704 = vpop.f32.mrf.mxu0
  %v1705 = vadd.f32 %v1686, %v1704
  %1706 = vmatmul.bf16.gmra.mxu0 %v313
  %v1707 = vpop.f32.mrf.mxu0
  %v1708 = vadd.f32 %v1689, %v1707
  %v1709 = vpop.f32.mrf.mxu0
  %v1710 = vadd.f32 %v1691, %v1709
  %1711 = vdwg.mxu0
  %1712 = vmatpush.bf16.msra.mxu0 %v1201
  %1713 = vmatpush.bf16.msra.mxu0 %v1185
  %1714 = vmatpush.bf16.msra.mxu0 %v1169
  %1715 = vmatpush.bf16.msra.mxu0 %v1153
  %1716 = vmatpush.bf16.msra.mxu0 %v1137
  %1717 = vmatpush.bf16.msra.mxu0 %v1121
  %1718 = vmatpush.bf16.msra.mxu0 %v1105
  %1719 = vmatpush.bf16.msra.mxu0 %v1089
  %1720 = vmatmul.bf16.gmra.mxu0 %v310
  %v1721 = vpop.f32.mrf.mxu0
  %v1722 = vadd.f32 %v281, %v1721
  %v1723 = vpop.f32.mrf.mxu0
  %v1724 = vadd.f32 %v286, %v1723
  %1725 = vmatmul.bf16.gmra.mxu0 %v312
  %v1726 = vpop.f32.mrf.mxu0
  %v1727 = vadd.f32 %v291, %v1726
  %v1728 = vpop.f32.mrf.mxu0
  %v1729 = vadd.f32 %v296, %v1728
  %1730 = vdwg.mxu0
  %1731 = vmatpush.bf16.msra.mxu0 %v1329
  %1732 = vmatpush.bf16.msra.mxu0 %v1313
  %1733 = vmatpush.bf16.msra.mxu0 %v1297
  %1734 = vmatpush.bf16.msra.mxu0 %v1281
  %1735 = vmatpush.bf16.msra.mxu0 %v1265
  %1736 = vmatpush.bf16.msra.mxu0 %v1249
  %1737 = vmatpush.bf16.msra.mxu0 %v1233
  %1738 = vmatpush.bf16.msra.mxu0 %v1217
  %1739 = vmatmul.bf16.gmra.mxu0 %v311
  %v1740 = vpop.f32.mrf.mxu0
  %v1741 = vadd.f32 %v1722, %v1740
  %v1742 = vpop.f32.mrf.mxu0
  %v1743 = vadd.f32 %v1724, %v1742
  %1744 = vmatmul.bf16.gmra.mxu0 %v313
  %v1745 = vpop.f32.mrf.mxu0
  %v1746 = vadd.f32 %v1727, %v1745
  %v1747 = vpop.f32.mrf.mxu0
  %v1748 = vadd.f32 %v1729, %v1747
  %1749 = vdwg.mxu0
  %1750 = vmatpush.bf16.msra.mxu0 %v1202
  %1751 = vmatpush.bf16.msra.mxu0 %v1186
  %1752 = vmatpush.bf16.msra.mxu0 %v1170
  %1753 = vmatpush.bf16.msra.mxu0 %v1154
  %1754 = vmatpush.bf16.msra.mxu0 %v1138
  %1755 = vmatpush.bf16.msra.mxu0 %v1122
  %1756 = vmatpush.bf16.msra.mxu0 %v1106
  %1757 = vmatpush.bf16.msra.mxu0 %v1090
  %1758 = vmatmul.bf16.gmra.mxu0 %v310
  %v1759 = vpop.f32.mrf.mxu0
  %v1760 = vadd.f32 %v281, %v1759
  %v1761 = vpop.f32.mrf.mxu0
  %v1762 = vadd.f32 %v286, %v1761
  %1763 = vmatmul.bf16.gmra.mxu0 %v312
  %v1764 = vpop.f32.mrf.mxu0
  %v1765 = vadd.f32 %v291, %v1764
  %v1766 = vpop.f32.mrf.mxu0
  %v1767 = vadd.f32 %v296, %v1766
  %1768 = vdwg.mxu0
  %1769 = vmatpush.bf16.msra.mxu0 %v1330
  %1770 = vmatpush.bf16.msra.mxu0 %v1314
  %1771 = vmatpush.bf16.msra.mxu0 %v1298
  %1772 = vmatpush.bf16.msra.mxu0 %v1282
  %1773 = vmatpush.bf16.msra.mxu0 %v1266
  %1774 = vmatpush.bf16.msra.mxu0 %v1250
  %1775 = vmatpush.bf16.msra.mxu0 %v1234
  %1776 = vmatpush.bf16.msra.mxu0 %v1218
  %1777 = vmatmul.bf16.gmra.mxu0 %v311
  %v1778 = vpop.f32.mrf.mxu0
  %v1779 = vadd.f32 %v1760, %v1778
  %v1780 = vpop.f32.mrf.mxu0
  %v1781 = vadd.f32 %v1762, %v1780
  %1782 = vmatmul.bf16.gmra.mxu0 %v313
  %v1783 = vpop.f32.mrf.mxu0
  %v1784 = vadd.f32 %v1765, %v1783
  %v1785 = vpop.f32.mrf.mxu0
  %v1786 = vadd.f32 %v1767, %v1785
  %1787 = vdwg.mxu0
  %1788 = vmatpush.bf16.msra.mxu0 %v1203
  %1789 = vmatpush.bf16.msra.mxu0 %v1187
  %1790 = vmatpush.bf16.msra.mxu0 %v1171
  %1791 = vmatpush.bf16.msra.mxu0 %v1155
  %1792 = vmatpush.bf16.msra.mxu0 %v1139
  %1793 = vmatpush.bf16.msra.mxu0 %v1123
  %1794 = vmatpush.bf16.msra.mxu0 %v1107
  %1795 = vmatpush.bf16.msra.mxu0 %v1091
  %1796 = vmatmul.bf16.gmra.mxu0 %v310
  %v1797 = vpop.f32.mrf.mxu0
  %v1798 = vadd.f32 %v281, %v1797
  %v1799 = vpop.f32.mrf.mxu0
  %v1800 = vadd.f32 %v286, %v1799
  %1801 = vmatmul.bf16.gmra.mxu0 %v312
  %v1802 = vpop.f32.mrf.mxu0
  %v1803 = vadd.f32 %v291, %v1802
  %v1804 = vpop.f32.mrf.mxu0
  %v1805 = vadd.f32 %v296, %v1804
  %1806 = vdwg.mxu0
  %1807 = vmatpush.bf16.msra.mxu0 %v1331
  %1808 = vmatpush.bf16.msra.mxu0 %v1315
  %1809 = vmatpush.bf16.msra.mxu0 %v1299
  %1810 = vmatpush.bf16.msra.mxu0 %v1283
  %1811 = vmatpush.bf16.msra.mxu0 %v1267
  %1812 = vmatpush.bf16.msra.mxu0 %v1251
  %1813 = vmatpush.bf16.msra.mxu0 %v1235
  %1814 = vmatpush.bf16.msra.mxu0 %v1219
  %1815 = vmatmul.bf16.gmra.mxu0 %v311
  %v1816 = vpop.f32.mrf.mxu0
  %v1817 = vadd.f32 %v1798, %v1816
  %v1818 = vpop.f32.mrf.mxu0
  %v1819 = vadd.f32 %v1800, %v1818
  %1820 = vmatmul.bf16.gmra.mxu0 %v313
  %v1821 = vpop.f32.mrf.mxu0
  %v1822 = vadd.f32 %v1803, %v1821
  %v1823 = vpop.f32.mrf.mxu0
  %v1824 = vadd.f32 %v1805, %v1823
  %1825 = vdwg.mxu0
  %1826 = vmatpush.bf16.msra.mxu0 %v1204
  %1827 = vmatpush.bf16.msra.mxu0 %v1188
  %1828 = vmatpush.bf16.msra.mxu0 %v1172
  %1829 = vmatpush.bf16.msra.mxu0 %v1156
  %1830 = vmatpush.bf16.msra.mxu0 %v1140
  %1831 = vmatpush.bf16.msra.mxu0 %v1124
  %1832 = vmatpush.bf16.msra.mxu0 %v1108
  %1833 = vmatpush.bf16.msra.mxu0 %v1092
  %1834 = vmatmul.bf16.gmra.mxu0 %v310
  %v1835 = vpop.f32.mrf.mxu0
  %v1836 = vadd.f32 %v281, %v1835
  %v1837 = vpop.f32.mrf.mxu0
  %v1838 = vadd.f32 %v286, %v1837
  %1839 = vmatmul.bf16.gmra.mxu0 %v312
  %v1840 = vpop.f32.mrf.mxu0
  %v1841 = vadd.f32 %v291, %v1840
  %v1842 = vpop.f32.mrf.mxu0
  %v1843 = vadd.f32 %v296, %v1842
  %1844 = vdwg.mxu0
  %1845 = vmatpush.bf16.msra.mxu0 %v1332
  %1846 = vmatpush.bf16.msra.mxu0 %v1316
  %1847 = vmatpush.bf16.msra.mxu0 %v1300
  %1848 = vmatpush.bf16.msra.mxu0 %v1284
  %1849 = vmatpush.bf16.msra.mxu0 %v1268
  %1850 = vmatpush.bf16.msra.mxu0 %v1252
  %1851 = vmatpush.bf16.msra.mxu0 %v1236
  %1852 = vmatpush.bf16.msra.mxu0 %v1220
  %1853 = vmatmul.bf16.gmra.mxu0 %v311
  %v1854 = vpop.f32.mrf.mxu0
  %v1855 = vadd.f32 %v1836, %v1854
  %v1856 = vpop.f32.mrf.mxu0
  %v1857 = vadd.f32 %v1838, %v1856
  %1858 = vmatmul.bf16.gmra.mxu0 %v313
  %v1859 = vpop.f32.mrf.mxu0
  %v1860 = vadd.f32 %v1841, %v1859
  %v1861 = vpop.f32.mrf.mxu0
  %v1862 = vadd.f32 %v1843, %v1861
  %1863 = vdwg.mxu0
  %1864 = vmatpush.bf16.msra.mxu0 %v1205
  %1865 = vmatpush.bf16.msra.mxu0 %v1189
  %1866 = vmatpush.bf16.msra.mxu0 %v1173
  %1867 = vmatpush.bf16.msra.mxu0 %v1157
  %1868 = vmatpush.bf16.msra.mxu0 %v1141
  %1869 = vmatpush.bf16.msra.mxu0 %v1125
  %1870 = vmatpush.bf16.msra.mxu0 %v1109
  %1871 = vmatpush.bf16.msra.mxu0 %v1093
  %1872 = vmatmul.bf16.gmra.mxu0 %v310
  %v1873 = vpop.f32.mrf.mxu0
  %v1874 = vadd.f32 %v281, %v1873
  %v1875 = vpop.f32.mrf.mxu0
  %v1876 = vadd.f32 %v286, %v1875
  %1877 = vmatmul.bf16.gmra.mxu0 %v312
  %v1878 = vpop.f32.mrf.mxu0
  %v1879 = vadd.f32 %v291, %v1878
  %v1880 = vpop.f32.mrf.mxu0
  %v1881 = vadd.f32 %v296, %v1880
  %1882 = vdwg.mxu0
  %1883 = vmatpush.bf16.msra.mxu0 %v1333
  %1884 = vmatpush.bf16.msra.mxu0 %v1317
  %1885 = vmatpush.bf16.msra.mxu0 %v1301
  %1886 = vmatpush.bf16.msra.mxu0 %v1285
  %1887 = vmatpush.bf16.msra.mxu0 %v1269
  %1888 = vmatpush.bf16.msra.mxu0 %v1253
  %1889 = vmatpush.bf16.msra.mxu0 %v1237
  %1890 = vmatpush.bf16.msra.mxu0 %v1221
  %1891 = vmatmul.bf16.gmra.mxu0 %v311
  %v1892 = vpop.f32.mrf.mxu0
  %v1893 = vadd.f32 %v1874, %v1892
  %v1894 = vpop.f32.mrf.mxu0
  %v1895 = vadd.f32 %v1876, %v1894
  %1896 = vmatmul.bf16.gmra.mxu0 %v313
  %v1897 = vpop.f32.mrf.mxu0
  %v1898 = vadd.f32 %v1879, %v1897
  %v1899 = vpop.f32.mrf.mxu0
  %v1900 = vadd.f32 %v1881, %v1899
  %1901 = vdwg.mxu0
  %1902 = vmatpush.bf16.msra.mxu0 %v1206
  %1903 = vmatpush.bf16.msra.mxu0 %v1190
  %1904 = vmatpush.bf16.msra.mxu0 %v1174
  %1905 = vmatpush.bf16.msra.mxu0 %v1158
  %1906 = vmatpush.bf16.msra.mxu0 %v1142
  %1907 = vmatpush.bf16.msra.mxu0 %v1126
  %1908 = vmatpush.bf16.msra.mxu0 %v1110
  %1909 = vmatpush.bf16.msra.mxu0 %v1094
  %1910 = vmatmul.bf16.gmra.mxu0 %v310
  %v1911 = vpop.f32.mrf.mxu0
  %v1912 = vadd.f32 %v281, %v1911
  %v1913 = vpop.f32.mrf.mxu0
  %v1914 = vadd.f32 %v286, %v1913
  %1915 = vmatmul.bf16.gmra.mxu0 %v312
  %v1916 = vpop.f32.mrf.mxu0
  %v1917 = vadd.f32 %v291, %v1916
  %v1918 = vpop.f32.mrf.mxu0
  %v1919 = vadd.f32 %v296, %v1918
  %1920 = vdwg.mxu0
  %1921 = vmatpush.bf16.msra.mxu0 %v1334
  %1922 = vmatpush.bf16.msra.mxu0 %v1318
  %1923 = vmatpush.bf16.msra.mxu0 %v1302
  %1924 = vmatpush.bf16.msra.mxu0 %v1286
  %1925 = vmatpush.bf16.msra.mxu0 %v1270
  %1926 = vmatpush.bf16.msra.mxu0 %v1254
  %1927 = vmatpush.bf16.msra.mxu0 %v1238
  %1928 = vmatpush.bf16.msra.mxu0 %v1222
  %1929 = vmatmul.bf16.gmra.mxu0 %v311
  %v1930 = vpop.f32.mrf.mxu0
  %v1931 = vadd.f32 %v1912, %v1930
  %v1932 = vpop.f32.mrf.mxu0
  %v1933 = vadd.f32 %v1914, %v1932
  %1934 = vmatmul.bf16.gmra.mxu0 %v313
  %v1935 = vpop.f32.mrf.mxu0
  %v1936 = vadd.f32 %v1917, %v1935
  %v1937 = vpop.f32.mrf.mxu0
  %v1938 = vadd.f32 %v1919, %v1937
  %1939 = vdwg.mxu0
  %1940 = vmatpush.bf16.msra.mxu0 %v1207
  %1941 = vmatpush.bf16.msra.mxu0 %v1191
  %1942 = vmatpush.bf16.msra.mxu0 %v1175
  %1943 = vmatpush.bf16.msra.mxu0 %v1159
  %1944 = vmatpush.bf16.msra.mxu0 %v1143
  %1945 = vmatpush.bf16.msra.mxu0 %v1127
  %1946 = vmatpush.bf16.msra.mxu0 %v1111
  %1947 = vmatpush.bf16.msra.mxu0 %v1095
  %1948 = vmatmul.bf16.gmra.mxu0 %v310
  %v1949 = vpop.f32.mrf.mxu0
  %v1950 = vadd.f32 %v281, %v1949
  %v1951 = vpop.f32.mrf.mxu0
  %v1952 = vadd.f32 %v286, %v1951
  %1953 = vmatmul.bf16.gmra.mxu0 %v312
  %v1954 = vpop.f32.mrf.mxu0
  %v1955 = vadd.f32 %v291, %v1954
  %v1956 = vpop.f32.mrf.mxu0
  %v1957 = vadd.f32 %v296, %v1956
  %1958 = vdwg.mxu0
  %1959 = vmatpush.bf16.msra.mxu0 %v1335
  %1960 = vmatpush.bf16.msra.mxu0 %v1319
  %1961 = vmatpush.bf16.msra.mxu0 %v1303
  %1962 = vmatpush.bf16.msra.mxu0 %v1287
  %1963 = vmatpush.bf16.msra.mxu0 %v1271
  %1964 = vmatpush.bf16.msra.mxu0 %v1255
  %1965 = vmatpush.bf16.msra.mxu0 %v1239
  %1966 = vmatpush.bf16.msra.mxu0 %v1223
  %1967 = vmatmul.bf16.gmra.mxu0 %v311
  %v1968 = vpop.f32.mrf.mxu0
  %v1969 = vadd.f32 %v1950, %v1968
  %v1970 = vpop.f32.mrf.mxu0
  %v1971 = vadd.f32 %v1952, %v1970
  %1972 = vmatmul.bf16.gmra.mxu0 %v313
  %v1973 = vpop.f32.mrf.mxu0
  %v1974 = vadd.f32 %v1955, %v1973
  %v1975 = vpop.f32.mrf.mxu0
  %v1976 = vadd.f32 %v1957, %v1975
  %1977 = vdwg.mxu0
  %1978 = vmatpush.bf16.msra.mxu0 %v1208
  %1979 = vmatpush.bf16.msra.mxu0 %v1192
  %1980 = vmatpush.bf16.msra.mxu0 %v1176
  %1981 = vmatpush.bf16.msra.mxu0 %v1160
  %1982 = vmatpush.bf16.msra.mxu0 %v1144
  %1983 = vmatpush.bf16.msra.mxu0 %v1128
  %1984 = vmatpush.bf16.msra.mxu0 %v1112
  %1985 = vmatpush.bf16.msra.mxu0 %v1096
  %1986 = vmatmul.bf16.gmra.mxu0 %v310
  %v1987 = vpop.f32.mrf.mxu0
  %v1988 = vadd.f32 %v281, %v1987
  %v1989 = vpop.f32.mrf.mxu0
  %v1990 = vadd.f32 %v286, %v1989
  %1991 = vmatmul.bf16.gmra.mxu0 %v312
  %v1992 = vpop.f32.mrf.mxu0
  %v1993 = vadd.f32 %v291, %v1992
  %v1994 = vpop.f32.mrf.mxu0
  %v1995 = vadd.f32 %v296, %v1994
  %1996 = vdwg.mxu0
  %1997 = vmatpush.bf16.msra.mxu0 %v1336
  %1998 = vmatpush.bf16.msra.mxu0 %v1320
  %1999 = vmatpush.bf16.msra.mxu0 %v1304
  %2000 = vmatpush.bf16.msra.mxu0 %v1288
  %2001 = vmatpush.bf16.msra.mxu0 %v1272
  %2002 = vmatpush.bf16.msra.mxu0 %v1256
  %2003 = vmatpush.bf16.msra.mxu0 %v1240
  %2004 = vmatpush.bf16.msra.mxu0 %v1224
  %2005 = vmatmul.bf16.gmra.mxu0 %v311
  %v2006 = vpop.f32.mrf.mxu0
  %v2007 = vadd.f32 %v1988, %v2006
  %v2008 = vpop.f32.mrf.mxu0
  %v2009 = vadd.f32 %v1990, %v2008
  %2010 = vmatmul.bf16.gmra.mxu0 %v313
  %v2011 = vpop.f32.mrf.mxu0
  %v2012 = vadd.f32 %v1993, %v2011
  %v2013 = vpop.f32.mrf.mxu0
  %v2014 = vadd.f32 %v1995, %v2013
  %2015 = vdwg.mxu0
  %2016 = vmatpush.bf16.msra.mxu0 %v1209
  %2017 = vmatpush.bf16.msra.mxu0 %v1193
  %2018 = vmatpush.bf16.msra.mxu0 %v1177
  %2019 = vmatpush.bf16.msra.mxu0 %v1161
  %2020 = vmatpush.bf16.msra.mxu0 %v1145
  %2021 = vmatpush.bf16.msra.mxu0 %v1129
  %2022 = vmatpush.bf16.msra.mxu0 %v1113
  %2023 = vmatpush.bf16.msra.mxu0 %v1097
  %2024 = vmatmul.bf16.gmra.mxu0 %v310
  %v2025 = vpop.f32.mrf.mxu0
  %v2026 = vadd.f32 %v281, %v2025
  %v2027 = vpop.f32.mrf.mxu0
  %v2028 = vadd.f32 %v286, %v2027
  %2029 = vmatmul.bf16.gmra.mxu0 %v312
  %v2030 = vpop.f32.mrf.mxu0
  %v2031 = vadd.f32 %v291, %v2030
  %v2032 = vpop.f32.mrf.mxu0
  %v2033 = vadd.f32 %v296, %v2032
  %2034 = vdwg.mxu0
  %2035 = vmatpush.bf16.msra.mxu0 %v1337
  %2036 = vmatpush.bf16.msra.mxu0 %v1321
  %2037 = vmatpush.bf16.msra.mxu0 %v1305
  %2038 = vmatpush.bf16.msra.mxu0 %v1289
  %2039 = vmatpush.bf16.msra.mxu0 %v1273
  %2040 = vmatpush.bf16.msra.mxu0 %v1257
  %2041 = vmatpush.bf16.msra.mxu0 %v1241
  %2042 = vmatpush.bf16.msra.mxu0 %v1225
  %2043 = vmatmul.bf16.gmra.mxu0 %v311
  %v2044 = vpop.f32.mrf.mxu0
  %v2045 = vadd.f32 %v2026, %v2044
  %v2046 = vpop.f32.mrf.mxu0
  %v2047 = vadd.f32 %v2028, %v2046
  %2048 = vmatmul.bf16.gmra.mxu0 %v313
  %v2049 = vpop.f32.mrf.mxu0
  %v2050 = vadd.f32 %v2031, %v2049
  %v2051 = vpop.f32.mrf.mxu0
  %v2052 = vadd.f32 %v2033, %v2051
  %2053 = vdwg.mxu0
  %2054 = vmatpush.bf16.msra.mxu0 %v1210
  %2055 = vmatpush.bf16.msra.mxu0 %v1194
  %2056 = vmatpush.bf16.msra.mxu0 %v1178
  %2057 = vmatpush.bf16.msra.mxu0 %v1162
  %2058 = vmatpush.bf16.msra.mxu0 %v1146
  %2059 = vmatpush.bf16.msra.mxu0 %v1130
  %2060 = vmatpush.bf16.msra.mxu0 %v1114
  %2061 = vmatpush.bf16.msra.mxu0 %v1098
  %2062 = vmatmul.bf16.gmra.mxu0 %v310
  %v2063 = vpop.f32.mrf.mxu0
  %v2064 = vadd.f32 %v281, %v2063
  %v2065 = vpop.f32.mrf.mxu0
  %v2066 = vadd.f32 %v286, %v2065
  %2067 = vmatmul.bf16.gmra.mxu0 %v312
  %v2068 = vpop.f32.mrf.mxu0
  %v2069 = vadd.f32 %v291, %v2068
  %v2070 = vpop.f32.mrf.mxu0
  %v2071 = vadd.f32 %v296, %v2070
  %2072 = vdwg.mxu0
  %2073 = vmatpush.bf16.msra.mxu0 %v1338
  %2074 = vmatpush.bf16.msra.mxu0 %v1322
  %2075 = vmatpush.bf16.msra.mxu0 %v1306
  %2076 = vmatpush.bf16.msra.mxu0 %v1290
  %2077 = vmatpush.bf16.msra.mxu0 %v1274
  %2078 = vmatpush.bf16.msra.mxu0 %v1258
  %2079 = vmatpush.bf16.msra.mxu0 %v1242
  %2080 = vmatpush.bf16.msra.mxu0 %v1226
  %2081 = vmatmul.bf16.gmra.mxu0 %v311
  %v2082 = vpop.f32.mrf.mxu0
  %v2083 = vadd.f32 %v2064, %v2082
  %v2084 = vpop.f32.mrf.mxu0
  %v2085 = vadd.f32 %v2066, %v2084
  %2086 = vmatmul.bf16.gmra.mxu0 %v313
  %v2087 = vpop.f32.mrf.mxu0
  %v2088 = vadd.f32 %v2069, %v2087
  %v2089 = vpop.f32.mrf.mxu0
  %v2090 = vadd.f32 %v2071, %v2089
  %2091 = vdwg.mxu0
  %2092 = vmatpush.bf16.msra.mxu0 %v1211
  %2093 = vmatpush.bf16.msra.mxu0 %v1195
  %2094 = vmatpush.bf16.msra.mxu0 %v1179
  %2095 = vmatpush.bf16.msra.mxu0 %v1163
  %2096 = vmatpush.bf16.msra.mxu0 %v1147
  %2097 = vmatpush.bf16.msra.mxu0 %v1131
  %2098 = vmatpush.bf16.msra.mxu0 %v1115
  %2099 = vmatpush.bf16.msra.mxu0 %v1099
  %2100 = vmatmul.bf16.gmra.mxu0 %v310
  %v2101 = vpop.f32.mrf.mxu0
  %v2102 = vadd.f32 %v281, %v2101
  %v2103 = vpop.f32.mrf.mxu0
  %v2104 = vadd.f32 %v286, %v2103
  %2105 = vmatmul.bf16.gmra.mxu0 %v312
  %v2106 = vpop.f32.mrf.mxu0
  %v2107 = vadd.f32 %v291, %v2106
  %v2108 = vpop.f32.mrf.mxu0
  %v2109 = vadd.f32 %v296, %v2108
  %2110 = vdwg.mxu0
  %2111 = vmatpush.bf16.msra.mxu0 %v1339
  %2112 = vmatpush.bf16.msra.mxu0 %v1323
  %2113 = vmatpush.bf16.msra.mxu0 %v1307
  %2114 = vmatpush.bf16.msra.mxu0 %v1291
  %2115 = vmatpush.bf16.msra.mxu0 %v1275
  %2116 = vmatpush.bf16.msra.mxu0 %v1259
  %2117 = vmatpush.bf16.msra.mxu0 %v1243
  %2118 = vmatpush.bf16.msra.mxu0 %v1227
  %2119 = vmatmul.bf16.gmra.mxu0 %v311
  %v2120 = vpop.f32.mrf.mxu0
  %v2121 = vadd.f32 %v2102, %v2120
  %v2122 = vpop.f32.mrf.mxu0
  %v2123 = vadd.f32 %v2104, %v2122
  %2124 = vmatmul.bf16.gmra.mxu0 %v313
  %v2125 = vpop.f32.mrf.mxu0
  %v2126 = vadd.f32 %v2107, %v2125
  %v2127 = vpop.f32.mrf.mxu0
  %v2128 = vadd.f32 %v2109, %v2127
  %2129 = vdwg.mxu0
  %2130 = vmatpush.bf16.msra.mxu0 %v1212
  %2131 = vmatpush.bf16.msra.mxu0 %v1196
  %2132 = vmatpush.bf16.msra.mxu0 %v1180
  %2133 = vmatpush.bf16.msra.mxu0 %v1164
  %2134 = vmatpush.bf16.msra.mxu0 %v1148
  %2135 = vmatpush.bf16.msra.mxu0 %v1132
  %2136 = vmatpush.bf16.msra.mxu0 %v1116
  %2137 = vmatpush.bf16.msra.mxu0 %v1100
  %2138 = vmatmul.bf16.gmra.mxu0 %v310
  %v2139 = vpop.f32.mrf.mxu0
  %v2140 = vadd.f32 %v281, %v2139
  %v2141 = vpop.f32.mrf.mxu0
  %v2142 = vadd.f32 %v286, %v2141
  %2143 = vmatmul.bf16.gmra.mxu0 %v312
  %v2144 = vpop.f32.mrf.mxu0
  %v2145 = vadd.f32 %v291, %v2144
  %v2146 = vpop.f32.mrf.mxu0
  %v2147 = vadd.f32 %v296, %v2146
  %2148 = vdwg.mxu0
  %2149 = vmatpush.bf16.msra.mxu0 %v1340
  %2150 = vmatpush.bf16.msra.mxu0 %v1324
  %2151 = vmatpush.bf16.msra.mxu0 %v1308
  %2152 = vmatpush.bf16.msra.mxu0 %v1292
  %2153 = vmatpush.bf16.msra.mxu0 %v1276
  %2154 = vmatpush.bf16.msra.mxu0 %v1260
  %2155 = vmatpush.bf16.msra.mxu0 %v1244
  %2156 = vmatpush.bf16.msra.mxu0 %v1228
  %2157 = vmatmul.bf16.gmra.mxu0 %v311
  %v2158 = vpop.f32.mrf.mxu0
  %v2159 = vadd.f32 %v2140, %v2158
  %v2160 = vpop.f32.mrf.mxu0
  %v2161 = vadd.f32 %v2142, %v2160
  %2162 = vmatmul.bf16.gmra.mxu0 %v313
  %v2163 = vpop.f32.mrf.mxu0
  %v2164 = vadd.f32 %v2145, %v2163
  %v2165 = vpop.f32.mrf.mxu0
  %v2166 = vadd.f32 %v2147, %v2165
  %2167 = vdwg.mxu0
  %2168 = vmatpush.bf16.msra.mxu0 %v1213
  %2169 = vmatpush.bf16.msra.mxu0 %v1197
  %2170 = vmatpush.bf16.msra.mxu0 %v1181
  %2171 = vmatpush.bf16.msra.mxu0 %v1165
  %2172 = vmatpush.bf16.msra.mxu0 %v1149
  %2173 = vmatpush.bf16.msra.mxu0 %v1133
  %2174 = vmatpush.bf16.msra.mxu0 %v1117
  %2175 = vmatpush.bf16.msra.mxu0 %v1101
  %2176 = vmatmul.bf16.gmra.mxu0 %v310
  %v2177 = vpop.f32.mrf.mxu0
  %v2178 = vadd.f32 %v281, %v2177
  %v2179 = vpop.f32.mrf.mxu0
  %v2180 = vadd.f32 %v286, %v2179
  %2181 = vmatmul.bf16.gmra.mxu0 %v312
  %v2182 = vpop.f32.mrf.mxu0
  %v2183 = vadd.f32 %v291, %v2182
  %v2184 = vpop.f32.mrf.mxu0
  %v2185 = vadd.f32 %v296, %v2184
  %2186 = vdwg.mxu0
  %2187 = vmatpush.bf16.msra.mxu0 %v1341
  %2188 = vmatpush.bf16.msra.mxu0 %v1325
  %2189 = vmatpush.bf16.msra.mxu0 %v1309
  %2190 = vmatpush.bf16.msra.mxu0 %v1293
  %2191 = vmatpush.bf16.msra.mxu0 %v1277
  %2192 = vmatpush.bf16.msra.mxu0 %v1261
  %2193 = vmatpush.bf16.msra.mxu0 %v1245
  %2194 = vmatpush.bf16.msra.mxu0 %v1229
  %2195 = vmatmul.bf16.gmra.mxu0 %v311
  %v2196 = vpop.f32.mrf.mxu0
  %v2197 = vadd.f32 %v2178, %v2196
  %v2198 = vpop.f32.mrf.mxu0
  %v2199 = vadd.f32 %v2180, %v2198
  %2200 = vmatmul.bf16.gmra.mxu0 %v313
  %v2201 = vpop.f32.mrf.mxu0
  %v2202 = vadd.f32 %v2183, %v2201
  %v2203 = vpop.f32.mrf.mxu0
  %v2204 = vadd.f32 %v2185, %v2203
  %2205 = vdwg.mxu0
  %v2206 = vmax.f32 %v1627, 0.0
  %v2207 = vmax.f32 %v1665, 0.0
  %v2208 = vmax.f32 %v1703, 0.0
  %v2209 = vmax.f32 %v1741, 0.0
  %v2210 = vmax.f32 %v1779, 0.0
  %v2211 = vmax.f32 %v1817, 0.0
  %v2212 = vmax.f32 %v1855, 0.0
  %v2213 = vmax.f32 %v1893, 0.0
  %v2214 = vmax.f32 %v1931, 0.0
  %v2215 = vmax.f32 %v1969, 0.0
  %v2216 = vmax.f32 %v2007, 0.0
  %v2217 = vmax.f32 %v2045, 0.0
  %v2218 = vmax.f32 %v2083, 0.0
  %v2219 = vmax.f32 %v2121, 0.0
  %v2220 = vmax.f32 %v2159, 0.0
  %v2221 = vmax.f32 %v2197, 0.0
  %v2222 = vmax.f32 %v1629, 0.0
  %v2223 = vmax.f32 %v1667, 0.0
  %v2224 = vmax.f32 %v1705, 0.0
  %v2225 = vmax.f32 %v1743, 0.0
  %v2226 = vmax.f32 %v1781, 0.0
  %v2227 = vmax.f32 %v1819, 0.0
  %v2228 = vmax.f32 %v1857, 0.0
  %v2229 = vmax.f32 %v1895, 0.0
  %v2230 = vmax.f32 %v1933, 0.0
  %v2231 = vmax.f32 %v1971, 0.0
  %v2232 = vmax.f32 %v2009, 0.0
  %v2233 = vmax.f32 %v2047, 0.0
  %v2234 = vmax.f32 %v2085, 0.0
  %v2235 = vmax.f32 %v2123, 0.0
  %v2236 = vmax.f32 %v2161, 0.0
  %v2237 = vmax.f32 %v2199, 0.0
  %v2238 = vmax.f32 %v1632, 0.0
  %v2239 = vmax.f32 %v1670, 0.0
  %v2240 = vmax.f32 %v1708, 0.0
  %v2241 = vmax.f32 %v1746, 0.0
  %v2242 = vmax.f32 %v1784, 0.0
  %v2243 = vmax.f32 %v1822, 0.0
  %v2244 = vmax.f32 %v1860, 0.0
  %v2245 = vmax.f32 %v1898, 0.0
  %v2246 = vmax.f32 %v1936, 0.0
  %v2247 = vmax.f32 %v1974, 0.0
  %v2248 = vmax.f32 %v2012, 0.0
  %v2249 = vmax.f32 %v2050, 0.0
  %v2250 = vmax.f32 %v2088, 0.0
  %v2251 = vmax.f32 %v2126, 0.0
  %v2252 = vmax.f32 %v2164, 0.0
  %v2253 = vmax.f32 %v2202, 0.0
  %v2254 = vmax.f32 %v1634, 0.0
  %v2255 = vmax.f32 %v1672, 0.0
  %v2256 = vmax.f32 %v1710, 0.0
  %v2257 = vmax.f32 %v1748, 0.0
  %v2258 = vmax.f32 %v1786, 0.0
  %v2259 = vmax.f32 %v1824, 0.0
  %v2260 = vmax.f32 %v1862, 0.0
  %v2261 = vmax.f32 %v1900, 0.0
  %v2262 = vmax.f32 %v1938, 0.0
  %v2263 = vmax.f32 %v1976, 0.0
  %v2264 = vmax.f32 %v2014, 0.0
  %v2265 = vmax.f32 %v2052, 0.0
  %v2266 = vmax.f32 %v2090, 0.0
  %v2267 = vmax.f32 %v2128, 0.0
  %v2268 = vmax.f32 %v2166, 0.0
  %v2269 = vmax.f32 %v2204, 0.0
  %v2270 = vmax.f32 %v2206, %v2210
  %v2271 = vmax.f32 %v2207, %v2211
  %v2272 = vmax.f32 %v2208, %v2212
  %v2273 = vmax.f32 %v2209, %v2213
  %v2274 = vmax.f32 %v2222, %v2226
  %v2275 = vmax.f32 %v2223, %v2227
  %v2276 = vmax.f32 %v2224, %v2228
  %v2277 = vmax.f32 %v2225, %v2229
  %v2278 = vmax.f32 %v2238, %v2242
  %v2279 = vmax.f32 %v2239, %v2243
  %v2280 = vmax.f32 %v2240, %v2244
  %v2281 = vmax.f32 %v2241, %v2245
  %v2282 = vmax.f32 %v2254, %v2258
  %v2283 = vmax.f32 %v2255, %v2259
  %v2284 = vmax.f32 %v2256, %v2260
  %v2285 = vmax.f32 %v2257, %v2261
  %v2286 = vmax.f32 %v2214, %v2218
  %v2287 = vmax.f32 %v2215, %v2219
  %v2288 = vmax.f32 %v2216, %v2220
  %v2289 = vmax.f32 %v2217, %v2221
  %v2290 = vmax.f32 %v2230, %v2234
  %v2291 = vmax.f32 %v2231, %v2235
  %v2292 = vmax.f32 %v2232, %v2236
  %v2293 = vmax.f32 %v2233, %v2237
  %v2294 = vmax.f32 %v2246, %v2250
  %v2295 = vmax.f32 %v2247, %v2251
  %v2296 = vmax.f32 %v2248, %v2252
  %v2297 = vmax.f32 %v2249, %v2253
  %v2298 = vmax.f32 %v2262, %v2266
  %v2299 = vmax.f32 %v2263, %v2267
  %v2300 = vmax.f32 %v2264, %v2268
  %v2301 = vmax.f32 %v2265, %v2269
  %v2302 = vmax.f32 %v2270, %v2286
  %v2303 = vmax.f32 %v2271, %v2287
  %v2304 = vmax.f32 %v2272, %v2288
  %v2305 = vmax.f32 %v2273, %v2289
  %v2306 = vmax.f32 %v2274, %v2290
  %v2307 = vmax.f32 %v2275, %v2291
  %v2308 = vmax.f32 %v2276, %v2292
  %v2309 = vmax.f32 %v2277, %v2293
  %v2310 = vmax.f32 %v2278, %v2294
  %v2311 = vmax.f32 %v2279, %v2295
  %v2312 = vmax.f32 %v2280, %v2296
  %v2313 = vmax.f32 %v2281, %v2297
  %v2314 = vmax.f32 %v2282, %v2298
  %v2315 = vmax.f32 %v2283, %v2299
  %v2316 = vmax.f32 %v2284, %v2300
  %v2317 = vmax.f32 %v2285, %v2301
  %v2318 = vpack.c.bf16 %v2303, %v2302
  %v2319 = vpack.c.bf16 %v2305, %v2304
  %v2320 = vpack.c.bf16 %v2307, %v2306
  %v2321 = vpack.c.bf16 %v2309, %v2308
  %v2322 = vpack.c.bf16 %v2311, %v2310
  %v2323 = vpack.c.bf16 %v2313, %v2312
  %v2324 = vpack.c.bf16 %v2315, %v2314
  %v2325 = vpack.c.bf16 %v2317, %v2316
  %2326 = vst [vmem:[%s3] sm:$0xff] %v2318
  %2327 = vst [vmem:[%s3 + $0x8] sm:$0xff] %v2319
  %2328 = vst [vmem:[%s3 + $0x10] sm:$0xff] %v2320
  %2329 = vst [vmem:[%s3 + $0x18] sm:$0xff] %v2321
  %2330 = vst [vmem:[%s3 + $0x20] sm:$0xff] %v2322
  %2331 = vst [vmem:[%s3 + $0x28] sm:$0xff] %v2323
  %2332 = vst [vmem:[%s3 + $0x30] sm:$0xff] %v2324
  %2333 = vst [vmem:[%s3 + $0x38] sm:$0xff] %v2325
  // Predicated region
  $region14: #{net_forward.4} parent=0 // pred_check
    _
  $region15: #{net_forward.4} parent=0 // pred_check_branch
    %2335 = sbr.rel (0) target = $region17
  $region16: #{net_forward.4} parent=0 // pred_region
    _
  $region17: #{net_forward.4} parent=0 // pred_fallthru
    _
  // Predicated region
  $region18: #{net_forward.4} parent=0 // pred_check
    _
  $region19: #{net_forward.4} parent=0 // pred_check_branch
    %2337 = sbr.rel (0) target = $region21
  $region20: #{net_forward.4} parent=0 // pred_region
    _
  $region21: #{net_forward.4} parent=0 // pred_fallthru
    _

// kernel: net_forward.5
$region0: #{net_forward.5}
  #allocation0 [shape = 'u32[]', space=smem, size = 0x4, offset = 0x4, fixed_abs, tag = 'smem constant byte address 0x4 - core index']
  #allocation1 [shape = 'u32[72,128]{1,0:T(1,128)}', space=vmem, size = 0x9000, scoped, tag = 'internal scratch']
  #allocation2 [shape = 'f32[16,512]{1,0:T(8,128)}', space=vmem, size = 0x8000, scoped, tag = 'scratch operand']
  %s0 = inlined_call_operand.vmem [shape: bf16[16,8192], index: 0, kind: input, shape index: {}]
  %s1 = inlined_call_operand.vmem [shape: bf16[8192,512], index: 1, kind: input, shape index: {}]
  %s2 = inlined_call_operand.vmem [shape: f32[1,512], index: 2, kind: input, shape index: {}]
  %s3 = inlined_call_operand.vmem [shape: bf16[512,128], index: 3, kind: input, shape index: {}]
  %s4 = inlined_call_operand.vmem [shape: f32[1,16,128], index: 4, kind: output, shape index: {}]
  %s5 = sld [smem:[#allocation0]]
  $region80: #{net_forward.5} parent=0
    _
  %s7 = ssub.s32 1, %s5
  %s8 = scalar_select 0, %s7, %s5
  $region1: #{net_forward.5} parent=0
    #allocation3 [shape = 'u8[262144]{0}', space=vmem, size = 0x40000, scoped, tag = 'input window, operand 0']
    loop: start=0, step=1, limit=4
    $region2: #{net_forward.5} parent=1 // loop_pre_header
      _
    $region3: #{net_forward.5} parent=1 // loop_header
      %s10 = sphi 0, %s14
      %p11 = scmp.ge.s32.totalorder %s10, 4
      %s17 = sphi 0, %s29
      %s18 = sphi 0, %s25
      %s19 = sphi 0, %s17
      %s20 = sphi 0, %s18
      %s21 = sphi 0, %s19
      %s22 = sphi 0, %s20
      %s32 = sphi 0, %s34
      %s35 = sphi 0, %s32
      %s36 = sphi 0, %s35
      %s52 = sphi 0, %s36
      %s60 = sphi 0, %s62
      %s63 = sphi 0, %s60
      %s64 = sphi 0, %s63
      %s80 = sphi 0, %s64
      %s86 = sphi 0, %s88
      %s89 = sphi 0, %s86
      %s90 = sphi 0, %s89
      %s106 = sphi 0, %s90
      %s112 = sphi 0, %s114
      %s115 = sphi 0, %s112
      %s116 = sphi 0, %s115
      %s132 = sphi 0, %s116
      %s138 = sphi 0, %s140
      %s141 = sphi 0, %s138
      %s142 = sphi 0, %s141
      %s158 = sphi 0, %s142
    $region4: #{net_forward.5} parent=1 // loop_header_branch
      %13 = sbr.rel (%p11) target = $region8
    $region5: #{net_forward.5} parent=1 // loop_body
      %s15 = ssub.s32 %s10, 1
      %s16 = ssub.s32 %s10, 2
      %s23 = sadd.s32 1, %s18
      %p24 = scmp.ge.s32.totalorder %s23, 2
      %s25 = scalar_select %p24, 0, %s23
      %s26 = sadd.s32 1, %s17
      %s27 = scalar_select %p24, %s26, %s17
      %p28 = scmp.ge.s32.totalorder %s27, 1
      %s29 = scalar_select %p28, 0, %s27
      %s30 = ssub.s32 %s18, %s25
      %p31 = scmp.eq.s32.totalorder %s30, 0
      %s33 = sadd.s32 %s32, 1
      %s34 = scalar_select %p31, %s32, %s33
      %p37 = pneg %p31
      %p38 = scmp.eq.s32.totalorder %s10, 1
      %p39 = por %p37, %p38
      %p40 = scmp.ne.s32.totalorder %s32, %s35
      %p41 = scmp.eq.s32.totalorder %s10, 0
      %p42 = por %p40, %p41
      %p43 = scmp.ne.s32.totalorder %s32, %s35
      %p44 = scmp.eq.s32.totalorder %s15, 1
      %p45 = por %p43, %p44
      %p46 = scmp.ne.s32.totalorder %s35, %s36
      %p47 = scmp.eq.s32.totalorder %s15, 0
      %p48 = por %p46, %p47
      %p49 = scmp.ne.s32.totalorder %s35, %s36
      %p50 = scmp.eq.s32.totalorder %s16, 1
      %p51 = por %p49, %p50
      %p53 = scmp.ne.s32.totalorder %s36, %s52
      %p54 = scmp.eq.s32.totalorder %s16, 0
      %p55 = por %p53, %p54
      %s56 = ssub.s32 %s18, %s25
      %s57 = ssub.s32 %s17, %s29
      %s58 = sor.u32 %s56, %s57
      %p59 = scmp.eq.s32.totalorder %s58, 0
      %s61 = sadd.s32 %s60, 1
      %s62 = scalar_select %p59, %s60, %s61
      %p65 = pneg %p59
      %p66 = scmp.eq.s32.totalorder %s10, 1
      %p67 = por %p65, %p66
      %p68 = scmp.ne.s32.totalorder %s60, %s63
      %p69 = scmp.eq.s32.totalorder %s10, 0
      %p70 = por %p68, %p69
      %p71 = scmp.ne.s32.totalorder %s60, %s63
      %p72 = scmp.eq.s32.totalorder %s15, 1
      %p73 = por %p71, %p72
      %p74 = scmp.ne.s32.totalorder %s63, %s64
      %p75 = scmp.eq.s32.totalorder %s15, 0
      %p76 = por %p74, %p75
      %p77 = scmp.ne.s32.totalorder %s63, %s64
      %p78 = scmp.eq.s32.totalorder %s16, 1
      %p79 = por %p77, %p78
      %p81 = scmp.ne.s32.totalorder %s64, %s80
      %p82 = scmp.eq.s32.totalorder %s16, 0
      %p83 = por %p81, %p82
      %s84 = ssub.s32 %s17, %s29
      %p85 = scmp.eq.s32.totalorder %s84, 0
      %s87 = sadd.s32 %s86, 1
      %s88 = scalar_select %p85, %s86, %s87
      %p91 = pneg %p85
      %p92 = scmp.eq.s32.totalorder %s10, 1
      %p93 = por %p91, %p92
      %p94 = scmp.ne.s32.totalorder %s86, %s89
      %p95 = scmp.eq.s32.totalorder %s10, 0
      %p96 = por %p94, %p95
      %p97 = scmp.ne.s32.totalorder %s86, %s89
      %p98 = scmp.eq.s32.totalorder %s15, 1
      %p99 = por %p97, %p98
      %p100 = scmp.ne.s32.totalorder %s89, %s90
      %p101 = scmp.eq.s32.totalorder %s15, 0
      %p102 = por %p100, %p101
      %p103 = scmp.ne.s32.totalorder %s89, %s90
      %p104 = scmp.eq.s32.totalorder %s16, 1
      %p105 = por %p103, %p104
      %p107 = scmp.ne.s32.totalorder %s90, %s106
      %p108 = scmp.eq.s32.totalorder %s16, 0
      %p109 = por %p107, %p108
      %s110 = ssub.s32 %s17, %s29
      %p111 = scmp.eq.s32.totalorder %s110, 0
      %s113 = sadd.s32 %s112, 1
      %s114 = scalar_select %p111, %s112, %s113
      %p117 = pneg %p111
      %p118 = scmp.eq.s32.totalorder %s10, 1
      %p119 = por %p117, %p118
      %p120 = scmp.ne.s32.totalorder %s112, %s115
      %p121 = scmp.eq.s32.totalorder %s10, 0
      %p122 = por %p120, %p121
      %p123 = scmp.ne.s32.totalorder %s112, %s115
      %p124 = scmp.eq.s32.totalorder %s15, 1
      %p125 = por %p123, %p124
      %p126 = scmp.ne.s32.totalorder %s115, %s116
      %p127 = scmp.eq.s32.totalorder %s15, 0
      %p128 = por %p126, %p127
      %p129 = scmp.ne.s32.totalorder %s115, %s116
      %p130 = scmp.eq.s32.totalorder %s16, 1
      %p131 = por %p129, %p130
      %p133 = scmp.ne.s32.totalorder %s116, %s132
      %p134 = scmp.eq.s32.totalorder %s16, 0
      %p135 = por %p133, %p134
      %s136 = ssub.s32 %s17, %s29
      %p137 = scmp.eq.s32.totalorder %s136, 0
      %s139 = sadd.s32 %s138, 1
      %s140 = scalar_select %p137, %s138, %s139
      %p143 = pneg %p137
      %p144 = scmp.eq.s32.totalorder %s10, 1
      %p145 = por %p143, %p144
      %p146 = scmp.ne.s32.totalorder %s138, %s141
      %p147 = scmp.eq.s32.totalorder %s10, 0
      %p148 = por %p146, %p147
      %p149 = scmp.ne.s32.totalorder %s138, %s141
      %p150 = scmp.eq.s32.totalorder %s15, 1
      %p151 = por %p149, %p150
      %p152 = scmp.ne.s32.totalorder %s141, %s142
      %p153 = scmp.eq.s32.totalorder %s15, 0
      %p154 = por %p152, %p153
      %p155 = scmp.ne.s32.totalorder %s141, %s142
      %p156 = scmp.eq.s32.totalorder %s16, 1
      %p157 = por %p155, %p156
      %p159 = scmp.ne.s32.totalorder %s142, %s158
      %p160 = scmp.eq.s32.totalorder %s16, 0
      %p161 = por %p159, %p160
      %p162 = scmp.le.s32.totalorder 1, %s10
      %p163 = scmp.lt.s32.totalorder %s10, 3
      %p164 = pnand %p162, %p163
      %p165 = pneg %p164
      // Predicated region
      $region9: #{net_forward.5} parent=5 // pred_check
        _
      $region10: #{net_forward.5} parent=5 // pred_check_branch
        %167 = sbr.rel (%p164) target = $region12
      $region11: #{net_forward.5} parent=5 // pred_region
        %s168 = ssub.s32 %s10, 1
        // Predicated region
        $region13: #{net_forward.5} parent=11 // pred_check
          %p169 = pneg %p102
        $region14: #{net_forward.5} parent=11 // pred_check_branch
          %171 = sbr.rel (%p169) target = $region16
        $region15: #{net_forward.5} parent=11 // pred_region
          %s172 = smul.u32 4, %s19
          %p173 = scmp.lt.s32.totalorder %s172, 3
          %s174 = scalar_select %p173, %s172, 3
          %s175 = scalar_lea.vmem %s2, %s174
          %s176 = smul.u32 4, %s19
        $region16: #{net_forward.5} parent=11 // pred_fallthru
          _
        // Predicated region
        $region17: #{net_forward.5} parent=11 // pred_check
          %p177 = pneg %p128
        $region18: #{net_forward.5} parent=11 // pred_check_branch
          %179 = sbr.rel (%p177) target = $region20
        $region19: #{net_forward.5} parent=11 // pred_region
          %s180 = smul.u32 64, %s19
          %p181 = scmp.lt.s32.totalorder %s180, 63
          %s182 = scalar_select %p181, %s180, 63
          %s183 = smul.addr %s182, 4
          %s184 = scalar_lea.vmem %s3, %s183
          %s185 = smul.u32 64, %s19
        $region20: #{net_forward.5} parent=11 // pred_fallthru
          _
      $region12: #{net_forward.5} parent=5 // pred_fallthru
        _
      %p186 = scmp.lt.s32.totalorder %s10, 2
      // Predicated region
      $region21: #{net_forward.5} parent=5 // pred_check
        %p187 = pneg %p186
      $region22: #{net_forward.5} parent=5 // pred_check_branch
        %189 = sbr.rel (%p187) target = $region24
      $region23: #{net_forward.5} parent=5 // pred_region
        // Predicated region
        $region25: #{net_forward.5} parent=23 // pred_check
          %p190 = pneg %p42
        $region26: #{net_forward.5} parent=23 // pred_check_branch
          %192 = sbr.rel (%p190) target = $region28
        $region27: #{net_forward.5} parent=23 // pred_region
          %s193 = sand.u32 %s32, 1
          %s194 = sand.u32 %s32, 1
          %s195 = smul.addr %s194, 256
          %s196 = scalar_lea.vmem [#allocation3], %s195
          %s197 = smul.u32 32, %s18
          %s198 = smul.addr %s197, 4
          %s199 = scalar_lea.vmem %s0, %s198
          // Predicated region
          $region29: #{net_forward.5} parent=27 // pred_check
            _
          $region30: #{net_forward.5} parent=27 // pred_check_branch
            %201 = sbr.rel (0) target = $region32
          $region31: #{net_forward.5} parent=27 // pred_region
            // Predicated region
            $region33: #{net_forward.5} parent=31 // pred_check
              _
            $region34: #{net_forward.5} parent=31 // pred_check_branch
              %203 = sbr.rel (0) target = $region36
            $region35: #{net_forward.5} parent=31 // pred_region
              loop: start=0, step=1, limit=1
              $region37: #{net_forward.5} parent=35 // loop_pre_header
                _
              $region38: #{net_forward.5} parent=35 // loop_header
                %s205 = sphi 0, %s209
                %p206 = scmp.ge.s32.totalorder %s205, 1
                %s210 = sphi %s199, %s199
                %s211 = sphi %s196, %s196
              $region39: #{net_forward.5} parent=35 // loop_header_branch
                %208 = sbr.rel (%p206) target = $region43
              $region40: #{net_forward.5} parent=35 // loop_body
                %v212 = vld [vmem:[%s210] sm:$0xff]
                %213 = vst [vmem:[%s211] sm:$0xff] %v212
                %v214 = vld [vmem:[%s210 + $0x8] sm:$0xff]
                %215 = vst [vmem:[%s211 + $0x8] sm:$0xff] %v214
                %v216 = vld [vmem:[%s210 + $0x10] sm:$0xff]
                %217 = vst [vmem:[%s211 + $0x10] sm:$0xff] %v216
                %v218 = vld [vmem:[%s210 + $0x18] sm:$0xff]
                %219 = vst [vmem:[%s211 + $0x18] sm:$0xff] %v218
                %v220 = vld [vmem:[%s210 + $0x20] sm:$0xff]
                %221 = vst [vmem:[%s211 + $0x20] sm:$0xff] %v220
                %v222 = vld [vmem:[%s210 + $0x28] sm:$0xff]
                %223 = vst [vmem:[%s211 + $0x28] sm:$0xff] %v222
                %v224 = vld [vmem:[%s210 + $0x30] sm:$0xff]
                %225 = vst [vmem:[%s211 + $0x30] sm:$0xff] %v224
                %v226 = vld [vmem:[%s210 + $0x38] sm:$0xff]
                %227 = vst [vmem:[%s211 + $0x38] sm:$0xff] %v226
                %v228 = vld [vmem:[%s210 + $0x40] sm:$0xff]
                %229 = vst [vmem:[%s211 + $0x40] sm:$0xff] %v228
                %v230 = vld [vmem:[%s210 + $0x48] sm:$0xff]
                %231 = vst [vmem:[%s211 + $0x48] sm:$0xff] %v230
                %v232 = vld [vmem:[%s210 + $0x50] sm:$0xff]
                %233 = vst [vmem:[%s211 + $0x50] sm:$0xff] %v232
                %v234 = vld [vmem:[%s210 + $0x58] sm:$0xff]
                %235 = vst [vmem:[%s211 + $0x58] sm:$0xff] %v234
                %v236 = vld [vmem:[%s210 + $0x60] sm:$0xff]
                %237 = vst [vmem:[%s211 + $0x60] sm:$0xff] %v236
                %v238 = vld [vmem:[%s210 + $0x68] sm:$0xff]
                %239 = vst [vmem:[%s211 + $0x68] sm:$0xff] %v238
                %v240 = vld [vmem:[%s210 + $0x70] sm:$0xff]
                %241 = vst [vmem:[%s211 + $0x70] sm:$0xff] %v240
                %v242 = vld [vmem:[%s210 + $0x78] sm:$0xff]
                %243 = vst [vmem:[%s211 + $0x78] sm:$0xff] %v242
                %v244 = vld [vmem:[%s210 + $0x100] sm:$0xff]
                %245 = vst [vmem:[%s211 + $0x80] sm:$0xff] %v244
                %v246 = vld [vmem:[%s210 + $0x108] sm:$0xff]
                %247 = vst [vmem:[%s211 + $0x88] sm:$0xff] %v246
                %v248 = vld [vmem:[%s210 + $0x110] sm:$0xff]
                %249 = vst [vmem:[%s211 + $0x90] sm:$0xff] %v248
                %v250 = vld [vmem:[%s210 + $0x118] sm:$0xff]
                %251 = vst [vmem:[%s211 + $0x98] sm:$0xff] %v250
                %v252 = vld [vmem:[%s210 + $0x120] sm:$0xff]
                %253 = vst [vmem:[%s211 + $0xa0] sm:$0xff] %v252
                %v254 = vld [vmem:[%s210 + $0x128] sm:$0xff]
                %255 = vst [vmem:[%s211 + $0xa8] sm:$0xff] %v254
                %v256 = vld [vmem:[%s210 + $0x130] sm:$0xff]
                %257 = vst [vmem:[%s211 + $0xb0] sm:$0xff] %v256
                %v258 = vld [vmem:[%s210 + $0x138] sm:$0xff]
                %259 = vst [vmem:[%s211 + $0xb8] sm:$0xff] %v258
                %v260 = vld [vmem:[%s210 + $0x140] sm:$0xff]
                %261 = vst [vmem:[%s211 + $0xc0] sm:$0xff] %v260
                %v262 = vld [vmem:[%s210 + $0x148] sm:$0xff]
                %263 = vst [vmem:[%s211 + $0xc8] sm:$0xff] %v262
                %v264 = vld [vmem:[%s210 + $0x150] sm:$0xff]
                %265 = vst [vmem:[%s211 + $0xd0] sm:$0xff] %v264
                %v266 = vld [vmem:[%s210 + $0x158] sm:$0xff]
                %267 = vst [vmem:[%s211 + $0xd8] sm:$0xff] %v266
                %v268 = vld [vmem:[%s210 + $0x160] sm:$0xff]
                %269 = vst [vmem:[%s211 + $0xe0] sm:$0xff] %v268
                %v270 = vld [vmem:[%s210 + $0x168] sm:$0xff]
                %271 = vst [vmem:[%s211 + $0xe8] sm:$0xff] %v270
                %v272 = vld [vmem:[%s210 + $0x170] sm:$0xff]
                %273 = vst [vmem:[%s211 + $0xf0] sm:$0xff] %v272
                %v274 = vld [vmem:[%s210 + $0x178] sm:$0xff]
                %275 = vst [vmem:[%s211 + $0xf8] sm:$0xff] %v274
              $region41: #{net_forward.5} parent=35 // loop_footer
                %s209 = sadd.s32 1, %s205
              $region42: #{net_forward.5} parent=35 // loop_footer_branch
                %204 = sbr.rel target = $region38
              $region43: #{net_forward.5} parent=35 // loop_exit
                _
            $region36: #{net_forward.5} parent=31 // pred_fallthru
              _
            // Predicated region
            $region44: #{net_forward.5} parent=31 // pred_check
              _
            $region45: #{net_forward.5} parent=31 // pred_check_branch
              %277 = sbr.rel target = $region47
            $region46: #{net_forward.5} parent=31 // pred_region
              _
            $region47: #{net_forward.5} parent=31 // pred_fallthru
              _
          $region32: #{net_forward.5} parent=27 // pred_fallthru
            _
          %278 = vnop
        $region28: #{net_forward.5} parent=23 // pred_fallthru
          _
        // Predicated region
        $region48: #{net_forward.5} parent=23 // pred_check
          %p279 = pneg %p70
        $region49: #{net_forward.5} parent=23 // pred_check_branch
          %281 = sbr.rel (%p279) target = $region51
        $region50: #{net_forward.5} parent=23 // pred_region
          %s282 = smul.u32 512, %s18
          %s283 = smul.u32 4, %s17
          %p284 = scmp.lt.s32.totalorder %s282, 1023
          %s285 = scalar_select %p284, %s282, 1023
          %p286 = scmp.lt.s32.totalorder %s283, 3
          %s287 = scalar_select %p286, %s283, 3
          %s288 = smul.addr %s285, 4
          %s289 = sadd.s32 %s287, %s288
          %s290 = smul.addr %s289, 4
          %s291 = scalar_lea.vmem %s1, %s290
          %s292 = smul.u32 512, %s18
          %s293 = smul.u32 4, %s17
        $region51: #{net_forward.5} parent=23 // pred_fallthru
          _
      $region24: #{net_forward.5} parent=5 // pred_fallthru
        _
      %p294 = scmp.le.s32.totalorder 1, %s10
      %p295 = scmp.lt.s32.totalorder %s10, 3
      %p296 = pnand %p294, %p295
      %p297 = pneg %p296
      // Predicated region
      $region52: #{net_forward.5} parent=5 // pred_check
        _
      $region53: #{net_forward.5} parent=5 // pred_check_branch
        %299 = sbr.rel (%p296) target = $region55
      $region54: #{net_forward.5} parent=5 // pred_region
        %s300 = ssub.s32 %s10, 1
        %s301 = sand.u32 %s35, 1
        %s302 = sand.u32 %s35, 1
        %s303 = smul.addr %s302, 256
        %s304 = scalar_lea.vmem [#allocation3], %s303
        // Predicated region
        $region56: #{net_forward.5} parent=54 // pred_check
          %p305 = pneg %p48
        $region57: #{net_forward.5} parent=54 // pred_check_branch
          %307 = sbr.rel (%p305) target = $region59
        $region58: #{net_forward.5} parent=54 // pred_region
          _
        $region59: #{net_forward.5} parent=54 // pred_fallthru
          _
        %s308 = sand.u32 %s35, 1
        %s309 = sand.u32 %s35, 1
        %s310 = smul.addr %s309, 256
        %s311 = scalar_lea.vmem [#allocation3], %s310
        %p312 = pneg %p48
        %p313 = pneg %p45
        %s314 = smul.u32 512, %s20
        %s315 = smul.u32 4, %s19
        %p316 = scmp.lt.s32.totalorder %s314, 1023
        %s317 = scalar_select %p316, %s314, 1023
        %p318 = scmp.lt.s32.totalorder %s315, 3
        %s319 = scalar_select %p318, %s315, 3
        %s320 = smul.addr %s317, 4
        %s321 = sadd.s32 %s319, %s320
        %s322 = smul.addr %s321, 4
        %s323 = scalar_lea.vmem %s1, %s322
        %p324 = pneg %p76
        %p325 = pneg %p73
        %s326 = smul.u32 4, %s19
        %p327 = scmp.lt.s32.totalorder %s326, 3
        %s328 = scalar_select %p327, %s326, 3
        %s329 = scalar_lea.vmem %s2, %s328
        %p330 = pneg %p102
        %p331 = pneg %p99
        %s332 = smul.u32 64, %s19
        %p333 = scmp.lt.s32.totalorder %s332, 63
        %s334 = scalar_select %p333, %s332, 63
        %s335 = smul.addr %s334, 4
        %s336 = scalar_lea.vmem %s3, %s335
        %p337 = pneg %p128
        %p338 = pneg %p125
        %p339 = pneg %p154
        %p340 = pneg %p151
        %p341 = scmp.lt.s32.totalorder %s19, 0
        %s342 = scalar_select %p341, %s19, 0
        %s343 = smul.addr %s342, 2
        %s344 = smul.addr %s343, 8
        %s345 = scalar_lea.vmem %s4, %s344
        %s346 = smul.u32 32, %s20
        %s347 = smul.u32 512, %s20
        %s348 = smul.u32 4, %s19
        %p349 = scmp.lt.s32.totalorder %s347, 1023
        %s350 = scalar_select %p349, %s347, 1023
        %p351 = scmp.lt.s32.totalorder %s348, 3
        %s352 = scalar_select %p351, %s348, 3
        %s353 = smul.addr %s350, 4
        %s354 = sadd.s32 %s352, %s353
        %s355 = smul.addr %s354, 4
        %s356 = scalar_lea.vmem %s1, %s355
        %s357 = smul.u32 512, %s20
        %s358 = smul.u32 4, %s19
        %s359 = smul.u32 4, %s19
        %p360 = scmp.lt.s32.totalorder %s359, 3
        %s361 = scalar_select %p360, %s359, 3
        %s362 = scalar_lea.vmem %s2, %s361
        %s363 = smul.u32 4, %s19
        %s364 = smul.u32 64, %s19
        %p365 = scmp.lt.s32.totalorder %s364, 63
        %s366 = scalar_select %p365, %s364, 63
        %s367 = smul.addr %s366, 4
        %s368 = scalar_lea.vmem %s3, %s367
        %s369 = smul.u32 64, %s19
        %p370 = scmp.lt.s32.totalorder %s19, 0
        %s371 = scalar_select %p370, %s19, 0
        %s372 = smul.addr %s371, 2
        %s373 = smul.addr %s372, 8
        %s374 = scalar_lea.vmem %s4, %s373
        %p375 = scmp.eq.s32.totalorder %s20, 0
        // Predicated region
        $region60: #{net_forward.5} parent=54 // pred_check
          %p376 = pneg %p375
        $region61: #{net_forward.5} parent=54 // pred_check_branch
          %378 = sbr.rel (%p376) target = $region63
        $region62: #{net_forward.5} parent=54 // pred_region
          %379 = vst [vmem:[#allocation2] sm:$0xff] 0.0
          %380 = vst [vmem:[#allocation2 + $0x8] sm:$0xff] 0.0
          %381 = vst [vmem:[#allocation2 + $0x10] sm:$0xff] 0.0
          %382 = vst [vmem:[#allocation2 + $0x18] sm:$0xff] 0.0
          %383 = vst [vmem:[#allocation2 + $0x20] sm:$0xff] 0.0
          %384 = vst [vmem:[#allocation2 + $0x28] sm:$0xff] 0.0
          %385 = vst [vmem:[#allocation2 + $0x30] sm:$0xff] 0.0
          %386 = vst [vmem:[#allocation2 + $0x38] sm:$0xff] 0.0
        $region63: #{net_forward.5} parent=54 // pred_fallthru
          _
        %v387 = vld [vmem:[#allocation2] sm:$0xff]
        %v388 = vld [vmem:[#allocation2 + $0x8] sm:$0xff]
        %v389 = vld [vmem:[#allocation2 + $0x10] sm:$0xff]
        %v390 = vld [vmem:[#allocation2 + $0x18] sm:$0xff]
        %v391 = vld [vmem:[#allocation2 + $0x20] sm:$0xff]
        %v392 = vld [vmem:[#allocation2 + $0x28] sm:$0xff]
        %v393 = vld [vmem:[#allocation2 + $0x30] sm:$0xff]
        %v394 = vld [vmem:[#allocation2 + $0x38] sm:$0xff]
        %v395 = vld [vmem:[%s304] sm:$0xff]
        %v396 = vld [vmem:[%s304 + $0x8] sm:$0xff]
        %v397 = vld [vmem:[%s304 + $0x10] sm:$0xff]
        %v398 = vld [vmem:[%s304 + $0x18] sm:$0xff]
        %v399 = vld [vmem:[%s304 + $0x20] sm:$0xff]
        %v400 = vld [vmem:[%s304 + $0x28] sm:$0xff]
        %v401 = vld [vmem:[%s304 + $0x30] sm:$0xff]
        %v402 = vld [vmem:[%s304 + $0x38] sm:$0xff]
        %v403 = vld [vmem:[%s304 + $0x40] sm:$0xff]
        %v404 = vld [vmem:[%s304 + $0x48] sm:$0xff]
        %v405 = vld [vmem:[%s304 + $0x50] sm:$0xff]
        %v406 = vld [vmem:[%s304 + $0x58] sm:$0xff]
        %v407 = vld [vmem:[%s304 + $0x60] sm:$0xff]
        %v408 = vld [vmem:[%s304 + $0x68] sm:$0xff]
        %v409 = vld [vmem:[%s304 + $0x70] sm:$0xff]
        %v410 = vld [vmem:[%s304 + $0x78] sm:$0xff]
        %v411 = vld [vmem:[%s304 + $0x80] sm:$0xff]
        %v412 = vld [vmem:[%s304 + $0x88] sm:$0xff]
        %v413 = vld [vmem:[%s304 + $0x90] sm:$0xff]
        %v414 = vld [vmem:[%s304 + $0x98] sm:$0xff]
        %v415 = vld [vmem:[%s304 + $0xa0] sm:$0xff]
        %v416 = vld [vmem:[%s304 + $0xa8] sm:$0xff]
        %v417 = vld [vmem:[%s304 + $0xb0] sm:$0xff]
        %v418 = vld [vmem:[%s304 + $0xb8] sm:$0xff]
        %v419 = vld [vmem:[%s304 + $0xc0] sm:$0xff]
        %v420 = vld [vmem:[%s304 + $0xc8] sm:$0xff]
        %v421 = vld [vmem:[%s304 + $0xd0] sm:$0xff]
        %v422 = vld [vmem:[%s304 + $0xd8] sm:$0xff]
        %v423 = vld [vmem:[%s304 + $0xe0] sm:$0xff]
        %v424 = vld [vmem:[%s304 + $0xe8] sm:$0xff]
        %v425 = vld [vmem:[%s304 + $0xf0] sm:$0xff]
        %v426 = vld [vmem:[%s304 + $0xf8] sm:$0xff]
        %v427 = vld [vmem:[%s356] sm:$0xff]
        %v428 = vld [vmem:[%s356 + $0x8] sm:$0xff]
        %v429 = vld [vmem:[%s356 + $0x10] sm:$0xff]
        %v430 = vld [vmem:[%s356 + $0x18] sm:$0xff]
        %v431 = vld [vmem:[%s356 + $0x20] sm:$0xff]
        %v432 = vld [vmem:[%s356 + $0x28] sm:$0xff]
        %v433 = vld [vmem:[%s356 + $0x30] sm:$0xff]
        %v434 = vld [vmem:[%s356 + $0x38] sm:$0xff]
        %v435 = vld [vmem:[%s356 + $0x40] sm:$0xff]
        %v436 = vld [vmem:[%s356 + $0x48] sm:$0xff]
        %v437 = vld [vmem:[%s356 + $0x50] sm:$0xff]
        %v438 = vld [vmem:[%s356 + $0x58] sm:$0xff]
        %v439 = vld [vmem:[%s356 + $0x60] sm:$0xff]
        %v440 = vld [vmem:[%s356 + $0x68] sm:$0xff]
        %v441 = vld [vmem:[%s356 + $0x70] sm:$0xff]
        %v442 = vld [vmem:[%s356 + $0x78] sm:$0xff]
        %v443 = vld [vmem:[%s356 + $0x80] sm:$0xff]
        %v444 = vld [vmem:[%s356 + $0x88] sm:$0xff]
        %v445 = vld [vmem:[%s356 + $0x90] sm:$0xff]
        %v446 = vld [vmem:[%s356 + $0x98] sm:$0xff]
        %v447 = vld [vmem:[%s356 + $0xa0] sm:$0xff]
        %v448 = vld [vmem:[%s356 + $0xa8] sm:$0xff]
        %v449 = vld [vmem:[%s356 + $0xb0] sm:$0xff]
        %v450 = vld [vmem:[%s356 + $0xb8] sm:$0xff]
        %v451 = vld [vmem:[%s356 + $0xc0] sm:$0xff]
        %v452 = vld [vmem:[%s356 + $0xc8] sm:$0xff]
        %v453 = vld [vmem:[%s356 + $0xd0] sm:$0xff]
        %v454 = vld [vmem:[%s356 + $0xd8] sm:$0xff]
        %v455 = vld [vmem:[%s356 + $0xe0] sm:$0xff]
        %v456 = vld [vmem:[%s356 + $0xe8] sm:$0xff]
        %v457 = vld [vmem:[%s356 + $0xf0] sm:$0xff]
        %v458 = vld [vmem:[%s356 + $0xf8] sm:$0xff]
        %v459 = vld [vmem:[%s356 + $0x100] sm:$0xff]
        %v460 = vld [vmem:[%s356 + $0x108] sm:$0xff]
        %v461 = vld [vmem:[%s356 + $0x110] sm:$0xff]
        %v462 = vld [vmem:[%s356 + $0x118] sm:$0xff]
        %v463 = vld [vmem:[%s356 + $0x120] sm:$0xff]
        %v464 = vld [vmem:[%s356 + $0x128] sm:$0xff]
        %v465 = vld [vmem:[%s356 + $0x130] sm:$0xff]
        %v466 = vld [vmem:[%s356 + $0x138] sm:$0xff]
        %v467 = vld [vmem:[%s356 + $0x140] sm:$0xff]
        %v468 = vld [vmem:[%s356 + $0x148] sm:$0xff]
        %v469 = vld [vmem:[%s356 + $0x150] sm:$0xff]
        %v470 = vld [vmem:[%s356 + $0x158] sm:$0xff]
        %v471 = vld [vmem:[%s356 + $0x160] sm:$0xff]
        %v472 = vld [vmem:[%s356 + $0x168] sm:$0xff]
        %v473 = vld [vmem:[%s356 + $0x170] sm:$0xff]
        %v474 = vld [vmem:[%s356 + $0x178] sm:$0xff]
        %v475 = vld [vmem:[%s356 + $0x180] sm:$0xff]
        %v476 = vld [vmem:[%s356 + $0x188] sm:$0xff]
        %v477 = vld [vmem:[%s356 + $0x190] sm:$0xff]
        %v478 = vld [vmem:[%s356 + $0x198] sm:$0xff]
        %v479 = vld [vmem:[%s356 + $0x1a0] sm:$0xff]
        %v480 = vld [vmem:[%s356 + $0x1a8] sm:$0xff]
        %v481 = vld [vmem:[%s356 + $0x1b0] sm:$0xff]
        %v482 = vld [vmem:[%s356 + $0x1b8] sm:$0xff]
        %v483 = vld [vmem:[%s356 + $0x1c0] sm:$0xff]
        %v484 = vld [vmem:[%s356 + $0x1c8] sm:$0xff]
        %v485 = vld [vmem:[%s356 + $0x1d0] sm:$0xff]
        %v486 = vld [vmem:[%s356 + $0x1d8] sm:$0xff]
        %v487 = vld [vmem:[%s356 + $0x1e0] sm:$0xff]
        %v488 = vld [vmem:[%s356 + $0x1e8] sm:$0xff]
        %v489 = vld [vmem:[%s356 + $0x1f0] sm:$0xff]
        %v490 = vld [vmem:[%s356 + $0x1f8] sm:$0xff]
        %v491 = vld [vmem:[%s356 + $0x200] sm:$0xff]
        %v492 = vld [vmem:[%s356 + $0x208] sm:$0xff]
        %v493 = vld [vmem:[%s356 + $0x210] sm:$0xff]
        %v494 = vld [vmem:[%s356 + $0x218] sm:$0xff]
        %v495 = vld [vmem:[%s356 + $0x220] sm:$0xff]
        %v496 = vld [vmem:[%s356 + $0x228] sm:$0xff]
        %v497 = vld [vmem:[%s356 + $0x230] sm:$0xff]
        %v498 = vld [vmem:[%s356 + $0x238] sm:$0xff]
        %v499 = vld [vmem:[%s356 + $0x240] sm:$0xff]
        %v500 = vld [vmem:[%s356 + $0x248] sm:$0xff]
        %v501 = vld [vmem:[%s356 + $0x250] sm:$0xff]
        %v502 = vld [vmem:[%s356 + $0x258] sm:$0xff]
        %v503 = vld [vmem:[%s356 + $0x260] sm:$0xff]
        %v504 = vld [vmem:[%s356 + $0x268] sm:$0xff]
        %v505 = vld [vmem:[%s356 + $0x270] sm:$0xff]
        %v506 = vld [vmem:[%s356 + $0x278] sm:$0xff]
        %v507 = vld [vmem:[%s356 + $0x280] sm:$0xff]
        %v508 = vld [vmem:[%s356 + $0x288] sm:$0xff]
        %v509 = vld [vmem:[%s356 + $0x290] sm:$0xff]
        %v510 = vld [vmem:[%s356 + $0x298] sm:$0xff]
        %v511 = vld [vmem:[%s356 + $0x2a0] sm:$0xff]
        %v512 = vld [vmem:[%s356 + $0x2a8] sm:$0xff]
        %v513 = vld [vmem:[%s356 + $0x2b0] sm:$0xff]
        %v514 = vld [vmem:[%s356 + $0x2b8] sm:$0xff]
        %v515 = vld [vmem:[%s356 + $0x2c0] sm:$0xff]
        %v516 = vld [vmem:[%s356 + $0x2c8] sm:$0xff]
        %v517 = vld [vmem:[%s356 + $0x2d0] sm:$0xff]
        %v518 = vld [vmem:[%s356 + $0x2d8] sm:$0xff]
        %v519 = vld [vmem:[%s356 + $0x2e0] sm:$0xff]
        %v520 = vld [vmem:[%s356 + $0x2e8] sm:$0xff]
        %v521 = vld [vmem:[%s356 + $0x2f0] sm:$0xff]
        %v522 = vld [vmem:[%s356 + $0x2f8] sm:$0xff]
        %v523 = vld [vmem:[%s356 + $0x300] sm:$0xff]
        %v524 = vld [vmem:[%s356 + $0x308] sm:$0xff]
        %v525 = vld [vmem:[%s356 + $0x310] sm:$0xff]
        %v526 = vld [vmem:[%s356 + $0x318] sm:$0xff]
        %v527 = vld [vmem:[%s356 + $0x320] sm:$0xff]
        %v528 = vld [vmem:[%s356 + $0x328] sm:$0xff]
        %v529 = vld [vmem:[%s356 + $0x330] sm:$0xff]
        %v530 = vld [vmem:[%s356 + $0x338] sm:$0xff]
        %v531 = vld [vmem:[%s356 + $0x340] sm:$0xff]
        %v532 = vld [vmem:[%s356 + $0x348] sm:$0xff]
        %v533 = vld [vmem:[%s356 + $0x350] sm:$0xff]
        %v534 = vld [vmem:[%s356 + $0x358] sm:$0xff]
        %v535 = vld [vmem:[%s356 + $0x360] sm:$0xff]
        %v536 = vld [vmem:[%s356 + $0x368] sm:$0xff]
        %v537 = vld [vmem:[%s356 + $0x370] sm:$0xff]
        %v538 = vld [vmem:[%s356 + $0x378] sm:$0xff]
        %v539 = vld [vmem:[%s356 + $0x380] sm:$0xff]
        %v540 = vld [vmem:[%s356 + $0x388] sm:$0xff]
        %v541 = vld [vmem:[%s356 + $0x390] sm:$0xff]
        %v542 = vld [vmem:[%s356 + $0x398] sm:$0xff]
        %v543 = vld [vmem:[%s356 + $0x3a0] sm:$0xff]
        %v544 = vld [vmem:[%s356 + $0x3a8] sm:$0xff]
        %v545 = vld [vmem:[%s356 + $0x3b0] sm:$0xff]
        %v546 = vld [vmem:[%s356 + $0x3b8] sm:$0xff]
        %v547 = vld [vmem:[%s356 + $0x3c0] sm:$0xff]
        %v548 = vld [vmem:[%s356 + $0x3c8] sm:$0xff]
        %v549 = vld [vmem:[%s356 + $0x3d0] sm:$0xff]
        %v550 = vld [vmem:[%s356 + $0x3d8] sm:$0xff]
        %v551 = vld [vmem:[%s356 + $0x3e0] sm:$0xff]
        %v552 = vld [vmem:[%s356 + $0x3e8] sm:$0xff]
        %v553 = vld [vmem:[%s356 + $0x3f0] sm:$0xff]
        %v554 = vld [vmem:[%s356 + $0x3f8] sm:$0xff]
        %v555 = vld [vmem:[%s356 + $0x400] sm:$0xff]
        %v556 = vld [vmem:[%s356 + $0x408] sm:$0xff]
        %v557 = vld [vmem:[%s356 + $0x410] sm:$0xff]
        %v558 = vld [vmem:[%s356 + $0x418] sm:$0xff]
        %v559 = vld [vmem:[%s356 + $0x420] sm:$0xff]
        %v560 = vld [vmem:[%s356 + $0x428] sm:$0xff]
        %v561 = vld [vmem:[%s356 + $0x430] sm:$0xff]
        %v562 = vld [vmem:[%s356 + $0x438] sm:$0xff]
        %v563 = vld [vmem:[%s356 + $0x440] sm:$0xff]
        %v564 = vld [vmem:[%s356 + $0x448] sm:$0xff]
        %v565 = vld [vmem:[%s356 + $0x450] sm:$0xff]
        %v566 = vld [vmem:[%s356 + $0x458] sm:$0xff]
        %v567 = vld [vmem:[%s356 + $0x460] sm:$0xff]
        %v568 = vld [vmem:[%s356 + $0x468] sm:$0xff]
        %v569 = vld [vmem:[%s356 + $0x470] sm:$0xff]
        %v570 = vld [vmem:[%s356 + $0x478] sm:$0xff]
        %v571 = vld [vmem:[%s356 + $0x480] sm:$0xff]
        %v572 = vld [vmem:[%s356 + $0x488] sm:$0xff]
        %v573 = vld [vmem:[%s356 + $0x490] sm:$0xff]
        %v574 = vld [vmem:[%s356 + $0x498] sm:$0xff]
        %v575 = vld [vmem:[%s356 + $0x4a0] sm:$0xff]
        %v576 = vld [vmem:[%s356 + $0x4a8] sm:$0xff]
        %v577 = vld [vmem:[%s356 + $0x4b0] sm:$0xff]
        %v578 = vld [vmem:[%s356 + $0x4b8] sm:$0xff]
        %v579 = vld [vmem:[%s356 + $0x4c0] sm:$0xff]
        %v580 = vld [vmem:[%s356 + $0x4c8] sm:$0xff]
        %v581 = vld [vmem:[%s356 + $0x4d0] sm:$0xff]
        %v582 = vld [vmem:[%s356 + $0x4d8] sm:$0xff]
        %v583 = vld [vmem:[%s356 + $0x4e0] sm:$0xff]
        %v584 = vld [vmem:[%s356 + $0x4e8] sm:$0xff]
        %v585 = vld [vmem:[%s356 + $0x4f0] sm:$0xff]
        %v586 = vld [vmem:[%s356 + $0x4f8] sm:$0xff]
        %v587 = vld [vmem:[%s356 + $0x500] sm:$0xff]
        %v588 = vld [vmem:[%s356 + $0x508] sm:$0xff]
        %v589 = vld [vmem:[%s356 + $0x510] sm:$0xff]
        %v590 = vld [vmem:[%s356 + $0x518] sm:$0xff]
        %v591 = vld [vmem:[%s356 + $0x520] sm:$0xff]
        %v592 = vld [vmem:[%s356 + $0x528] sm:$0xff]
        %v593 = vld [vmem:[%s356 + $0x530] sm:$0xff]
        %v594 = vld [vmem:[%s356 + $0x538] sm:$0xff]
        %v595 = vld [vmem:[%s356 + $0x540] sm:$0xff]
        %v596 = vld [vmem:[%s356 + $0x548] sm:$0xff]
        %v597 = vld [vmem:[%s356 + $0x550] sm:$0xff]
        %v598 = vld [vmem:[%s356 + $0x558] sm:$0xff]
        %v599 = vld [vmem:[%s356 + $0x560] sm:$0xff]
        %v600 = vld [vmem:[%s356 + $0x568] sm:$0xff]
        %v601 = vld [vmem:[%s356 + $0x570] sm:$0xff]
        %v602 = vld [vmem:[%s356 + $0x578] sm:$0xff]
        %v603 = vld [vmem:[%s356 + $0x580] sm:$0xff]
        %v604 = vld [vmem:[%s356 + $0x588] sm:$0xff]
        %v605 = vld [vmem:[%s356 + $0x590] sm:$0xff]
        %v606 = vld [vmem:[%s356 + $0x598] sm:$0xff]
        %v607 = vld [vmem:[%s356 + $0x5a0] sm:$0xff]
        %v608 = vld [vmem:[%s356 + $0x5a8] sm:$0xff]
        %v609 = vld [vmem:[%s356 + $0x5b0] sm:$0xff]
        %v610 = vld [vmem:[%s356 + $0x5b8] sm:$0xff]
        %v611 = vld [vmem:[%s356 + $0x5c0] sm:$0xff]
        %v612 = vld [vmem:[%s356 + $0x5c8] sm:$0xff]
        %v613 = vld [vmem:[%s356 + $0x5d0] sm:$0xff]
        %v614 = vld [vmem:[%s356 + $0x5d8] sm:$0xff]
        %v615 = vld [vmem:[%s356 + $0x5e0] sm:$0xff]
        %v616 = vld [vmem:[%s356 + $0x5e8] sm:$0xff]
        %v617 = vld [vmem:[%s356 + $0x5f0] sm:$0xff]
        %v618 = vld [vmem:[%s356 + $0x5f8] sm:$0xff]
        %v619 = vld [vmem:[%s356 + $0x600] sm:$0xff]
        %v620 = vld [vmem:[%s356 + $0x608] sm:$0xff]
        %v621 = vld [vmem:[%s356 + $0x610] sm:$0xff]
        %v622 = vld [vmem:[%s356 + $0x618] sm:$0xff]
        %v623 = vld [vmem:[%s356 + $0x620] sm:$0xff]
        %v624 = vld [vmem:[%s356 + $0x628] sm:$0xff]
        %v625 = vld [vmem:[%s356 + $0x630] sm:$0xff]
        %v626 = vld [vmem:[%s356 + $0x638] sm:$0xff]
        %v627 = vld [vmem:[%s356 + $0x640] sm:$0xff]
        %v628 = vld [vmem:[%s356 + $0x648] sm:$0xff]
        %v629 = vld [vmem:[%s356 + $0x650] sm:$0xff]
        %v630 = vld [vmem:[%s356 + $0x658] sm:$0xff]
        %v631 = vld [vmem:[%s356 + $0x660] sm:$0xff]
        %v632 = vld [vmem:[%s356 + $0x668] sm:$0xff]
        %v633 = vld [vmem:[%s356 + $0x670] sm:$0xff]
        %v634 = vld [vmem:[%s356 + $0x678] sm:$0xff]
        %v635 = vld [vmem:[%s356 + $0x680] sm:$0xff]
        %v636 = vld [vmem:[%s356 + $0x688] sm:$0xff]
        %v637 = vld [vmem:[%s356 + $0x690] sm:$0xff]
        %v638 = vld [vmem:[%s356 + $0x698] sm:$0xff]
        %v639 = vld [vmem:[%s356 + $0x6a0] sm:$0xff]
        %v640 = vld [vmem:[%s356 + $0x6a8] sm:$0xff]
        %v641 = vld [vmem:[%s356 + $0x6b0] sm:$0xff]
        %v642 = vld [vmem:[%s356 + $0x6b8] sm:$0xff]
        %v643 = vld [vmem:[%s356 + $0x6c0] sm:$0xff]
        %v644 = vld [vmem:[%s356 + $0x6c8] sm:$0xff]
        %v645 = vld [vmem:[%s356 + $0x6d0] sm:$0xff]
        %v646 = vld [vmem:[%s356 + $0x6d8] sm:$0xff]
        %v647 = vld [vmem:[%s356 + $0x6e0] sm:$0xff]
        %v648 = vld [vmem:[%s356 + $0x6e8] sm:$0xff]
        %v649 = vld [vmem:[%s356 + $0x6f0] sm:$0xff]
        %v650 = vld [vmem:[%s356 + $0x6f8] sm:$0xff]
        %v651 = vld [vmem:[%s356 + $0x700] sm:$0xff]
        %v652 = vld [vmem:[%s356 + $0x708] sm:$0xff]
        %v653 = vld [vmem:[%s356 + $0x710] sm:$0xff]
        %v654 = vld [vmem:[%s356 + $0x718] sm:$0xff]
        %v655 = vld [vmem:[%s356 + $0x720] sm:$0xff]
        %v656 = vld [vmem:[%s356 + $0x728] sm:$0xff]
        %v657 = vld [vmem:[%s356 + $0x730] sm:$0xff]
        %v658 = vld [vmem:[%s356 + $0x738] sm:$0xff]
        %v659 = vld [vmem:[%s356 + $0x740] sm:$0xff]
        %v660 = vld [vmem:[%s356 + $0x748] sm:$0xff]
        %v661 = vld [vmem:[%s356 + $0x750] sm:$0xff]
        %v662 = vld [vmem:[%s356 + $0x758] sm:$0xff]
        %v663 = vld [vmem:[%s356 + $0x760] sm:$0xff]
        %v664 = vld [vmem:[%s356 + $0x768] sm:$0xff]
        %v665 = vld [vmem:[%s356 + $0x770] sm:$0xff]
        %v666 = vld [vmem:[%s356 + $0x778] sm:$0xff]
        %v667 = vld [vmem:[%s356 + $0x780] sm:$0xff]
        %v668 = vld [vmem:[%s356 + $0x788] sm:$0xff]
        %v669 = vld [vmem:[%s356 + $0x790] sm:$0xff]
        %v670 = vld [vmem:[%s356 + $0x798] sm:$0xff]
        %v671 = vld [vmem:[%s356 + $0x7a0] sm:$0xff]
        %v672 = vld [vmem:[%s356 + $0x7a8] sm:$0xff]
        %v673 = vld [vmem:[%s356 + $0x7b0] sm:$0xff]
        %v674 = vld [vmem:[%s356 + $0x7b8] sm:$0xff]
        %v675 = vld [vmem:[%s356 + $0x7c0] sm:$0xff]
        %v676 = vld [vmem:[%s356 + $0x7c8] sm:$0xff]
        %v677 = vld [vmem:[%s356 + $0x7d0] sm:$0xff]
        %v678 = vld [vmem:[%s356 + $0x7d8] sm:$0xff]
        %v679 = vld [vmem:[%s356 + $0x7e0] sm:$0xff]
        %v680 = vld [vmem:[%s356 + $0x7e8] sm:$0xff]
        %v681 = vld [vmem:[%s356 + $0x7f0] sm:$0xff]
        %v682 = vld [vmem:[%s356 + $0x7f8] sm:$0xff]
        %v683 = vld [vmem:[%s356 + $0x800] sm:$0xff]
        %v684 = vld [vmem:[%s356 + $0x808] sm:$0xff]
        %v685 = vld [vmem:[%s356 + $0x810] sm:$0xff]
        %v686 = vld [vmem:[%s356 + $0x818] sm:$0xff]
        %v687 = vld [vmem:[%s356 + $0x820] sm:$0xff]
        %v688 = vld [vmem:[%s356 + $0x828] sm:$0xff]
        %v689 = vld [vmem:[%s356 + $0x830] sm:$0xff]
        %v690 = vld [vmem:[%s356 + $0x838] sm:$0xff]
        %v691 = vld [vmem:[%s356 + $0x840] sm:$0xff]
        %v692 = vld [vmem:[%s356 + $0x848] sm:$0xff]
        %v693 = vld [vmem:[%s356 + $0x850] sm:$0xff]
        %v694 = vld [vmem:[%s356 + $0x858] sm:$0xff]
        %v695 = vld [vmem:[%s356 + $0x860] sm:$0xff]
        %v696 = vld [vmem:[%s356 + $0x868] sm:$0xff]
        %v697 = vld [vmem:[%s356 + $0x870] sm:$0xff]
        %v698 = vld [vmem:[%s356 + $0x878] sm:$0xff]
        %v699 = vld [vmem:[%s356 + $0x880] sm:$0xff]
        %v700 = vld [vmem:[%s356 + $0x888] sm:$0xff]
        %v701 = vld [vmem:[%s356 + $0x890] sm:$0xff]
        %v702 = vld [vmem:[%s356 + $0x898] sm:$0xff]
        %v703 = vld [vmem:[%s356 + $0x8a0] sm:$0xff]
        %v704 = vld [vmem:[%s356 + $0x8a8] sm:$0xff]
        %v705 = vld [vmem:[%s356 + $0x8b0] sm:$0xff]
        %v706 = vld [vmem:[%s356 + $0x8b8] sm:$0xff]
        %v707 = vld [vmem:[%s356 + $0x8c0] sm:$0xff]
        %v708 = vld [vmem:[%s356 + $0x8c8] sm:$0xff]
        %v709 = vld [vmem:[%s356 + $0x8d0] sm:$0xff]
        %v710 = vld [vmem:[%s356 + $0x8d8] sm:$0xff]
        %v711 = vld [vmem:[%s356 + $0x8e0] sm:$0xff]
        %v712 = vld [vmem:[%s356 + $0x8e8] sm:$0xff]
        %v713 = vld [vmem:[%s356 + $0x8f0] sm:$0xff]
        %v714 = vld [vmem:[%s356 + $0x8f8] sm:$0xff]
        %v715 = vld [vmem:[%s356 + $0x900] sm:$0xff]
        %v716 = vld [vmem:[%s356 + $0x908] sm:$0xff]
        %v717 = vld [vmem:[%s356 + $0x910] sm:$0xff]
        %v718 = vld [vmem:[%s356 + $0x918] sm:$0xff]
        %v719 = vld [vmem:[%s356 + $0x920] sm:$0xff]
        %v720 = vld [vmem:[%s356 + $0x928] sm:$0xff]
        %v721 = vld [vmem:[%s356 + $0x930] sm:$0xff]
        %v722 = vld [vmem:[%s356 + $0x938] sm:$0xff]
        %v723 = vld [vmem:[%s356 + $0x940] sm:$0xff]
        %v724 = vld [vmem:[%s356 + $0x948] sm:$0xff]
        %v725 = vld [vmem:[%s356 + $0x950] sm:$0xff]
        %v726 = vld [vmem:[%s356 + $0x958] sm:$0xff]
        %v727 = vld [vmem:[%s356 + $0x960] sm:$0xff]
        %v728 = vld [vmem:[%s356 + $0x968] sm:$0xff]
        %v729 = vld [vmem:[%s356 + $0x970] sm:$0xff]
        %v730 = vld [vmem:[%s356 + $0x978] sm:$0xff]
        %v731 = vld [vmem:[%s356 + $0x980] sm:$0xff]
        %v732 = vld [vmem:[%s356 + $0x988] sm:$0xff]
        %v733 = vld [vmem:[%s356 + $0x990] sm:$0xff]
        %v734 = vld [vmem:[%s356 + $0x998] sm:$0xff]
        %v735 = vld [vmem:[%s356 + $0x9a0] sm:$0xff]
        %v736 = vld [vmem:[%s356 + $0x9a8] sm:$0xff]
        %v737 = vld [vmem:[%s356 + $0x9b0] sm:$0xff]
        %v738 = vld [vmem:[%s356 + $0x9b8] sm:$0xff]
        %v739 = vld [vmem:[%s356 + $0x9c0] sm:$0xff]
        %v740 = vld [vmem:[%s356 + $0x9c8] sm:$0xff]
        %v741 = vld [vmem:[%s356 + $0x9d0] sm:$0xff]
        %v742 = vld [vmem:[%s356 + $0x9d8] sm:$0xff]
        %v743 = vld [vmem:[%s356 + $0x9e0] sm:$0xff]
        %v744 = vld [vmem:[%s356 + $0x9e8] sm:$0xff]
        %v745 = vld [vmem:[%s356 + $0x9f0] sm:$0xff]
        %v746 = vld [vmem:[%s356 + $0x9f8] sm:$0xff]
        %v747 = vld [vmem:[%s356 + $0xa00] sm:$0xff]
        %v748 = vld [vmem:[%s356 + $0xa08] sm:$0xff]
        %v749 = vld [vmem:[%s356 + $0xa10] sm:$0xff]
        %v750 = vld [vmem:[%s356 + $0xa18] sm:$0xff]
        %v751 = vld [vmem:[%s356 + $0xa20] sm:$0xff]
        %v752 = vld [vmem:[%s356 + $0xa28] sm:$0xff]
        %v753 = vld [vmem:[%s356 + $0xa30] sm:$0xff]
        %v754 = vld [vmem:[%s356 + $0xa38] sm:$0xff]
        %v755 = vld [vmem:[%s356 + $0xa40] sm:$0xff]
        %v756 = vld [vmem:[%s356 + $0xa48] sm:$0xff]
        %v757 = vld [vmem:[%s356 + $0xa50] sm:$0xff]
        %v758 = vld [vmem:[%s356 + $0xa58] sm:$0xff]
        %v759 = vld [vmem:[%s356 + $0xa60] sm:$0xff]
        %v760 = vld [vmem:[%s356 + $0xa68] sm:$0xff]
        %v761 = vld [vmem:[%s356 + $0xa70] sm:$0xff]
        %v762 = vld [vmem:[%s356 + $0xa78] sm:$0xff]
        %v763 = vld [vmem:[%s356 + $0xa80] sm:$0xff]
        %v764 = vld [vmem:[%s356 + $0xa88] sm:$0xff]
        %v765 = vld [vmem:[%s356 + $0xa90] sm:$0xff]
        %v766 = vld [vmem:[%s356 + $0xa98] sm:$0xff]
        %v767 = vld [vmem:[%s356 + $0xaa0] sm:$0xff]
        %v768 = vld [vmem:[%s356 + $0xaa8] sm:$0xff]
        %v769 = vld [vmem:[%s356 + $0xab0] sm:$0xff]
        %v770 = vld [vmem:[%s356 + $0xab8] sm:$0xff]
        %v771 = vld [vmem:[%s356 + $0xac0] sm:$0xff]
        %v772 = vld [vmem:[%s356 + $0xac8] sm:$0xff]
        %v773 = vld [vmem:[%s356 + $0xad0] sm:$0xff]
        %v774 = vld [vmem:[%s356 + $0xad8] sm:$0xff]
        %v775 = vld [vmem:[%s356 + $0xae0] sm:$0xff]
        %v776 = vld [vmem:[%s356 + $0xae8] sm:$0xff]
        %v777 = vld [vmem:[%s356 + $0xaf0] sm:$0xff]
        %v778 = vld [vmem:[%s356 + $0xaf8] sm:$0xff]
        %v779 = vld [vmem:[%s356 + $0xb00] sm:$0xff]
        %v780 = vld [vmem:[%s356 + $0xb08] sm:$0xff]
        %v781 = vld [vmem:[%s356 + $0xb10] sm:$0xff]
        %v782 = vld [vmem:[%s356 + $0xb18] sm:$0xff]
        %v783 = vld [vmem:[%s356 + $0xb20] sm:$0xff]
        %v784 = vld [vmem:[%s356 + $0xb28] sm:$0xff]
        %v785 = vld [vmem:[%s356 + $0xb30] sm:$0xff]
        %v786 = vld [vmem:[%s356 + $0xb38] sm:$0xff]
        %v787 = vld [vmem:[%s356 + $0xb40] sm:$0xff]
        %v788 = vld [vmem:[%s356 + $0xb48] sm:$0xff]
        %v789 = vld [vmem:[%s356 + $0xb50] sm:$0xff]
        %v790 = vld [vmem:[%s356 + $0xb58] sm:$0xff]
        %v791 = vld [vmem:[%s356 + $0xb60] sm:$0xff]
        %v792 = vld [vmem:[%s356 + $0xb68] sm:$0xff]
        %v793 = vld [vmem:[%s356 + $0xb70] sm:$0xff]
        %v794 = vld [vmem:[%s356 + $0xb78] sm:$0xff]
        %v795 = vld [vmem:[%s356 + $0xb80] sm:$0xff]
        %v796 = vld [vmem:[%s356 + $0xb88] sm:$0xff]
        %v797 = vld [vmem:[%s356 + $0xb90] sm:$0xff]
        %v798 = vld [vmem:[%s356 + $0xb98] sm:$0xff]
        %v799 = vld [vmem:[%s356 + $0xba0] sm:$0xff]
        %v800 = vld [vmem:[%s356 + $0xba8] sm:$0xff]
        %v801 = vld [vmem:[%s356 + $0xbb0] sm:$0xff]
        %v802 = vld [vmem:[%s356 + $0xbb8] sm:$0xff]
        %v803 = vld [vmem:[%s356 + $0xbc0] sm:$0xff]
        %v804 = vld [vmem:[%s356 + $0xbc8] sm:$0xff]
        %v805 = vld [vmem:[%s356 + $0xbd0] sm:$0xff]
        %v806 = vld [vmem:[%s356 + $0xbd8] sm:$0xff]
        %v807 = vld [vmem:[%s356 + $0xbe0] sm:$0xff]
        %v808 = vld [vmem:[%s356 + $0xbe8] sm:$0xff]
        %v809 = vld [vmem:[%s356 + $0xbf0] sm:$0xff]
        %v810 = vld [vmem:[%s356 + $0xbf8] sm:$0xff]
        %v811 = vld [vmem:[%s356 + $0xc00] sm:$0xff]
        %v812 = vld [vmem:[%s356 + $0xc08] sm:$0xff]
        %v813 = vld [vmem:[%s356 + $0xc10] sm:$0xff]
        %v814 = vld [vmem:[%s356 + $0xc18] sm:$0xff]
        %v815 = vld [vmem:[%s356 + $0xc20] sm:$0xff]
        %v816 = vld [vmem:[%s356 + $0xc28] sm:$0xff]
        %v817 = vld [vmem:[%s356 + $0xc30] sm:$0xff]
        %v818 = vld [vmem:[%s356 + $0xc38] sm:$0xff]
        %v819 = vld [vmem:[%s356 + $0xc40] sm:$0xff]
        %v820 = vld [vmem:[%s356 + $0xc48] sm:$0xff]
        %v821 = vld [vmem:[%s356 + $0xc50] sm:$0xff]
        %v822 = vld [vmem:[%s356 + $0xc58] sm:$0xff]
        %v823 = vld [vmem:[%s356 + $0xc60] sm:$0xff]
        %v824 = vld [vmem:[%s356 + $0xc68] sm:$0xff]
        %v825 = vld [vmem:[%s356 + $0xc70] sm:$0xff]
        %v826 = vld [vmem:[%s356 + $0xc78] sm:$0xff]
        %v827 = vld [vmem:[%s356 + $0xc80] sm:$0xff]
        %v828 = vld [vmem:[%s356 + $0xc88] sm:$0xff]
        %v829 = vld [vmem:[%s356 + $0xc90] sm:$0xff]
        %v830 = vld [vmem:[%s356 + $0xc98] sm:$0xff]
        %v831 = vld [vmem:[%s356 + $0xca0] sm:$0xff]
        %v832 = vld [vmem:[%s356 + $0xca8] sm:$0xff]
        %v833 = vld [vmem:[%s356 + $0xcb0] sm:$0xff]
        %v834 = vld [vmem:[%s356 + $0xcb8] sm:$0xff]
        %v835 = vld [vmem:[%s356 + $0xcc0] sm:$0xff]
        %v836 = vld [vmem:[%s356 + $0xcc8] sm:$0xff]
        %v837 = vld [vmem:[%s356 + $0xcd0] sm:$0xff]
        %v838 = vld [vmem:[%s356 + $0xcd8] sm:$0xff]
        %v839 = vld [vmem:[%s356 + $0xce0] sm:$0xff]
        %v840 = vld [vmem:[%s356 + $0xce8] sm:$0xff]
        %v841 = vld [vmem:[%s356 + $0xcf0] sm:$0xff]
        %v842 = vld [vmem:[%s356 + $0xcf8] sm:$0xff]
        %v843 = vld [vmem:[%s356 + $0xd00] sm:$0xff]
        %v844 = vld [vmem:[%s356 + $0xd08] sm:$0xff]
        %v845 = vld [vmem:[%s356 + $0xd10] sm:$0xff]
        %v846 = vld [vmem:[%s356 + $0xd18] sm:$0xff]
        %v847 = vld [vmem:[%s356 + $0xd20] sm:$0xff]
        %v848 = vld [vmem:[%s356 + $0xd28] sm:$0xff]
        %v849 = vld [vmem:[%s356 + $0xd30] sm:$0xff]
        %v850 = vld [vmem:[%s356 + $0xd38] sm:$0xff]
        %v851 = vld [vmem:[%s356 + $0xd40] sm:$0xff]
        %v852 = vld [vmem:[%s356 + $0xd48] sm:$0xff]
        %v853 = vld [vmem:[%s356 + $0xd50] sm:$0xff]
        %v854 = vld [vmem:[%s356 + $0xd58] sm:$0xff]
        %v855 = vld [vmem:[%s356 + $0xd60] sm:$0xff]
        %v856 = vld [vmem:[%s356 + $0xd68] sm:$0xff]
        %v857 = vld [vmem:[%s356 + $0xd70] sm:$0xff]
        %v858 = vld [vmem:[%s356 + $0xd78] sm:$0xff]
        %v859 = vld [vmem:[%s356 + $0xd80] sm:$0xff]
        %v860 = vld [vmem:[%s356 + $0xd88] sm:$0xff]
        %v861 = vld [vmem:[%s356 + $0xd90] sm:$0xff]
        %v862 = vld [vmem:[%s356 + $0xd98] sm:$0xff]
        %v863 = vld [vmem:[%s356 + $0xda0] sm:$0xff]
        %v864 = vld [vmem:[%s356 + $0xda8] sm:$0xff]
        %v865 = vld [vmem:[%s356 + $0xdb0] sm:$0xff]
        %v866 = vld [vmem:[%s356 + $0xdb8] sm:$0xff]
        %v867 = vld [vmem:[%s356 + $0xdc0] sm:$0xff]
        %v868 = vld [vmem:[%s356 + $0xdc8] sm:$0xff]
        %v869 = vld [vmem:[%s356 + $0xdd0] sm:$0xff]
        %v870 = vld [vmem:[%s356 + $0xdd8] sm:$0xff]
        %v871 = vld [vmem:[%s356 + $0xde0] sm:$0xff]
        %v872 = vld [vmem:[%s356 + $0xde8] sm:$0xff]
        %v873 = vld [vmem:[%s356 + $0xdf0] sm:$0xff]
        %v874 = vld [vmem:[%s356 + $0xdf8] sm:$0xff]
        %v875 = vld [vmem:[%s356 + $0xe00] sm:$0xff]
        %v876 = vld [vmem:[%s356 + $0xe08] sm:$0xff]
        %v877 = vld [vmem:[%s356 + $0xe10] sm:$0xff]
        %v878 = vld [vmem:[%s356 + $0xe18] sm:$0xff]
        %v879 = vld [vmem:[%s356 + $0xe20] sm:$0xff]
        %v880 = vld [vmem:[%s356 + $0xe28] sm:$0xff]
        %v881 = vld [vmem:[%s356 + $0xe30] sm:$0xff]
        %v882 = vld [vmem:[%s356 + $0xe38] sm:$0xff]
        %v883 = vld [vmem:[%s356 + $0xe40] sm:$0xff]
        %v884 = vld [vmem:[%s356 + $0xe48] sm:$0xff]
        %v885 = vld [vmem:[%s356 + $0xe50] sm:$0xff]
        %v886 = vld [vmem:[%s356 + $0xe58] sm:$0xff]
        %v887 = vld [vmem:[%s356 + $0xe60] sm:$0xff]
        %v888 = vld [vmem:[%s356 + $0xe68] sm:$0xff]
        %v889 = vld [vmem:[%s356 + $0xe70] sm:$0xff]
        %v890 = vld [vmem:[%s356 + $0xe78] sm:$0xff]
        %v891 = vld [vmem:[%s356 + $0xe80] sm:$0xff]
        %v892 = vld [vmem:[%s356 + $0xe88] sm:$0xff]
        %v893 = vld [vmem:[%s356 + $0xe90] sm:$0xff]
        %v894 = vld [vmem:[%s356 + $0xe98] sm:$0xff]
        %v895 = vld [vmem:[%s356 + $0xea0] sm:$0xff]
        %v896 = vld [vmem:[%s356 + $0xea8] sm:$0xff]
        %v897 = vld [vmem:[%s356 + $0xeb0] sm:$0xff]
        %v898 = vld [vmem:[%s356 + $0xeb8] sm:$0xff]
        %v899 = vld [vmem:[%s356 + $0xec0] sm:$0xff]
        %v900 = vld [vmem:[%s356 + $0xec8] sm:$0xff]
        %v901 = vld [vmem:[%s356 + $0xed0] sm:$0xff]
        %v902 = vld [vmem:[%s356 + $0xed8] sm:$0xff]
        %v903 = vld [vmem:[%s356 + $0xee0] sm:$0xff]
        %v904 = vld [vmem:[%s356 + $0xee8] sm:$0xff]
        %v905 = vld [vmem:[%s356 + $0xef0] sm:$0xff]
        %v906 = vld [vmem:[%s356 + $0xef8] sm:$0xff]
        %v907 = vld [vmem:[%s356 + $0xf00] sm:$0xff]
        %v908 = vld [vmem:[%s356 + $0xf08] sm:$0xff]
        %v909 = vld [vmem:[%s356 + $0xf10] sm:$0xff]
        %v910 = vld [vmem:[%s356 + $0xf18] sm:$0xff]
        %v911 = vld [vmem:[%s356 + $0xf20] sm:$0xff]
        %v912 = vld [vmem:[%s356 + $0xf28] sm:$0xff]
        %v913 = vld [vmem:[%s356 + $0xf30] sm:$0xff]
        %v914 = vld [vmem:[%s356 + $0xf38] sm:$0xff]
        %v915 = vld [vmem:[%s356 + $0xf40] sm:$0xff]
        %v916 = vld [vmem:[%s356 + $0xf48] sm:$0xff]
        %v917 = vld [vmem:[%s356 + $0xf50] sm:$0xff]
        %v918 = vld [vmem:[%s356 + $0xf58] sm:$0xff]
        %v919 = vld [vmem:[%s356 + $0xf60] sm:$0xff]
        %v920 = vld [vmem:[%s356 + $0xf68] sm:$0xff]
        %v921 = vld [vmem:[%s356 + $0xf70] sm:$0xff]
        %v922 = vld [vmem:[%s356 + $0xf78] sm:$0xff]
        %v923 = vld [vmem:[%s356 + $0xf80] sm:$0xff]
        %v924 = vld [vmem:[%s356 + $0xf88] sm:$0xff]
        %v925 = vld [vmem:[%s356 + $0xf90] sm:$0xff]
        %v926 = vld [vmem:[%s356 + $0xf98] sm:$0xff]
        %v927 = vld [vmem:[%s356 + $0xfa0] sm:$0xff]
        %v928 = vld [vmem:[%s356 + $0xfa8] sm:$0xff]
        %v929 = vld [vmem:[%s356 + $0xfb0] sm:$0xff]
        %v930 = vld [vmem:[%s356 + $0xfb8] sm:$0xff]
        %v931 = vld [vmem:[%s356 + $0xfc0] sm:$0xff]
        %v932 = vld [vmem:[%s356 + $0xfc8] sm:$0xff]
        %v933 = vld [vmem:[%s356 + $0xfd0] sm:$0xff]
        %v934 = vld [vmem:[%s356 + $0xfd8] sm:$0xff]
        %v935 = vld [vmem:[%s356 + $0xfe0] sm:$0xff]
        %v936 = vld [vmem:[%s356 + $0xfe8] sm:$0xff]
        %v937 = vld [vmem:[%s356 + $0xff0] sm:$0xff]
        %v938 = vld [vmem:[%s356 + $0xff8] sm:$0xff]
        %v939 = vld [vmem:[%s356 + $0x1000] sm:$0xff]
        %v940 = vld [vmem:[%s356 + $0x1008] sm:$0xff]
        %v941 = vld [vmem:[%s356 + $0x1010] sm:$0xff]
        %v942 = vld [vmem:[%s356 + $0x1018] sm:$0xff]
        %v943 = vld [vmem:[%s356 + $0x1020] sm:$0xff]
        %v944 = vld [vmem:[%s356 + $0x1028] sm:$0xff]
        %v945 = vld [vmem:[%s356 + $0x1030] sm:$0xff]
        %v946 = vld [vmem:[%s356 + $0x1038] sm:$0xff]
        %v947 = vld [vmem:[%s356 + $0x1040] sm:$0xff]
        %v948 = vld [vmem:[%s356 + $0x1048] sm:$0xff]
        %v949 = vld [vmem:[%s356 + $0x1050] sm:$0xff]
        %v950 = vld [vmem:[%s356 + $0x1058] sm:$0xff]
        %v951 = vld [vmem:[%s356 + $0x1060] sm:$0xff]
        %v952 = vld [vmem:[%s356 + $0x1068] sm:$0xff]
        %v953 = vld [vmem:[%s356 + $0x1070] sm:$0xff]
        %v954 = vld [vmem:[%s356 + $0x1078] sm:$0xff]
        %v955 = vld [vmem:[%s356 + $0x1080] sm:$0xff]
        %v956 = vld [vmem:[%s356 + $0x1088] sm:$0xff]
        %v957 = vld [vmem:[%s356 + $0x1090] sm:$0xff]
        %v958 = vld [vmem:[%s356 + $0x1098] sm:$0xff]
        %v959 = vld [vmem:[%s356 + $0x10a0] sm:$0xff]
        %v960 = vld [vmem:[%s356 + $0x10a8] sm:$0xff]
        %v961 = vld [vmem:[%s356 + $0x10b0] sm:$0xff]
        %v962 = vld [vmem:[%s356 + $0x10b8] sm:$0xff]
        %v963 = vld [vmem:[%s356 + $0x10c0] sm:$0xff]
        %v964 = vld [vmem:[%s356 + $0x10c8] sm:$0xff]
        %v965 = vld [vmem:[%s356 + $0x10d0] sm:$0xff]
        %v966 = vld [vmem:[%s356 + $0x10d8] sm:$0xff]
        %v967 = vld [vmem:[%s356 + $0x10e0] sm:$0xff]
        %v968 = vld [vmem:[%s356 + $0x10e8] sm:$0xff]
        %v969 = vld [vmem:[%s356 + $0x10f0] sm:$0xff]
        %v970 = vld [vmem:[%s356 + $0x10f8] sm:$0xff]
        %v971 = vld [vmem:[%s356 + $0x1100] sm:$0xff]
        %v972 = vld [vmem:[%s356 + $0x1108] sm:$0xff]
        %v973 = vld [vmem:[%s356 + $0x1110] sm:$0xff]
        %v974 = vld [vmem:[%s356 + $0x1118] sm:$0xff]
        %v975 = vld [vmem:[%s356 + $0x1120] sm:$0xff]
        %v976 = vld [vmem:[%s356 + $0x1128] sm:$0xff]
        %v977 = vld [vmem:[%s356 + $0x1130] sm:$0xff]
        %v978 = vld [vmem:[%s356 + $0x1138] sm:$0xff]
        %v979 = vld [vmem:[%s356 + $0x1140] sm:$0xff]
        %v980 = vld [vmem:[%s356 + $0x1148] sm:$0xff]
        %v981 = vld [vmem:[%s356 + $0x1150] sm:$0xff]
        %v982 = vld [vmem:[%s356 + $0x1158] sm:$0xff]
        %v983 = vld [vmem:[%s356 + $0x1160] sm:$0xff]
        %v984 = vld [vmem:[%s356 + $0x1168] sm:$0xff]
        %v985 = vld [vmem:[%s356 + $0x1170] sm:$0xff]
        %v986 = vld [vmem:[%s356 + $0x1178] sm:$0xff]
        %v987 = vld [vmem:[%s356 + $0x1180] sm:$0xff]
        %v988 = vld [vmem:[%s356 + $0x1188] sm:$0xff]
        %v989 = vld [vmem:[%s356 + $0x1190] sm:$0xff]
        %v990 = vld [vmem:[%s356 + $0x1198] sm:$0xff]
        %v991 = vld [vmem:[%s356 + $0x11a0] sm:$0xff]
        %v992 = vld [vmem:[%s356 + $0x11a8] sm:$0xff]
        %v993 = vld [vmem:[%s356 + $0x11b0] sm:$0xff]
        %v994 = vld [vmem:[%s356 + $0x11b8] sm:$0xff]
        %v995 = vld [vmem:[%s356 + $0x11c0] sm:$0xff]
        %v996 = vld [vmem:[%s356 + $0x11c8] sm:$0xff]
        %v997 = vld [vmem:[%s356 + $0x11d0] sm:$0xff]
        %v998 = vld [vmem:[%s356 + $0x11d8] sm:$0xff]
        %v999 = vld [vmem:[%s356 + $0x11e0] sm:$0xff]
        %v1000 = vld [vmem:[%s356 + $0x11e8] sm:$0xff]
        %v1001 = vld [vmem:[%s356 + $0x11f0] sm:$0xff]
        %v1002 = vld [vmem:[%s356 + $0x11f8] sm:$0xff]
        %v1003 = vld [vmem:[%s356 + $0x1200] sm:$0xff]
        %v1004 = vld [vmem:[%s356 + $0x1208] sm:$0xff]
        %v1005 = vld [vmem:[%s356 + $0x1210] sm:$0xff]
        %v1006 = vld [vmem:[%s356 + $0x1218] sm:$0xff]
        %v1007 = vld [vmem:[%s356 + $0x1220] sm:$0xff]
        %v1008 = vld [vmem:[%s356 + $0x1228] sm:$0xff]
        %v1009 = vld [vmem:[%s356 + $0x1230] sm:$0xff]
        %v1010 = vld [vmem:[%s356 + $0x1238] sm:$0xff]
        %v1011 = vld [vmem:[%s356 + $0x1240] sm:$0xff]
        %v1012 = vld [vmem:[%s356 + $0x1248] sm:$0xff]
        %v1013 = vld [vmem:[%s356 + $0x1250] sm:$0xff]
        %v1014 = vld [vmem:[%s356 + $0x1258] sm:$0xff]
        %v1015 = vld [vmem:[%s356 + $0x1260] sm:$0xff]
        %v1016 = vld [vmem:[%s356 + $0x1268] sm:$0xff]
        %v1017 = vld [vmem:[%s356 + $0x1270] sm:$0xff]
        %v1018 = vld [vmem:[%s356 + $0x1278] sm:$0xff]
        %v1019 = vld [vmem:[%s356 + $0x1280] sm:$0xff]
        %v1020 = vld [vmem:[%s356 + $0x1288] sm:$0xff]
        %v1021 = vld [vmem:[%s356 + $0x1290] sm:$0xff]
        %v1022 = vld [vmem:[%s356 + $0x1298] sm:$0xff]
        %v1023 = vld [vmem:[%s356 + $0x12a0] sm:$0xff]
        %v1024 = vld [vmem:[%s356 + $0x12a8] sm:$0xff]
        %v1025 = vld [vmem:[%s356 + $0x12b0] sm:$0xff]
        %v1026 = vld [vmem:[%s356 + $0x12b8] sm:$0xff]
        %v1027 = vld [vmem:[%s356 + $0x12c0] sm:$0xff]
        %v1028 = vld [vmem:[%s356 + $0x12c8] sm:$0xff]
        %v1029 = vld [vmem:[%s356 + $0x12d0] sm:$0xff]
        %v1030 = vld [vmem:[%s356 + $0x12d8] sm:$0xff]
        %v1031 = vld [vmem:[%s356 + $0x12e0] sm:$0xff]
        %v1032 = vld [vmem:[%s356 + $0x12e8] sm:$0xff]
        %v1033 = vld [vmem:[%s356 + $0x12f0] sm:$0xff]
        %v1034 = vld [vmem:[%s356 + $0x12f8] sm:$0xff]
        %v1035 = vld [vmem:[%s356 + $0x1300] sm:$0xff]
        %v1036 = vld [vmem:[%s356 + $0x1308] sm:$0xff]
        %v1037 = vld [vmem:[%s356 + $0x1310] sm:$0xff]
        %v1038 = vld [vmem:[%s356 + $0x1318] sm:$0xff]
        %v1039 = vld [vmem:[%s356 + $0x1320] sm:$0xff]
        %v1040 = vld [vmem:[%s356 + $0x1328] sm:$0xff]
        %v1041 = vld [vmem:[%s356 + $0x1330] sm:$0xff]
        %v1042 = vld [vmem:[%s356 + $0x1338] sm:$0xff]
        %v1043 = vld [vmem:[%s356 + $0x1340] sm:$0xff]
        %v1044 = vld [vmem:[%s356 + $0x1348] sm:$0xff]
        %v1045 = vld [vmem:[%s356 + $0x1350] sm:$0xff]
        %v1046 = vld [vmem:[%s356 + $0x1358] sm:$0xff]
        %v1047 = vld [vmem:[%s356 + $0x1360] sm:$0xff]
        %v1048 = vld [vmem:[%s356 + $0x1368] sm:$0xff]
        %v1049 = vld [vmem:[%s356 + $0x1370] sm:$0xff]
        %v1050 = vld [vmem:[%s356 + $0x1378] sm:$0xff]
        %v1051 = vld [vmem:[%s356 + $0x1380] sm:$0xff]
        %v1052 = vld [vmem:[%s356 + $0x1388] sm:$0xff]
        %v1053 = vld [vmem:[%s356 + $0x1390] sm:$0xff]
        %v1054 = vld [vmem:[%s356 + $0x1398] sm:$0xff]
        %v1055 = vld [vmem:[%s356 + $0x13a0] sm:$0xff]
        %v1056 = vld [vmem:[%s356 + $0x13a8] sm:$0xff]
        %v1057 = vld [vmem:[%s356 + $0x13b0] sm:$0xff]
        %v1058 = vld [vmem:[%s356 + $0x13b8] sm:$0xff]
        %v1059 = vld [vmem:[%s356 + $0x13c0] sm:$0xff]
        %v1060 = vld [vmem:[%s356 + $0x13c8] sm:$0xff]
        %v1061 = vld [vmem:[%s356 + $0x13d0] sm:$0xff]
        %v1062 = vld [vmem:[%s356 + $0x13d8] sm:$0xff]
        %v1063 = vld [vmem:[%s356 + $0x13e0] sm:$0xff]
        %v1064 = vld [vmem:[%s356 + $0x13e8] sm:$0xff]
        %v1065 = vld [vmem:[%s356 + $0x13f0] sm:$0xff]
        %v1066 = vld [vmem:[%s356 + $0x13f8] sm:$0xff]
        %v1067 = vld [vmem:[%s356 + $0x1400] sm:$0xff]
        %v1068 = vld [vmem:[%s356 + $0x1408] sm:$0xff]
        %v1069 = vld [vmem:[%s356 + $0x1410] sm:$0xff]
        %v1070 = vld [vmem:[%s356 + $0x1418] sm:$0xff]
        %v1071 = vld [vmem:[%s356 + $0x1420] sm:$0xff]
        %v1072 = vld [vmem:[%s356 + $0x1428] sm:$0xff]
        %v1073 = vld [vmem:[%s356 + $0x1430] sm:$0xff]
        %v1074 = vld [vmem:[%s356 + $0x1438] sm:$0xff]
        %v1075 = vld [vmem:[%s356 + $0x1440] sm:$0xff]
        %v1076 = vld [vmem:[%s356 + $0x1448] sm:$0xff]
        %v1077 = vld [vmem:[%s356 + $0x1450] sm:$0xff]
        %v1078 = vld [vmem:[%s356 + $0x1458] sm:$0xff]
        %v1079 = vld [vmem:[%s356 + $0x1460] sm:$0xff]
        %v1080 = vld [vmem:[%s356 + $0x1468] sm:$0xff]
        %v1081 = vld [vmem:[%s356 + $0x1470] sm:$0xff]
        %v1082 = vld [vmem:[%s356 + $0x1478] sm:$0xff]
        %v1083 = vld [vmem:[%s356 + $0x1480] sm:$0xff]
        %v1084 = vld [vmem:[%s356 + $0x1488] sm:$0xff]
        %v1085 = vld [vmem:[%s356 + $0x1490] sm:$0xff]
        %v1086 = vld [vmem:[%s356 + $0x1498] sm:$0xff]
        %v1087 = vld [vmem:[%s356 + $0x14a0] sm:$0xff]
        %v1088 = vld [vmem:[%s356 + $0x14a8] sm:$0xff]
        %v1089 = vld [vmem:[%s356 + $0x14b0] sm:$0xff]
        %v1090 = vld [vmem:[%s356 + $0x14b8] sm:$0xff]
        %v1091 = vld [vmem:[%s356 + $0x14c0] sm:$0xff]
        %v1092 = vld [vmem:[%s356 + $0x14c8] sm:$0xff]
        %v1093 = vld [vmem:[%s356 + $0x14d0] sm:$0xff]
        %v1094 = vld [vmem:[%s356 + $0x14d8] sm:$0xff]
        %v1095 = vld [vmem:[%s356 + $0x14e0] sm:$0xff]
        %v1096 = vld [vmem:[%s356 + $0x14e8] sm:$0xff]
        %v1097 = vld [vmem:[%s356 + $0x14f0] sm:$0xff]
        %v1098 = vld [vmem:[%s356 + $0x14f8] sm:$0xff]
        %v1099 = vld [vmem:[%s356 + $0x1500] sm:$0xff]
        %v1100 = vld [vmem:[%s356 + $0x1508] sm:$0xff]
        %v1101 = vld [vmem:[%s356 + $0x1510] sm:$0xff]
        %v1102 = vld [vmem:[%s356 + $0x1518] sm:$0xff]
        %v1103 = vld [vmem:[%s356 + $0x1520] sm:$0xff]
        %v1104 = vld [vmem:[%s356 + $0x1528] sm:$0xff]
        %v1105 = vld [vmem:[%s356 + $0x1530] sm:$0xff]
        %v1106 = vld [vmem:[%s356 + $0x1538] sm:$0xff]
        %v1107 = vld [vmem:[%s356 + $0x1540] sm:$0xff]
        %v1108 = vld [vmem:[%s356 + $0x1548] sm:$0xff]
        %v1109 = vld [vmem:[%s356 + $0x1550] sm:$0xff]
        %v1110 = vld [vmem:[%s356 + $0x1558] sm:$0xff]
        %v1111 = vld [vmem:[%s356 + $0x1560] sm:$0xff]
        %v1112 = vld [vmem:[%s356 + $0x1568] sm:$0xff]
        %v1113 = vld [vmem:[%s356 + $0x1570] sm:$0xff]
        %v1114 = vld [vmem:[%s356 + $0x1578] sm:$0xff]
        %v1115 = vld [vmem:[%s356 + $0x1580] sm:$0xff]
        %v1116 = vld [vmem:[%s356 + $0x1588] sm:$0xff]
        %v1117 = vld [vmem:[%s356 + $0x1590] sm:$0xff]
        %v1118 = vld [vmem:[%s356 + $0x1598] sm:$0xff]
        %v1119 = vld [vmem:[%s356 + $0x15a0] sm:$0xff]
        %v1120 = vld [vmem:[%s356 + $0x15a8] sm:$0xff]
        %v1121 = vld [vmem:[%s356 + $0x15b0] sm:$0xff]
        %v1122 = vld [vmem:[%s356 + $0x15b8] sm:$0xff]
        %v1123 = vld [vmem:[%s356 + $0x15c0] sm:$0xff]
        %v1124 = vld [vmem:[%s356 + $0x15c8] sm:$0xff]
        %v1125 = vld [vmem:[%s356 + $0x15d0] sm:$0xff]
        %v1126 = vld [vmem:[%s356 + $0x15d8] sm:$0xff]
        %v1127 = vld [vmem:[%s356 + $0x15e0] sm:$0xff]
        %v1128 = vld [vmem:[%s356 + $0x15e8] sm:$0xff]
        %v1129 = vld [vmem:[%s356 + $0x15f0] sm:$0xff]
        %v1130 = vld [vmem:[%s356 + $0x15f8] sm:$0xff]
        %v1131 = vld [vmem:[%s356 + $0x1600] sm:$0xff]
        %v1132 = vld [vmem:[%s356 + $0x1608] sm:$0xff]
        %v1133 = vld [vmem:[%s356 + $0x1610] sm:$0xff]
        %v1134 = vld [vmem:[%s356 + $0x1618] sm:$0xff]
        %v1135 = vld [vmem:[%s356 + $0x1620] sm:$0xff]
        %v1136 = vld [vmem:[%s356 + $0x1628] sm:$0xff]
        %v1137 = vld [vmem:[%s356 + $0x1630] sm:$0xff]
        %v1138 = vld [vmem:[%s356 + $0x1638] sm:$0xff]
        %v1139 = vld [vmem:[%s356 + $0x1640] sm:$0xff]
        %v1140 = vld [vmem:[%s356 + $0x1648] sm:$0xff]
        %v1141 = vld [vmem:[%s356 + $0x1650] sm:$0xff]
        %v1142 = vld [vmem:[%s356 + $0x1658] sm:$0xff]
        %v1143 = vld [vmem:[%s356 + $0x1660] sm:$0xff]
        %v1144 = vld [vmem:[%s356 + $0x1668] sm:$0xff]
        %v1145 = vld [vmem:[%s356 + $0x1670] sm:$0xff]
        %v1146 = vld [vmem:[%s356 + $0x1678] sm:$0xff]
        %v1147 = vld [vmem:[%s356 + $0x1680] sm:$0xff]
        %v1148 = vld [vmem:[%s356 + $0x1688] sm:$0xff]
        %v1149 = vld [vmem:[%s356 + $0x1690] sm:$0xff]
        %v1150 = vld [vmem:[%s356 + $0x1698] sm:$0xff]
        %v1151 = vld [vmem:[%s356 + $0x16a0] sm:$0xff]
        %v1152 = vld [vmem:[%s356 + $0x16a8] sm:$0xff]
        %v1153 = vld [vmem:[%s356 + $0x16b0] sm:$0xff]
        %v1154 = vld [vmem:[%s356 + $0x16b8] sm:$0xff]
        %v1155 = vld [vmem:[%s356 + $0x16c0] sm:$0xff]
        %v1156 = vld [vmem:[%s356 + $0x16c8] sm:$0xff]
        %v1157 = vld [vmem:[%s356 + $0x16d0] sm:$0xff]
        %v1158 = vld [vmem:[%s356 + $0x16d8] sm:$0xff]
        %v1159 = vld [vmem:[%s356 + $0x16e0] sm:$0xff]
        %v1160 = vld [vmem:[%s356 + $0x16e8] sm:$0xff]
        %v1161 = vld [vmem:[%s356 + $0x16f0] sm:$0xff]
        %v1162 = vld [vmem:[%s356 + $0x16f8] sm:$0xff]
        %v1163 = vld [vmem:[%s356 + $0x1700] sm:$0xff]
        %v1164 = vld [vmem:[%s356 + $0x1708] sm:$0xff]
        %v1165 = vld [vmem:[%s356 + $0x1710] sm:$0xff]
        %v1166 = vld [vmem:[%s356 + $0x1718] sm:$0xff]
        %v1167 = vld [vmem:[%s356 + $0x1720] sm:$0xff]
        %v1168 = vld [vmem:[%s356 + $0x1728] sm:$0xff]
        %v1169 = vld [vmem:[%s356 + $0x1730] sm:$0xff]
        %v1170 = vld [vmem:[%s356 + $0x1738] sm:$0xff]
        %v1171 = vld [vmem:[%s356 + $0x1740] sm:$0xff]
        %v1172 = vld [vmem:[%s356 + $0x1748] sm:$0xff]
        %v1173 = vld [vmem:[%s356 + $0x1750] sm:$0xff]
        %v1174 = vld [vmem:[%s356 + $0x1758] sm:$0xff]
        %v1175 = vld [vmem:[%s356 + $0x1760] sm:$0xff]
        %v1176 = vld [vmem:[%s356 + $0x1768] sm:$0xff]
        %v1177 = vld [vmem:[%s356 + $0x1770] sm:$0xff]
        %v1178 = vld [vmem:[%s356 + $0x1778] sm:$0xff]
        %v1179 = vld [vmem:[%s356 + $0x1780] sm:$0xff]
        %v1180 = vld [vmem:[%s356 + $0x1788] sm:$0xff]
        %v1181 = vld [vmem:[%s356 + $0x1790] sm:$0xff]
        %v1182 = vld [vmem:[%s356 + $0x1798] sm:$0xff]
        %v1183 = vld [vmem:[%s356 + $0x17a0] sm:$0xff]
        %v1184 = vld [vmem:[%s356 + $0x17a8] sm:$0xff]
        %v1185 = vld [vmem:[%s356 + $0x17b0] sm:$0xff]
        %v1186 = vld [vmem:[%s356 + $0x17b8] sm:$0xff]
        %v1187 = vld [vmem:[%s356 + $0x17c0] sm:$0xff]
        %v1188 = vld [vmem:[%s356 + $0x17c8] sm:$0xff]
        %v1189 = vld [vmem:[%s356 + $0x17d0] sm:$0xff]
        %v1190 = vld [vmem:[%s356 + $0x17d8] sm:$0xff]
        %v1191 = vld [vmem:[%s356 + $0x17e0] sm:$0xff]
        %v1192 = vld [vmem:[%s356 + $0x17e8] sm:$0xff]
        %v1193 = vld [vmem:[%s356 + $0x17f0] sm:$0xff]
        %v1194 = vld [vmem:[%s356 + $0x17f8] sm:$0xff]
        %v1195 = vld [vmem:[%s356 + $0x1800] sm:$0xff]
        %v1196 = vld [vmem:[%s356 + $0x1808] sm:$0xff]
        %v1197 = vld [vmem:[%s356 + $0x1810] sm:$0xff]
        %v1198 = vld [vmem:[%s356 + $0x1818] sm:$0xff]
        %v1199 = vld [vmem:[%s356 + $0x1820] sm:$0xff]
        %v1200 = vld [vmem:[%s356 + $0x1828] sm:$0xff]
        %v1201 = vld [vmem:[%s356 + $0x1830] sm:$0xff]
        %v1202 = vld [vmem:[%s356 + $0x1838] sm:$0xff]
        %v1203 = vld [vmem:[%s356 + $0x1840] sm:$0xff]
        %v1204 = vld [vmem:[%s356 + $0x1848] sm:$0xff]
        %v1205 = vld [vmem:[%s356 + $0x1850] sm:$0xff]
        %v1206 = vld [vmem:[%s356 + $0x1858] sm:$0xff]
        %v1207 = vld [vmem:[%s356 + $0x1860] sm:$0xff]
        %v1208 = vld [vmem:[%s356 + $0x1868] sm:$0xff]
        %v1209 = vld [vmem:[%s356 + $0x1870] sm:$0xff]
        %v1210 = vld [vmem:[%s356 + $0x1878] sm:$0xff]
        %v1211 = vld [vmem:[%s356 + $0x1880] sm:$0xff]
        %v1212 = vld [vmem:[%s356 + $0x1888] sm:$0xff]
        %v1213 = vld [vmem:[%s356 + $0x1890] sm:$0xff]
        %v1214 = vld [vmem:[%s356 + $0x1898] sm:$0xff]
        %v1215 = vld [vmem:[%s356 + $0x18a0] sm:$0xff]
        %v1216 = vld [vmem:[%s356 + $0x18a8] sm:$0xff]
        %v1217 = vld [vmem:[%s356 + $0x18b0] sm:$0xff]
        %v1218 = vld [vmem:[%s356 + $0x18b8] sm:$0xff]
        %v1219 = vld [vmem:[%s356 + $0x18c0] sm:$0xff]
        %v1220 = vld [vmem:[%s356 + $0x18c8] sm:$0xff]
        %v1221 = vld [vmem:[%s356 + $0x18d0] sm:$0xff]
        %v1222 = vld [vmem:[%s356 + $0x18d8] sm:$0xff]
        %v1223 = vld [vmem:[%s356 + $0x18e0] sm:$0xff]
        %v1224 = vld [vmem:[%s356 + $0x18e8] sm:$0xff]
        %v1225 = vld [vmem:[%s356 + $0x18f0] sm:$0xff]
        %v1226 = vld [vmem:[%s356 + $0x18f8] sm:$0xff]
        %v1227 = vld [vmem:[%s356 + $0x1900] sm:$0xff]
        %v1228 = vld [vmem:[%s356 + $0x1908] sm:$0xff]
        %v1229 = vld [vmem:[%s356 + $0x1910] sm:$0xff]
        %v1230 = vld [vmem:[%s356 + $0x1918] sm:$0xff]
        %v1231 = vld [vmem:[%s356 + $0x1920] sm:$0xff]
        %v1232 = vld [vmem:[%s356 + $0x1928] sm:$0xff]
        %v1233 = vld [vmem:[%s356 + $0x1930] sm:$0xff]
        %v1234 = vld [vmem:[%s356 + $0x1938] sm:$0xff]
        %v1235 = vld [vmem:[%s356 + $0x1940] sm:$0xff]
        %v1236 = vld [vmem:[%s356 + $0x1948] sm:$0xff]
        %v1237 = vld [vmem:[%s356 + $0x1950] sm:$0xff]
        %v1238 = vld [vmem:[%s356 + $0x1958] sm:$0xff]
        %v1239 = vld [vmem:[%s356 + $0x1960] sm:$0xff]
        %v1240 = vld [vmem:[%s356 + $0x1968] sm:$0xff]
        %v1241 = vld [vmem:[%s356 + $0x1970] sm:$0xff]
        %v1242 = vld [vmem:[%s356 + $0x1978] sm:$0xff]
        %v1243 = vld [vmem:[%s356 + $0x1980] sm:$0xff]
        %v1244 = vld [vmem:[%s356 + $0x1988] sm:$0xff]
        %v1245 = vld [vmem:[%s356 + $0x1990] sm:$0xff]
        %v1246 = vld [vmem:[%s356 + $0x1998] sm:$0xff]
        %v1247 = vld [vmem:[%s356 + $0x19a0] sm:$0xff]
        %v1248 = vld [vmem:[%s356 + $0x19a8] sm:$0xff]
        %v1249 = vld [vmem:[%s356 + $0x19b0] sm:$0xff]
        %v1250 = vld [vmem:[%s356 + $0x19b8] sm:$0xff]
        %v1251 = vld [vmem:[%s356 + $0x19c0] sm:$0xff]
        %v1252 = vld [vmem:[%s356 + $0x19c8] sm:$0xff]
        %v1253 = vld [vmem:[%s356 + $0x19d0] sm:$0xff]
        %v1254 = vld [vmem:[%s356 + $0x19d8] sm:$0xff]
        %v1255 = vld [vmem:[%s356 + $0x19e0] sm:$0xff]
        %v1256 = vld [vmem:[%s356 + $0x19e8] sm:$0xff]
        %v1257 = vld [vmem:[%s356 + $0x19f0] sm:$0xff]
        %v1258 = vld [vmem:[%s356 + $0x19f8] sm:$0xff]
        %v1259 = vld [vmem:[%s356 + $0x1a00] sm:$0xff]
        %v1260 = vld [vmem:[%s356 + $0x1a08] sm:$0xff]
        %v1261 = vld [vmem:[%s356 + $0x1a10] sm:$0xff]
        %v1262 = vld [vmem:[%s356 + $0x1a18] sm:$0xff]
        %v1263 = vld [vmem:[%s356 + $0x1a20] sm:$0xff]
        %v1264 = vld [vmem:[%s356 + $0x1a28] sm:$0xff]
        %v1265 = vld [vmem:[%s356 + $0x1a30] sm:$0xff]
        %v1266 = vld [vmem:[%s356 + $0x1a38] sm:$0xff]
        %v1267 = vld [vmem:[%s356 + $0x1a40] sm:$0xff]
        %v1268 = vld [vmem:[%s356 + $0x1a48] sm:$0xff]
        %v1269 = vld [vmem:[%s356 + $0x1a50] sm:$0xff]
        %v1270 = vld [vmem:[%s356 + $0x1a58] sm:$0xff]
        %v1271 = vld [vmem:[%s356 + $0x1a60] sm:$0xff]
        %v1272 = vld [vmem:[%s356 + $0x1a68] sm:$0xff]
        %v1273 = vld [vmem:[%s356 + $0x1a70] sm:$0xff]
        %v1274 = vld [vmem:[%s356 + $0x1a78] sm:$0xff]
        %v1275 = vld [vmem:[%s356 + $0x1a80] sm:$0xff]
        %v1276 = vld [vmem:[%s356 + $0x1a88] sm:$0xff]
        %v1277 = vld [vmem:[%s356 + $0x1a90] sm:$0xff]
        %v1278 = vld [vmem:[%s356 + $0x1a98] sm:$0xff]
        %v1279 = vld [vmem:[%s356 + $0x1aa0] sm:$0xff]
        %v1280 = vld [vmem:[%s356 + $0x1aa8] sm:$0xff]
        %v1281 = vld [vmem:[%s356 + $0x1ab0] sm:$0xff]
        %v1282 = vld [vmem:[%s356 + $0x1ab8] sm:$0xff]
        %v1283 = vld [vmem:[%s356 + $0x1ac0] sm:$0xff]
        %v1284 = vld [vmem:[%s356 + $0x1ac8] sm:$0xff]
        %v1285 = vld [vmem:[%s356 + $0x1ad0] sm:$0xff]
        %v1286 = vld [vmem:[%s356 + $0x1ad8] sm:$0xff]
        %v1287 = vld [vmem:[%s356 + $0x1ae0] sm:$0xff]
        %v1288 = vld [vmem:[%s356 + $0x1ae8] sm:$0xff]
        %v1289 = vld [vmem:[%s356 + $0x1af0] sm:$0xff]
        %v1290 = vld [vmem:[%s356 + $0x1af8] sm:$0xff]
        %v1291 = vld [vmem:[%s356 + $0x1b00] sm:$0xff]
        %v1292 = vld [vmem:[%s356 + $0x1b08] sm:$0xff]
        %v1293 = vld [vmem:[%s356 + $0x1b10] sm:$0xff]
        %v1294 = vld [vmem:[%s356 + $0x1b18] sm:$0xff]
        %v1295 = vld [vmem:[%s356 + $0x1b20] sm:$0xff]
        %v1296 = vld [vmem:[%s356 + $0x1b28] sm:$0xff]
        %v1297 = vld [vmem:[%s356 + $0x1b30] sm:$0xff]
        %v1298 = vld [vmem:[%s356 + $0x1b38] sm:$0xff]
        %v1299 = vld [vmem:[%s356 + $0x1b40] sm:$0xff]
        %v1300 = vld [vmem:[%s356 + $0x1b48] sm:$0xff]
        %v1301 = vld [vmem:[%s356 + $0x1b50] sm:$0xff]
        %v1302 = vld [vmem:[%s356 + $0x1b58] sm:$0xff]
        %v1303 = vld [vmem:[%s356 + $0x1b60] sm:$0xff]
        %v1304 = vld [vmem:[%s356 + $0x1b68] sm:$0xff]
        %v1305 = vld [vmem:[%s356 + $0x1b70] sm:$0xff]
        %v1306 = vld [vmem:[%s356 + $0x1b78] sm:$0xff]
        %v1307 = vld [vmem:[%s356 + $0x1b80] sm:$0xff]
        %v1308 = vld [vmem:[%s356 + $0x1b88] sm:$0xff]
        %v1309 = vld [vmem:[%s356 + $0x1b90] sm:$0xff]
        %v1310 = vld [vmem:[%s356 + $0x1b98] sm:$0xff]
        %v1311 = vld [vmem:[%s356 + $0x1ba0] sm:$0xff]
        %v1312 = vld [vmem:[%s356 + $0x1ba8] sm:$0xff]
        %v1313 = vld [vmem:[%s356 + $0x1bb0] sm:$0xff]
        %v1314 = vld [vmem:[%s356 + $0x1bb8] sm:$0xff]
        %v1315 = vld [vmem:[%s356 + $0x1bc0] sm:$0xff]
        %v1316 = vld [vmem:[%s356 + $0x1bc8] sm:$0xff]
        %v1317 = vld [vmem:[%s356 + $0x1bd0] sm:$0xff]
        %v1318 = vld [vmem:[%s356 + $0x1bd8] sm:$0xff]
        %v1319 = vld [vmem:[%s356 + $0x1be0] sm:$0xff]
        %v1320 = vld [vmem:[%s356 + $0x1be8] sm:$0xff]
        %v1321 = vld [vmem:[%s356 + $0x1bf0] sm:$0xff]
        %v1322 = vld [vmem:[%s356 + $0x1bf8] sm:$0xff]
        %v1323 = vld [vmem:[%s356 + $0x1c00] sm:$0xff]
        %v1324 = vld [vmem:[%s356 + $0x1c08] sm:$0xff]
        %v1325 = vld [vmem:[%s356 + $0x1c10] sm:$0xff]
        %v1326 = vld [vmem:[%s356 + $0x1c18] sm:$0xff]
        %v1327 = vld [vmem:[%s356 + $0x1c20] sm:$0xff]
        %v1328 = vld [vmem:[%s356 + $0x1c28] sm:$0xff]
        %v1329 = vld [vmem:[%s356 + $0x1c30] sm:$0xff]
        %v1330 = vld [vmem:[%s356 + $0x1c38] sm:$0xff]
        %v1331 = vld [vmem:[%s356 + $0x1c40] sm:$0xff]
        %v1332 = vld [vmem:[%s356 + $0x1c48] sm:$0xff]
        %v1333 = vld [vmem:[%s356 + $0x1c50] sm:$0xff]
        %v1334 = vld [vmem:[%s356 + $0x1c58] sm:$0xff]
        %v1335 = vld [vmem:[%s356 + $0x1c60] sm:$0xff]
        %v1336 = vld [vmem:[%s356 + $0x1c68] sm:$0xff]
        %v1337 = vld [vmem:[%s356 + $0x1c70] sm:$0xff]
        %v1338 = vld [vmem:[%s356 + $0x1c78] sm:$0xff]
        %v1339 = vld [vmem:[%s356 + $0x1c80] sm:$0xff]
        %v1340 = vld [vmem:[%s356 + $0x1c88] sm:$0xff]
        %v1341 = vld [vmem:[%s356 + $0x1c90] sm:$0xff]
        %v1342 = vld [vmem:[%s356 + $0x1c98] sm:$0xff]
        %v1343 = vld [vmem:[%s356 + $0x1ca0] sm:$0xff]
        %v1344 = vld [vmem:[%s356 + $0x1ca8] sm:$0xff]
        %v1345 = vld [vmem:[%s356 + $0x1cb0] sm:$0xff]
        %v1346 = vld [vmem:[%s356 + $0x1cb8] sm:$0xff]
        %v1347 = vld [vmem:[%s356 + $0x1cc0] sm:$0xff]
        %v1348 = vld [vmem:[%s356 + $0x1cc8] sm:$0xff]
        %v1349 = vld [vmem:[%s356 + $0x1cd0] sm:$0xff]
        %v1350 = vld [vmem:[%s356 + $0x1cd8] sm:$0xff]
        %v1351 = vld [vmem:[%s356 + $0x1ce0] sm:$0xff]
        %v1352 = vld [vmem:[%s356 + $0x1ce8] sm:$0xff]
        %v1353 = vld [vmem:[%s356 + $0x1cf0] sm:$0xff]
        %v1354 = vld [vmem:[%s356 + $0x1cf8] sm:$0xff]
        %v1355 = vld [vmem:[%s356 + $0x1d00] sm:$0xff]
        %v1356 = vld [vmem:[%s356 + $0x1d08] sm:$0xff]
        %v1357 = vld [vmem:[%s356 + $0x1d10] sm:$0xff]
        %v1358 = vld [vmem:[%s356 + $0x1d18] sm:$0xff]
        %v1359 = vld [vmem:[%s356 + $0x1d20] sm:$0xff]
        %v1360 = vld [vmem:[%s356 + $0x1d28] sm:$0xff]
        %v1361 = vld [vmem:[%s356 + $0x1d30] sm:$0xff]
        %v1362 = vld [vmem:[%s356 + $0x1d38] sm:$0xff]
        %v1363 = vld [vmem:[%s356 + $0x1d40] sm:$0xff]
        %v1364 = vld [vmem:[%s356 + $0x1d48] sm:$0xff]
        %v1365 = vld [vmem:[%s356 + $0x1d50] sm:$0xff]
        %v1366 = vld [vmem:[%s356 + $0x1d58] sm:$0xff]
        %v1367 = vld [vmem:[%s356 + $0x1d60] sm:$0xff]
        %v1368 = vld [vmem:[%s356 + $0x1d68] sm:$0xff]
        %v1369 = vld [vmem:[%s356 + $0x1d70] sm:$0xff]
        %v1370 = vld [vmem:[%s356 + $0x1d78] sm:$0xff]
        %v1371 = vld [vmem:[%s356 + $0x1d80] sm:$0xff]
        %v1372 = vld [vmem:[%s356 + $0x1d88] sm:$0xff]
        %v1373 = vld [vmem:[%s356 + $0x1d90] sm:$0xff]
        %v1374 = vld [vmem:[%s356 + $0x1d98] sm:$0xff]
        %v1375 = vld [vmem:[%s356 + $0x1da0] sm:$0xff]
        %v1376 = vld [vmem:[%s356 + $0x1da8] sm:$0xff]
        %v1377 = vld [vmem:[%s356 + $0x1db0] sm:$0xff]
        %v1378 = vld [vmem:[%s356 + $0x1db8] sm:$0xff]
        %v1379 = vld [vmem:[%s356 + $0x1dc0] sm:$0xff]
        %v1380 = vld [vmem:[%s356 + $0x1dc8] sm:$0xff]
        %v1381 = vld [vmem:[%s356 + $0x1dd0] sm:$0xff]
        %v1382 = vld [vmem:[%s356 + $0x1dd8] sm:$0xff]
        %v1383 = vld [vmem:[%s356 + $0x1de0] sm:$0xff]
        %v1384 = vld [vmem:[%s356 + $0x1de8] sm:$0xff]
        %v1385 = vld [vmem:[%s356 + $0x1df0] sm:$0xff]
        %v1386 = vld [vmem:[%s356 + $0x1df8] sm:$0xff]
        %v1387 = vld [vmem:[%s356 + $0x1e00] sm:$0xff]
        %v1388 = vld [vmem:[%s356 + $0x1e08] sm:$0xff]
        %v1389 = vld [vmem:[%s356 + $0x1e10] sm:$0xff]
        %v1390 = vld [vmem:[%s356 + $0x1e18] sm:$0xff]
        %v1391 = vld [vmem:[%s356 + $0x1e20] sm:$0xff]
        %v1392 = vld [vmem:[%s356 + $0x1e28] sm:$0xff]
        %v1393 = vld [vmem:[%s356 + $0x1e30] sm:$0xff]
        %v1394 = vld [vmem:[%s356 + $0x1e38] sm:$0xff]
        %v1395 = vld [vmem:[%s356 + $0x1e40] sm:$0xff]
        %v1396 = vld [vmem:[%s356 + $0x1e48] sm:$0xff]
        %v1397 = vld [vmem:[%s356 + $0x1e50] sm:$0xff]
        %v1398 = vld [vmem:[%s356 + $0x1e58] sm:$0xff]
        %v1399 = vld [vmem:[%s356 + $0x1e60] sm:$0xff]
        %v1400 = vld [vmem:[%s356 + $0x1e68] sm:$0xff]
        %v1401 = vld [vmem:[%s356 + $0x1e70] sm:$0xff]
        %v1402 = vld [vmem:[%s356 + $0x1e78] sm:$0xff]
        %v1403 = vld [vmem:[%s356 + $0x1e80] sm:$0xff]
        %v1404 = vld [vmem:[%s356 + $0x1e88] sm:$0xff]
        %v1405 = vld [vmem:[%s356 + $0x1e90] sm:$0xff]
        %v1406 = vld [vmem:[%s356 + $0x1e98] sm:$0xff]
        %v1407 = vld [vmem:[%s356 + $0x1ea0] sm:$0xff]
        %v1408 = vld [vmem:[%s356 + $0x1ea8] sm:$0xff]
        %v1409 = vld [vmem:[%s356 + $0x1eb0] sm:$0xff]
        %v1410 = vld [vmem:[%s356 + $0x1eb8] sm:$0xff]
        %v1411 = vld [vmem:[%s356 + $0x1ec0] sm:$0xff]
        %v1412 = vld [vmem:[%s356 + $0x1ec8] sm:$0xff]
        %v1413 = vld [vmem:[%s356 + $0x1ed0] sm:$0xff]
        %v1414 = vld [vmem:[%s356 + $0x1ed8] sm:$0xff]
        %v1415 = vld [vmem:[%s356 + $0x1ee0] sm:$0xff]
        %v1416 = vld [vmem:[%s356 + $0x1ee8] sm:$0xff]
        %v1417 = vld [vmem:[%s356 + $0x1ef0] sm:$0xff]
        %v1418 = vld [vmem:[%s356 + $0x1ef8] sm:$0xff]
        %v1419 = vld [vmem:[%s356 + $0x1f00] sm:$0xff]
        %v1420 = vld [vmem:[%s356 + $0x1f08] sm:$0xff]
        %v1421 = vld [vmem:[%s356 + $0x1f10] sm:$0xff]
        %v1422 = vld [vmem:[%s356 + $0x1f18] sm:$0xff]
        %v1423 = vld [vmem:[%s356 + $0x1f20] sm:$0xff]
        %v1424 = vld [vmem:[%s356 + $0x1f28] sm:$0xff]
        %v1425 = vld [vmem:[%s356 + $0x1f30] sm:$0xff]
        %v1426 = vld [vmem:[%s356 + $0x1f38] sm:$0xff]
        %v1427 = vld [vmem:[%s356 + $0x1f40] sm:$0xff]
        %v1428 = vld [vmem:[%s356 + $0x1f48] sm:$0xff]
        %v1429 = vld [vmem:[%s356 + $0x1f50] sm:$0xff]
        %v1430 = vld [vmem:[%s356 + $0x1f58] sm:$0xff]
        %v1431 = vld [vmem:[%s356 + $0x1f60] sm:$0xff]
        %v1432 = vld [vmem:[%s356 + $0x1f68] sm:$0xff]
        %v1433 = vld [vmem:[%s356 + $0x1f70] sm:$0xff]
        %v1434 = vld [vmem:[%s356 + $0x1f78] sm:$0xff]
        %v1435 = vld [vmem:[%s356 + $0x1f80] sm:$0xff]
        %v1436 = vld [vmem:[%s356 + $0x1f88] sm:$0xff]
        %v1437 = vld [vmem:[%s356 + $0x1f90] sm:$0xff]
        %v1438 = vld [vmem:[%s356 + $0x1f98] sm:$0xff]
        %v1439 = vld [vmem:[%s356 + $0x1fa0] sm:$0xff]
        %v1440 = vld [vmem:[%s356 + $0x1fa8] sm:$0xff]
        %v1441 = vld [vmem:[%s356 + $0x1fb0] sm:$0xff]
        %v1442 = vld [vmem:[%s356 + $0x1fb8] sm:$0xff]
        %v1443 = vld [vmem:[%s356 + $0x1fc0] sm:$0xff]
        %v1444 = vld [vmem:[%s356 + $0x1fc8] sm:$0xff]
        %v1445 = vld [vmem:[%s356 + $0x1fd0] sm:$0xff]
        %v1446 = vld [vmem:[%s356 + $0x1fd8] sm:$0xff]
        %v1447 = vld [vmem:[%s356 + $0x1fe0] sm:$0xff]
        %v1448 = vld [vmem:[%s356 + $0x1fe8] sm:$0xff]
        %v1449 = vld [vmem:[%s356 + $0x1ff0] sm:$0xff]
        %v1450 = vld [vmem:[%s356 + $0x1ff8] sm:$0xff]
        %v1483 = vunpack.c.l.b16 %v395
        %v1484 = vunpack.c.h.b16 %v395
        %v1485 = vunpack.c.l.b16 %v396
        %v1486 = vunpack.c.h.b16 %v396
        %v1487 = vunpack.c.l.b16 %v397
        %v1488 = vunpack.c.h.b16 %v397
        %v1489 = vunpack.c.l.b16 %v398
        %v1490 = vunpack.c.h.b16 %v398
        %v1491 = vunpack.c.l.b16 %v399
        %v1492 = vunpack.c.h.b16 %v399
        %v1493 = vunpack.c.l.b16 %v400
        %v1494 = vunpack.c.h.b16 %v400
        %v1495 = vunpack.c.l.b16 %v401
        %v1496 = vunpack.c.h.b16 %v401
        %v1497 = vunpack.c.l.b16 %v402
        %v1498 = vunpack.c.h.b16 %v402
        %v1499 = vunpack.c.l.b16 %v403
        %v1500 = vunpack.c.h.b16 %v403
        %v1501 = vunpack.c.l.b16 %v404
        %v1502 = vunpack.c.h.b16 %v404
        %v1503 = vunpack.c.l.b16 %v405
        %v1504 = vunpack.c.h.b16 %v405
        %v1505 = vunpack.c.l.b16 %v406
        %v1506 = vunpack.c.h.b16 %v406
        %v1507 = vunpack.c.l.b16 %v407
        %v1508 = vunpack.c.h.b16 %v407
        %v1509 = vunpack.c.l.b16 %v408
        %v1510 = vunpack.c.h.b16 %v408
        %v1511 = vunpack.c.l.b16 %v409
        %v1512 = vunpack.c.h.b16 %v409
        %v1513 = vunpack.c.l.b16 %v410
        %v1514 = vunpack.c.h.b16 %v410
        %v1515 = vunpack.c.l.b16 %v411
        %v1516 = vunpack.c.h.b16 %v411
        %v1517 = vunpack.c.l.b16 %v412
        %v1518 = vunpack.c.h.b16 %v412
        %v1519 = vunpack.c.l.b16 %v413
        %v1520 = vunpack.c.h.b16 %v413
        %v1521 = vunpack.c.l.b16 %v414
        %v1522 = vunpack.c.h.b16 %v414
        %v1523 = vunpack.c.l.b16 %v415
        %v1524 = vunpack.c.h.b16 %v415
        %v1525 = vunpack.c.l.b16 %v416
        %v1526 = vunpack.c.h.b16 %v416
        %v1527 = vunpack.c.l.b16 %v417
        %v1528 = vunpack.c.h.b16 %v417
        %v1529 = vunpack.c.l.b16 %v418
        %v1530 = vunpack.c.h.b16 %v418
        %v1531 = vunpack.c.l.b16 %v419
        %v1532 = vunpack.c.h.b16 %v419
        %v1533 = vunpack.c.l.b16 %v420
        %v1534 = vunpack.c.h.b16 %v420
        %v1535 = vunpack.c.l.b16 %v421
        %v1536 = vunpack.c.h.b16 %v421
        %v1537 = vunpack.c.l.b16 %v422
        %v1538 = vunpack.c.h.b16 %v422
        %v1539 = vunpack.c.l.b16 %v423
        %v1540 = vunpack.c.h.b16 %v423
        %v1541 = vunpack.c.l.b16 %v424
        %v1542 = vunpack.c.h.b16 %v424
        %v1543 = vunpack.c.l.b16 %v425
        %v1544 = vunpack.c.h.b16 %v425
        %v1545 = vunpack.c.l.b16 %v426
        %v1546 = vunpack.c.h.b16 %v426
        %v1547 = vpack.c.b16 %v1515, %v1483
        %v1548 = vpack.c.b16 %v1516, %v1484
        %v1549 = vpack.c.b16 %v1517, %v1485
        %v1550 = vpack.c.b16 %v1518, %v1486
        %v1551 = vpack.c.b16 %v1519, %v1487
        %v1552 = vpack.c.b16 %v1520, %v1488
        %v1553 = vpack.c.b16 %v1521, %v1489
        %v1554 = vpack.c.b16 %v1522, %v1490
        %v1555 = vpack.c.b16 %v1523, %v1491
        %v1556 = vpack.c.b16 %v1524, %v1492
        %v1557 = vpack.c.b16 %v1525, %v1493
        %v1558 = vpack.c.b16 %v1526, %v1494
        %v1559 = vpack.c.b16 %v1527, %v1495
        %v1560 = vpack.c.b16 %v1528, %v1496
        %v1561 = vpack.c.b16 %v1529, %v1497
        %v1562 = vpack.c.b16 %v1530, %v1498
        %v1563 = vpack.c.b16 %v1531, %v1499
        %v1564 = vpack.c.b16 %v1532, %v1500
        %v1565 = vpack.c.b16 %v1533, %v1501
        %v1566 = vpack.c.b16 %v1534, %v1502
        %v1567 = vpack.c.b16 %v1535, %v1503
        %v1568 = vpack.c.b16 %v1536, %v1504
        %v1569 = vpack.c.b16 %v1537, %v1505
        %v1570 = vpack.c.b16 %v1538, %v1506
        %v1571 = vpack.c.b16 %v1539, %v1507
        %v1572 = vpack.c.b16 %v1540, %v1508
        %v1573 = vpack.c.b16 %v1541, %v1509
        %v1574 = vpack.c.b16 %v1542, %v1510
        %v1575 = vpack.c.b16 %v1543, %v1511
        %v1576 = vpack.c.b16 %v1544, %v1512
        %v1577 = vpack.c.b16 %v1545, %v1513
        %v1578 = vpack.c.b16 %v1546, %v1514
        %v2635 = vunpack.c.l.b16 %v427
        %v2636 = vunpack.c.h.b16 %v427
        %v2637 = vunpack.c.l.b16 %v428
        %v2638 = vunpack.c.h.b16 %v428
        %v2639 = vunpack.c.l.b16 %v429
        %v2640 = vunpack.c.h.b16 %v429
        %v2641 = vunpack.c.l.b16 %v430
        %v2642 = vunpack.c.h.b16 %v430
        %v2643 = vunpack.c.l.b16 %v431
        %v2644 = vunpack.c.h.b16 %v431
        %v2645 = vunpack.c.l.b16 %v432
        %v2646 = vunpack.c.h.b16 %v432
        %v2647 = vunpack.c.l.b16 %v433
        %v2648 = vunpack.c.h.b16 %v433
        %v2649 = vunpack.c.l.b16 %v434
        %v2650 = vunpack.c.h.b16 %v434
        %v2651 = vunpack.c.l.b16 %v435
        %v2652 = vunpack.c.h.b16 %v435
        %v2653 = vunpack.c.l.b16 %v436
        %v2654 = vunpack.c.h.b16 %v436
        %v2655 = vunpack.c.l.b16 %v437
        %v2656 = vunpack.c.h.b16 %v437
        %v2657 = vunpack.c.l.b16 %v438
        %v2658 = vunpack.c.h.b16 %v438
        %v2659 = vunpack.c.l.b16 %v439
        %v2660 = vunpack.c.h.b16 %v439
        %v2661 = vunpack.c.l.b16 %v440
        %v2662 = vunpack.c.h.b16 %v440
        %v2663 = vunpack.c.l.b16 %v441
        %v2664 = vunpack.c.h.b16 %v441
        %v2665 = vunpack.c.l.b16 %v442
        %v2666 = vunpack.c.h.b16 %v442
        %v2667 = vunpack.c.l.b16 %v443
        %v2668 = vunpack.c.h.b16 %v443
        %v2669 = vunpack.c.l.b16 %v444
        %v2670 = vunpack.c.h.b16 %v444
        %v2671 = vunpack.c.l.b16 %v445
        %v2672 = vunpack.c.h.b16 %v445
        %v2673 = vunpack.c.l.b16 %v446
        %v2674 = vunpack.c.h.b16 %v446
        %v2675 = vunpack.c.l.b16 %v447
        %v2676 = vunpack.c.h.b16 %v447
        %v2677 = vunpack.c.l.b16 %v448
        %v2678 = vunpack.c.h.b16 %v448
        %v2679 = vunpack.c.l.b16 %v449
        %v2680 = vunpack.c.h.b16 %v449
        %v2681 = vunpack.c.l.b16 %v450
        %v2682 = vunpack.c.h.b16 %v450
        %v2683 = vunpack.c.l.b16 %v451
        %v2684 = vunpack.c.h.b16 %v451
        %v2685 = vunpack.c.l.b16 %v452
        %v2686 = vunpack.c.h.b16 %v452
        %v2687 = vunpack.c.l.b16 %v453
        %v2688 = vunpack.c.h.b16 %v453
        %v2689 = vunpack.c.l.b16 %v454
        %v2690 = vunpack.c.h.b16 %v454
        %v2691 = vunpack.c.l.b16 %v455
        %v2692 = vunpack.c.h.b16 %v455
        %v2693 = vunpack.c.l.b16 %v456
        %v2694 = vunpack.c.h.b16 %v456
        %v2695 = vunpack.c.l.b16 %v457
        %v2696 = vunpack.c.h.b16 %v457
        %v2697 = vunpack.c.l.b16 %v458
        %v2698 = vunpack.c.h.b16 %v458
        %v2699 = vunpack.c.l.b16 %v459
        %v2700 = vunpack.c.h.b16 %v459
        %v2701 = vunpack.c.l.b16 %v460
        %v2702 = vunpack.c.h.b16 %v460
        %v2703 = vunpack.c.l.b16 %v461
        %v2704 = vunpack.c.h.b16 %v461
        %v2705 = vunpack.c.l.b16 %v462
        %v2706 = vunpack.c.h.b16 %v462
        %v2707 = vunpack.c.l.b16 %v463
        %v2708 = vunpack.c.h.b16 %v463
        %v2709 = vunpack.c.l.b16 %v464
        %v2710 = vunpack.c.h.b16 %v464
        %v2711 = vunpack.c.l.b16 %v465
        %v2712 = vunpack.c.h.b16 %v465
        %v2713 = vunpack.c.l.b16 %v466
        %v2714 = vunpack.c.h.b16 %v466
        %v2715 = vunpack.c.l.b16 %v467
        %v2716 = vunpack.c.h.b16 %v467
        %v2717 = vunpack.c.l.b16 %v468
        %v2718 = vunpack.c.h.b16 %v468
        %v2719 = vunpack.c.l.b16 %v469
        %v2720 = vunpack.c.h.b16 %v469
        %v2721 = vunpack.c.l.b16 %v470
        %v2722 = vunpack.c.h.b16 %v470
        %v2723 = vunpack.c.l.b16 %v471
        %v2724 = vunpack.c.h.b16 %v471
        %v2725 = vunpack.c.l.b16 %v472
        %v2726 = vunpack.c.h.b16 %v472
        %v2727 = vunpack.c.l.b16 %v473
        %v2728 = vunpack.c.h.b16 %v473
        %v2729 = vunpack.c.l.b16 %v474
        %v2730 = vunpack.c.h.b16 %v474
        %v2731 = vunpack.c.l.b16 %v475
        %v2732 = vunpack.c.h.b16 %v475
        %v2733 = vunpack.c.l.b16 %v476
        %v2734 = vunpack.c.h.b16 %v476
        %v2735 = vunpack.c.l.b16 %v477
        %v2736 = vunpack.c.h.b16 %v477
        %v2737 = vunpack.c.l.b16 %v478
        %v2738 = vunpack.c.h.b16 %v478
        %v2739 = vunpack.c.l.b16 %v479
        %v2740 = vunpack.c.h.b16 %v479
        %v2741 = vunpack.c.l.b16 %v480
        %v2742 = vunpack.c.h.b16 %v480
        %v2743 = vunpack.c.l.b16 %v481
        %v2744 = vunpack.c.h.b16 %v481
        %v2745 = vunpack.c.l.b16 %v482
        %v2746 = vunpack.c.h.b16 %v482
        %v2747 = vunpack.c.l.b16 %v483
        %v2748 = vunpack.c.h.b16 %v483
        %v2749 = vunpack.c.l.b16 %v484
        %v2750 = vunpack.c.h.b16 %v484
        %v2751 = vunpack.c.l.b16 %v485
        %v2752 = vunpack.c.h.b16 %v485
        %v2753 = vunpack.c.l.b16 %v486
        %v2754 = vunpack.c.h.b16 %v486
        %v2755 = vunpack.c.l.b16 %v487
        %v2756 = vunpack.c.h.b16 %v487
        %v2757 = vunpack.c.l.b16 %v488
        %v2758 = vunpack.c.h.b16 %v488
        %v2759 = vunpack.c.l.b16 %v489
        %v2760 = vunpack.c.h.b16 %v489
        %v2761 = vunpack.c.l.b16 %v490
        %v2762 = vunpack.c.h.b16 %v490
        %v2763 = vunpack.c.l.b16 %v491
        %v2764 = vunpack.c.h.b16 %v491
        %v2765 = vunpack.c.l.b16 %v492
        %v2766 = vunpack.c.h.b16 %v492
        %v2767 = vunpack.c.l.b16 %v493
        %v2768 = vunpack.c.h.b16 %v493
        %v2769 = vunpack.c.l.b16 %v494
        %v2770 = vunpack.c.h.b16 %v494
        %v2771 = vunpack.c.l.b16 %v495
        %v2772 = vunpack.c.h.b16 %v495
        %v2773 = vunpack.c.l.b16 %v496
        %v2774 = vunpack.c.h.b16 %v496
        %v2775 = vunpack.c.l.b16 %v497
        %v2776 = vunpack.c.h.b16 %v497
        %v2777 = vunpack.c.l.b16 %v498
        %v2778 = vunpack.c.h.b16 %v498
        %v2779 = vunpack.c.l.b16 %v499
        %v2780 = vunpack.c.h.b16 %v499
        %v2781 = vunpack.c.l.b16 %v500
        %v2782 = vunpack.c.h.b16 %v500
        %v2783 = vunpack.c.l.b16 %v501
        %v2784 = vunpack.c.h.b16 %v501
        %v2785 = vunpack.c.l.b16 %v502
        %v2786 = vunpack.c.h.b16 %v502
        %v2787 = vunpack.c.l.b16 %v503
        %v2788 = vunpack.c.h.b16 %v503
        %v2789 = vunpack.c.l.b16 %v504
        %v2790 = vunpack.c.h.b16 %v504
        %v2791 = vunpack.c.l.b16 %v505
        %v2792 = vunpack.c.h.b16 %v505
        %v2793 = vunpack.c.l.b16 %v506
        %v2794 = vunpack.c.h.b16 %v506
        %v2795 = vunpack.c.l.b16 %v507
        %v2796 = vunpack.c.h.b16 %v507
        %v2797 = vunpack.c.l.b16 %v508
        %v2798 = vunpack.c.h.b16 %v508
        %v2799 = vunpack.c.l.b16 %v509
        %v2800 = vunpack.c.h.b16 %v509
        %v2801 = vunpack.c.l.b16 %v510
        %v2802 = vunpack.c.h.b16 %v510
        %v2803 = vunpack.c.l.b16 %v511
        %v2804 = vunpack.c.h.b16 %v511
        %v2805 = vunpack.c.l.b16 %v512
        %v2806 = vunpack.c.h.b16 %v512
        %v2807 = vunpack.c.l.b16 %v513
        %v2808 = vunpack.c.h.b16 %v513
        %v2809 = vunpack.c.l.b16 %v514
        %v2810 = vunpack.c.h.b16 %v514
        %v2811 = vunpack.c.l.b16 %v515
        %v2812 = vunpack.c.h.b16 %v515
        %v2813 = vunpack.c.l.b16 %v516
        %v2814 = vunpack.c.h.b16 %v516
        %v2815 = vunpack.c.l.b16 %v517
        %v2816 = vunpack.c.h.b16 %v517
        %v2817 = vunpack.c.l.b16 %v518
        %v2818 = vunpack.c.h.b16 %v518
        %v2819 = vunpack.c.l.b16 %v519
        %v2820 = vunpack.c.h.b16 %v519
        %v2821 = vunpack.c.l.b16 %v520
        %v2822 = vunpack.c.h.b16 %v520
        %v2823 = vunpack.c.l.b16 %v521
        %v2824 = vunpack.c.h.b16 %v521
        %v2825 = vunpack.c.l.b16 %v522
        %v2826 = vunpack.c.h.b16 %v522
        %v2827 = vunpack.c.l.b16 %v523
        %v2828 = vunpack.c.h.b16 %v523
        %v2829 = vunpack.c.l.b16 %v524
        %v2830 = vunpack.c.h.b16 %v524
        %v2831 = vunpack.c.l.b16 %v525
        %v2832 = vunpack.c.h.b16 %v525
        %v2833 = vunpack.c.l.b16 %v526
        %v2834 = vunpack.c.h.b16 %v526
        %v2835 = vunpack.c.l.b16 %v527
        %v2836 = vunpack.c.h.b16 %v527
        %v2837 = vunpack.c.l.b16 %v528
        %v2838 = vunpack.c.h.b16 %v528
        %v2839 = vunpack.c.l.b16 %v529
        %v2840 = vunpack.c.h.b16 %v529
        %v2841 = vunpack.c.l.b16 %v530
        %v2842 = vunpack.c.h.b16 %v530
        %v2843 = vunpack.c.l.b16 %v531
        %v2844 = vunpack.c.h.b16 %v531
        %v2845 = vunpack.c.l.b16 %v532
        %v2846 = vunpack.c.h.b16 %v532
        %v2847 = vunpack.c.l.b16 %v533
        %v2848 = vunpack.c.h.b16 %v533
        %v2849 = vunpack.c.l.b16 %v534
        %v2850 = vunpack.c.h.b16 %v534
        %v2851 = vunpack.c.l.b16 %v535
        %v2852 = vunpack.c.h.b16 %v535
        %v2853 = vunpack.c.l.b16 %v536
        %v2854 = vunpack.c.h.b16 %v536
        %v2855 = vunpack.c.l.b16 %v537
        %v2856 = vunpack.c.h.b16 %v537
        %v2857 = vunpack.c.l.b16 %v538
        %v2858 = vunpack.c.h.b16 %v538
        %v2859 = vunpack.c.l.b16 %v539
        %v2860 = vunpack.c.h.b16 %v539
        %v2861 = vunpack.c.l.b16 %v540
        %v2862 = vunpack.c.h.b16 %v540
        %v2863 = vunpack.c.l.b16 %v541
        %v2864 = vunpack.c.h.b16 %v541
        %v2865 = vunpack.c.l.b16 %v542
        %v2866 = vunpack.c.h.b16 %v542
        %v2867 = vunpack.c.l.b16 %v543
        %v2868 = vunpack.c.h.b16 %v543
        %v2869 = vunpack.c.l.b16 %v544
        %v2870 = vunpack.c.h.b16 %v544
        %v2871 = vunpack.c.l.b16 %v545
        %v2872 = vunpack.c.h.b16 %v545
        %v2873 = vunpack.c.l.b16 %v546
        %v2874 = vunpack.c.h.b16 %v546
        %v2875 = vunpack.c.l.b16 %v547
        %v2876 = vunpack.c.h.b16 %v547
        %v2877 = vunpack.c.l.b16 %v548
        %v2878 = vunpack.c.h.b16 %v548
        %v2879 = vunpack.c.l.b16 %v549
        %v2880 = vunpack.c.h.b16 %v549
        %v2881 = vunpack.c.l.b16 %v550
        %v2882 = vunpack.c.h.b16 %v550
        %v2883 = vunpack.c.l.b16 %v551
        %v2884 = vunpack.c.h.b16 %v551
        %v2885 = vunpack.c.l.b16 %v552
        %v2886 = vunpack.c.h.b16 %v552
        %v2887 = vunpack.c.l.b16 %v553
        %v2888 = vunpack.c.h.b16 %v553
        %v2889 = vunpack.c.l.b16 %v554
        %v2890 = vunpack.c.h.b16 %v554
        %v2891 = vunpack.c.l.b16 %v555
        %v2892 = vunpack.c.h.b16 %v555
        %v2893 = vunpack.c.l.b16 %v556
        %v2894 = vunpack.c.h.b16 %v556
        %v2895 = vunpack.c.l.b16 %v557
        %v2896 = vunpack.c.h.b16 %v557
        %v2897 = vunpack.c.l.b16 %v558
        %v2898 = vunpack.c.h.b16 %v558
        %v2899 = vunpack.c.l.b16 %v559
        %v2900 = vunpack.c.h.b16 %v559
        %v2901 = vunpack.c.l.b16 %v560
        %v2902 = vunpack.c.h.b16 %v560
        %v2903 = vunpack.c.l.b16 %v561
        %v2904 = vunpack.c.h.b16 %v561
        %v2905 = vunpack.c.l.b16 %v562
        %v2906 = vunpack.c.h.b16 %v562
        %v2907 = vunpack.c.l.b16 %v563
        %v2908 = vunpack.c.h.b16 %v563
        %v2909 = vunpack.c.l.b16 %v564
        %v2910 = vunpack.c.h.b16 %v564
        %v2911 = vunpack.c.l.b16 %v565
        %v2912 = vunpack.c.h.b16 %v565
        %v2913 = vunpack.c.l.b16 %v566
        %v2914 = vunpack.c.h.b16 %v566
        %v2915 = vunpack.c.l.b16 %v567
        %v2916 = vunpack.c.h.b16 %v567
        %v2917 = vunpack.c.l.b16 %v568
        %v2918 = vunpack.c.h.b16 %v568
        %v2919 = vunpack.c.l.b16 %v569
        %v2920 = vunpack.c.h.b16 %v569
        %v2921 = vunpack.c.l.b16 %v570
        %v2922 = vunpack.c.h.b16 %v570
        %v2923 = vunpack.c.l.b16 %v571
        %v2924 = vunpack.c.h.b16 %v571
        %v2925 = vunpack.c.l.b16 %v572
        %v2926 = vunpack.c.h.b16 %v572
        %v2927 = vunpack.c.l.b16 %v573
        %v2928 = vunpack.c.h.b16 %v573
        %v2929 = vunpack.c.l.b16 %v574
        %v2930 = vunpack.c.h.b16 %v574
        %v2931 = vunpack.c.l.b16 %v575
        %v2932 = vunpack.c.h.b16 %v575
        %v2933 = vunpack.c.l.b16 %v576
        %v2934 = vunpack.c.h.b16 %v576
        %v2935 = vunpack.c.l.b16 %v577
        %v2936 = vunpack.c.h.b16 %v577
        %v2937 = vunpack.c.l.b16 %v578
        %v2938 = vunpack.c.h.b16 %v578
        %v2939 = vunpack.c.l.b16 %v579
        %v2940 = vunpack.c.h.b16 %v579
        %v2941 = vunpack.c.l.b16 %v580
        %v2942 = vunpack.c.h.b16 %v580
        %v2943 = vunpack.c.l.b16 %v581
        %v2944 = vunpack.c.h.b16 %v581
        %v2945 = vunpack.c.l.b16 %v582
        %v2946 = vunpack.c.h.b16 %v582
        %v2947 = vunpack.c.l.b16 %v583
        %v2948 = vunpack.c.h.b16 %v583
        %v2949 = vunpack.c.l.b16 %v584
        %v2950 = vunpack.c.h.b16 %v584
        %v2951 = vunpack.c.l.b16 %v585
        %v2952 = vunpack.c.h.b16 %v585
        %v2953 = vunpack.c.l.b16 %v586
        %v2954 = vunpack.c.h.b16 %v586
        %v2955 = vunpack.c.l.b16 %v587
        %v2956 = vunpack.c.h.b16 %v587
        %v2957 = vunpack.c.l.b16 %v588
        %v2958 = vunpack.c.h.b16 %v588
        %v2959 = vunpack.c.l.b16 %v589
        %v2960 = vunpack.c.h.b16 %v589
        %v2961 = vunpack.c.l.b16 %v590
        %v2962 = vunpack.c.h.b16 %v590
        %v2963 = vunpack.c.l.b16 %v591
        %v2964 = vunpack.c.h.b16 %v591
        %v2965 = vunpack.c.l.b16 %v592
        %v2966 = vunpack.c.h.b16 %v592
        %v2967 = vunpack.c.l.b16 %v593
        %v2968 = vunpack.c.h.b16 %v593
        %v2969 = vunpack.c.l.b16 %v594
        %v2970 = vunpack.c.h.b16 %v594
        %v2971 = vunpack.c.l.b16 %v595
        %v2972 = vunpack.c.h.b16 %v595
        %v2973 = vunpack.c.l.b16 %v596
        %v2974 = vunpack.c.h.b16 %v596
        %v2975 = vunpack.c.l.b16 %v597
        %v2976 = vunpack.c.h.b16 %v597
        %v2977 = vunpack.c.l.b16 %v598
        %v2978 = vunpack.c.h.b16 %v598
        %v2979 = vunpack.c.l.b16 %v599
        %v2980 = vunpack.c.h.b16 %v599
        %v2981 = vunpack.c.l.b16 %v600
        %v2982 = vunpack.c.h.b16 %v600
        %v2983 = vunpack.c.l.b16 %v601
        %v2984 = vunpack.c.h.b16 %v601
        %v2985 = vunpack.c.l.b16 %v602
        %v2986 = vunpack.c.h.b16 %v602
        %v2987 = vunpack.c.l.b16 %v603
        %v2988 = vunpack.c.h.b16 %v603
        %v2989 = vunpack.c.l.b16 %v604
        %v2990 = vunpack.c.h.b16 %v604
        %v2991 = vunpack.c.l.b16 %v605
        %v2992 = vunpack.c.h.b16 %v605
        %v2993 = vunpack.c.l.b16 %v606
        %v2994 = vunpack.c.h.b16 %v606
        %v2995 = vunpack.c.l.b16 %v607
        %v2996 = vunpack.c.h.b16 %v607
        %v2997 = vunpack.c.l.b16 %v608
        %v2998 = vunpack.c.h.b16 %v608
        %v2999 = vunpack.c.l.b16 %v609
        %v3000 = vunpack.c.h.b16 %v609
        %v3001 = vunpack.c.l.b16 %v610
        %v3002 = vunpack.c.h.b16 %v610
        %v3003 = vunpack.c.l.b16 %v611
        %v3004 = vunpack.c.h.b16 %v611
        %v3005 = vunpack.c.l.b16 %v612
        %v3006 = vunpack.c.h.b16 %v612
        %v3007 = vunpack.c.l.b16 %v613
        %v3008 = vunpack.c.h.b16 %v613
        %v3009 = vunpack.c.l.b16 %v614
        %v3010 = vunpack.c.h.b16 %v614
        %v3011 = vunpack.c.l.b16 %v615
        %v3012 = vunpack.c.h.b16 %v615
        %v3013 = vunpack.c.l.b16 %v616
        %v3014 = vunpack.c.h.b16 %v616
        %v3015 = vunpack.c.l.b16 %v617
        %v3016 = vunpack.c.h.b16 %v617
        %v3017 = vunpack.c.l.b16 %v618
        %v3018 = vunpack.c.h.b16 %v618
        %v3019 = vunpack.c.l.b16 %v619
        %v3020 = vunpack.c.h.b16 %v619
        %v3021 = vunpack.c.l.b16 %v620
        %v3022 = vunpack.c.h.b16 %v620
        %v3023 = vunpack.c.l.b16 %v621
        %v3024 = vunpack.c.h.b16 %v621
        %v3025 = vunpack.c.l.b16 %v622
        %v3026 = vunpack.c.h.b16 %v622
        %v3027 = vunpack.c.l.b16 %v623
        %v3028 = vunpack.c.h.b16 %v623
        %v3029 = vunpack.c.l.b16 %v624
        %v3030 = vunpack.c.h.b16 %v624
        %v3031 = vunpack.c.l.b16 %v625
        %v3032 = vunpack.c.h.b16 %v625
        %v3033 = vunpack.c.l.b16 %v626
        %v3034 = vunpack.c.h.b16 %v626
        %v3035 = vunpack.c.l.b16 %v627
        %v3036 = vunpack.c.h.b16 %v627
        %v3037 = vunpack.c.l.b16 %v628
        %v3038 = vunpack.c.h.b16 %v628
        %v3039 = vunpack.c.l.b16 %v629
        %v3040 = vunpack.c.h.b16 %v629
        %v3041 = vunpack.c.l.b16 %v630
        %v3042 = vunpack.c.h.b16 %v630
        %v3043 = vunpack.c.l.b16 %v631
        %v3044 = vunpack.c.h.b16 %v631
        %v3045 = vunpack.c.l.b16 %v632
        %v3046 = vunpack.c.h.b16 %v632
        %v3047 = vunpack.c.l.b16 %v633
        %v3048 = vunpack.c.h.b16 %v633
        %v3049 = vunpack.c.l.b16 %v634
        %v3050 = vunpack.c.h.b16 %v634
        %v3051 = vunpack.c.l.b16 %v635
        %v3052 = vunpack.c.h.b16 %v635
        %v3053 = vunpack.c.l.b16 %v636
        %v3054 = vunpack.c.h.b16 %v636
        %v3055 = vunpack.c.l.b16 %v637
        %v3056 = vunpack.c.h.b16 %v637
        %v3057 = vunpack.c.l.b16 %v638
        %v3058 = vunpack.c.h.b16 %v638
        %v3059 = vunpack.c.l.b16 %v639
        %v3060 = vunpack.c.h.b16 %v639
        %v3061 = vunpack.c.l.b16 %v640
        %v3062 = vunpack.c.h.b16 %v640
        %v3063 = vunpack.c.l.b16 %v641
        %v3064 = vunpack.c.h.b16 %v641
        %v3065 = vunpack.c.l.b16 %v642
        %v3066 = vunpack.c.h.b16 %v642
        %v3067 = vunpack.c.l.b16 %v643
        %v3068 = vunpack.c.h.b16 %v643
        %v3069 = vunpack.c.l.b16 %v644
        %v3070 = vunpack.c.h.b16 %v644
        %v3071 = vunpack.c.l.b16 %v645
        %v3072 = vunpack.c.h.b16 %v645
        %v3073 = vunpack.c.l.b16 %v646
        %v3074 = vunpack.c.h.b16 %v646
        %v3075 = vunpack.c.l.b16 %v647
        %v3076 = vunpack.c.h.b16 %v647
        %v3077 = vunpack.c.l.b16 %v648
        %v3078 = vunpack.c.h.b16 %v648
        %v3079 = vunpack.c.l.b16 %v649
        %v3080 = vunpack.c.h.b16 %v649
        %v3081 = vunpack.c.l.b16 %v650
        %v3082 = vunpack.c.h.b16 %v650
        %v3083 = vunpack.c.l.b16 %v651
        %v3084 = vunpack.c.h.b16 %v651
        %v3085 = vunpack.c.l.b16 %v652
        %v3086 = vunpack.c.h.b16 %v652
        %v3087 = vunpack.c.l.b16 %v653
        %v3088 = vunpack.c.h.b16 %v653
        %v3089 = vunpack.c.l.b16 %v654
        %v3090 = vunpack.c.h.b16 %v654
        %v3091 = vunpack.c.l.b16 %v655
        %v3092 = vunpack.c.h.b16 %v655
        %v3093 = vunpack.c.l.b16 %v656
        %v3094 = vunpack.c.h.b16 %v656
        %v3095 = vunpack.c.l.b16 %v657
        %v3096 = vunpack.c.h.b16 %v657
        %v3097 = vunpack.c.l.b16 %v658
        %v3098 = vunpack.c.h.b16 %v658
        %v3099 = vunpack.c.l.b16 %v659
        %v3100 = vunpack.c.h.b16 %v659
        %v3101 = vunpack.c.l.b16 %v660
        %v3102 = vunpack.c.h.b16 %v660
        %v3103 = vunpack.c.l.b16 %v661
        %v3104 = vunpack.c.h.b16 %v661
        %v3105 = vunpack.c.l.b16 %v662
        %v3106 = vunpack.c.h.b16 %v662
        %v3107 = vunpack.c.l.b16 %v663
        %v3108 = vunpack.c.h.b16 %v663
        %v3109 = vunpack.c.l.b16 %v664
        %v3110 = vunpack.c.h.b16 %v664
        %v3111 = vunpack.c.l.b16 %v665
        %v3112 = vunpack.c.h.b16 %v665
        %v3113 = vunpack.c.l.b16 %v666
        %v3114 = vunpack.c.h.b16 %v666
        %v3115 = vunpack.c.l.b16 %v667
        %v3116 = vunpack.c.h.b16 %v667
        %v3117 = vunpack.c.l.b16 %v668
        %v3118 = vunpack.c.h.b16 %v668
        %v3119 = vunpack.c.l.b16 %v669
        %v3120 = vunpack.c.h.b16 %v669
        %v3121 = vunpack.c.l.b16 %v670
        %v3122 = vunpack.c.h.b16 %v670
        %v3123 = vunpack.c.l.b16 %v671
        %v3124 = vunpack.c.h.b16 %v671
        %v3125 = vunpack.c.l.b16 %v672
        %v3126 = vunpack.c.h.b16 %v672
        %v3127 = vunpack.c.l.b16 %v673
        %v3128 = vunpack.c.h.b16 %v673
        %v3129 = vunpack.c.l.b16 %v674
        %v3130 = vunpack.c.h.b16 %v674
        %v3131 = vunpack.c.l.b16 %v675
        %v3132 = vunpack.c.h.b16 %v675
        %v3133 = vunpack.c.l.b16 %v676
        %v3134 = vunpack.c.h.b16 %v676
        %v3135 = vunpack.c.l.b16 %v677
        %v3136 = vunpack.c.h.b16 %v677
        %v3137 = vunpack.c.l.b16 %v678
        %v3138 = vunpack.c.h.b16 %v678
        %v3139 = vunpack.c.l.b16 %v679
        %v3140 = vunpack.c.h.b16 %v679
        %v3141 = vunpack.c.l.b16 %v680
        %v3142 = vunpack.c.h.b16 %v680
        %v3143 = vunpack.c.l.b16 %v681
        %v3144 = vunpack.c.h.b16 %v681
        %v3145 = vunpack.c.l.b16 %v682
        %v3146 = vunpack.c.h.b16 %v682
        %v3147 = vunpack.c.l.b16 %v683
        %v3148 = vunpack.c.h.b16 %v683
        %v3149 = vunpack.c.l.b16 %v684
        %v3150 = vunpack.c.h.b16 %v684
        %v3151 = vunpack.c.l.b16 %v685
        %v3152 = vunpack.c.h.b16 %v685
        %v3153 = vunpack.c.l.b16 %v686
        %v3154 = vunpack.c.h.b16 %v686
        %v3155 = vunpack.c.l.b16 %v687
        %v3156 = vunpack.c.h.b16 %v687
        %v3157 = vunpack.c.l.b16 %v688
        %v3158 = vunpack.c.h.b16 %v688
        %v3159 = vunpack.c.l.b16 %v689
        %v3160 = vunpack.c.h.b16 %v689
        %v3161 = vunpack.c.l.b16 %v690
        %v3162 = vunpack.c.h.b16 %v690
        %v3163 = vunpack.c.l.b16 %v691
        %v3164 = vunpack.c.h.b16 %v691
        %v3165 = vunpack.c.l.b16 %v692
        %v3166 = vunpack.c.h.b16 %v692
        %v3167 = vunpack.c.l.b16 %v693
        %v3168 = vunpack.c.h.b16 %v693
        %v3169 = vunpack.c.l.b16 %v694
        %v3170 = vunpack.c.h.b16 %v694
        %v3171 = vunpack.c.l.b16 %v695
        %v3172 = vunpack.c.h.b16 %v695
        %v3173 = vunpack.c.l.b16 %v696
        %v3174 = vunpack.c.h.b16 %v696
        %v3175 = vunpack.c.l.b16 %v697
        %v3176 = vunpack.c.h.b16 %v697
        %v3177 = vunpack.c.l.b16 %v698
        %v3178 = vunpack.c.h.b16 %v698
        %v3179 = vunpack.c.l.b16 %v699
        %v3180 = vunpack.c.h.b16 %v699
        %v3181 = vunpack.c.l.b16 %v700
        %v3182 = vunpack.c.h.b16 %v700
        %v3183 = vunpack.c.l.b16 %v701
        %v3184 = vunpack.c.h.b16 %v701
        %v3185 = vunpack.c.l.b16 %v702
        %v3186 = vunpack.c.h.b16 %v702
        %v3187 = vunpack.c.l.b16 %v703
        %v3188 = vunpack.c.h.b16 %v703
        %v3189 = vunpack.c.l.b16 %v704
        %v3190 = vunpack.c.h.b16 %v704
        %v3191 = vunpack.c.l.b16 %v705
        %v3192 = vunpack.c.h.b16 %v705
        %v3193 = vunpack.c.l.b16 %v706
        %v3194 = vunpack.c.h.b16 %v706
        %v3195 = vunpack.c.l.b16 %v707
        %v3196 = vunpack.c.h.b16 %v707
        %v3197 = vunpack.c.l.b16 %v708
        %v3198 = vunpack.c.h.b16 %v708
        %v3199 = vunpack.c.l.b16 %v709
        %v3200 = vunpack.c.h.b16 %v709
        %v3201 = vunpack.c.l.b16 %v710
        %v3202 = vunpack.c.h.b16 %v710
        %v3203 = vunpack.c.l.b16 %v711
        %v3204 = vunpack.c.h.b16 %v711
        %v3205 = vunpack.c.l.b16 %v712
        %v3206 = vunpack.c.h.b16 %v712
        %v3207 = vunpack.c.l.b16 %v713
        %v3208 = vunpack.c.h.b16 %v713
        %v3209 = vunpack.c.l.b16 %v714
        %v3210 = vunpack.c.h.b16 %v714
        %v3211 = vunpack.c.l.b16 %v715
        %v3212 = vunpack.c.h.b16 %v715
        %v3213 = vunpack.c.l.b16 %v716
        %v3214 = vunpack.c.h.b16 %v716
        %v3215 = vunpack.c.l.b16 %v717
        %v3216 = vunpack.c.h.b16 %v717
        %v3217 = vunpack.c.l.b16 %v718
        %v3218 = vunpack.c.h.b16 %v718
        %v3219 = vunpack.c.l.b16 %v719
        %v3220 = vunpack.c.h.b16 %v719
        %v3221 = vunpack.c.l.b16 %v720
        %v3222 = vunpack.c.h.b16 %v720
        %v3223 = vunpack.c.l.b16 %v721
        %v3224 = vunpack.c.h.b16 %v721
        %v3225 = vunpack.c.l.b16 %v722
        %v3226 = vunpack.c.h.b16 %v722
        %v3227 = vunpack.c.l.b16 %v723
        %v3228 = vunpack.c.h.b16 %v723
        %v3229 = vunpack.c.l.b16 %v724
        %v3230 = vunpack.c.h.b16 %v724
        %v3231 = vunpack.c.l.b16 %v725
        %v3232 = vunpack.c.h.b16 %v725
        %v3233 = vunpack.c.l.b16 %v726
        %v3234 = vunpack.c.h.b16 %v726
        %v3235 = vunpack.c.l.b16 %v727
        %v3236 = vunpack.c.h.b16 %v727
        %v3237 = vunpack.c.l.b16 %v728
        %v3238 = vunpack.c.h.b16 %v728
        %v3239 = vunpack.c.l.b16 %v729
        %v3240 = vunpack.c.h.b16 %v729
        %v3241 = vunpack.c.l.b16 %v730
        %v3242 = vunpack.c.h.b16 %v730
        %v3243 = vunpack.c.l.b16 %v731
        %v3244 = vunpack.c.h.b16 %v731
        %v3245 = vunpack.c.l.b16 %v732
        %v3246 = vunpack.c.h.b16 %v732
        %v3247 = vunpack.c.l.b16 %v733
        %v3248 = vunpack.c.h.b16 %v733
        %v3249 = vunpack.c.l.b16 %v734
        %v3250 = vunpack.c.h.b16 %v734
        %v3251 = vunpack.c.l.b16 %v735
        %v3252 = vunpack.c.h.b16 %v735
        %v3253 = vunpack.c.l.b16 %v736
        %v3254 = vunpack.c.h.b16 %v736
        %v3255 = vunpack.c.l.b16 %v737
        %v3256 = vunpack.c.h.b16 %v737
        %v3257 = vunpack.c.l.b16 %v738
        %v3258 = vunpack.c.h.b16 %v738
        %v3259 = vunpack.c.l.b16 %v739
        %v3260 = vunpack.c.h.b16 %v739
        %v3261 = vunpack.c.l.b16 %v740
        %v3262 = vunpack.c.h.b16 %v740
        %v3263 = vunpack.c.l.b16 %v741
        %v3264 = vunpack.c.h.b16 %v741
        %v3265 = vunpack.c.l.b16 %v742
        %v3266 = vunpack.c.h.b16 %v742
        %v3267 = vunpack.c.l.b16 %v743
        %v3268 = vunpack.c.h.b16 %v743
        %v3269 = vunpack.c.l.b16 %v744
        %v3270 = vunpack.c.h.b16 %v744
        %v3271 = vunpack.c.l.b16 %v745
        %v3272 = vunpack.c.h.b16 %v745
        %v3273 = vunpack.c.l.b16 %v746
        %v3274 = vunpack.c.h.b16 %v746
        %v3275 = vunpack.c.l.b16 %v747
        %v3276 = vunpack.c.h.b16 %v747
        %v3277 = vunpack.c.l.b16 %v748
        %v3278 = vunpack.c.h.b16 %v748
        %v3279 = vunpack.c.l.b16 %v749
        %v3280 = vunpack.c.h.b16 %v749
        %v3281 = vunpack.c.l.b16 %v750
        %v3282 = vunpack.c.h.b16 %v750
        %v3283 = vunpack.c.l.b16 %v751
        %v3284 = vunpack.c.h.b16 %v751
        %v3285 = vunpack.c.l.b16 %v752
        %v3286 = vunpack.c.h.b16 %v752
        %v3287 = vunpack.c.l.b16 %v753
        %v3288 = vunpack.c.h.b16 %v753
        %v3289 = vunpack.c.l.b16 %v754
        %v3290 = vunpack.c.h.b16 %v754
        %v3291 = vunpack.c.l.b16 %v755
        %v3292 = vunpack.c.h.b16 %v755
        %v3293 = vunpack.c.l.b16 %v756
        %v3294 = vunpack.c.h.b16 %v756
        %v3295 = vunpack.c.l.b16 %v757
        %v3296 = vunpack.c.h.b16 %v757
        %v3297 = vunpack.c.l.b16 %v758
        %v3298 = vunpack.c.h.b16 %v758
        %v3299 = vunpack.c.l.b16 %v759
        %v3300 = vunpack.c.h.b16 %v759
        %v3301 = vunpack.c.l.b16 %v760
        %v3302 = vunpack.c.h.b16 %v760
        %v3303 = vunpack.c.l.b16 %v761
        %v3304 = vunpack.c.h.b16 %v761
        %v3305 = vunpack.c.l.b16 %v762
        %v3306 = vunpack.c.h.b16 %v762
        %v3307 = vunpack.c.l.b16 %v763
        %v3308 = vunpack.c.h.b16 %v763
        %v3309 = vunpack.c.l.b16 %v764
        %v3310 = vunpack.c.h.b16 %v764
        %v3311 = vunpack.c.l.b16 %v765
        %v3312 = vunpack.c.h.b16 %v765
        %v3313 = vunpack.c.l.b16 %v766
        %v3314 = vunpack.c.h.b16 %v766
        %v3315 = vunpack.c.l.b16 %v767
        %v3316 = vunpack.c.h.b16 %v767
        %v3317 = vunpack.c.l.b16 %v768
        %v3318 = vunpack.c.h.b16 %v768
        %v3319 = vunpack.c.l.b16 %v769
        %v3320 = vunpack.c.h.b16 %v769
        %v3321 = vunpack.c.l.b16 %v770
        %v3322 = vunpack.c.h.b16 %v770
        %v3323 = vunpack.c.l.b16 %v771
        %v3324 = vunpack.c.h.b16 %v771
        %v3325 = vunpack.c.l.b16 %v772
        %v3326 = vunpack.c.h.b16 %v772
        %v3327 = vunpack.c.l.b16 %v773
        %v3328 = vunpack.c.h.b16 %v773
        %v3329 = vunpack.c.l.b16 %v774
        %v3330 = vunpack.c.h.b16 %v774
        %v3331 = vunpack.c.l.b16 %v775
        %v3332 = vunpack.c.h.b16 %v775
        %v3333 = vunpack.c.l.b16 %v776
        %v3334 = vunpack.c.h.b16 %v776
        %v3335 = vunpack.c.l.b16 %v777
        %v3336 = vunpack.c.h.b16 %v777
        %v3337 = vunpack.c.l.b16 %v778
        %v3338 = vunpack.c.h.b16 %v778
        %v3339 = vunpack.c.l.b16 %v779
        %v3340 = vunpack.c.h.b16 %v779
        %v3341 = vunpack.c.l.b16 %v780
        %v3342 = vunpack.c.h.b16 %v780
        %v3343 = vunpack.c.l.b16 %v781
        %v3344 = vunpack.c.h.b16 %v781
        %v3345 = vunpack.c.l.b16 %v782
        %v3346 = vunpack.c.h.b16 %v782
        %v3347 = vunpack.c.l.b16 %v783
        %v3348 = vunpack.c.h.b16 %v783
        %v3349 = vunpack.c.l.b16 %v784
        %v3350 = vunpack.c.h.b16 %v784
        %v3351 = vunpack.c.l.b16 %v785
        %v3352 = vunpack.c.h.b16 %v785
        %v3353 = vunpack.c.l.b16 %v786
        %v3354 = vunpack.c.h.b16 %v786
        %v3355 = vunpack.c.l.b16 %v787
        %v3356 = vunpack.c.h.b16 %v787
        %v3357 = vunpack.c.l.b16 %v788
        %v3358 = vunpack.c.h.b16 %v788
        %v3359 = vunpack.c.l.b16 %v789
        %v3360 = vunpack.c.h.b16 %v789
        %v3361 = vunpack.c.l.b16 %v790
        %v3362 = vunpack.c.h.b16 %v790
        %v3363 = vunpack.c.l.b16 %v791
        %v3364 = vunpack.c.h.b16 %v791
        %v3365 = vunpack.c.l.b16 %v792
        %v3366 = vunpack.c.h.b16 %v792
        %v3367 = vunpack.c.l.b16 %v793
        %v3368 = vunpack.c.h.b16 %v793
        %v3369 = vunpack.c.l.b16 %v794
        %v3370 = vunpack.c.h.b16 %v794
        %v3371 = vunpack.c.l.b16 %v795
        %v3372 = vunpack.c.h.b16 %v795
        %v3373 = vunpack.c.l.b16 %v796
        %v3374 = vunpack.c.h.b16 %v796
        %v3375 = vunpack.c.l.b16 %v797
        %v3376 = vunpack.c.h.b16 %v797
        %v3377 = vunpack.c.l.b16 %v798
        %v3378 = vunpack.c.h.b16 %v798
        %v3379 = vunpack.c.l.b16 %v799
        %v3380 = vunpack.c.h.b16 %v799
        %v3381 = vunpack.c.l.b16 %v800
        %v3382 = vunpack.c.h.b16 %v800
        %v3383 = vunpack.c.l.b16 %v801
        %v3384 = vunpack.c.h.b16 %v801
        %v3385 = vunpack.c.l.b16 %v802
        %v3386 = vunpack.c.h.b16 %v802
        %v3387 = vunpack.c.l.b16 %v803
        %v3388 = vunpack.c.h.b16 %v803
        %v3389 = vunpack.c.l.b16 %v804
        %v3390 = vunpack.c.h.b16 %v804
        %v3391 = vunpack.c.l.b16 %v805
        %v3392 = vunpack.c.h.b16 %v805
        %v3393 = vunpack.c.l.b16 %v806
        %v3394 = vunpack.c.h.b16 %v806
        %v3395 = vunpack.c.l.b16 %v807
        %v3396 = vunpack.c.h.b16 %v807
        %v3397 = vunpack.c.l.b16 %v808
        %v3398 = vunpack.c.h.b16 %v808
        %v3399 = vunpack.c.l.b16 %v809
        %v3400 = vunpack.c.h.b16 %v809
        %v3401 = vunpack.c.l.b16 %v810
        %v3402 = vunpack.c.h.b16 %v810
        %v3403 = vunpack.c.l.b16 %v811
        %v3404 = vunpack.c.h.b16 %v811
        %v3405 = vunpack.c.l.b16 %v812
        %v3406 = vunpack.c.h.b16 %v812
        %v3407 = vunpack.c.l.b16 %v813
        %v3408 = vunpack.c.h.b16 %v813
        %v3409 = vunpack.c.l.b16 %v814
        %v3410 = vunpack.c.h.b16 %v814
        %v3411 = vunpack.c.l.b16 %v815
        %v3412 = vunpack.c.h.b16 %v815
        %v3413 = vunpack.c.l.b16 %v816
        %v3414 = vunpack.c.h.b16 %v816
        %v3415 = vunpack.c.l.b16 %v817
        %v3416 = vunpack.c.h.b16 %v817
        %v3417 = vunpack.c.l.b16 %v818
        %v3418 = vunpack.c.h.b16 %v818
        %v3419 = vunpack.c.l.b16 %v819
        %v3420 = vunpack.c.h.b16 %v819
        %v3421 = vunpack.c.l.b16 %v820
        %v3422 = vunpack.c.h.b16 %v820
        %v3423 = vunpack.c.l.b16 %v821
        %v3424 = vunpack.c.h.b16 %v821
        %v3425 = vunpack.c.l.b16 %v822
        %v3426 = vunpack.c.h.b16 %v822
        %v3427 = vunpack.c.l.b16 %v823
        %v3428 = vunpack.c.h.b16 %v823
        %v3429 = vunpack.c.l.b16 %v824
        %v3430 = vunpack.c.h.b16 %v824
        %v3431 = vunpack.c.l.b16 %v825
        %v3432 = vunpack.c.h.b16 %v825
        %v3433 = vunpack.c.l.b16 %v826
        %v3434 = vunpack.c.h.b16 %v826
        %v3435 = vunpack.c.l.b16 %v827
        %v3436 = vunpack.c.h.b16 %v827
        %v3437 = vunpack.c.l.b16 %v828
        %v3438 = vunpack.c.h.b16 %v828
        %v3439 = vunpack.c.l.b16 %v829
        %v3440 = vunpack.c.h.b16 %v829
        %v3441 = vunpack.c.l.b16 %v830
        %v3442 = vunpack.c.h.b16 %v830
        %v3443 = vunpack.c.l.b16 %v831
        %v3444 = vunpack.c.h.b16 %v831
        %v3445 = vunpack.c.l.b16 %v832
        %v3446 = vunpack.c.h.b16 %v832
        %v3447 = vunpack.c.l.b16 %v833
        %v3448 = vunpack.c.h.b16 %v833
        %v3449 = vunpack.c.l.b16 %v834
        %v3450 = vunpack.c.h.b16 %v834
        %v3451 = vunpack.c.l.b16 %v835
        %v3452 = vunpack.c.h.b16 %v835
        %v3453 = vunpack.c.l.b16 %v836
        %v3454 = vunpack.c.h.b16 %v836
        %v3455 = vunpack.c.l.b16 %v837
        %v3456 = vunpack.c.h.b16 %v837
        %v3457 = vunpack.c.l.b16 %v838
        %v3458 = vunpack.c.h.b16 %v838
        %v3459 = vunpack.c.l.b16 %v839
        %v3460 = vunpack.c.h.b16 %v839
        %v3461 = vunpack.c.l.b16 %v840
        %v3462 = vunpack.c.h.b16 %v840
        %v3463 = vunpack.c.l.b16 %v841
        %v3464 = vunpack.c.h.b16 %v841
        %v3465 = vunpack.c.l.b16 %v842
        %v3466 = vunpack.c.h.b16 %v842
        %v3467 = vunpack.c.l.b16 %v843
        %v3468 = vunpack.c.h.b16 %v843
        %v3469 = vunpack.c.l.b16 %v844
        %v3470 = vunpack.c.h.b16 %v844
        %v3471 = vunpack.c.l.b16 %v845
        %v3472 = vunpack.c.h.b16 %v845
        %v3473 = vunpack.c.l.b16 %v846
        %v3474 = vunpack.c.h.b16 %v846
        %v3475 = vunpack.c.l.b16 %v847
        %v3476 = vunpack.c.h.b16 %v847
        %v3477 = vunpack.c.l.b16 %v848
        %v3478 = vunpack.c.h.b16 %v848
        %v3479 = vunpack.c.l.b16 %v849
        %v3480 = vunpack.c.h.b16 %v849
        %v3481 = vunpack.c.l.b16 %v850
        %v3482 = vunpack.c.h.b16 %v850
        %v3483 = vunpack.c.l.b16 %v851
        %v3484 = vunpack.c.h.b16 %v851
        %v3485 = vunpack.c.l.b16 %v852
        %v3486 = vunpack.c.h.b16 %v852
        %v3487 = vunpack.c.l.b16 %v853
        %v3488 = vunpack.c.h.b16 %v853
        %v3489 = vunpack.c.l.b16 %v854
        %v3490 = vunpack.c.h.b16 %v854
        %v3491 = vunpack.c.l.b16 %v855
        %v3492 = vunpack.c.h.b16 %v855
        %v3493 = vunpack.c.l.b16 %v856
        %v3494 = vunpack.c.h.b16 %v856
        %v3495 = vunpack.c.l.b16 %v857
        %v3496 = vunpack.c.h.b16 %v857
        %v3497 = vunpack.c.l.b16 %v858
        %v3498 = vunpack.c.h.b16 %v858
        %v3499 = vunpack.c.l.b16 %v859
        %v3500 = vunpack.c.h.b16 %v859
        %v3501 = vunpack.c.l.b16 %v860
        %v3502 = vunpack.c.h.b16 %v860
        %v3503 = vunpack.c.l.b16 %v861
        %v3504 = vunpack.c.h.b16 %v861
        %v3505 = vunpack.c.l.b16 %v862
        %v3506 = vunpack.c.h.b16 %v862
        %v3507 = vunpack.c.l.b16 %v863
        %v3508 = vunpack.c.h.b16 %v863
        %v3509 = vunpack.c.l.b16 %v864
        %v3510 = vunpack.c.h.b16 %v864
        %v3511 = vunpack.c.l.b16 %v865
        %v3512 = vunpack.c.h.b16 %v865
        %v3513 = vunpack.c.l.b16 %v866
        %v3514 = vunpack.c.h.b16 %v866
        %v3515 = vunpack.c.l.b16 %v867
        %v3516 = vunpack.c.h.b16 %v867
        %v3517 = vunpack.c.l.b16 %v868
        %v3518 = vunpack.c.h.b16 %v868
        %v3519 = vunpack.c.l.b16 %v869
        %v3520 = vunpack.c.h.b16 %v869
        %v3521 = vunpack.c.l.b16 %v870
        %v3522 = vunpack.c.h.b16 %v870
        %v3523 = vunpack.c.l.b16 %v871
        %v3524 = vunpack.c.h.b16 %v871
        %v3525 = vunpack.c.l.b16 %v872
        %v3526 = vunpack.c.h.b16 %v872
        %v3527 = vunpack.c.l.b16 %v873
        %v3528 = vunpack.c.h.b16 %v873
        %v3529 = vunpack.c.l.b16 %v874
        %v3530 = vunpack.c.h.b16 %v874
        %v3531 = vunpack.c.l.b16 %v875
        %v3532 = vunpack.c.h.b16 %v875
        %v3533 = vunpack.c.l.b16 %v876
        %v3534 = vunpack.c.h.b16 %v876
        %v3535 = vunpack.c.l.b16 %v877
        %v3536 = vunpack.c.h.b16 %v877
        %v3537 = vunpack.c.l.b16 %v878
        %v3538 = vunpack.c.h.b16 %v878
        %v3539 = vunpack.c.l.b16 %v879
        %v3540 = vunpack.c.h.b16 %v879
        %v3541 = vunpack.c.l.b16 %v880
        %v3542 = vunpack.c.h.b16 %v880
        %v3543 = vunpack.c.l.b16 %v881
        %v3544 = vunpack.c.h.b16 %v881
        %v3545 = vunpack.c.l.b16 %v882
        %v3546 = vunpack.c.h.b16 %v882
        %v3547 = vunpack.c.l.b16 %v883
        %v3548 = vunpack.c.h.b16 %v883
        %v3549 = vunpack.c.l.b16 %v884
        %v3550 = vunpack.c.h.b16 %v884
        %v3551 = vunpack.c.l.b16 %v885
        %v3552 = vunpack.c.h.b16 %v885
        %v3553 = vunpack.c.l.b16 %v886
        %v3554 = vunpack.c.h.b16 %v886
        %v3555 = vunpack.c.l.b16 %v887
        %v3556 = vunpack.c.h.b16 %v887
        %v3557 = vunpack.c.l.b16 %v888
        %v3558 = vunpack.c.h.b16 %v888
        %v3559 = vunpack.c.l.b16 %v889
        %v3560 = vunpack.c.h.b16 %v889
        %v3561 = vunpack.c.l.b16 %v890
        %v3562 = vunpack.c.h.b16 %v890
        %v3563 = vunpack.c.l.b16 %v891
        %v3564 = vunpack.c.h.b16 %v891
        %v3565 = vunpack.c.l.b16 %v892
        %v3566 = vunpack.c.h.b16 %v892
        %v3567 = vunpack.c.l.b16 %v893
        %v3568 = vunpack.c.h.b16 %v893
        %v3569 = vunpack.c.l.b16 %v894
        %v3570 = vunpack.c.h.b16 %v894
        %v3571 = vunpack.c.l.b16 %v895
        %v3572 = vunpack.c.h.b16 %v895
        %v3573 = vunpack.c.l.b16 %v896
        %v3574 = vunpack.c.h.b16 %v896
        %v3575 = vunpack.c.l.b16 %v897
        %v3576 = vunpack.c.h.b16 %v897
        %v3577 = vunpack.c.l.b16 %v898
        %v3578 = vunpack.c.h.b16 %v898
        %v3579 = vunpack.c.l.b16 %v899
        %v3580 = vunpack.c.h.b16 %v899
        %v3581 = vunpack.c.l.b16 %v900
        %v3582 = vunpack.c.h.b16 %v900
        %v3583 = vunpack.c.l.b16 %v901
        %v3584 = vunpack.c.h.b16 %v901
        %v3585 = vunpack.c.l.b16 %v902
        %v3586 = vunpack.c.h.b16 %v902
        %v3587 = vunpack.c.l.b16 %v903
        %v3588 = vunpack.c.h.b16 %v903
        %v3589 = vunpack.c.l.b16 %v904
        %v3590 = vunpack.c.h.b16 %v904
        %v3591 = vunpack.c.l.b16 %v905
        %v3592 = vunpack.c.h.b16 %v905
        %v3593 = vunpack.c.l.b16 %v906
        %v3594 = vunpack.c.h.b16 %v906
        %v3595 = vunpack.c.l.b16 %v907
        %v3596 = vunpack.c.h.b16 %v907
        %v3597 = vunpack.c.l.b16 %v908
        %v3598 = vunpack.c.h.b16 %v908
        %v3599 = vunpack.c.l.b16 %v909
        %v3600 = vunpack.c.h.b16 %v909
        %v3601 = vunpack.c.l.b16 %v910
        %v3602 = vunpack.c.h.b16 %v910
        %v3603 = vunpack.c.l.b16 %v911
        %v3604 = vunpack.c.h.b16 %v911
        %v3605 = vunpack.c.l.b16 %v912
        %v3606 = vunpack.c.h.b16 %v912
        %v3607 = vunpack.c.l.b16 %v913
        %v3608 = vunpack.c.h.b16 %v913
        %v3609 = vunpack.c.l.b16 %v914
        %v3610 = vunpack.c.h.b16 %v914
        %v3611 = vunpack.c.l.b16 %v915
        %v3612 = vunpack.c.h.b16 %v915
        %v3613 = vunpack.c.l.b16 %v916
        %v3614 = vunpack.c.h.b16 %v916
        %v3615 = vunpack.c.l.b16 %v917
        %v3616 = vunpack.c.h.b16 %v917
        %v3617 = vunpack.c.l.b16 %v918
        %v3618 = vunpack.c.h.b16 %v918
        %v3619 = vunpack.c.l.b16 %v919
        %v3620 = vunpack.c.h.b16 %v919
        %v3621 = vunpack.c.l.b16 %v920
        %v3622 = vunpack.c.h.b16 %v920
        %v3623 = vunpack.c.l.b16 %v921
        %v3624 = vunpack.c.h.b16 %v921
        %v3625 = vunpack.c.l.b16 %v922
        %v3626 = vunpack.c.h.b16 %v922
        %v3627 = vunpack.c.l.b16 %v923
        %v3628 = vunpack.c.h.b16 %v923
        %v3629 = vunpack.c.l.b16 %v924
        %v3630 = vunpack.c.h.b16 %v924
        %v3631 = vunpack.c.l.b16 %v925
        %v3632 = vunpack.c.h.b16 %v925
        %v3633 = vunpack.c.l.b16 %v926
        %v3634 = vunpack.c.h.b16 %v926
        %v3635 = vunpack.c.l.b16 %v927
        %v3636 = vunpack.c.h.b16 %v927
        %v3637 = vunpack.c.l.b16 %v928
        %v3638 = vunpack.c.h.b16 %v928
        %v3639 = vunpack.c.l.b16 %v929
        %v3640 = vunpack.c.h.b16 %v929
        %v3641 = vunpack.c.l.b16 %v930
        %v3642 = vunpack.c.h.b16 %v930
        %v3643 = vunpack.c.l.b16 %v931
        %v3644 = vunpack.c.h.b16 %v931
        %v3645 = vunpack.c.l.b16 %v932
        %v3646 = vunpack.c.h.b16 %v932
        %v3647 = vunpack.c.l.b16 %v933
        %v3648 = vunpack.c.h.b16 %v933
        %v3649 = vunpack.c.l.b16 %v934
        %v3650 = vunpack.c.h.b16 %v934
        %v3651 = vunpack.c.l.b16 %v935
        %v3652 = vunpack.c.h.b16 %v935
        %v3653 = vunpack.c.l.b16 %v936
        %v3654 = vunpack.c.h.b16 %v936
        %v3655 = vunpack.c.l.b16 %v937
        %v3656 = vunpack.c.h.b16 %v937
        %v3657 = vunpack.c.l.b16 %v938
        %v3658 = vunpack.c.h.b16 %v938
        %v3659 = vunpack.c.l.b16 %v939
        %v3660 = vunpack.c.h.b16 %v939
        %v3661 = vunpack.c.l.b16 %v940
        %v3662 = vunpack.c.h.b16 %v940
        %v3663 = vunpack.c.l.b16 %v941
        %v3664 = vunpack.c.h.b16 %v941
        %v3665 = vunpack.c.l.b16 %v942
        %v3666 = vunpack.c.h.b16 %v942
        %v3667 = vunpack.c.l.b16 %v943
        %v3668 = vunpack.c.h.b16 %v943
        %v3669 = vunpack.c.l.b16 %v944
        %v3670 = vunpack.c.h.b16 %v944
        %v3671 = vunpack.c.l.b16 %v945
        %v3672 = vunpack.c.h.b16 %v945
        %v3673 = vunpack.c.l.b16 %v946
        %v3674 = vunpack.c.h.b16 %v946
        %v3675 = vunpack.c.l.b16 %v947
        %v3676 = vunpack.c.h.b16 %v947
        %v3677 = vunpack.c.l.b16 %v948
        %v3678 = vunpack.c.h.b16 %v948
        %v3679 = vunpack.c.l.b16 %v949
        %v3680 = vunpack.c.h.b16 %v949
        %v3681 = vunpack.c.l.b16 %v950
        %v3682 = vunpack.c.h.b16 %v950
        %v3683 = vunpack.c.l.b16 %v951
        %v3684 = vunpack.c.h.b16 %v951
        %v3685 = vunpack.c.l.b16 %v952
        %v3686 = vunpack.c.h.b16 %v952
        %v3687 = vunpack.c.l.b16 %v953
        %v3688 = vunpack.c.h.b16 %v953
        %v3689 = vunpack.c.l.b16 %v954
        %v3690 = vunpack.c.h.b16 %v954
        %v3691 = vunpack.c.l.b16 %v955
        %v3692 = vunpack.c.h.b16 %v955
        %v3693 = vunpack.c.l.b16 %v956
        %v3694 = vunpack.c.h.b16 %v956
        %v3695 = vunpack.c.l.b16 %v957
        %v3696 = vunpack.c.h.b16 %v957
        %v3697 = vunpack.c.l.b16 %v958
        %v3698 = vunpack.c.h.b16 %v958
        %v3699 = vunpack.c.l.b16 %v959
        %v3700 = vunpack.c.h.b16 %v959
        %v3701 = vunpack.c.l.b16 %v960
        %v3702 = vunpack.c.h.b16 %v960
        %v3703 = vunpack.c.l.b16 %v961
        %v3704 = vunpack.c.h.b16 %v961
        %v3705 = vunpack.c.l.b16 %v962
        %v3706 = vunpack.c.h.b16 %v962
        %v3707 = vunpack.c.l.b16 %v963
        %v3708 = vunpack.c.h.b16 %v963
        %v3709 = vunpack.c.l.b16 %v964
        %v3710 = vunpack.c.h.b16 %v964
        %v3711 = vunpack.c.l.b16 %v965
        %v3712 = vunpack.c.h.b16 %v965
        %v3713 = vunpack.c.l.b16 %v966
        %v3714 = vunpack.c.h.b16 %v966
        %v3715 = vunpack.c.l.b16 %v967
        %v3716 = vunpack.c.h.b16 %v967
        %v3717 = vunpack.c.l.b16 %v968
        %v3718 = vunpack.c.h.b16 %v968
        %v3719 = vunpack.c.l.b16 %v969
        %v3720 = vunpack.c.h.b16 %v969
        %v3721 = vunpack.c.l.b16 %v970
        %v3722 = vunpack.c.h.b16 %v970
        %v3723 = vunpack.c.l.b16 %v971
        %v3724 = vunpack.c.h.b16 %v971
        %v3725 = vunpack.c.l.b16 %v972
        %v3726 = vunpack.c.h.b16 %v972
        %v3727 = vunpack.c.l.b16 %v973
        %v3728 = vunpack.c.h.b16 %v973
        %v3729 = vunpack.c.l.b16 %v974
        %v3730 = vunpack.c.h.b16 %v974
        %v3731 = vunpack.c.l.b16 %v975
        %v3732 = vunpack.c.h.b16 %v975
        %v3733 = vunpack.c.l.b16 %v976
        %v3734 = vunpack.c.h.b16 %v976
        %v3735 = vunpack.c.l.b16 %v977
        %v3736 = vunpack.c.h.b16 %v977
        %v3737 = vunpack.c.l.b16 %v978
        %v3738 = vunpack.c.h.b16 %v978
        %v3739 = vunpack.c.l.b16 %v979
        %v3740 = vunpack.c.h.b16 %v979
        %v3741 = vunpack.c.l.b16 %v980
        %v3742 = vunpack.c.h.b16 %v980
        %v3743 = vunpack.c.l.b16 %v981
        %v3744 = vunpack.c.h.b16 %v981
        %v3745 = vunpack.c.l.b16 %v982
        %v3746 = vunpack.c.h.b16 %v982
        %v3747 = vunpack.c.l.b16 %v983
        %v3748 = vunpack.c.h.b16 %v983
        %v3749 = vunpack.c.l.b16 %v984
        %v3750 = vunpack.c.h.b16 %v984
        %v3751 = vunpack.c.l.b16 %v985
        %v3752 = vunpack.c.h.b16 %v985
        %v3753 = vunpack.c.l.b16 %v986
        %v3754 = vunpack.c.h.b16 %v986
        %v3755 = vunpack.c.l.b16 %v987
        %v3756 = vunpack.c.h.b16 %v987
        %v3757 = vunpack.c.l.b16 %v988
        %v3758 = vunpack.c.h.b16 %v988
        %v3759 = vunpack.c.l.b16 %v989
        %v3760 = vunpack.c.h.b16 %v989
        %v3761 = vunpack.c.l.b16 %v990
        %v3762 = vunpack.c.h.b16 %v990
        %v3763 = vunpack.c.l.b16 %v991
        %v3764 = vunpack.c.h.b16 %v991
        %v3765 = vunpack.c.l.b16 %v992
        %v3766 = vunpack.c.h.b16 %v992
        %v3767 = vunpack.c.l.b16 %v993
        %v3768 = vunpack.c.h.b16 %v993
        %v3769 = vunpack.c.l.b16 %v994
        %v3770 = vunpack.c.h.b16 %v994
        %v3771 = vunpack.c.l.b16 %v995
        %v3772 = vunpack.c.h.b16 %v995
        %v3773 = vunpack.c.l.b16 %v996
        %v3774 = vunpack.c.h.b16 %v996
        %v3775 = vunpack.c.l.b16 %v997
        %v3776 = vunpack.c.h.b16 %v997
        %v3777 = vunpack.c.l.b16 %v998
        %v3778 = vunpack.c.h.b16 %v998
        %v3779 = vunpack.c.l.b16 %v999
        %v3780 = vunpack.c.h.b16 %v999
        %v3781 = vunpack.c.l.b16 %v1000
        %v3782 = vunpack.c.h.b16 %v1000
        %v3783 = vunpack.c.l.b16 %v1001
        %v3784 = vunpack.c.h.b16 %v1001
        %v3785 = vunpack.c.l.b16 %v1002
        %v3786 = vunpack.c.h.b16 %v1002
        %v3787 = vunpack.c.l.b16 %v1003
        %v3788 = vunpack.c.h.b16 %v1003
        %v3789 = vunpack.c.l.b16 %v1004
        %v3790 = vunpack.c.h.b16 %v1004
        %v3791 = vunpack.c.l.b16 %v1005
        %v3792 = vunpack.c.h.b16 %v1005
        %v3793 = vunpack.c.l.b16 %v1006
        %v3794 = vunpack.c.h.b16 %v1006
        %v3795 = vunpack.c.l.b16 %v1007
        %v3796 = vunpack.c.h.b16 %v1007
        %v3797 = vunpack.c.l.b16 %v1008
        %v3798 = vunpack.c.h.b16 %v1008
        %v3799 = vunpack.c.l.b16 %v1009
        %v3800 = vunpack.c.h.b16 %v1009
        %v3801 = vunpack.c.l.b16 %v1010
        %v3802 = vunpack.c.h.b16 %v1010
        %v3803 = vunpack.c.l.b16 %v1011
        %v3804 = vunpack.c.h.b16 %v1011
        %v3805 = vunpack.c.l.b16 %v1012
        %v3806 = vunpack.c.h.b16 %v1012
        %v3807 = vunpack.c.l.b16 %v1013
        %v3808 = vunpack.c.h.b16 %v1013
        %v3809 = vunpack.c.l.b16 %v1014
        %v3810 = vunpack.c.h.b16 %v1014
        %v3811 = vunpack.c.l.b16 %v1015
        %v3812 = vunpack.c.h.b16 %v1015
        %v3813 = vunpack.c.l.b16 %v1016
        %v3814 = vunpack.c.h.b16 %v1016
        %v3815 = vunpack.c.l.b16 %v1017
        %v3816 = vunpack.c.h.b16 %v1017
        %v3817 = vunpack.c.l.b16 %v1018
        %v3818 = vunpack.c.h.b16 %v1018
        %v3819 = vunpack.c.l.b16 %v1019
        %v3820 = vunpack.c.h.b16 %v1019
        %v3821 = vunpack.c.l.b16 %v1020
        %v3822 = vunpack.c.h.b16 %v1020
        %v3823 = vunpack.c.l.b16 %v1021
        %v3824 = vunpack.c.h.b16 %v1021
        %v3825 = vunpack.c.l.b16 %v1022
        %v3826 = vunpack.c.h.b16 %v1022
        %v3827 = vunpack.c.l.b16 %v1023
        %v3828 = vunpack.c.h.b16 %v1023
        %v3829 = vunpack.c.l.b16 %v1024
        %v3830 = vunpack.c.h.b16 %v1024
        %v3831 = vunpack.c.l.b16 %v1025
        %v3832 = vunpack.c.h.b16 %v1025
        %v3833 = vunpack.c.l.b16 %v1026
        %v3834 = vunpack.c.h.b16 %v1026
        %v3835 = vunpack.c.l.b16 %v1027
        %v3836 = vunpack.c.h.b16 %v1027
        %v3837 = vunpack.c.l.b16 %v1028
        %v3838 = vunpack.c.h.b16 %v1028
        %v3839 = vunpack.c.l.b16 %v1029
        %v3840 = vunpack.c.h.b16 %v1029
        %v3841 = vunpack.c.l.b16 %v1030
        %v3842 = vunpack.c.h.b16 %v1030
        %v3843 = vunpack.c.l.b16 %v1031
        %v3844 = vunpack.c.h.b16 %v1031
        %v3845 = vunpack.c.l.b16 %v1032
        %v3846 = vunpack.c.h.b16 %v1032
        %v3847 = vunpack.c.l.b16 %v1033
        %v3848 = vunpack.c.h.b16 %v1033
        %v3849 = vunpack.c.l.b16 %v1034
        %v3850 = vunpack.c.h.b16 %v1034
        %v3851 = vunpack.c.l.b16 %v1035
        %v3852 = vunpack.c.h.b16 %v1035
        %v3853 = vunpack.c.l.b16 %v1036
        %v3854 = vunpack.c.h.b16 %v1036
        %v3855 = vunpack.c.l.b16 %v1037
        %v3856 = vunpack.c.h.b16 %v1037
        %v3857 = vunpack.c.l.b16 %v1038
        %v3858 = vunpack.c.h.b16 %v1038
        %v3859 = vunpack.c.l.b16 %v1039
        %v3860 = vunpack.c.h.b16 %v1039
        %v3861 = vunpack.c.l.b16 %v1040
        %v3862 = vunpack.c.h.b16 %v1040
        %v3863 = vunpack.c.l.b16 %v1041
        %v3864 = vunpack.c.h.b16 %v1041
        %v3865 = vunpack.c.l.b16 %v1042
        %v3866 = vunpack.c.h.b16 %v1042
        %v3867 = vunpack.c.l.b16 %v1043
        %v3868 = vunpack.c.h.b16 %v1043
        %v3869 = vunpack.c.l.b16 %v1044
        %v3870 = vunpack.c.h.b16 %v1044
        %v3871 = vunpack.c.l.b16 %v1045
        %v3872 = vunpack.c.h.b16 %v1045
        %v3873 = vunpack.c.l.b16 %v1046
        %v3874 = vunpack.c.h.b16 %v1046
        %v3875 = vunpack.c.l.b16 %v1047
        %v3876 = vunpack.c.h.b16 %v1047
        %v3877 = vunpack.c.l.b16 %v1048
        %v3878 = vunpack.c.h.b16 %v1048
        %v3879 = vunpack.c.l.b16 %v1049
        %v3880 = vunpack.c.h.b16 %v1049
        %v3881 = vunpack.c.l.b16 %v1050
        %v3882 = vunpack.c.h.b16 %v1050
        %v3883 = vunpack.c.l.b16 %v1051
        %v3884 = vunpack.c.h.b16 %v1051
        %v3885 = vunpack.c.l.b16 %v1052
        %v3886 = vunpack.c.h.b16 %v1052
        %v3887 = vunpack.c.l.b16 %v1053
        %v3888 = vunpack.c.h.b16 %v1053
        %v3889 = vunpack.c.l.b16 %v1054
        %v3890 = vunpack.c.h.b16 %v1054
        %v3891 = vunpack.c.l.b16 %v1055
        %v3892 = vunpack.c.h.b16 %v1055
        %v3893 = vunpack.c.l.b16 %v1056
        %v3894 = vunpack.c.h.b16 %v1056
        %v3895 = vunpack.c.l.b16 %v1057
        %v3896 = vunpack.c.h.b16 %v1057
        %v3897 = vunpack.c.l.b16 %v1058
        %v3898 = vunpack.c.h.b16 %v1058
        %v3899 = vunpack.c.l.b16 %v1059
        %v3900 = vunpack.c.h.b16 %v1059
        %v3901 = vunpack.c.l.b16 %v1060
        %v3902 = vunpack.c.h.b16 %v1060
        %v3903 = vunpack.c.l.b16 %v1061
        %v3904 = vunpack.c.h.b16 %v1061
        %v3905 = vunpack.c.l.b16 %v1062
        %v3906 = vunpack.c.h.b16 %v1062
        %v3907 = vunpack.c.l.b16 %v1063
        %v3908 = vunpack.c.h.b16 %v1063
        %v3909 = vunpack.c.l.b16 %v1064
        %v3910 = vunpack.c.h.b16 %v1064
        %v3911 = vunpack.c.l.b16 %v1065
        %v3912 = vunpack.c.h.b16 %v1065
        %v3913 = vunpack.c.l.b16 %v1066
        %v3914 = vunpack.c.h.b16 %v1066
        %v3915 = vunpack.c.l.b16 %v1067
        %v3916 = vunpack.c.h.b16 %v1067
        %v3917 = vunpack.c.l.b16 %v1068
        %v3918 = vunpack.c.h.b16 %v1068
        %v3919 = vunpack.c.l.b16 %v1069
        %v3920 = vunpack.c.h.b16 %v1069
        %v3921 = vunpack.c.l.b16 %v1070
        %v3922 = vunpack.c.h.b16 %v1070
        %v3923 = vunpack.c.l.b16 %v1071
        %v3924 = vunpack.c.h.b16 %v1071
        %v3925 = vunpack.c.l.b16 %v1072
        %v3926 = vunpack.c.h.b16 %v1072
        %v3927 = vunpack.c.l.b16 %v1073
        %v3928 = vunpack.c.h.b16 %v1073
        %v3929 = vunpack.c.l.b16 %v1074
        %v3930 = vunpack.c.h.b16 %v1074
        %v3931 = vunpack.c.l.b16 %v1075
        %v3932 = vunpack.c.h.b16 %v1075
        %v3933 = vunpack.c.l.b16 %v1076
        %v3934 = vunpack.c.h.b16 %v1076
        %v3935 = vunpack.c.l.b16 %v1077
        %v3936 = vunpack.c.h.b16 %v1077
        %v3937 = vunpack.c.l.b16 %v1078
        %v3938 = vunpack.c.h.b16 %v1078
        %v3939 = vunpack.c.l.b16 %v1079
        %v3940 = vunpack.c.h.b16 %v1079
        %v3941 = vunpack.c.l.b16 %v1080
        %v3942 = vunpack.c.h.b16 %v1080
        %v3943 = vunpack.c.l.b16 %v1081
        %v3944 = vunpack.c.h.b16 %v1081
        %v3945 = vunpack.c.l.b16 %v1082
        %v3946 = vunpack.c.h.b16 %v1082
        %v3947 = vunpack.c.l.b16 %v1083
        %v3948 = vunpack.c.h.b16 %v1083
        %v3949 = vunpack.c.l.b16 %v1084
        %v3950 = vunpack.c.h.b16 %v1084
        %v3951 = vunpack.c.l.b16 %v1085
        %v3952 = vunpack.c.h.b16 %v1085
        %v3953 = vunpack.c.l.b16 %v1086
        %v3954 = vunpack.c.h.b16 %v1086
        %v3955 = vunpack.c.l.b16 %v1087
        %v3956 = vunpack.c.h.b16 %v1087
        %v3957 = vunpack.c.l.b16 %v1088
        %v3958 = vunpack.c.h.b16 %v1088
        %v3959 = vunpack.c.l.b16 %v1089
        %v3960 = vunpack.c.h.b16 %v1089
        %v3961 = vunpack.c.l.b16 %v1090
        %v3962 = vunpack.c.h.b16 %v1090
        %v3963 = vunpack.c.l.b16 %v1091
        %v3964 = vunpack.c.h.b16 %v1091
        %v3965 = vunpack.c.l.b16 %v1092
        %v3966 = vunpack.c.h.b16 %v1092
        %v3967 = vunpack.c.l.b16 %v1093
        %v3968 = vunpack.c.h.b16 %v1093
        %v3969 = vunpack.c.l.b16 %v1094
        %v3970 = vunpack.c.h.b16 %v1094
        %v3971 = vunpack.c.l.b16 %v1095
        %v3972 = vunpack.c.h.b16 %v1095
        %v3973 = vunpack.c.l.b16 %v1096
        %v3974 = vunpack.c.h.b16 %v1096
        %v3975 = vunpack.c.l.b16 %v1097
        %v3976 = vunpack.c.h.b16 %v1097
        %v3977 = vunpack.c.l.b16 %v1098
        %v3978 = vunpack.c.h.b16 %v1098
        %v3979 = vunpack.c.l.b16 %v1099
        %v3980 = vunpack.c.h.b16 %v1099
        %v3981 = vunpack.c.l.b16 %v1100
        %v3982 = vunpack.c.h.b16 %v1100
        %v3983 = vunpack.c.l.b16 %v1101
        %v3984 = vunpack.c.h.b16 %v1101
        %v3985 = vunpack.c.l.b16 %v1102
        %v3986 = vunpack.c.h.b16 %v1102
        %v3987 = vunpack.c.l.b16 %v1103
        %v3988 = vunpack.c.h.b16 %v1103
        %v3989 = vunpack.c.l.b16 %v1104
        %v3990 = vunpack.c.h.b16 %v1104
        %v3991 = vunpack.c.l.b16 %v1105
        %v3992 = vunpack.c.h.b16 %v1105
        %v3993 = vunpack.c.l.b16 %v1106
        %v3994 = vunpack.c.h.b16 %v1106
        %v3995 = vunpack.c.l.b16 %v1107
        %v3996 = vunpack.c.h.b16 %v1107
        %v3997 = vunpack.c.l.b16 %v1108
        %v3998 = vunpack.c.h.b16 %v1108
        %v3999 = vunpack.c.l.b16 %v1109
        %v4000 = vunpack.c.h.b16 %v1109
        %v4001 = vunpack.c.l.b16 %v1110
        %v4002 = vunpack.c.h.b16 %v1110
        %v4003 = vunpack.c.l.b16 %v1111
        %v4004 = vunpack.c.h.b16 %v1111
        %v4005 = vunpack.c.l.b16 %v1112
        %v4006 = vunpack.c.h.b16 %v1112
        %v4007 = vunpack.c.l.b16 %v1113
        %v4008 = vunpack.c.h.b16 %v1113
        %v4009 = vunpack.c.l.b16 %v1114
        %v4010 = vunpack.c.h.b16 %v1114
        %v4011 = vunpack.c.l.b16 %v1115
        %v4012 = vunpack.c.h.b16 %v1115
        %v4013 = vunpack.c.l.b16 %v1116
        %v4014 = vunpack.c.h.b16 %v1116
        %v4015 = vunpack.c.l.b16 %v1117
        %v4016 = vunpack.c.h.b16 %v1117
        %v4017 = vunpack.c.l.b16 %v1118
        %v4018 = vunpack.c.h.b16 %v1118
        %v4019 = vunpack.c.l.b16 %v1119
        %v4020 = vunpack.c.h.b16 %v1119
        %v4021 = vunpack.c.l.b16 %v1120
        %v4022 = vunpack.c.h.b16 %v1120
        %v4023 = vunpack.c.l.b16 %v1121
        %v4024 = vunpack.c.h.b16 %v1121
        %v4025 = vunpack.c.l.b16 %v1122
        %v4026 = vunpack.c.h.b16 %v1122
        %v4027 = vunpack.c.l.b16 %v1123
        %v4028 = vunpack.c.h.b16 %v1123
        %v4029 = vunpack.c.l.b16 %v1124
        %v4030 = vunpack.c.h.b16 %v1124
        %v4031 = vunpack.c.l.b16 %v1125
        %v4032 = vunpack.c.h.b16 %v1125
        %v4033 = vunpack.c.l.b16 %v1126
        %v4034 = vunpack.c.h.b16 %v1126
        %v4035 = vunpack.c.l.b16 %v1127
        %v4036 = vunpack.c.h.b16 %v1127
        %v4037 = vunpack.c.l.b16 %v1128
        %v4038 = vunpack.c.h.b16 %v1128
        %v4039 = vunpack.c.l.b16 %v1129
        %v4040 = vunpack.c.h.b16 %v1129
        %v4041 = vunpack.c.l.b16 %v1130
        %v4042 = vunpack.c.h.b16 %v1130
        %v4043 = vunpack.c.l.b16 %v1131
        %v4044 = vunpack.c.h.b16 %v1131
        %v4045 = vunpack.c.l.b16 %v1132
        %v4046 = vunpack.c.h.b16 %v1132
        %v4047 = vunpack.c.l.b16 %v1133
        %v4048 = vunpack.c.h.b16 %v1133
        %v4049 = vunpack.c.l.b16 %v1134
        %v4050 = vunpack.c.h.b16 %v1134
        %v4051 = vunpack.c.l.b16 %v1135
        %v4052 = vunpack.c.h.b16 %v1135
        %v4053 = vunpack.c.l.b16 %v1136
        %v4054 = vunpack.c.h.b16 %v1136
        %v4055 = vunpack.c.l.b16 %v1137
        %v4056 = vunpack.c.h.b16 %v1137
        %v4057 = vunpack.c.l.b16 %v1138
        %v4058 = vunpack.c.h.b16 %v1138
        %v4059 = vunpack.c.l.b16 %v1139
        %v4060 = vunpack.c.h.b16 %v1139
        %v4061 = vunpack.c.l.b16 %v1140
        %v4062 = vunpack.c.h.b16 %v1140
        %v4063 = vunpack.c.l.b16 %v1141
        %v4064 = vunpack.c.h.b16 %v1141
        %v4065 = vunpack.c.l.b16 %v1142
        %v4066 = vunpack.c.h.b16 %v1142
        %v4067 = vunpack.c.l.b16 %v1143
        %v4068 = vunpack.c.h.b16 %v1143
        %v4069 = vunpack.c.l.b16 %v1144
        %v4070 = vunpack.c.h.b16 %v1144
        %v4071 = vunpack.c.l.b16 %v1145
        %v4072 = vunpack.c.h.b16 %v1145
        %v4073 = vunpack.c.l.b16 %v1146
        %v4074 = vunpack.c.h.b16 %v1146
        %v4075 = vunpack.c.l.b16 %v1147
        %v4076 = vunpack.c.h.b16 %v1147
        %v4077 = vunpack.c.l.b16 %v1148
        %v4078 = vunpack.c.h.b16 %v1148
        %v4079 = vunpack.c.l.b16 %v1149
        %v4080 = vunpack.c.h.b16 %v1149
        %v4081 = vunpack.c.l.b16 %v1150
        %v4082 = vunpack.c.h.b16 %v1150
        %v4083 = vunpack.c.l.b16 %v1151
        %v4084 = vunpack.c.h.b16 %v1151
        %v4085 = vunpack.c.l.b16 %v1152
        %v4086 = vunpack.c.h.b16 %v1152
        %v4087 = vunpack.c.l.b16 %v1153
        %v4088 = vunpack.c.h.b16 %v1153
        %v4089 = vunpack.c.l.b16 %v1154
        %v4090 = vunpack.c.h.b16 %v1154
        %v4091 = vunpack.c.l.b16 %v1155
        %v4092 = vunpack.c.h.b16 %v1155
        %v4093 = vunpack.c.l.b16 %v1156
        %v4094 = vunpack.c.h.b16 %v1156
        %v4095 = vunpack.c.l.b16 %v1157
        %v4096 = vunpack.c.h.b16 %v1157
        %v4097 = vunpack.c.l.b16 %v1158
        %v4098 = vunpack.c.h.b16 %v1158
        %v4099 = vunpack.c.l.b16 %v1159
        %v4100 = vunpack.c.h.b16 %v1159
        %v4101 = vunpack.c.l.b16 %v1160
        %v4102 = vunpack.c.h.b16 %v1160
        %v4103 = vunpack.c.l.b16 %v1161
        %v4104 = vunpack.c.h.b16 %v1161
        %v4105 = vunpack.c.l.b16 %v1162
        %v4106 = vunpack.c.h.b16 %v1162
        %v4107 = vunpack.c.l.b16 %v1163
        %v4108 = vunpack.c.h.b16 %v1163
        %v4109 = vunpack.c.l.b16 %v1164
        %v4110 = vunpack.c.h.b16 %v1164
        %v4111 = vunpack.c.l.b16 %v1165
        %v4112 = vunpack.c.h.b16 %v1165
        %v4113 = vunpack.c.l.b16 %v1166
        %v4114 = vunpack.c.h.b16 %v1166
        %v4115 = vunpack.c.l.b16 %v1167
        %v4116 = vunpack.c.h.b16 %v1167
        %v4117 = vunpack.c.l.b16 %v1168
        %v4118 = vunpack.c.h.b16 %v1168
        %v4119 = vunpack.c.l.b16 %v1169
        %v4120 = vunpack.c.h.b16 %v1169
        %v4121 = vunpack.c.l.b16 %v1170
        %v4122 = vunpack.c.h.b16 %v1170
        %v4123 = vunpack.c.l.b16 %v1171
        %v4124 = vunpack.c.h.b16 %v1171
        %v4125 = vunpack.c.l.b16 %v1172
        %v4126 = vunpack.c.h.b16 %v1172
        %v4127 = vunpack.c.l.b16 %v1173
        %v4128 = vunpack.c.h.b16 %v1173
        %v4129 = vunpack.c.l.b16 %v1174
        %v4130 = vunpack.c.h.b16 %v1174
        %v4131 = vunpack.c.l.b16 %v1175
        %v4132 = vunpack.c.h.b16 %v1175
        %v4133 = vunpack.c.l.b16 %v1176
        %v4134 = vunpack.c.h.b16 %v1176
        %v4135 = vunpack.c.l.b16 %v1177
        %v4136 = vunpack.c.h.b16 %v1177
        %v4137 = vunpack.c.l.b16 %v1178
        %v4138 = vunpack.c.h.b16 %v1178
        %v4139 = vunpack.c.l.b16 %v1179
        %v4140 = vunpack.c.h.b16 %v1179
        %v4141 = vunpack.c.l.b16 %v1180
        %v4142 = vunpack.c.h.b16 %v1180
        %v4143 = vunpack.c.l.b16 %v1181
        %v4144 = vunpack.c.h.b16 %v1181
        %v4145 = vunpack.c.l.b16 %v1182
        %v4146 = vunpack.c.h.b16 %v1182
        %v4147 = vunpack.c.l.b16 %v1183
        %v4148 = vunpack.c.h.b16 %v1183
        %v4149 = vunpack.c.l.b16 %v1184
        %v4150 = vunpack.c.h.b16 %v1184
        %v4151 = vunpack.c.l.b16 %v1185
        %v4152 = vunpack.c.h.b16 %v1185
        %v4153 = vunpack.c.l.b16 %v1186
        %v4154 = vunpack.c.h.b16 %v1186
        %v4155 = vunpack.c.l.b16 %v1187
        %v4156 = vunpack.c.h.b16 %v1187
        %v4157 = vunpack.c.l.b16 %v1188
        %v4158 = vunpack.c.h.b16 %v1188
        %v4159 = vunpack.c.l.b16 %v1189
        %v4160 = vunpack.c.h.b16 %v1189
        %v4161 = vunpack.c.l.b16 %v1190
        %v4162 = vunpack.c.h.b16 %v1190
        %v4163 = vunpack.c.l.b16 %v1191
        %v4164 = vunpack.c.h.b16 %v1191
        %v4165 = vunpack.c.l.b16 %v1192
        %v4166 = vunpack.c.h.b16 %v1192
        %v4167 = vunpack.c.l.b16 %v1193
        %v4168 = vunpack.c.h.b16 %v1193
        %v4169 = vunpack.c.l.b16 %v1194
        %v4170 = vunpack.c.h.b16 %v1194
        %v4171 = vunpack.c.l.b16 %v1195
        %v4172 = vunpack.c.h.b16 %v1195
        %v4173 = vunpack.c.l.b16 %v1196
        %v4174 = vunpack.c.h.b16 %v1196
        %v4175 = vunpack.c.l.b16 %v1197
        %v4176 = vunpack.c.h.b16 %v1197
        %v4177 = vunpack.c.l.b16 %v1198
        %v4178 = vunpack.c.h.b16 %v1198
        %v4179 = vunpack.c.l.b16 %v1199
        %v4180 = vunpack.c.h.b16 %v1199
        %v4181 = vunpack.c.l.b16 %v1200
        %v4182 = vunpack.c.h.b16 %v1200
        %v4183 = vunpack.c.l.b16 %v1201
        %v4184 = vunpack.c.h.b16 %v1201
        %v4185 = vunpack.c.l.b16 %v1202
        %v4186 = vunpack.c.h.b16 %v1202
        %v4187 = vunpack.c.l.b16 %v1203
        %v4188 = vunpack.c.h.b16 %v1203
        %v4189 = vunpack.c.l.b16 %v1204
        %v4190 = vunpack.c.h.b16 %v1204
        %v4191 = vunpack.c.l.b16 %v1205
        %v4192 = vunpack.c.h.b16 %v1205
        %v4193 = vunpack.c.l.b16 %v1206
        %v4194 = vunpack.c.h.b16 %v1206
        %v4195 = vunpack.c.l.b16 %v1207
        %v4196 = vunpack.c.h.b16 %v1207
        %v4197 = vunpack.c.l.b16 %v1208
        %v4198 = vunpack.c.h.b16 %v1208
        %v4199 = vunpack.c.l.b16 %v1209
        %v4200 = vunpack.c.h.b16 %v1209
        %v4201 = vunpack.c.l.b16 %v1210
        %v4202 = vunpack.c.h.b16 %v1210
        %v4203 = vunpack.c.l.b16 %v1211
        %v4204 = vunpack.c.h.b16 %v1211
        %v4205 = vunpack.c.l.b16 %v1212
        %v4206 = vunpack.c.h.b16 %v1212
        %v4207 = vunpack.c.l.b16 %v1213
        %v4208 = vunpack.c.h.b16 %v1213
        %v4209 = vunpack.c.l.b16 %v1214
        %v4210 = vunpack.c.h.b16 %v1214
        %v4211 = vunpack.c.l.b16 %v1215
        %v4212 = vunpack.c.h.b16 %v1215
        %v4213 = vunpack.c.l.b16 %v1216
        %v4214 = vunpack.c.h.b16 %v1216
        %v4215 = vunpack.c.l.b16 %v1217
        %v4216 = vunpack.c.h.b16 %v1217
        %v4217 = vunpack.c.l.b16 %v1218
        %v4218 = vunpack.c.h.b16 %v1218
        %v4219 = vunpack.c.l.b16 %v1219
        %v4220 = vunpack.c.h.b16 %v1219
        %v4221 = vunpack.c.l.b16 %v1220
        %v4222 = vunpack.c.h.b16 %v1220
        %v4223 = vunpack.c.l.b16 %v1221
        %v4224 = vunpack.c.h.b16 %v1221
        %v4225 = vunpack.c.l.b16 %v1222
        %v4226 = vunpack.c.h.b16 %v1222
        %v4227 = vunpack.c.l.b16 %v1223
        %v4228 = vunpack.c.h.b16 %v1223
        %v4229 = vunpack.c.l.b16 %v1224
        %v4230 = vunpack.c.h.b16 %v1224
        %v4231 = vunpack.c.l.b16 %v1225
        %v4232 = vunpack.c.h.b16 %v1225
        %v4233 = vunpack.c.l.b16 %v1226
        %v4234 = vunpack.c.h.b16 %v1226
        %v4235 = vunpack.c.l.b16 %v1227
        %v4236 = vunpack.c.h.b16 %v1227
        %v4237 = vunpack.c.l.b16 %v1228
        %v4238 = vunpack.c.h.b16 %v1228
        %v4239 = vunpack.c.l.b16 %v1229
        %v4240 = vunpack.c.h.b16 %v1229
        %v4241 = vunpack.c.l.b16 %v1230
        %v4242 = vunpack.c.h.b16 %v1230
        %v4243 = vunpack.c.l.b16 %v1231
        %v4244 = vunpack.c.h.b16 %v1231
        %v4245 = vunpack.c.l.b16 %v1232
        %v4246 = vunpack.c.h.b16 %v1232
        %v4247 = vunpack.c.l.b16 %v1233
        %v4248 = vunpack.c.h.b16 %v1233
        %v4249 = vunpack.c.l.b16 %v1234
        %v4250 = vunpack.c.h.b16 %v1234
        %v4251 = vunpack.c.l.b16 %v1235
        %v4252 = vunpack.c.h.b16 %v1235
        %v4253 = vunpack.c.l.b16 %v1236
        %v4254 = vunpack.c.h.b16 %v1236
        %v4255 = vunpack.c.l.b16 %v1237
        %v4256 = vunpack.c.h.b16 %v1237
        %v4257 = vunpack.c.l.b16 %v1238
        %v4258 = vunpack.c.h.b16 %v1238
        %v4259 = vunpack.c.l.b16 %v1239
        %v4260 = vunpack.c.h.b16 %v1239
        %v4261 = vunpack.c.l.b16 %v1240
        %v4262 = vunpack.c.h.b16 %v1240
        %v4263 = vunpack.c.l.b16 %v1241
        %v4264 = vunpack.c.h.b16 %v1241
        %v4265 = vunpack.c.l.b16 %v1242
        %v4266 = vunpack.c.h.b16 %v1242
        %v4267 = vunpack.c.l.b16 %v1243
        %v4268 = vunpack.c.h.b16 %v1243
        %v4269 = vunpack.c.l.b16 %v1244
        %v4270 = vunpack.c.h.b16 %v1244
        %v4271 = vunpack.c.l.b16 %v1245
        %v4272 = vunpack.c.h.b16 %v1245
        %v4273 = vunpack.c.l.b16 %v1246
        %v4274 = vunpack.c.h.b16 %v1246
        %v4275 = vunpack.c.l.b16 %v1247
        %v4276 = vunpack.c.h.b16 %v1247
        %v4277 = vunpack.c.l.b16 %v1248
        %v4278 = vunpack.c.h.b16 %v1248
        %v4279 = vunpack.c.l.b16 %v1249
        %v4280 = vunpack.c.h.b16 %v1249
        %v4281 = vunpack.c.l.b16 %v1250
        %v4282 = vunpack.c.h.b16 %v1250
        %v4283 = vunpack.c.l.b16 %v1251
        %v4284 = vunpack.c.h.b16 %v1251
        %v4285 = vunpack.c.l.b16 %v1252
        %v4286 = vunpack.c.h.b16 %v1252
        %v4287 = vunpack.c.l.b16 %v1253
        %v4288 = vunpack.c.h.b16 %v1253
        %v4289 = vunpack.c.l.b16 %v1254
        %v4290 = vunpack.c.h.b16 %v1254
        %v4291 = vunpack.c.l.b16 %v1255
        %v4292 = vunpack.c.h.b16 %v1255
        %v4293 = vunpack.c.l.b16 %v1256
        %v4294 = vunpack.c.h.b16 %v1256
        %v4295 = vunpack.c.l.b16 %v1257
        %v4296 = vunpack.c.h.b16 %v1257
        %v4297 = vunpack.c.l.b16 %v1258
        %v4298 = vunpack.c.h.b16 %v1258
        %v4299 = vunpack.c.l.b16 %v1259
        %v4300 = vunpack.c.h.b16 %v1259
        %v4301 = vunpack.c.l.b16 %v1260
        %v4302 = vunpack.c.h.b16 %v1260
        %v4303 = vunpack.c.l.b16 %v1261
        %v4304 = vunpack.c.h.b16 %v1261
        %v4305 = vunpack.c.l.b16 %v1262
        %v4306 = vunpack.c.h.b16 %v1262
        %v4307 = vunpack.c.l.b16 %v1263
        %v4308 = vunpack.c.h.b16 %v1263
        %v4309 = vunpack.c.l.b16 %v1264
        %v4310 = vunpack.c.h.b16 %v1264
        %v4311 = vunpack.c.l.b16 %v1265
        %v4312 = vunpack.c.h.b16 %v1265
        %v4313 = vunpack.c.l.b16 %v1266
        %v4314 = vunpack.c.h.b16 %v1266
        %v4315 = vunpack.c.l.b16 %v1267
        %v4316 = vunpack.c.h.b16 %v1267
        %v4317 = vunpack.c.l.b16 %v1268
        %v4318 = vunpack.c.h.b16 %v1268
        %v4319 = vunpack.c.l.b16 %v1269
        %v4320 = vunpack.c.h.b16 %v1269
        %v4321 = vunpack.c.l.b16 %v1270
        %v4322 = vunpack.c.h.b16 %v1270
        %v4323 = vunpack.c.l.b16 %v1271
        %v4324 = vunpack.c.h.b16 %v1271
        %v4325 = vunpack.c.l.b16 %v1272
        %v4326 = vunpack.c.h.b16 %v1272
        %v4327 = vunpack.c.l.b16 %v1273
        %v4328 = vunpack.c.h.b16 %v1273
        %v4329 = vunpack.c.l.b16 %v1274
        %v4330 = vunpack.c.h.b16 %v1274
        %v4331 = vunpack.c.l.b16 %v1275
        %v4332 = vunpack.c.h.b16 %v1275
        %v4333 = vunpack.c.l.b16 %v1276
        %v4334 = vunpack.c.h.b16 %v1276
        %v4335 = vunpack.c.l.b16 %v1277
        %v4336 = vunpack.c.h.b16 %v1277
        %v4337 = vunpack.c.l.b16 %v1278
        %v4338 = vunpack.c.h.b16 %v1278
        %v4339 = vunpack.c.l.b16 %v1279
        %v4340 = vunpack.c.h.b16 %v1279
        %v4341 = vunpack.c.l.b16 %v1280
        %v4342 = vunpack.c.h.b16 %v1280
        %v4343 = vunpack.c.l.b16 %v1281
        %v4344 = vunpack.c.h.b16 %v1281
        %v4345 = vunpack.c.l.b16 %v1282
        %v4346 = vunpack.c.h.b16 %v1282
        %v4347 = vunpack.c.l.b16 %v1283
        %v4348 = vunpack.c.h.b16 %v1283
        %v4349 = vunpack.c.l.b16 %v1284
        %v4350 = vunpack.c.h.b16 %v1284
        %v4351 = vunpack.c.l.b16 %v1285
        %v4352 = vunpack.c.h.b16 %v1285
        %v4353 = vunpack.c.l.b16 %v1286
        %v4354 = vunpack.c.h.b16 %v1286
        %v4355 = vunpack.c.l.b16 %v1287
        %v4356 = vunpack.c.h.b16 %v1287
        %v4357 = vunpack.c.l.b16 %v1288
        %v4358 = vunpack.c.h.b16 %v1288
        %v4359 = vunpack.c.l.b16 %v1289
        %v4360 = vunpack.c.h.b16 %v1289
        %v4361 = vunpack.c.l.b16 %v1290
        %v4362 = vunpack.c.h.b16 %v1290
        %v4363 = vunpack.c.l.b16 %v1291
        %v4364 = vunpack.c.h.b16 %v1291
        %v4365 = vunpack.c.l.b16 %v1292
        %v4366 = vunpack.c.h.b16 %v1292
        %v4367 = vunpack.c.l.b16 %v1293
        %v4368 = vunpack.c.h.b16 %v1293
        %v4369 = vunpack.c.l.b16 %v1294
        %v4370 = vunpack.c.h.b16 %v1294
        %v4371 = vunpack.c.l.b16 %v1295
        %v4372 = vunpack.c.h.b16 %v1295
        %v4373 = vunpack.c.l.b16 %v1296
        %v4374 = vunpack.c.h.b16 %v1296
        %v4375 = vunpack.c.l.b16 %v1297
        %v4376 = vunpack.c.h.b16 %v1297
        %v4377 = vunpack.c.l.b16 %v1298
        %v4378 = vunpack.c.h.b16 %v1298
        %v4379 = vunpack.c.l.b16 %v1299
        %v4380 = vunpack.c.h.b16 %v1299
        %v4381 = vunpack.c.l.b16 %v1300
        %v4382 = vunpack.c.h.b16 %v1300
        %v4383 = vunpack.c.l.b16 %v1301
        %v4384 = vunpack.c.h.b16 %v1301
        %v4385 = vunpack.c.l.b16 %v1302
        %v4386 = vunpack.c.h.b16 %v1302
        %v4387 = vunpack.c.l.b16 %v1303
        %v4388 = vunpack.c.h.b16 %v1303
        %v4389 = vunpack.c.l.b16 %v1304
        %v4390 = vunpack.c.h.b16 %v1304
        %v4391 = vunpack.c.l.b16 %v1305
        %v4392 = vunpack.c.h.b16 %v1305
        %v4393 = vunpack.c.l.b16 %v1306
        %v4394 = vunpack.c.h.b16 %v1306
        %v4395 = vunpack.c.l.b16 %v1307
        %v4396 = vunpack.c.h.b16 %v1307
        %v4397 = vunpack.c.l.b16 %v1308
        %v4398 = vunpack.c.h.b16 %v1308
        %v4399 = vunpack.c.l.b16 %v1309
        %v4400 = vunpack.c.h.b16 %v1309
        %v4401 = vunpack.c.l.b16 %v1310
        %v4402 = vunpack.c.h.b16 %v1310
        %v4403 = vunpack.c.l.b16 %v1311
        %v4404 = vunpack.c.h.b16 %v1311
        %v4405 = vunpack.c.l.b16 %v1312
        %v4406 = vunpack.c.h.b16 %v1312
        %v4407 = vunpack.c.l.b16 %v1313
        %v4408 = vunpack.c.h.b16 %v1313
        %v4409 = vunpack.c.l.b16 %v1314
        %v4410 = vunpack.c.h.b16 %v1314
        %v4411 = vunpack.c.l.b16 %v1315
        %v4412 = vunpack.c.h.b16 %v1315
        %v4413 = vunpack.c.l.b16 %v1316
        %v4414 = vunpack.c.h.b16 %v1316
        %v4415 = vunpack.c.l.b16 %v1317
        %v4416 = vunpack.c.h.b16 %v1317
        %v4417 = vunpack.c.l.b16 %v1318
        %v4418 = vunpack.c.h.b16 %v1318
        %v4419 = vunpack.c.l.b16 %v1319
        %v4420 = vunpack.c.h.b16 %v1319
        %v4421 = vunpack.c.l.b16 %v1320
        %v4422 = vunpack.c.h.b16 %v1320
        %v4423 = vunpack.c.l.b16 %v1321
        %v4424 = vunpack.c.h.b16 %v1321
        %v4425 = vunpack.c.l.b16 %v1322
        %v4426 = vunpack.c.h.b16 %v1322
        %v4427 = vunpack.c.l.b16 %v1323
        %v4428 = vunpack.c.h.b16 %v1323
        %v4429 = vunpack.c.l.b16 %v1324
        %v4430 = vunpack.c.h.b16 %v1324
        %v4431 = vunpack.c.l.b16 %v1325
        %v4432 = vunpack.c.h.b16 %v1325
        %v4433 = vunpack.c.l.b16 %v1326
        %v4434 = vunpack.c.h.b16 %v1326
        %v4435 = vunpack.c.l.b16 %v1327
        %v4436 = vunpack.c.h.b16 %v1327
        %v4437 = vunpack.c.l.b16 %v1328
        %v4438 = vunpack.c.h.b16 %v1328
        %v4439 = vunpack.c.l.b16 %v1329
        %v4440 = vunpack.c.h.b16 %v1329
        %v4441 = vunpack.c.l.b16 %v1330
        %v4442 = vunpack.c.h.b16 %v1330
        %v4443 = vunpack.c.l.b16 %v1331
        %v4444 = vunpack.c.h.b16 %v1331
        %v4445 = vunpack.c.l.b16 %v1332
        %v4446 = vunpack.c.h.b16 %v1332
        %v4447 = vunpack.c.l.b16 %v1333
        %v4448 = vunpack.c.h.b16 %v1333
        %v4449 = vunpack.c.l.b16 %v1334
        %v4450 = vunpack.c.h.b16 %v1334
        %v4451 = vunpack.c.l.b16 %v1335
        %v4452 = vunpack.c.h.b16 %v1335
        %v4453 = vunpack.c.l.b16 %v1336
        %v4454 = vunpack.c.h.b16 %v1336
        %v4455 = vunpack.c.l.b16 %v1337
        %v4456 = vunpack.c.h.b16 %v1337
        %v4457 = vunpack.c.l.b16 %v1338
        %v4458 = vunpack.c.h.b16 %v1338
        %v4459 = vunpack.c.l.b16 %v1339
        %v4460 = vunpack.c.h.b16 %v1339
        %v4461 = vunpack.c.l.b16 %v1340
        %v4462 = vunpack.c.h.b16 %v1340
        %v4463 = vunpack.c.l.b16 %v1341
        %v4464 = vunpack.c.h.b16 %v1341
        %v4465 = vunpack.c.l.b16 %v1342
        %v4466 = vunpack.c.h.b16 %v1342
        %v4467 = vunpack.c.l.b16 %v1343
        %v4468 = vunpack.c.h.b16 %v1343
        %v4469 = vunpack.c.l.b16 %v1344
        %v4470 = vunpack.c.h.b16 %v1344
        %v4471 = vunpack.c.l.b16 %v1345
        %v4472 = vunpack.c.h.b16 %v1345
        %v4473 = vunpack.c.l.b16 %v1346
        %v4474 = vunpack.c.h.b16 %v1346
        %v4475 = vunpack.c.l.b16 %v1347
        %v4476 = vunpack.c.h.b16 %v1347
        %v4477 = vunpack.c.l.b16 %v1348
        %v4478 = vunpack.c.h.b16 %v1348
        %v4479 = vunpack.c.l.b16 %v1349
        %v4480 = vunpack.c.h.b16 %v1349
        %v4481 = vunpack.c.l.b16 %v1350
        %v4482 = vunpack.c.h.b16 %v1350
        %v4483 = vunpack.c.l.b16 %v1351
        %v4484 = vunpack.c.h.b16 %v1351
        %v4485 = vunpack.c.l.b16 %v1352
        %v4486 = vunpack.c.h.b16 %v1352
        %v4487 = vunpack.c.l.b16 %v1353
        %v4488 = vunpack.c.h.b16 %v1353
        %v4489 = vunpack.c.l.b16 %v1354
        %v4490 = vunpack.c.h.b16 %v1354
        %v4491 = vunpack.c.l.b16 %v1355
        %v4492 = vunpack.c.h.b16 %v1355
        %v4493 = vunpack.c.l.b16 %v1356
        %v4494 = vunpack.c.h.b16 %v1356
        %v4495 = vunpack.c.l.b16 %v1357
        %v4496 = vunpack.c.h.b16 %v1357
        %v4497 = vunpack.c.l.b16 %v1358
        %v4498 = vunpack.c.h.b16 %v1358
        %v4499 = vunpack.c.l.b16 %v1359
        %v4500 = vunpack.c.h.b16 %v1359
        %v4501 = vunpack.c.l.b16 %v1360
        %v4502 = vunpack.c.h.b16 %v1360
        %v4503 = vunpack.c.l.b16 %v1361
        %v4504 = vunpack.c.h.b16 %v1361
        %v4505 = vunpack.c.l.b16 %v1362
        %v4506 = vunpack.c.h.b16 %v1362
        %v4507 = vunpack.c.l.b16 %v1363
        %v4508 = vunpack.c.h.b16 %v1363
        %v4509 = vunpack.c.l.b16 %v1364
        %v4510 = vunpack.c.h.b16 %v1364
        %v4511 = vunpack.c.l.b16 %v1365
        %v4512 = vunpack.c.h.b16 %v1365
        %v4513 = vunpack.c.l.b16 %v1366
        %v4514 = vunpack.c.h.b16 %v1366
        %v4515 = vunpack.c.l.b16 %v1367
        %v4516 = vunpack.c.h.b16 %v1367
        %v4517 = vunpack.c.l.b16 %v1368
        %v4518 = vunpack.c.h.b16 %v1368
        %v4519 = vunpack.c.l.b16 %v1369
        %v4520 = vunpack.c.h.b16 %v1369
        %v4521 = vunpack.c.l.b16 %v1370
        %v4522 = vunpack.c.h.b16 %v1370
        %v4523 = vunpack.c.l.b16 %v1371
        %v4524 = vunpack.c.h.b16 %v1371
        %v4525 = vunpack.c.l.b16 %v1372
        %v4526 = vunpack.c.h.b16 %v1372
        %v4527 = vunpack.c.l.b16 %v1373
        %v4528 = vunpack.c.h.b16 %v1373
        %v4529 = vunpack.c.l.b16 %v1374
        %v4530 = vunpack.c.h.b16 %v1374
        %v4531 = vunpack.c.l.b16 %v1375
        %v4532 = vunpack.c.h.b16 %v1375
        %v4533 = vunpack.c.l.b16 %v1376
        %v4534 = vunpack.c.h.b16 %v1376
        %v4535 = vunpack.c.l.b16 %v1377
        %v4536 = vunpack.c.h.b16 %v1377
        %v4537 = vunpack.c.l.b16 %v1378
        %v4538 = vunpack.c.h.b16 %v1378
        %v4539 = vunpack.c.l.b16 %v1379
        %v4540 = vunpack.c.h.b16 %v1379
        %v4541 = vunpack.c.l.b16 %v1380
        %v4542 = vunpack.c.h.b16 %v1380
        %v4543 = vunpack.c.l.b16 %v1381
        %v4544 = vunpack.c.h.b16 %v1381
        %v4545 = vunpack.c.l.b16 %v1382
        %v4546 = vunpack.c.h.b16 %v1382
        %v4547 = vunpack.c.l.b16 %v1383
        %v4548 = vunpack.c.h.b16 %v1383
        %v4549 = vunpack.c.l.b16 %v1384
        %v4550 = vunpack.c.h.b16 %v1384
        %v4551 = vunpack.c.l.b16 %v1385
        %v4552 = vunpack.c.h.b16 %v1385
        %v4553 = vunpack.c.l.b16 %v1386
        %v4554 = vunpack.c.h.b16 %v1386
        %v4555 = vunpack.c.l.b16 %v1387
        %v4556 = vunpack.c.h.b16 %v1387
        %v4557 = vunpack.c.l.b16 %v1388
        %v4558 = vunpack.c.h.b16 %v1388
        %v4559 = vunpack.c.l.b16 %v1389
        %v4560 = vunpack.c.h.b16 %v1389
        %v4561 = vunpack.c.l.b16 %v1390
        %v4562 = vunpack.c.h.b16 %v1390
        %v4563 = vunpack.c.l.b16 %v1391
        %v4564 = vunpack.c.h.b16 %v1391
        %v4565 = vunpack.c.l.b16 %v1392
        %v4566 = vunpack.c.h.b16 %v1392
        %v4567 = vunpack.c.l.b16 %v1393
        %v4568 = vunpack.c.h.b16 %v1393
        %v4569 = vunpack.c.l.b16 %v1394
        %v4570 = vunpack.c.h.b16 %v1394
        %v4571 = vunpack.c.l.b16 %v1395
        %v4572 = vunpack.c.h.b16 %v1395
        %v4573 = vunpack.c.l.b16 %v1396
        %v4574 = vunpack.c.h.b16 %v1396
        %v4575 = vunpack.c.l.b16 %v1397
        %v4576 = vunpack.c.h.b16 %v1397
        %v4577 = vunpack.c.l.b16 %v1398
        %v4578 = vunpack.c.h.b16 %v1398
        %v4579 = vunpack.c.l.b16 %v1399
        %v4580 = vunpack.c.h.b16 %v1399
        %v4581 = vunpack.c.l.b16 %v1400
        %v4582 = vunpack.c.h.b16 %v1400
        %v4583 = vunpack.c.l.b16 %v1401
        %v4584 = vunpack.c.h.b16 %v1401
        %v4585 = vunpack.c.l.b16 %v1402
        %v4586 = vunpack.c.h.b16 %v1402
        %v4587 = vunpack.c.l.b16 %v1403
        %v4588 = vunpack.c.h.b16 %v1403
        %v4589 = vunpack.c.l.b16 %v1404
        %v4590 = vunpack.c.h.b16 %v1404
        %v4591 = vunpack.c.l.b16 %v1405
        %v4592 = vunpack.c.h.b16 %v1405
        %v4593 = vunpack.c.l.b16 %v1406
        %v4594 = vunpack.c.h.b16 %v1406
        %v4595 = vunpack.c.l.b16 %v1407
        %v4596 = vunpack.c.h.b16 %v1407
        %v4597 = vunpack.c.l.b16 %v1408
        %v4598 = vunpack.c.h.b16 %v1408
        %v4599 = vunpack.c.l.b16 %v1409
        %v4600 = vunpack.c.h.b16 %v1409
        %v4601 = vunpack.c.l.b16 %v1410
        %v4602 = vunpack.c.h.b16 %v1410
        %v4603 = vunpack.c.l.b16 %v1411
        %v4604 = vunpack.c.h.b16 %v1411
        %v4605 = vunpack.c.l.b16 %v1412
        %v4606 = vunpack.c.h.b16 %v1412
        %v4607 = vunpack.c.l.b16 %v1413
        %v4608 = vunpack.c.h.b16 %v1413
        %v4609 = vunpack.c.l.b16 %v1414
        %v4610 = vunpack.c.h.b16 %v1414
        %v4611 = vunpack.c.l.b16 %v1415
        %v4612 = vunpack.c.h.b16 %v1415
        %v4613 = vunpack.c.l.b16 %v1416
        %v4614 = vunpack.c.h.b16 %v1416
        %v4615 = vunpack.c.l.b16 %v1417
        %v4616 = vunpack.c.h.b16 %v1417
        %v4617 = vunpack.c.l.b16 %v1418
        %v4618 = vunpack.c.h.b16 %v1418
        %v4619 = vunpack.c.l.b16 %v1419
        %v4620 = vunpack.c.h.b16 %v1419
        %v4621 = vunpack.c.l.b16 %v1420
        %v4622 = vunpack.c.h.b16 %v1420
        %v4623 = vunpack.c.l.b16 %v1421
        %v4624 = vunpack.c.h.b16 %v1421
        %v4625 = vunpack.c.l.b16 %v1422
        %v4626 = vunpack.c.h.b16 %v1422
        %v4627 = vunpack.c.l.b16 %v1423
        %v4628 = vunpack.c.h.b16 %v1423
        %v4629 = vunpack.c.l.b16 %v1424
        %v4630 = vunpack.c.h.b16 %v1424
        %v4631 = vunpack.c.l.b16 %v1425
        %v4632 = vunpack.c.h.b16 %v1425
        %v4633 = vunpack.c.l.b16 %v1426
        %v4634 = vunpack.c.h.b16 %v1426
        %v4635 = vunpack.c.l.b16 %v1427
        %v4636 = vunpack.c.h.b16 %v1427
        %v4637 = vunpack.c.l.b16 %v1428
        %v4638 = vunpack.c.h.b16 %v1428
        %v4639 = vunpack.c.l.b16 %v1429
        %v4640 = vunpack.c.h.b16 %v1429
        %v4641 = vunpack.c.l.b16 %v1430
        %v4642 = vunpack.c.h.b16 %v1430
        %v4643 = vunpack.c.l.b16 %v1431
        %v4644 = vunpack.c.h.b16 %v1431
        %v4645 = vunpack.c.l.b16 %v1432
        %v4646 = vunpack.c.h.b16 %v1432
        %v4647 = vunpack.c.l.b16 %v1433
        %v4648 = vunpack.c.h.b16 %v1433
        %v4649 = vunpack.c.l.b16 %v1434
        %v4650 = vunpack.c.h.b16 %v1434
        %v4651 = vunpack.c.l.b16 %v1435
        %v4652 = vunpack.c.h.b16 %v1435
        %v4653 = vunpack.c.l.b16 %v1436
        %v4654 = vunpack.c.h.b16 %v1436
        %v4655 = vunpack.c.l.b16 %v1437
        %v4656 = vunpack.c.h.b16 %v1437
        %v4657 = vunpack.c.l.b16 %v1438
        %v4658 = vunpack.c.h.b16 %v1438
        %v4659 = vunpack.c.l.b16 %v1439
        %v4660 = vunpack.c.h.b16 %v1439
        %v4661 = vunpack.c.l.b16 %v1440
        %v4662 = vunpack.c.h.b16 %v1440
        %v4663 = vunpack.c.l.b16 %v1441
        %v4664 = vunpack.c.h.b16 %v1441
        %v4665 = vunpack.c.l.b16 %v1442
        %v4666 = vunpack.c.h.b16 %v1442
        %v4667 = vunpack.c.l.b16 %v1443
        %v4668 = vunpack.c.h.b16 %v1443
        %v4669 = vunpack.c.l.b16 %v1444
        %v4670 = vunpack.c.h.b16 %v1444
        %v4671 = vunpack.c.l.b16 %v1445
        %v4672 = vunpack.c.h.b16 %v1445
        %v4673 = vunpack.c.l.b16 %v1446
        %v4674 = vunpack.c.h.b16 %v1446
        %v4675 = vunpack.c.l.b16 %v1447
        %v4676 = vunpack.c.h.b16 %v1447
        %v4677 = vunpack.c.l.b16 %v1448
        %v4678 = vunpack.c.h.b16 %v1448
        %v4679 = vunpack.c.l.b16 %v1449
        %v4680 = vunpack.c.h.b16 %v1449
        %v4681 = vunpack.c.l.b16 %v1450
        %v4682 = vunpack.c.h.b16 %v1450
        %v4683 = vpack.c.b16 %v2639, %v2635
        %v4684 = vpack.c.b16 %v2640, %v2636
        %v4685 = vpack.c.b16 %v2641, %v2637
        %v4686 = vpack.c.b16 %v2642, %v2638
        %v4687 = vpack.c.b16 %v2647, %v2643
        %v4688 = vpack.c.b16 %v2648, %v2644
        %v4689 = vpack.c.b16 %v2649, %v2645
        %v4690 = vpack.c.b16 %v2650, %v2646
        %v4691 = vpack.c.b16 %v2655, %v2651
        %v4692 = vpack.c.b16 %v2656, %v2652
        %v4693 = vpack.c.b16 %v2657, %v2653
        %v4694 = vpack.c.b16 %v2658, %v2654
        %v4695 = vpack.c.b16 %v2663, %v2659
        %v4696 = vpack.c.b16 %v2664, %v2660
        %v4697 = vpack.c.b16 %v2665, %v2661
        %v4698 = vpack.c.b16 %v2666, %v2662
        %v4699 = vpack.c.b16 %v2671, %v2667
        %v4700 = vpack.c.b16 %v2672, %v2668
        %v4701 = vpack.c.b16 %v2673, %v2669
        %v4702 = vpack.c.b16 %v2674, %v2670
        %v4703 = vpack.c.b16 %v2679, %v2675
        %v4704 = vpack.c.b16 %v2680, %v2676
        %v4705 = vpack.c.b16 %v2681, %v2677
        %v4706 = vpack.c.b16 %v2682, %v2678
        %v4707 = vpack.c.b16 %v2687, %v2683
        %v4708 = vpack.c.b16 %v2688, %v2684
        %v4709 = vpack.c.b16 %v2689, %v2685
        %v4710 = vpack.c.b16 %v2690, %v2686
        %v4711 = vpack.c.b16 %v2695, %v2691
        %v4712 = vpack.c.b16 %v2696, %v2692
        %v4713 = vpack.c.b16 %v2697, %v2693
        %v4714 = vpack.c.b16 %v2698, %v2694
        %v4715 = vpack.c.b16 %v2703, %v2699
        %v4716 = vpack.c.b16 %v2704, %v2700
        %v4717 = vpack.c.b16 %v2705, %v2701
        %v4718 = vpack.c.b16 %v2706, %v2702
        %v4719 = vpack.c.b16 %v2711, %v2707
        %v4720 = vpack.c.b16 %v2712, %v2708
        %v4721 = vpack.c.b16 %v2713, %v2709
        %v4722 = vpack.c.b16 %v2714, %v2710
        %v4723 = vpack.c.b16 %v2719, %v2715
        %v4724 = vpack.c.b16 %v2720, %v2716
        %v4725 = vpack.c.b16 %v2721, %v2717
        %v4726 = vpack.c.b16 %v2722, %v2718
        %v4727 = vpack.c.b16 %v2727, %v2723
        %v4728 = vpack.c.b16 %v2728, %v2724
        %v4729 = vpack.c.b16 %v2729, %v2725
        %v4730 = vpack.c.b16 %v2730, %v2726
        %v4731 = vpack.c.b16 %v2735, %v2731
        %v4732 = vpack.c.b16 %v2736, %v2732
        %v4733 = vpack.c.b16 %v2737, %v2733
        %v4734 = vpack.c.b16 %v2738, %v2734
        %v4735 = vpack.c.b16 %v2743, %v2739
        %v4736 = vpack.c.b16 %v2744, %v2740
        %v4737 = vpack.c.b16 %v2745, %v2741
        %v4738 = vpack.c.b16 %v2746, %v2742
        %v4739 = vpack.c.b16 %v2751, %v2747
        %v4740 = vpack.c.b16 %v2752, %v2748
        %v4741 = vpack.c.b16 %v2753, %v2749
        %v4742 = vpack.c.b16 %v2754, %v2750
        %v4743 = vpack.c.b16 %v2759, %v2755
        %v4744 = vpack.c.b16 %v2760, %v2756
        %v4745 = vpack.c.b16 %v2761, %v2757
        %v4746 = vpack.c.b16 %v2762, %v2758
        %v4747 = vpack.c.b16 %v2767, %v2763
        %v4748 = vpack.c.b16 %v2768, %v2764
        %v4749 = vpack.c.b16 %v2769, %v2765
        %v4750 = vpack.c.b16 %v2770, %v2766
        %v4751 = vpack.c.b16 %v2775, %v2771
        %v4752 = vpack.c.b16 %v2776, %v2772
        %v4753 = vpack.c.b16 %v2777, %v2773
        %v4754 = vpack.c.b16 %v2778, %v2774
        %v4755 = vpack.c.b16 %v2783, %v2779
        %v4756 = vpack.c.b16 %v2784, %v2780
        %v4757 = vpack.c.b16 %v2785, %v2781
        %v4758 = vpack.c.b16 %v2786, %v2782
        %v4759 = vpack.c.b16 %v2791, %v2787
        %v4760 = vpack.c.b16 %v2792, %v2788
        %v4761 = vpack.c.b16 %v2793, %v2789
        %v4762 = vpack.c.b16 %v2794, %v2790
        %v4763 = vpack.c.b16 %v2799, %v2795
        %v4764 = vpack.c.b16 %v2800, %v2796
        %v4765 = vpack.c.b16 %v2801, %v2797
        %v4766 = vpack.c.b16 %v2802, %v2798
        %v4767 = vpack.c.b16 %v2807, %v2803
        %v4768 = vpack.c.b16 %v2808, %v2804
        %v4769 = vpack.c.b16 %v2809, %v2805
        %v4770 = vpack.c.b16 %v2810, %v2806
        %v4771 = vpack.c.b16 %v2815, %v2811
        %v4772 = vpack.c.b16 %v2816, %v2812
        %v4773 = vpack.c.b16 %v2817, %v2813
        %v4774 = vpack.c.b16 %v2818, %v2814
        %v4775 = vpack.c.b16 %v2823, %v2819
        %v4776 = vpack.c.b16 %v2824, %v2820
        %v4777 = vpack.c.b16 %v2825, %v2821
        %v4778 = vpack.c.b16 %v2826, %v2822
        %v4779 = vpack.c.b16 %v2831, %v2827
        %v4780 = vpack.c.b16 %v2832, %v2828
        %v4781 = vpack.c.b16 %v2833, %v2829
        %v4782 = vpack.c.b16 %v2834, %v2830
        %v4783 = vpack.c.b16 %v2839, %v2835
        %v4784 = vpack.c.b16 %v2840, %v2836
        %v4785 = vpack.c.b16 %v2841, %v2837
        %v4786 = vpack.c.b16 %v2842, %v2838
        %v4787 = vpack.c.b16 %v2847, %v2843
        %v4788 = vpack.c.b16 %v2848, %v2844
        %v4789 = vpack.c.b16 %v2849, %v2845
        %v4790 = vpack.c.b16 %v2850, %v2846
        %v4791 = vpack.c.b16 %v2855, %v2851
        %v4792 = vpack.c.b16 %v2856, %v2852
        %v4793 = vpack.c.b16 %v2857, %v2853
        %v4794 = vpack.c.b16 %v2858, %v2854
        %v4795 = vpack.c.b16 %v2863, %v2859
        %v4796 = vpack.c.b16 %v2864, %v2860
        %v4797 = vpack.c.b16 %v2865, %v2861
        %v4798 = vpack.c.b16 %v2866, %v2862
        %v4799 = vpack.c.b16 %v2871, %v2867
        %v4800 = vpack.c.b16 %v2872, %v2868
        %v4801 = vpack.c.b16 %v2873, %v2869
        %v4802 = vpack.c.b16 %v2874, %v2870
        %v4803 = vpack.c.b16 %v2879, %v2875
        %v4804 = vpack.c.b16 %v2880, %v2876
        %v4805 = vpack.c.b16 %v2881, %v2877
        %v4806 = vpack.c.b16 %v2882, %v2878
        %v4807 = vpack.c.b16 %v2887, %v2883
        %v4808 = vpack.c.b16 %v2888, %v2884
        %v4809 = vpack.c.b16 %v2889, %v2885
        %v4810 = vpack.c.b16 %v2890, %v2886
        %v4811 = vpack.c.b16 %v2895, %v2891
        %v4812 = vpack.c.b16 %v2896, %v2892
        %v4813 = vpack.c.b16 %v2897, %v2893
        %v4814 = vpack.c.b16 %v2898, %v2894
        %v4815 = vpack.c.b16 %v2903, %v2899
        %v4816 = vpack.c.b16 %v2904, %v2900
        %v4817 = vpack.c.b16 %v2905, %v2901
        %v4818 = vpack.c.b16 %v2906, %v2902
        %v4819 = vpack.c.b16 %v2911, %v2907
        %v4820 = vpack.c.b16 %v2912, %v2908
        %v4821 = vpack.c.b16 %v2913, %v2909
        %v4822 = vpack.c.b16 %v2914, %v2910
        %v4823 = vpack.c.b16 %v2919, %v2915
        %v4824 = vpack.c.b16 %v2920, %v2916
        %v4825 = vpack.c.b16 %v2921, %v2917
        %v4826 = vpack.c.b16 %v2922, %v2918
        %v4827 = vpack.c.b16 %v2927, %v2923
        %v4828 = vpack.c.b16 %v2928, %v2924
        %v4829 = vpack.c.b16 %v2929, %v2925
        %v4830 = vpack.c.b16 %v2930, %v2926
        %v4831 = vpack.c.b16 %v2935, %v2931
        %v4832 = vpack.c.b16 %v2936, %v2932
        %v4833 = vpack.c.b16 %v2937, %v2933
        %v4834 = vpack.c.b16 %v2938, %v2934
        %v4835 = vpack.c.b16 %v2943, %v2939
        %v4836 = vpack.c.b16 %v2944, %v2940
        %v4837 = vpack.c.b16 %v2945, %v2941
        %v4838 = vpack.c.b16 %v2946, %v2942
        %v4839 = vpack.c.b16 %v2951, %v2947
        %v4840 = vpack.c.b16 %v2952, %v2948
        %v4841 = vpack.c.b16 %v2953, %v2949
        %v4842 = vpack.c.b16 %v2954, %v2950
        %v4843 = vpack.c.b16 %v2959, %v2955
        %v4844 = vpack.c.b16 %v2960, %v2956
        %v4845 = vpack.c.b16 %v2961, %v2957
        %v4846 = vpack.c.b16 %v2962, %v2958
        %v4847 = vpack.c.b16 %v2967, %v2963
        %v4848 = vpack.c.b16 %v2968, %v2964
        %v4849 = vpack.c.b16 %v2969, %v2965
        %v4850 = vpack.c.b16 %v2970, %v2966
        %v4851 = vpack.c.b16 %v2975, %v2971
        %v4852 = vpack.c.b16 %v2976, %v2972
        %v4853 = vpack.c.b16 %v2977, %v2973
        %v4854 = vpack.c.b16 %v2978, %v2974
        %v4855 = vpack.c.b16 %v2983, %v2979
        %v4856 = vpack.c.b16 %v2984, %v2980
        %v4857 = vpack.c.b16 %v2985, %v2981
        %v4858 = vpack.c.b16 %v2986, %v2982
        %v4859 = vpack.c.b16 %v2991, %v2987
        %v4860 = vpack.c.b16 %v2992, %v2988
        %v4861 = vpack.c.b16 %v2993, %v2989
        %v4862 = vpack.c.b16 %v2994, %v2990
        %v4863 = vpack.c.b16 %v2999, %v2995
        %v4864 = vpack.c.b16 %v3000, %v2996
        %v4865 = vpack.c.b16 %v3001, %v2997
        %v4866 = vpack.c.b16 %v3002, %v2998
        %v4867 = vpack.c.b16 %v3007, %v3003
        %v4868 = vpack.c.b16 %v3008, %v3004
        %v4869 = vpack.c.b16 %v3009, %v3005
        %v4870 = vpack.c.b16 %v3010, %v3006
        %v4871 = vpack.c.b16 %v3015, %v3011
        %v4872 = vpack.c.b16 %v3016, %v3012
        %v4873 = vpack.c.b16 %v3017, %v3013
        %v4874 = vpack.c.b16 %v3018, %v3014
        %v4875 = vpack.c.b16 %v3023, %v3019
        %v4876 = vpack.c.b16 %v3024, %v3020
        %v4877 = vpack.c.b16 %v3025, %v3021
        %v4878 = vpack.c.b16 %v3026, %v3022
        %v4879 = vpack.c.b16 %v3031, %v3027
        %v4880 = vpack.c.b16 %v3032, %v3028
        %v4881 = vpack.c.b16 %v3033, %v3029
        %v4882 = vpack.c.b16 %v3034, %v3030
        %v4883 = vpack.c.b16 %v3039, %v3035
        %v4884 = vpack.c.b16 %v3040, %v3036
        %v4885 = vpack.c.b16 %v3041, %v3037
        %v4886 = vpack.c.b16 %v3042, %v3038
        %v4887 = vpack.c.b16 %v3047, %v3043
        %v4888 = vpack.c.b16 %v3048, %v3044
        %v4889 = vpack.c.b16 %v3049, %v3045
        %v4890 = vpack.c.b16 %v3050, %v3046
        %v4891 = vpack.c.b16 %v3055, %v3051
        %v4892 = vpack.c.b16 %v3056, %v3052
        %v4893 = vpack.c.b16 %v3057, %v3053
        %v4894 = vpack.c.b16 %v3058, %v3054
        %v4895 = vpack.c.b16 %v3063, %v3059
        %v4896 = vpack.c.b16 %v3064, %v3060
        %v4897 = vpack.c.b16 %v3065, %v3061
        %v4898 = vpack.c.b16 %v3066, %v3062
        %v4899 = vpack.c.b16 %v3071, %v3067
        %v4900 = vpack.c.b16 %v3072, %v3068
        %v4901 = vpack.c.b16 %v3073, %v3069
        %v4902 = vpack.c.b16 %v3074, %v3070
        %v4903 = vpack.c.b16 %v3079, %v3075
        %v4904 = vpack.c.b16 %v3080, %v3076
        %v4905 = vpack.c.b16 %v3081, %v3077
        %v4906 = vpack.c.b16 %v3082, %v3078
        %v4907 = vpack.c.b16 %v3087, %v3083
        %v4908 = vpack.c.b16 %v3088, %v3084
        %v4909 = vpack.c.b16 %v3089, %v3085
        %v4910 = vpack.c.b16 %v3090, %v3086
        %v4911 = vpack.c.b16 %v3095, %v3091
        %v4912 = vpack.c.b16 %v3096, %v3092
        %v4913 = vpack.c.b16 %v3097, %v3093
        %v4914 = vpack.c.b16 %v3098, %v3094
        %v4915 = vpack.c.b16 %v3103, %v3099
        %v4916 = vpack.c.b16 %v3104, %v3100
        %v4917 = vpack.c.b16 %v3105, %v3101
        %v4918 = vpack.c.b16 %v3106, %v3102
        %v4919 = vpack.c.b16 %v3111, %v3107
        %v4920 = vpack.c.b16 %v3112, %v3108
        %v4921 = vpack.c.b16 %v3113, %v3109
        %v4922 = vpack.c.b16 %v3114, %v3110
        %v4923 = vpack.c.b16 %v3119, %v3115
        %v4924 = vpack.c.b16 %v3120, %v3116
        %v4925 = vpack.c.b16 %v3121, %v3117
        %v4926 = vpack.c.b16 %v3122, %v3118
        %v4927 = vpack.c.b16 %v3127, %v3123
        %v4928 = vpack.c.b16 %v3128, %v3124
        %v4929 = vpack.c.b16 %v3129, %v3125
        %v4930 = vpack.c.b16 %v3130, %v3126
        %v4931 = vpack.c.b16 %v3135, %v3131
        %v4932 = vpack.c.b16 %v3136, %v3132
        %v4933 = vpack.c.b16 %v3137, %v3133
        %v4934 = vpack.c.b16 %v3138, %v3134
        %v4935 = vpack.c.b16 %v3143, %v3139
        %v4936 = vpack.c.b16 %v3144, %v3140
        %v4937 = vpack.c.b16 %v3145, %v3141
        %v4938 = vpack.c.b16 %v3146, %v3142
        %v4939 = vpack.c.b16 %v3151, %v3147
        %v4940 = vpack.c.b16 %v3152, %v3148
        %v4941 = vpack.c.b16 %v3153, %v3149
        %v4942 = vpack.c.b16 %v3154, %v3150
        %v4943 = vpack.c.b16 %v3159, %v3155
        %v4944 = vpack.c.b16 %v3160, %v3156
        %v4945 = vpack.c.b16 %v3161, %v3157
        %v4946 = vpack.c.b16 %v3162, %v3158
        %v4947 = vpack.c.b16 %v3167, %v3163
        %v4948 = vpack.c.b16 %v3168, %v3164
        %v4949 = vpack.c.b16 %v3169, %v3165
        %v4950 = vpack.c.b16 %v3170, %v3166
        %v4951 = vpack.c.b16 %v3175, %v3171
        %v4952 = vpack.c.b16 %v3176, %v3172
        %v4953 = vpack.c.b16 %v3177, %v3173
        %v4954 = vpack.c.b16 %v3178, %v3174
        %v4955 = vpack.c.b16 %v3183, %v3179
        %v4956 = vpack.c.b16 %v3184, %v3180
        %v4957 = vpack.c.b16 %v3185, %v3181
        %v4958 = vpack.c.b16 %v3186, %v3182
        %v4959 = vpack.c.b16 %v3191, %v3187
        %v4960 = vpack.c.b16 %v3192, %v3188
        %v4961 = vpack.c.b16 %v3193, %v3189
        %v4962 = vpack.c.b16 %v3194, %v3190
        %v4963 = vpack.c.b16 %v3199, %v3195
        %v4964 = vpack.c.b16 %v3200, %v3196
        %v4965 = vpack.c.b16 %v3201, %v3197
        %v4966 = vpack.c.b16 %v3202, %v3198
        %v4967 = vpack.c.b16 %v3207, %v3203
        %v4968 = vpack.c.b16 %v3208, %v3204
        %v4969 = vpack.c.b16 %v3209, %v3205
        %v4970 = vpack.c.b16 %v3210, %v3206
        %v4971 = vpack.c.b16 %v3215, %v3211
        %v4972 = vpack.c.b16 %v3216, %v3212
        %v4973 = vpack.c.b16 %v3217, %v3213
        %v4974 = vpack.c.b16 %v3218, %v3214
        %v4975 = vpack.c.b16 %v3223, %v3219
        %v4976 = vpack.c.b16 %v3224, %v3220
        %v4977 = vpack.c.b16 %v3225, %v3221
        %v4978 = vpack.c.b16 %v3226, %v3222
        %v4979 = vpack.c.b16 %v3231, %v3227
        %v4980 = vpack.c.b16 %v3232, %v3228
        %v4981 = vpack.c.b16 %v3233, %v3229
        %v4982 = vpack.c.b16 %v3234, %v3230
        %v4983 = vpack.c.b16 %v3239, %v3235
        %v4984 = vpack.c.b16 %v3240, %v3236
        %v4985 = vpack.c.b16 %v3241, %v3237
        %v4986 = vpack.c.b16 %v3242, %v3238
        %v4987 = vpack.c.b16 %v3247, %v3243
        %v4988 = vpack.c.b16 %v3248, %v3244
        %v4989 = vpack.c.b16 %v3249, %v3245
        %v4990 = vpack.c.b16 %v3250, %v3246
        %v4991 = vpack.c.b16 %v3255, %v3251
        %v4992 = vpack.c.b16 %v3256, %v3252
        %v4993 = vpack.c.b16 %v3257, %v3253
        %v4994 = vpack.c.b16 %v3258, %v3254
        %v4995 = vpack.c.b16 %v3263, %v3259
        %v4996 = vpack.c.b16 %v3264, %v3260
        %v4997 = vpack.c.b16 %v3265, %v3261
        %v4998 = vpack.c.b16 %v3266, %v3262
        %v4999 = vpack.c.b16 %v3271, %v3267
        %v5000 = vpack.c.b16 %v3272, %v3268
        %v5001 = vpack.c.b16 %v3273, %v3269
        %v5002 = vpack.c.b16 %v3274, %v3270
        %v5003 = vpack.c.b16 %v3279, %v3275
        %v5004 = vpack.c.b16 %v3280, %v3276
        %v5005 = vpack.c.b16 %v3281, %v3277
        %v5006 = vpack.c.b16 %v3282, %v3278
        %v5007 = vpack.c.b16 %v3287, %v3283
        %v5008 = vpack.c.b16 %v3288, %v3284
        %v5009 = vpack.c.b16 %v3289, %v3285
        %v5010 = vpack.c.b16 %v3290, %v3286
        %v5011 = vpack.c.b16 %v3295, %v3291
        %v5012 = vpack.c.b16 %v3296, %v3292
        %v5013 = vpack.c.b16 %v3297, %v3293
        %v5014 = vpack.c.b16 %v3298, %v3294
        %v5015 = vpack.c.b16 %v3303, %v3299
        %v5016 = vpack.c.b16 %v3304, %v3300
        %v5017 = vpack.c.b16 %v3305, %v3301
        %v5018 = vpack.c.b16 %v3306, %v3302
        %v5019 = vpack.c.b16 %v3311, %v3307
        %v5020 = vpack.c.b16 %v3312, %v3308
        %v5021 = vpack.c.b16 %v3313, %v3309
        %v5022 = vpack.c.b16 %v3314, %v3310
        %v5023 = vpack.c.b16 %v3319, %v3315
        %v5024 = vpack.c.b16 %v3320, %v3316
        %v5025 = vpack.c.b16 %v3321, %v3317
        %v5026 = vpack.c.b16 %v3322, %v3318
        %v5027 = vpack.c.b16 %v3327, %v3323
        %v5028 = vpack.c.b16 %v3328, %v3324
        %v5029 = vpack.c.b16 %v3329, %v3325
        %v5030 = vpack.c.b16 %v3330, %v3326
        %v5031 = vpack.c.b16 %v3335, %v3331
        %v5032 = vpack.c.b16 %v3336, %v3332
        %v5033 = vpack.c.b16 %v3337, %v3333
        %v5034 = vpack.c.b16 %v3338, %v3334
        %v5035 = vpack.c.b16 %v3343, %v3339
        %v5036 = vpack.c.b16 %v3344, %v3340
        %v5037 = vpack.c.b16 %v3345, %v3341
        %v5038 = vpack.c.b16 %v3346, %v3342
        %v5039 = vpack.c.b16 %v3351, %v3347
        %v5040 = vpack.c.b16 %v3352, %v3348
        %v5041 = vpack.c.b16 %v3353, %v3349
        %v5042 = vpack.c.b16 %v3354, %v3350
        %v5043 = vpack.c.b16 %v3359, %v3355
        %v5044 = vpack.c.b16 %v3360, %v3356
        %v5045 = vpack.c.b16 %v3361, %v3357
        %v5046 = vpack.c.b16 %v3362, %v3358
        %v5047 = vpack.c.b16 %v3367, %v3363
        %v5048 = vpack.c.b16 %v3368, %v3364
        %v5049 = vpack.c.b16 %v3369, %v3365
        %v5050 = vpack.c.b16 %v3370, %v3366
        %v5051 = vpack.c.b16 %v3375, %v3371
        %v5052 = vpack.c.b16 %v3376, %v3372
        %v5053 = vpack.c.b16 %v3377, %v3373
        %v5054 = vpack.c.b16 %v3378, %v3374
        %v5055 = vpack.c.b16 %v3383, %v3379
        %v5056 = vpack.c.b16 %v3384, %v3380
        %v5057 = vpack.c.b16 %v3385, %v3381
        %v5058 = vpack.c.b16 %v3386, %v3382
        %v5059 = vpack.c.b16 %v3391, %v3387
        %v5060 = vpack.c.b16 %v3392, %v3388
        %v5061 = vpack.c.b16 %v3393, %v3389
        %v5062 = vpack.c.b16 %v3394, %v3390
        %v5063 = vpack.c.b16 %v3399, %v3395
        %v5064 = vpack.c.b16 %v3400, %v3396
        %v5065 = vpack.c.b16 %v3401, %v3397
        %v5066 = vpack.c.b16 %v3402, %v3398
        %v5067 = vpack.c.b16 %v3407, %v3403
        %v5068 = vpack.c.b16 %v3408, %v3404
        %v5069 = vpack.c.b16 %v3409, %v3405
        %v5070 = vpack.c.b16 %v3410, %v3406
        %v5071 = vpack.c.b16 %v3415, %v3411
        %v5072 = vpack.c.b16 %v3416, %v3412
        %v5073 = vpack.c.b16 %v3417, %v3413
        %v5074 = vpack.c.b16 %v3418, %v3414
        %v5075 = vpack.c.b16 %v3423, %v3419
        %v5076 = vpack.c.b16 %v3424, %v3420
        %v5077 = vpack.c.b16 %v3425, %v3421
        %v5078 = vpack.c.b16 %v3426, %v3422
        %v5079 = vpack.c.b16 %v3431, %v3427
        %v5080 = vpack.c.b16 %v3432, %v3428
        %v5081 = vpack.c.b16 %v3433, %v3429
        %v5082 = vpack.c.b16 %v3434, %v3430
        %v5083 = vpack.c.b16 %v3439, %v3435
        %v5084 = vpack.c.b16 %v3440, %v3436
        %v5085 = vpack.c.b16 %v3441, %v3437
        %v5086 = vpack.c.b16 %v3442, %v3438
        %v5087 = vpack.c.b16 %v3447, %v3443
        %v5088 = vpack.c.b16 %v3448, %v3444
        %v5089 = vpack.c.b16 %v3449, %v3445
        %v5090 = vpack.c.b16 %v3450, %v3446
        %v5091 = vpack.c.b16 %v3455, %v3451
        %v5092 = vpack.c.b16 %v3456, %v3452
        %v5093 = vpack.c.b16 %v3457, %v3453
        %v5094 = vpack.c.b16 %v3458, %v3454
        %v5095 = vpack.c.b16 %v3463, %v3459
        %v5096 = vpack.c.b16 %v3464, %v3460
        %v5097 = vpack.c.b16 %v3465, %v3461
        %v5098 = vpack.c.b16 %v3466, %v3462
        %v5099 = vpack.c.b16 %v3471, %v3467
        %v5100 = vpack.c.b16 %v3472, %v3468
        %v5101 = vpack.c.b16 %v3473, %v3469
        %v5102 = vpack.c.b16 %v3474, %v3470
        %v5103 = vpack.c.b16 %v3479, %v3475
        %v5104 = vpack.c.b16 %v3480, %v3476
        %v5105 = vpack.c.b16 %v3481, %v3477
        %v5106 = vpack.c.b16 %v3482, %v3478
        %v5107 = vpack.c.b16 %v3487, %v3483
        %v5108 = vpack.c.b16 %v3488, %v3484
        %v5109 = vpack.c.b16 %v3489, %v3485
        %v5110 = vpack.c.b16 %v3490, %v3486
        %v5111 = vpack.c.b16 %v3495, %v3491
        %v5112 = vpack.c.b16 %v3496, %v3492
        %v5113 = vpack.c.b16 %v3497, %v3493
        %v5114 = vpack.c.b16 %v3498, %v3494
        %v5115 = vpack.c.b16 %v3503, %v3499
        %v5116 = vpack.c.b16 %v3504, %v3500
        %v5117 = vpack.c.b16 %v3505, %v3501
        %v5118 = vpack.c.b16 %v3506, %v3502
        %v5119 = vpack.c.b16 %v3511, %v3507
        %v5120 = vpack.c.b16 %v3512, %v3508
        %v5121 = vpack.c.b16 %v3513, %v3509
        %v5122 = vpack.c.b16 %v3514, %v3510
        %v5123 = vpack.c.b16 %v3519, %v3515
        %v5124 = vpack.c.b16 %v3520, %v3516
        %v5125 = vpack.c.b16 %v3521, %v3517
        %v5126 = vpack.c.b16 %v3522, %v3518
        %v5127 = vpack.c.b16 %v3527, %v3523
        %v5128 = vpack.c.b16 %v3528, %v3524
        %v5129 = vpack.c.b16 %v3529, %v3525
        %v5130 = vpack.c.b16 %v3530, %v3526
        %v5131 = vpack.c.b16 %v3535, %v3531
        %v5132 = vpack.c.b16 %v3536, %v3532
        %v5133 = vpack.c.b16 %v3537, %v3533
        %v5134 = vpack.c.b16 %v3538, %v3534
        %v5135 = vpack.c.b16 %v3543, %v3539
        %v5136 = vpack.c.b16 %v3544, %v3540
        %v5137 = vpack.c.b16 %v3545, %v3541
        %v5138 = vpack.c.b16 %v3546, %v3542
        %v5139 = vpack.c.b16 %v3551, %v3547
        %v5140 = vpack.c.b16 %v3552, %v3548
        %v5141 = vpack.c.b16 %v3553, %v3549
        %v5142 = vpack.c.b16 %v3554, %v3550
        %v5143 = vpack.c.b16 %v3559, %v3555
        %v5144 = vpack.c.b16 %v3560, %v3556
        %v5145 = vpack.c.b16 %v3561, %v3557
        %v5146 = vpack.c.b16 %v3562, %v3558
        %v5147 = vpack.c.b16 %v3567, %v3563
        %v5148 = vpack.c.b16 %v3568, %v3564
        %v5149 = vpack.c.b16 %v3569, %v3565
        %v5150 = vpack.c.b16 %v3570, %v3566
        %v5151 = vpack.c.b16 %v3575, %v3571
        %v5152 = vpack.c.b16 %v3576, %v3572
        %v5153 = vpack.c.b16 %v3577, %v3573
        %v5154 = vpack.c.b16 %v3578, %v3574
        %v5155 = vpack.c.b16 %v3583, %v3579
        %v5156 = vpack.c.b16 %v3584, %v3580
        %v5157 = vpack.c.b16 %v3585, %v3581
        %v5158 = vpack.c.b16 %v3586, %v3582
        %v5159 = vpack.c.b16 %v3591, %v3587
        %v5160 = vpack.c.b16 %v3592, %v3588
        %v5161 = vpack.c.b16 %v3593, %v3589
        %v5162 = vpack.c.b16 %v3594, %v3590
        %v5163 = vpack.c.b16 %v3599, %v3595
        %v5164 = vpack.c.b16 %v3600, %v3596
        %v5165 = vpack.c.b16 %v3601, %v3597
        %v5166 = vpack.c.b16 %v3602, %v3598
        %v5167 = vpack.c.b16 %v3607, %v3603
        %v5168 = vpack.c.b16 %v3608, %v3604
        %v5169 = vpack.c.b16 %v3609, %v3605
        %v5170 = vpack.c.b16 %v3610, %v3606
        %v5171 = vpack.c.b16 %v3615, %v3611
        %v5172 = vpack.c.b16 %v3616, %v3612
        %v5173 = vpack.c.b16 %v3617, %v3613
        %v5174 = vpack.c.b16 %v3618, %v3614
        %v5175 = vpack.c.b16 %v3623, %v3619
        %v5176 = vpack.c.b16 %v3624, %v3620
        %v5177 = vpack.c.b16 %v3625, %v3621
        %v5178 = vpack.c.b16 %v3626, %v3622
        %v5179 = vpack.c.b16 %v3631, %v3627
        %v5180 = vpack.c.b16 %v3632, %v3628
        %v5181 = vpack.c.b16 %v3633, %v3629
        %v5182 = vpack.c.b16 %v3634, %v3630
        %v5183 = vpack.c.b16 %v3639, %v3635
        %v5184 = vpack.c.b16 %v3640, %v3636
        %v5185 = vpack.c.b16 %v3641, %v3637
        %v5186 = vpack.c.b16 %v3642, %v3638
        %v5187 = vpack.c.b16 %v3647, %v3643
        %v5188 = vpack.c.b16 %v3648, %v3644
        %v5189 = vpack.c.b16 %v3649, %v3645
        %v5190 = vpack.c.b16 %v3650, %v3646
        %v5191 = vpack.c.b16 %v3655, %v3651
        %v5192 = vpack.c.b16 %v3656, %v3652
        %v5193 = vpack.c.b16 %v3657, %v3653
        %v5194 = vpack.c.b16 %v3658, %v3654
        %v5195 = vpack.c.b16 %v3663, %v3659
        %v5196 = vpack.c.b16 %v3664, %v3660
        %v5197 = vpack.c.b16 %v3665, %v3661
        %v5198 = vpack.c.b16 %v3666, %v3662
        %v5199 = vpack.c.b16 %v3671, %v3667
        %v5200 = vpack.c.b16 %v3672, %v3668
        %v5201 = vpack.c.b16 %v3673, %v3669
        %v5202 = vpack.c.b16 %v3674, %v3670
        %v5203 = vpack.c.b16 %v3679, %v3675
        %v5204 = vpack.c.b16 %v3680, %v3676
        %v5205 = vpack.c.b16 %v3681, %v3677
        %v5206 = vpack.c.b16 %v3682, %v3678
        %v5207 = vpack.c.b16 %v3687, %v3683
        %v5208 = vpack.c.b16 %v3688, %v3684
        %v5209 = vpack.c.b16 %v3689, %v3685
        %v5210 = vpack.c.b16 %v3690, %v3686
        %v5211 = vpack.c.b16 %v3695, %v3691
        %v5212 = vpack.c.b16 %v3696, %v3692
        %v5213 = vpack.c.b16 %v3697, %v3693
        %v5214 = vpack.c.b16 %v3698, %v3694
        %v5215 = vpack.c.b16 %v3703, %v3699
        %v5216 = vpack.c.b16 %v3704, %v3700
        %v5217 = vpack.c.b16 %v3705, %v3701
        %v5218 = vpack.c.b16 %v3706, %v3702
        %v5219 = vpack.c.b16 %v3711, %v3707
        %v5220 = vpack.c.b16 %v3712, %v3708
        %v5221 = vpack.c.b16 %v3713, %v3709
        %v5222 = vpack.c.b16 %v3714, %v3710
        %v5223 = vpack.c.b16 %v3719, %v3715
        %v5224 = vpack.c.b16 %v3720, %v3716
        %v5225 = vpack.c.b16 %v3721, %v3717
        %v5226 = vpack.c.b16 %v3722, %v3718
        %v5227 = vpack.c.b16 %v3727, %v3723
        %v5228 = vpack.c.b16 %v3728, %v3724
        %v5229 = vpack.c.b16 %v3729, %v3725
        %v5230 = vpack.c.b16 %v3730, %v3726
        %v5231 = vpack.c.b16 %v3735, %v3731
        %v5232 = vpack.c.b16 %v3736, %v3732
        %v5233 = vpack.c.b16 %v3737, %v3733
        %v5234 = vpack.c.b16 %v3738, %v3734
        %v5235 = vpack.c.b16 %v3743, %v3739
        %v5236 = vpack.c.b16 %v3744, %v3740
        %v5237 = vpack.c.b16 %v3745, %v3741
        %v5238 = vpack.c.b16 %v3746, %v3742
        %v5239 = vpack.c.b16 %v3751, %v3747
        %v5240 = vpack.c.b16 %v3752, %v3748
        %v5241 = vpack.c.b16 %v3753, %v3749
        %v5242 = vpack.c.b16 %v3754, %v3750
        %v5243 = vpack.c.b16 %v3759, %v3755
        %v5244 = vpack.c.b16 %v3760, %v3756
        %v5245 = vpack.c.b16 %v3761, %v3757
        %v5246 = vpack.c.b16 %v3762, %v3758
        %v5247 = vpack.c.b16 %v3767, %v3763
        %v5248 = vpack.c.b16 %v3768, %v3764
        %v5249 = vpack.c.b16 %v3769, %v3765
        %v5250 = vpack.c.b16 %v3770, %v3766
        %v5251 = vpack.c.b16 %v3775, %v3771
        %v5252 = vpack.c.b16 %v3776, %v3772
        %v5253 = vpack.c.b16 %v3777, %v3773
        %v5254 = vpack.c.b16 %v3778, %v3774
        %v5255 = vpack.c.b16 %v3783, %v3779
        %v5256 = vpack.c.b16 %v3784, %v3780
        %v5257 = vpack.c.b16 %v3785, %v3781
        %v5258 = vpack.c.b16 %v3786, %v3782
        %v5259 = vpack.c.b16 %v3791, %v3787
        %v5260 = vpack.c.b16 %v3792, %v3788
        %v5261 = vpack.c.b16 %v3793, %v3789
        %v5262 = vpack.c.b16 %v3794, %v3790
        %v5263 = vpack.c.b16 %v3799, %v3795
        %v5264 = vpack.c.b16 %v3800, %v3796
        %v5265 = vpack.c.b16 %v3801, %v3797
        %v5266 = vpack.c.b16 %v3802, %v3798
        %v5267 = vpack.c.b16 %v3807, %v3803
        %v5268 = vpack.c.b16 %v3808, %v3804
        %v5269 = vpack.c.b16 %v3809, %v3805
        %v5270 = vpack.c.b16 %v3810, %v3806
        %v5271 = vpack.c.b16 %v3815, %v3811
        %v5272 = vpack.c.b16 %v3816, %v3812
        %v5273 = vpack.c.b16 %v3817, %v3813
        %v5274 = vpack.c.b16 %v3818, %v3814
        %v5275 = vpack.c.b16 %v3823, %v3819
        %v5276 = vpack.c.b16 %v3824, %v3820
        %v5277 = vpack.c.b16 %v3825, %v3821
        %v5278 = vpack.c.b16 %v3826, %v3822
        %v5279 = vpack.c.b16 %v3831, %v3827
        %v5280 = vpack.c.b16 %v3832, %v3828
        %v5281 = vpack.c.b16 %v3833, %v3829
        %v5282 = vpack.c.b16 %v3834, %v3830
        %v5283 = vpack.c.b16 %v3839, %v3835
        %v5284 = vpack.c.b16 %v3840, %v3836
        %v5285 = vpack.c.b16 %v3841, %v3837
        %v5286 = vpack.c.b16 %v3842, %v3838
        %v5287 = vpack.c.b16 %v3847, %v3843
        %v5288 = vpack.c.b16 %v3848, %v3844
        %v5289 = vpack.c.b16 %v3849, %v3845
        %v5290 = vpack.c.b16 %v3850, %v3846
        %v5291 = vpack.c.b16 %v3855, %v3851
        %v5292 = vpack.c.b16 %v3856, %v3852
        %v5293 = vpack.c.b16 %v3857, %v3853
        %v5294 = vpack.c.b16 %v3858, %v3854
        %v5295 = vpack.c.b16 %v3863, %v3859
        %v5296 = vpack.c.b16 %v3864, %v3860
        %v5297 = vpack.c.b16 %v3865, %v3861
        %v5298 = vpack.c.b16 %v3866, %v3862
        %v5299 = vpack.c.b16 %v3871, %v3867
        %v5300 = vpack.c.b16 %v3872, %v3868
        %v5301 = vpack.c.b16 %v3873, %v3869
        %v5302 = vpack.c.b16 %v3874, %v3870
        %v5303 = vpack.c.b16 %v3879, %v3875
        %v5304 = vpack.c.b16 %v3880, %v3876
        %v5305 = vpack.c.b16 %v3881, %v3877
        %v5306 = vpack.c.b16 %v3882, %v3878
        %v5307 = vpack.c.b16 %v3887, %v3883
        %v5308 = vpack.c.b16 %v3888, %v3884
        %v5309 = vpack.c.b16 %v3889, %v3885
        %v5310 = vpack.c.b16 %v3890, %v3886
        %v5311 = vpack.c.b16 %v3895, %v3891
        %v5312 = vpack.c.b16 %v3896, %v3892
        %v5313 = vpack.c.b16 %v3897, %v3893
        %v5314 = vpack.c.b16 %v3898, %v3894
        %v5315 = vpack.c.b16 %v3903, %v3899
        %v5316 = vpack.c.b16 %v3904, %v3900
        %v5317 = vpack.c.b16 %v3905, %v3901
        %v5318 = vpack.c.b16 %v3906, %v3902
        %v5319 = vpack.c.b16 %v3911, %v3907
        %v5320 = vpack.c.b16 %v3912, %v3908
        %v5321 = vpack.c.b16 %v3913, %v3909
        %v5322 = vpack.c.b16 %v3914, %v3910
        %v5323 = vpack.c.b16 %v3919, %v3915
        %v5324 = vpack.c.b16 %v3920, %v3916
        %v5325 = vpack.c.b16 %v3921, %v3917
        %v5326 = vpack.c.b16 %v3922, %v3918
        %v5327 = vpack.c.b16 %v3927, %v3923
        %v5328 = vpack.c.b16 %v3928, %v3924
        %v5329 = vpack.c.b16 %v3929, %v3925
        %v5330 = vpack.c.b16 %v3930, %v3926
        %v5331 = vpack.c.b16 %v3935, %v3931
        %v5332 = vpack.c.b16 %v3936, %v3932
        %v5333 = vpack.c.b16 %v3937, %v3933
        %v5334 = vpack.c.b16 %v3938, %v3934
        %v5335 = vpack.c.b16 %v3943, %v3939
        %v5336 = vpack.c.b16 %v3944, %v3940
        %v5337 = vpack.c.b16 %v3945, %v3941
        %v5338 = vpack.c.b16 %v3946, %v3942
        %v5339 = vpack.c.b16 %v3951, %v3947
        %v5340 = vpack.c.b16 %v3952, %v3948
        %v5341 = vpack.c.b16 %v3953, %v3949
        %v5342 = vpack.c.b16 %v3954, %v3950
        %v5343 = vpack.c.b16 %v3959, %v3955
        %v5344 = vpack.c.b16 %v3960, %v3956
        %v5345 = vpack.c.b16 %v3961, %v3957
        %v5346 = vpack.c.b16 %v3962, %v3958
        %v5347 = vpack.c.b16 %v3967, %v3963
        %v5348 = vpack.c.b16 %v3968, %v3964
        %v5349 = vpack.c.b16 %v3969, %v3965
        %v5350 = vpack.c.b16 %v3970, %v3966
        %v5351 = vpack.c.b16 %v3975, %v3971
        %v5352 = vpack.c.b16 %v3976, %v3972
        %v5353 = vpack.c.b16 %v3977, %v3973
        %v5354 = vpack.c.b16 %v3978, %v3974
        %v5355 = vpack.c.b16 %v3983, %v3979
        %v5356 = vpack.c.b16 %v3984, %v3980
        %v5357 = vpack.c.b16 %v3985, %v3981
        %v5358 = vpack.c.b16 %v3986, %v3982
        %v5359 = vpack.c.b16 %v3991, %v3987
        %v5360 = vpack.c.b16 %v3992, %v3988
        %v5361 = vpack.c.b16 %v3993, %v3989
        %v5362 = vpack.c.b16 %v3994, %v3990
        %v5363 = vpack.c.b16 %v3999, %v3995
        %v5364 = vpack.c.b16 %v4000, %v3996
        %v5365 = vpack.c.b16 %v4001, %v3997
        %v5366 = vpack.c.b16 %v4002, %v3998
        %v5367 = vpack.c.b16 %v4007, %v4003
        %v5368 = vpack.c.b16 %v4008, %v4004
        %v5369 = vpack.c.b16 %v4009, %v4005
        %v5370 = vpack.c.b16 %v4010, %v4006
        %v5371 = vpack.c.b16 %v4015, %v4011
        %v5372 = vpack.c.b16 %v4016, %v4012
        %v5373 = vpack.c.b16 %v4017, %v4013
        %v5374 = vpack.c.b16 %v4018, %v4014
        %v5375 = vpack.c.b16 %v4023, %v4019
        %v5376 = vpack.c.b16 %v4024, %v4020
        %v5377 = vpack.c.b16 %v4025, %v4021
        %v5378 = vpack.c.b16 %v4026, %v4022
        %v5379 = vpack.c.b16 %v4031, %v4027
        %v5380 = vpack.c.b16 %v4032, %v4028
        %v5381 = vpack.c.b16 %v4033, %v4029
        %v5382 = vpack.c.b16 %v4034, %v4030
        %v5383 = vpack.c.b16 %v4039, %v4035
        %v5384 = vpack.c.b16 %v4040, %v4036
        %v5385 = vpack.c.b16 %v4041, %v4037
        %v5386 = vpack.c.b16 %v4042, %v4038
        %v5387 = vpack.c.b16 %v4047, %v4043
        %v5388 = vpack.c.b16 %v4048, %v4044
        %v5389 = vpack.c.b16 %v4049, %v4045
        %v5390 = vpack.c.b16 %v4050, %v4046
        %v5391 = vpack.c.b16 %v4055, %v4051
        %v5392 = vpack.c.b16 %v4056, %v4052
        %v5393 = vpack.c.b16 %v4057, %v4053
        %v5394 = vpack.c.b16 %v4058, %v4054
        %v5395 = vpack.c.b16 %v4063, %v4059
        %v5396 = vpack.c.b16 %v4064, %v4060
        %v5397 = vpack.c.b16 %v4065, %v4061
        %v5398 = vpack.c.b16 %v4066, %v4062
        %v5399 = vpack.c.b16 %v4071, %v4067
        %v5400 = vpack.c.b16 %v4072, %v4068
        %v5401 = vpack.c.b16 %v4073, %v4069
        %v5402 = vpack.c.b16 %v4074, %v4070
        %v5403 = vpack.c.b16 %v4079, %v4075
        %v5404 = vpack.c.b16 %v4080, %v4076
        %v5405 = vpack.c.b16 %v4081, %v4077
        %v5406 = vpack.c.b16 %v4082, %v4078
        %v5407 = vpack.c.b16 %v4087, %v4083
        %v5408 = vpack.c.b16 %v4088, %v4084
        %v5409 = vpack.c.b16 %v4089, %v4085
        %v5410 = vpack.c.b16 %v4090, %v4086
        %v5411 = vpack.c.b16 %v4095, %v4091
        %v5412 = vpack.c.b16 %v4096, %v4092
        %v5413 = vpack.c.b16 %v4097, %v4093
        %v5414 = vpack.c.b16 %v4098, %v4094
        %v5415 = vpack.c.b16 %v4103, %v4099
        %v5416 = vpack.c.b16 %v4104, %v4100
        %v5417 = vpack.c.b16 %v4105, %v4101
        %v5418 = vpack.c.b16 %v4106, %v4102
        %v5419 = vpack.c.b16 %v4111, %v4107
        %v5420 = vpack.c.b16 %v4112, %v4108
        %v5421 = vpack.c.b16 %v4113, %v4109
        %v5422 = vpack.c.b16 %v4114, %v4110
        %v5423 = vpack.c.b16 %v4119, %v4115
        %v5424 = vpack.c.b16 %v4120, %v4116
        %v5425 = vpack.c.b16 %v4121, %v4117
        %v5426 = vpack.c.b16 %v4122, %v4118
        %v5427 = vpack.c.b16 %v4127, %v4123
        %v5428 = vpack.c.b16 %v4128, %v4124
        %v5429 = vpack.c.b16 %v4129, %v4125
        %v5430 = vpack.c.b16 %v4130, %v4126
        %v5431 = vpack.c.b16 %v4135, %v4131
        %v5432 = vpack.c.b16 %v4136, %v4132
        %v5433 = vpack.c.b16 %v4137, %v4133
        %v5434 = vpack.c.b16 %v4138, %v4134
        %v5435 = vpack.c.b16 %v4143, %v4139
        %v5436 = vpack.c.b16 %v4144, %v4140
        %v5437 = vpack.c.b16 %v4145, %v4141
        %v5438 = vpack.c.b16 %v4146, %v4142
        %v5439 = vpack.c.b16 %v4151, %v4147
        %v5440 = vpack.c.b16 %v4152, %v4148
        %v5441 = vpack.c.b16 %v4153, %v4149
        %v5442 = vpack.c.b16 %v4154, %v4150
        %v5443 = vpack.c.b16 %v4159, %v4155
        %v5444 = vpack.c.b16 %v4160, %v4156
        %v5445 = vpack.c.b16 %v4161, %v4157
        %v5446 = vpack.c.b16 %v4162, %v4158
        %v5447 = vpack.c.b16 %v4167, %v4163
        %v5448 = vpack.c.b16 %v4168, %v4164
        %v5449 = vpack.c.b16 %v4169, %v4165
        %v5450 = vpack.c.b16 %v4170, %v4166
        %v5451 = vpack.c.b16 %v4175, %v4171
        %v5452 = vpack.c.b16 %v4176, %v4172
        %v5453 = vpack.c.b16 %v4177, %v4173
        %v5454 = vpack.c.b16 %v4178, %v4174
        %v5455 = vpack.c.b16 %v4183, %v4179
        %v5456 = vpack.c.b16 %v4184, %v4180
        %v5457 = vpack.c.b16 %v4185, %v4181
        %v5458 = vpack.c.b16 %v4186, %v4182
        %v5459 = vpack.c.b16 %v4191, %v4187
        %v5460 = vpack.c.b16 %v4192, %v4188
        %v5461 = vpack.c.b16 %v4193, %v4189
        %v5462 = vpack.c.b16 %v4194, %v4190
        %v5463 = vpack.c.b16 %v4199, %v4195
        %v5464 = vpack.c.b16 %v4200, %v4196
        %v5465 = vpack.c.b16 %v4201, %v4197
        %v5466 = vpack.c.b16 %v4202, %v4198
        %v5467 = vpack.c.b16 %v4207, %v4203
        %v5468 = vpack.c.b16 %v4208, %v4204
        %v5469 = vpack.c.b16 %v4209, %v4205
        %v5470 = vpack.c.b16 %v4210, %v4206
        %v5471 = vpack.c.b16 %v4215, %v4211
        %v5472 = vpack.c.b16 %v4216, %v4212
        %v5473 = vpack.c.b16 %v4217, %v4213
        %v5474 = vpack.c.b16 %v4218, %v4214
        %v5475 = vpack.c.b16 %v4223, %v4219
        %v5476 = vpack.c.b16 %v4224, %v4220
        %v5477 = vpack.c.b16 %v4225, %v4221
        %v5478 = vpack.c.b16 %v4226, %v4222
        %v5479 = vpack.c.b16 %v4231, %v4227
        %v5480 = vpack.c.b16 %v4232, %v4228
        %v5481 = vpack.c.b16 %v4233, %v4229
        %v5482 = vpack.c.b16 %v4234, %v4230
        %v5483 = vpack.c.b16 %v4239, %v4235
        %v5484 = vpack.c.b16 %v4240, %v4236
        %v5485 = vpack.c.b16 %v4241, %v4237
        %v5486 = vpack.c.b16 %v4242, %v4238
        %v5487 = vpack.c.b16 %v4247, %v4243
        %v5488 = vpack.c.b16 %v4248, %v4244
        %v5489 = vpack.c.b16 %v4249, %v4245
        %v5490 = vpack.c.b16 %v4250, %v4246
        %v5491 = vpack.c.b16 %v4255, %v4251
        %v5492 = vpack.c.b16 %v4256, %v4252
        %v5493 = vpack.c.b16 %v4257, %v4253
        %v5494 = vpack.c.b16 %v4258, %v4254
        %v5495 = vpack.c.b16 %v4263, %v4259
        %v5496 = vpack.c.b16 %v4264, %v4260
        %v5497 = vpack.c.b16 %v4265, %v4261
        %v5498 = vpack.c.b16 %v4266, %v4262
        %v5499 = vpack.c.b16 %v4271, %v4267
        %v5500 = vpack.c.b16 %v4272, %v4268
        %v5501 = vpack.c.b16 %v4273, %v4269
        %v5502 = vpack.c.b16 %v4274, %v4270
        %v5503 = vpack.c.b16 %v4279, %v4275
        %v5504 = vpack.c.b16 %v4280, %v4276
        %v5505 = vpack.c.b16 %v4281, %v4277
        %v5506 = vpack.c.b16 %v4282, %v4278
        %v5507 = vpack.c.b16 %v4287, %v4283
        %v5508 = vpack.c.b16 %v4288, %v4284
        %v5509 = vpack.c.b16 %v4289, %v4285
        %v5510 = vpack.c.b16 %v4290, %v4286
        %v5511 = vpack.c.b16 %v4295, %v4291
        %v5512 = vpack.c.b16 %v4296, %v4292
        %v5513 = vpack.c.b16 %v4297, %v4293
        %v5514 = vpack.c.b16 %v4298, %v4294
        %v5515 = vpack.c.b16 %v4303, %v4299
        %v5516 = vpack.c.b16 %v4304, %v4300
        %v5517 = vpack.c.b16 %v4305, %v4301
        %v5518 = vpack.c.b16 %v4306, %v4302
        %v5519 = vpack.c.b16 %v4311, %v4307
        %v5520 = vpack.c.b16 %v4312, %v4308
        %v5521 = vpack.c.b16 %v4313, %v4309
        %v5522 = vpack.c.b16 %v4314, %v4310
        %v5523 = vpack.c.b16 %v4319, %v4315
        %v5524 = vpack.c.b16 %v4320, %v4316
        %v5525 = vpack.c.b16 %v4321, %v4317
        %v5526 = vpack.c.b16 %v4322, %v4318
        %v5527 = vpack.c.b16 %v4327, %v4323
        %v5528 = vpack.c.b16 %v4328, %v4324
        %v5529 = vpack.c.b16 %v4329, %v4325
        %v5530 = vpack.c.b16 %v4330, %v4326
        %v5531 = vpack.c.b16 %v4335, %v4331
        %v5532 = vpack.c.b16 %v4336, %v4332
        %v5533 = vpack.c.b16 %v4337, %v4333
        %v5534 = vpack.c.b16 %v4338, %v4334
        %v5535 = vpack.c.b16 %v4343, %v4339
        %v5536 = vpack.c.b16 %v4344, %v4340
        %v5537 = vpack.c.b16 %v4345, %v4341
        %v5538 = vpack.c.b16 %v4346, %v4342
        %v5539 = vpack.c.b16 %v4351, %v4347
        %v5540 = vpack.c.b16 %v4352, %v4348
        %v5541 = vpack.c.b16 %v4353, %v4349
        %v5542 = vpack.c.b16 %v4354, %v4350
        %v5543 = vpack.c.b16 %v4359, %v4355
        %v5544 = vpack.c.b16 %v4360, %v4356
        %v5545 = vpack.c.b16 %v4361, %v4357
        %v5546 = vpack.c.b16 %v4362, %v4358
        %v5547 = vpack.c.b16 %v4367, %v4363
        %v5548 = vpack.c.b16 %v4368, %v4364
        %v5549 = vpack.c.b16 %v4369, %v4365
        %v5550 = vpack.c.b16 %v4370, %v4366
        %v5551 = vpack.c.b16 %v4375, %v4371
        %v5552 = vpack.c.b16 %v4376, %v4372
        %v5553 = vpack.c.b16 %v4377, %v4373
        %v5554 = vpack.c.b16 %v4378, %v4374
        %v5555 = vpack.c.b16 %v4383, %v4379
        %v5556 = vpack.c.b16 %v4384, %v4380
        %v5557 = vpack.c.b16 %v4385, %v4381
        %v5558 = vpack.c.b16 %v4386, %v4382
        %v5559 = vpack.c.b16 %v4391, %v4387
        %v5560 = vpack.c.b16 %v4392, %v4388
        %v5561 = vpack.c.b16 %v4393, %v4389
        %v5562 = vpack.c.b16 %v4394, %v4390
        %v5563 = vpack.c.b16 %v4399, %v4395
        %v5564 = vpack.c.b16 %v4400, %v4396
        %v5565 = vpack.c.b16 %v4401, %v4397
        %v5566 = vpack.c.b16 %v4402, %v4398
        %v5567 = vpack.c.b16 %v4407, %v4403
        %v5568 = vpack.c.b16 %v4408, %v4404
        %v5569 = vpack.c.b16 %v4409, %v4405
        %v5570 = vpack.c.b16 %v4410, %v4406
        %v5571 = vpack.c.b16 %v4415, %v4411
        %v5572 = vpack.c.b16 %v4416, %v4412
        %v5573 = vpack.c.b16 %v4417, %v4413
        %v5574 = vpack.c.b16 %v4418, %v4414
        %v5575 = vpack.c.b16 %v4423, %v4419
        %v5576 = vpack.c.b16 %v4424, %v4420
        %v5577 = vpack.c.b16 %v4425, %v4421
        %v5578 = vpack.c.b16 %v4426, %v4422
        %v5579 = vpack.c.b16 %v4431, %v4427
        %v5580 = vpack.c.b16 %v4432, %v4428
        %v5581 = vpack.c.b16 %v4433, %v4429
        %v5582 = vpack.c.b16 %v4434, %v4430
        %v5583 = vpack.c.b16 %v4439, %v4435
        %v5584 = vpack.c.b16 %v4440, %v4436
        %v5585 = vpack.c.b16 %v4441, %v4437
        %v5586 = vpack.c.b16 %v4442, %v4438
        %v5587 = vpack.c.b16 %v4447, %v4443
        %v5588 = vpack.c.b16 %v4448, %v4444
        %v5589 = vpack.c.b16 %v4449, %v4445
        %v5590 = vpack.c.b16 %v4450, %v4446
        %v5591 = vpack.c.b16 %v4455, %v4451
        %v5592 = vpack.c.b16 %v4456, %v4452
        %v5593 = vpack.c.b16 %v4457, %v4453
        %v5594 = vpack.c.b16 %v4458, %v4454
        %v5595 = vpack.c.b16 %v4463, %v4459
        %v5596 = vpack.c.b16 %v4464, %v4460
        %v5597 = vpack.c.b16 %v4465, %v4461
        %v5598 = vpack.c.b16 %v4466, %v4462
        %v5599 = vpack.c.b16 %v4471, %v4467
        %v5600 = vpack.c.b16 %v4472, %v4468
        %v5601 = vpack.c.b16 %v4473, %v4469
        %v5602 = vpack.c.b16 %v4474, %v4470
        %v5603 = vpack.c.b16 %v4479, %v4475
        %v5604 = vpack.c.b16 %v4480, %v4476
        %v5605 = vpack.c.b16 %v4481, %v4477
        %v5606 = vpack.c.b16 %v4482, %v4478
        %v5607 = vpack.c.b16 %v4487, %v4483
        %v5608 = vpack.c.b16 %v4488, %v4484
        %v5609 = vpack.c.b16 %v4489, %v4485
        %v5610 = vpack.c.b16 %v4490, %v4486
        %v5611 = vpack.c.b16 %v4495, %v4491
        %v5612 = vpack.c.b16 %v4496, %v4492
        %v5613 = vpack.c.b16 %v4497, %v4493
        %v5614 = vpack.c.b16 %v4498, %v4494
        %v5615 = vpack.c.b16 %v4503, %v4499
        %v5616 = vpack.c.b16 %v4504, %v4500
        %v5617 = vpack.c.b16 %v4505, %v4501
        %v5618 = vpack.c.b16 %v4506, %v4502
        %v5619 = vpack.c.b16 %v4511, %v4507
        %v5620 = vpack.c.b16 %v4512, %v4508
        %v5621 = vpack.c.b16 %v4513, %v4509
        %v5622 = vpack.c.b16 %v4514, %v4510
        %v5623 = vpack.c.b16 %v4519, %v4515
        %v5624 = vpack.c.b16 %v4520, %v4516
        %v5625 = vpack.c.b16 %v4521, %v4517
        %v5626 = vpack.c.b16 %v4522, %v4518
        %v5627 = vpack.c.b16 %v4527, %v4523
        %v5628 = vpack.c.b16 %v4528, %v4524
        %v5629 = vpack.c.b16 %v4529, %v4525
        %v5630 = vpack.c.b16 %v4530, %v4526
        %v5631 = vpack.c.b16 %v4535, %v4531
        %v5632 = vpack.c.b16 %v4536, %v4532
        %v5633 = vpack.c.b16 %v4537, %v4533
        %v5634 = vpack.c.b16 %v4538, %v4534
        %v5635 = vpack.c.b16 %v4543, %v4539
        %v5636 = vpack.c.b16 %v4544, %v4540
        %v5637 = vpack.c.b16 %v4545, %v4541
        %v5638 = vpack.c.b16 %v4546, %v4542
        %v5639 = vpack.c.b16 %v4551, %v4547
        %v5640 = vpack.c.b16 %v4552, %v4548
        %v5641 = vpack.c.b16 %v4553, %v4549
        %v5642 = vpack.c.b16 %v4554, %v4550
        %v5643 = vpack.c.b16 %v4559, %v4555
        %v5644 = vpack.c.b16 %v4560, %v4556
        %v5645 = vpack.c.b16 %v4561, %v4557
        %v5646 = vpack.c.b16 %v4562, %v4558
        %v5647 = vpack.c.b16 %v4567, %v4563
        %v5648 = vpack.c.b16 %v4568, %v4564
        %v5649 = vpack.c.b16 %v4569, %v4565
        %v5650 = vpack.c.b16 %v4570, %v4566
        %v5651 = vpack.c.b16 %v4575, %v4571
        %v5652 = vpack.c.b16 %v4576, %v4572
        %v5653 = vpack.c.b16 %v4577, %v4573
        %v5654 = vpack.c.b16 %v4578, %v4574
        %v5655 = vpack.c.b16 %v4583, %v4579
        %v5656 = vpack.c.b16 %v4584, %v4580
        %v5657 = vpack.c.b16 %v4585, %v4581
        %v5658 = vpack.c.b16 %v4586, %v4582
        %v5659 = vpack.c.b16 %v4591, %v4587
        %v5660 = vpack.c.b16 %v4592, %v4588
        %v5661 = vpack.c.b16 %v4593, %v4589
        %v5662 = vpack.c.b16 %v4594, %v4590
        %v5663 = vpack.c.b16 %v4599, %v4595
        %v5664 = vpack.c.b16 %v4600, %v4596
        %v5665 = vpack.c.b16 %v4601, %v4597
        %v5666 = vpack.c.b16 %v4602, %v4598
        %v5667 = vpack.c.b16 %v4607, %v4603
        %v5668 = vpack.c.b16 %v4608, %v4604
        %v5669 = vpack.c.b16 %v4609, %v4605
        %v5670 = vpack.c.b16 %v4610, %v4606
        %v5671 = vpack.c.b16 %v4615, %v4611
        %v5672 = vpack.c.b16 %v4616, %v4612
        %v5673 = vpack.c.b16 %v4617, %v4613
        %v5674 = vpack.c.b16 %v4618, %v4614
        %v5675 = vpack.c.b16 %v4623, %v4619
        %v5676 = vpack.c.b16 %v4624, %v4620
        %v5677 = vpack.c.b16 %v4625, %v4621
        %v5678 = vpack.c.b16 %v4626, %v4622
        %v5679 = vpack.c.b16 %v4631, %v4627
        %v5680 = vpack.c.b16 %v4632, %v4628
        %v5681 = vpack.c.b16 %v4633, %v4629
        %v5682 = vpack.c.b16 %v4634, %v4630
        %v5683 = vpack.c.b16 %v4639, %v4635
        %v5684 = vpack.c.b16 %v4640, %v4636
        %v5685 = vpack.c.b16 %v4641, %v4637
        %v5686 = vpack.c.b16 %v4642, %v4638
        %v5687 = vpack.c.b16 %v4647, %v4643
        %v5688 = vpack.c.b16 %v4648, %v4644
        %v5689 = vpack.c.b16 %v4649, %v4645
        %v5690 = vpack.c.b16 %v4650, %v4646
        %v5691 = vpack.c.b16 %v4655, %v4651
        %v5692 = vpack.c.b16 %v4656, %v4652
        %v5693 = vpack.c.b16 %v4657, %v4653
        %v5694 = vpack.c.b16 %v4658, %v4654
        %v5695 = vpack.c.b16 %v4663, %v4659
        %v5696 = vpack.c.b16 %v4664, %v4660
        %v5697 = vpack.c.b16 %v4665, %v4661
        %v5698 = vpack.c.b16 %v4666, %v4662
        %v5699 = vpack.c.b16 %v4671, %v4667
        %v5700 = vpack.c.b16 %v4672, %v4668
        %v5701 = vpack.c.b16 %v4673, %v4669
        %v5702 = vpack.c.b16 %v4674, %v4670
        %v5703 = vpack.c.b16 %v4679, %v4675
        %v5704 = vpack.c.b16 %v4680, %v4676
        %v5705 = vpack.c.b16 %v4681, %v4677
        %v5706 = vpack.c.b16 %v4682, %v4678
        %6731 = vmatpush.bf16.msra.mxu0 %v4711
        %6732 = vmatpush.bf16.msra.mxu0 %v4707
        %6733 = vmatpush.bf16.msra.mxu0 %v4703
        %6734 = vmatpush.bf16.msra.mxu0 %v4699
        %6735 = vmatpush.bf16.msra.mxu0 %v4695
        %6736 = vmatpush.bf16.msra.mxu0 %v4691
        %6737 = vmatpush.bf16.msra.mxu0 %v4687
        %6738 = vmatpush.bf16.msra.mxu0 %v4683
        %6739 = vmatmul.bf16.gmra.mxu0 %v1547
        %v6740 = vpop.f32.mrf.mxu0
        %v6741 = vadd.f32 0.0, %v6740
        %v6742 = vpop.f32.mrf.mxu0
        %v6743 = vadd.f32 0.0, %v6742
        %6744 = vdwg.mxu0
        %6745 = vmatpush.bf16.msra.mxu0 %v4743
        %6746 = vmatpush.bf16.msra.mxu0 %v4739
        %6747 = vmatpush.bf16.msra.mxu0 %v4735
        %6748 = vmatpush.bf16.msra.mxu0 %v4731
        %6749 = vmatpush.bf16.msra.mxu0 %v4727
        %6750 = vmatpush.bf16.msra.mxu0 %v4723
        %6751 = vmatpush.bf16.msra.mxu0 %v4719
        %6752 = vmatpush.bf16.msra.mxu0 %v4715
        %6753 = vmatmul.bf16.gmra.mxu0 %v1548
        %v6754 = vpop.f32.mrf.mxu0
        %v6755 = vadd.f32 %v6741, %v6754
        %v6756 = vpop.f32.mrf.mxu0
        %v6757 = vadd.f32 %v6743, %v6756
        %6758 = vdwg.mxu0
        %6759 = vmatpush.bf16.msra.mxu0 %v4775
        %6760 = vmatpush.bf16.msra.mxu0 %v4771
        %6761 = vmatpush.bf16.msra.mxu0 %v4767
        %6762 = vmatpush.bf16.msra.mxu0 %v4763
        %6763 = vmatpush.bf16.msra.mxu0 %v4759
        %6764 = vmatpush.bf16.msra.mxu0 %v4755
        %6765 = vmatpush.bf16.msra.mxu0 %v4751
        %6766 = vmatpush.bf16.msra.mxu0 %v4747
        %6767 = vmatmul.bf16.gmra.mxu0 %v1549
        %v6768 = vpop.f32.mrf.mxu0
        %v6769 = vadd.f32 %v6755, %v6768
        %v6770 = vpop.f32.mrf.mxu0
        %v6771 = vadd.f32 %v6757, %v6770
        %6772 = vdwg.mxu0
        %6773 = vmatpush.bf16.msra.mxu0 %v4807
        %6774 = vmatpush.bf16.msra.mxu0 %v4803
        %6775 = vmatpush.bf16.msra.mxu0 %v4799
        %6776 = vmatpush.bf16.msra.mxu0 %v4795
        %6777 = vmatpush.bf16.msra.mxu0 %v4791
        %6778 = vmatpush.bf16.msra.mxu0 %v4787
        %6779 = vmatpush.bf16.msra.mxu0 %v4783
        %6780 = vmatpush.bf16.msra.mxu0 %v4779
        %6781 = vmatmul.bf16.gmra.mxu0 %v1550
        %v6782 = vpop.f32.mrf.mxu0
        %v6783 = vadd.f32 %v6769, %v6782
        %v6784 = vpop.f32.mrf.mxu0
        %v6785 = vadd.f32 %v6771, %v6784
        %6786 = vdwg.mxu0
        %6787 = vmatpush.bf16.msra.mxu0 %v4839
        %6788 = vmatpush.bf16.msra.mxu0 %v4835
        %6789 = vmatpush.bf16.msra.mxu0 %v4831
        %6790 = vmatpush.bf16.msra.mxu0 %v4827
        %6791 = vmatpush.bf16.msra.mxu0 %v4823
        %6792 = vmatpush.bf16.msra.mxu0 %v4819
        %6793 = vmatpush.bf16.msra.mxu0 %v4815
        %6794 = vmatpush.bf16.msra.mxu0 %v4811
        %6795 = vmatmul.bf16.gmra.mxu0 %v1551
        %v6796 = vpop.f32.mrf.mxu0
        %v6797 = vadd.f32 %v6783, %v6796
        %v6798 = vpop.f32.mrf.mxu0
        %v6799 = vadd.f32 %v6785, %v6798
        %6800 = vdwg.mxu0
        %6801 = vmatpush.bf16.msra.mxu0 %v4871
        %6802 = vmatpush.bf16.msra.mxu0 %v4867
        %6803 = vmatpush.bf16.msra.mxu0 %v4863
        %6804 = vmatpush.bf16.msra.mxu0 %v4859
        %6805 = vmatpush.bf16.msra.mxu0 %v4855
        %6806 = vmatpush.bf16.msra.mxu0 %v4851
        %6807 = vmatpush.bf16.msra.mxu0 %v4847
        %6808 = vmatpush.bf16.msra.mxu0 %v4843
        %6809 = vmatmul.bf16.gmra.mxu0 %v1552
        %v6810 = vpop.f32.mrf.mxu0
        %v6811 = vadd.f32 %v6797, %v6810
        %v6812 = vpop.f32.mrf.mxu0
        %v6813 = vadd.f32 %v6799, %v6812
        %6814 = vdwg.mxu0
        %6815 = vmatpush.bf16.msra.mxu0 %v4903
        %6816 = vmatpush.bf16.msra.mxu0 %v4899
        %6817 = vmatpush.bf16.msra.mxu0 %v4895
        %6818 = vmatpush.bf16.msra.mxu0 %v4891
        %6819 = vmatpush.bf16.msra.mxu0 %v4887
        %6820 = vmatpush.bf16.msra.mxu0 %v4883
        %6821 = vmatpush.bf16.msra.mxu0 %v4879
        %6822 = vmatpush.bf16.msra.mxu0 %v4875
        %6823 = vmatmul.bf16.gmra.mxu0 %v1553
        %v6824 = vpop.f32.mrf.mxu0
        %v6825 = vadd.f32 %v6811, %v6824
        %v6826 = vpop.f32.mrf.mxu0
        %v6827 = vadd.f32 %v6813, %v6826
        %6828 = vdwg.mxu0
        %6829 = vmatpush.bf16.msra.mxu0 %v4935
        %6830 = vmatpush.bf16.msra.mxu0 %v4931
        %6831 = vmatpush.bf16.msra.mxu0 %v4927
        %6832 = vmatpush.bf16.msra.mxu0 %v4923
        %6833 = vmatpush.bf16.msra.mxu0 %v4919
        %6834 = vmatpush.bf16.msra.mxu0 %v4915
        %6835 = vmatpush.bf16.msra.mxu0 %v4911
        %6836 = vmatpush.bf16.msra.mxu0 %v4907
        %6837 = vmatmul.bf16.gmra.mxu0 %v1554
        %v6838 = vpop.f32.mrf.mxu0
        %v6839 = vadd.f32 %v6825, %v6838
        %v6840 = vpop.f32.mrf.mxu0
        %v6841 = vadd.f32 %v6827, %v6840
        %6842 = vdwg.mxu0
        %6843 = vmatpush.bf16.msra.mxu0 %v4967
        %6844 = vmatpush.bf16.msra.mxu0 %v4963
        %6845 = vmatpush.bf16.msra.mxu0 %v4959
        %6846 = vmatpush.bf16.msra.mxu0 %v4955
        %6847 = vmatpush.bf16.msra.mxu0 %v4951
        %6848 = vmatpush.bf16.msra.mxu0 %v4947
        %6849 = vmatpush.bf16.msra.mxu0 %v4943
        %6850 = vmatpush.bf16.msra.mxu0 %v4939
        %6851 = vmatmul.bf16.gmra.mxu0 %v1555
        %v6852 = vpop.f32.mrf.mxu0
        %v6853 = vadd.f32 %v6839, %v6852
        %v6854 = vpop.f32.mrf.mxu0
        %v6855 = vadd.f32 %v6841, %v6854
        %6856 = vdwg.mxu0
        %6857 = vmatpush.bf16.msra.mxu0 %v4999
        %6858 = vmatpush.bf16.msra.mxu0 %v4995
        %6859 = vmatpush.bf16.msra.mxu0 %v4991
        %6860 = vmatpush.bf16.msra.mxu0 %v4987
        %6861 = vmatpush.bf16.msra.mxu0 %v4983
        %6862 = vmatpush.bf16.msra.mxu0 %v4979
        %6863 = vmatpush.bf16.msra.mxu0 %v4975
        %6864 = vmatpush.bf16.msra.mxu0 %v4971
        %6865 = vmatmul.bf16.gmra.mxu0 %v1556
        %v6866 = vpop.f32.mrf.mxu0
        %v6867 = vadd.f32 %v6853, %v6866
        %v6868 = vpop.f32.mrf.mxu0
        %v6869 = vadd.f32 %v6855, %v6868
        %6870 = vdwg.mxu0
        %6871 = vmatpush.bf16.msra.mxu0 %v5031
        %6872 = vmatpush.bf16.msra.mxu0 %v5027
        %6873 = vmatpush.bf16.msra.mxu0 %v5023
        %6874 = vmatpush.bf16.msra.mxu0 %v5019
        %6875 = vmatpush.bf16.msra.mxu0 %v5015
        %6876 = vmatpush.bf16.msra.mxu0 %v5011
        %6877 = vmatpush.bf16.msra.mxu0 %v5007
        %6878 = vmatpush.bf16.msra.mxu0 %v5003
        %6879 = vmatmul.bf16.gmra.mxu0 %v1557
        %v6880 = vpop.f32.mrf.mxu0
        %v6881 = vadd.f32 %v6867, %v6880
        %v6882 = vpop.f32.mrf.mxu0
        %v6883 = vadd.f32 %v6869, %v6882
        %6884 = vdwg.mxu0
        %6885 = vmatpush.bf16.msra.mxu0 %v5063
        %6886 = vmatpush.bf16.msra.mxu0 %v5059
        %6887 = vmatpush.bf16.msra.mxu0 %v5055
        %6888 = vmatpush.bf16.msra.mxu0 %v5051
        %6889 = vmatpush.bf16.msra.mxu0 %v5047
        %6890 = vmatpush.bf16.msra.mxu0 %v5043
        %6891 = vmatpush.bf16.msra.mxu0 %v5039
        %6892 = vmatpush.bf16.msra.mxu0 %v5035
        %6893 = vmatmul.bf16.gmra.mxu0 %v1558
        %v6894 = vpop.f32.mrf.mxu0
        %v6895 = vadd.f32 %v6881, %v6894
        %v6896 = vpop.f32.mrf.mxu0
        %v6897 = vadd.f32 %v6883, %v6896
        %6898 = vdwg.mxu0
        %6899 = vmatpush.bf16.msra.mxu0 %v5095
        %6900 = vmatpush.bf16.msra.mxu0 %v5091
        %6901 = vmatpush.bf16.msra.mxu0 %v5087
        %6902 = vmatpush.bf16.msra.mxu0 %v5083
        %6903 = vmatpush.bf16.msra.mxu0 %v5079
        %6904 = vmatpush.bf16.msra.mxu0 %v5075
        %6905 = vmatpush.bf16.msra.mxu0 %v5071
        %6906 = vmatpush.bf16.msra.mxu0 %v5067
        %6907 = vmatmul.bf16.gmra.mxu0 %v1559
        %v6908 = vpop.f32.mrf.mxu0
        %v6909 = vadd.f32 %v6895, %v6908
        %v6910 = vpop.f32.mrf.mxu0
        %v6911 = vadd.f32 %v6897, %v6910
        %6912 = vdwg.mxu0
        %6913 = vmatpush.bf16.msra.mxu0 %v5127
        %6914 = vmatpush.bf16.msra.mxu0 %v5123
        %6915 = vmatpush.bf16.msra.mxu0 %v5119
        %6916 = vmatpush.bf16.msra.mxu0 %v5115
        %6917 = vmatpush.bf16.msra.mxu0 %v5111
        %6918 = vmatpush.bf16.msra.mxu0 %v5107
        %6919 = vmatpush.bf16.msra.mxu0 %v5103
        %6920 = vmatpush.bf16.msra.mxu0 %v5099
        %6921 = vmatmul.bf16.gmra.mxu0 %v1560
        %v6922 = vpop.f32.mrf.mxu0
        %v6923 = vadd.f32 %v6909, %v6922
        %v6924 = vpop.f32.mrf.mxu0
        %v6925 = vadd.f32 %v6911, %v6924
        %6926 = vdwg.mxu0
        %6927 = vmatpush.bf16.msra.mxu0 %v5159
        %6928 = vmatpush.bf16.msra.mxu0 %v5155
        %6929 = vmatpush.bf16.msra.mxu0 %v5151
        %6930 = vmatpush.bf16.msra.mxu0 %v5147
        %6931 = vmatpush.bf16.msra.mxu0 %v5143
        %6932 = vmatpush.bf16.msra.mxu0 %v5139
        %6933 = vmatpush.bf16.msra.mxu0 %v5135
        %6934 = vmatpush.bf16.msra.mxu0 %v5131
        %6935 = vmatmul.bf16.gmra.mxu0 %v1561
        %v6936 = vpop.f32.mrf.mxu0
        %v6937 = vadd.f32 %v6923, %v6936
        %v6938 = vpop.f32.mrf.mxu0
        %v6939 = vadd.f32 %v6925, %v6938
        %6940 = vdwg.mxu0
        %6941 = vmatpush.bf16.msra.mxu0 %v5191
        %6942 = vmatpush.bf16.msra.mxu0 %v5187
        %6943 = vmatpush.bf16.msra.mxu0 %v5183
        %6944 = vmatpush.bf16.msra.mxu0 %v5179
        %6945 = vmatpush.bf16.msra.mxu0 %v5175
        %6946 = vmatpush.bf16.msra.mxu0 %v5171
        %6947 = vmatpush.bf16.msra.mxu0 %v5167
        %6948 = vmatpush.bf16.msra.mxu0 %v5163
        %6949 = vmatmul.bf16.gmra.mxu0 %v1562
        %v6950 = vpop.f32.mrf.mxu0
        %v6951 = vadd.f32 %v6937, %v6950
        %v6952 = vpop.f32.mrf.mxu0
        %v6953 = vadd.f32 %v6939, %v6952
        %6954 = vdwg.mxu0
        %6955 = vmatpush.bf16.msra.mxu0 %v5223
        %6956 = vmatpush.bf16.msra.mxu0 %v5219
        %6957 = vmatpush.bf16.msra.mxu0 %v5215
        %6958 = vmatpush.bf16.msra.mxu0 %v5211
        %6959 = vmatpush.bf16.msra.mxu0 %v5207
        %6960 = vmatpush.bf16.msra.mxu0 %v5203
        %6961 = vmatpush.bf16.msra.mxu0 %v5199
        %6962 = vmatpush.bf16.msra.mxu0 %v5195
        %6963 = vmatmul.bf16.gmra.mxu0 %v1563
        %v6964 = vpop.f32.mrf.mxu0
        %v6965 = vadd.f32 %v6951, %v6964
        %v6966 = vpop.f32.mrf.mxu0
        %v6967 = vadd.f32 %v6953, %v6966
        %6968 = vdwg.mxu0
        %6969 = vmatpush.bf16.msra.mxu0 %v5255
        %6970 = vmatpush.bf16.msra.mxu0 %v5251
        %6971 = vmatpush.bf16.msra.mxu0 %v5247
        %6972 = vmatpush.bf16.msra.mxu0 %v5243
        %6973 = vmatpush.bf16.msra.mxu0 %v5239
        %6974 = vmatpush.bf16.msra.mxu0 %v5235
        %6975 = vmatpush.bf16.msra.mxu0 %v5231
        %6976 = vmatpush.bf16.msra.mxu0 %v5227
        %6977 = vmatmul.bf16.gmra.mxu0 %v1564
        %v6978 = vpop.f32.mrf.mxu0
        %v6979 = vadd.f32 %v6965, %v6978
        %v6980 = vpop.f32.mrf.mxu0
        %v6981 = vadd.f32 %v6967, %v6980
        %6982 = vdwg.mxu0
        %6983 = vmatpush.bf16.msra.mxu0 %v5287
        %6984 = vmatpush.bf16.msra.mxu0 %v5283
        %6985 = vmatpush.bf16.msra.mxu0 %v5279
        %6986 = vmatpush.bf16.msra.mxu0 %v5275
        %6987 = vmatpush.bf16.msra.mxu0 %v5271
        %6988 = vmatpush.bf16.msra.mxu0 %v5267
        %6989 = vmatpush.bf16.msra.mxu0 %v5263
        %6990 = vmatpush.bf16.msra.mxu0 %v5259
        %6991 = vmatmul.bf16.gmra.mxu0 %v1565
        %v6992 = vpop.f32.mrf.mxu0
        %v6993 = vadd.f32 %v6979, %v6992
        %v6994 = vpop.f32.mrf.mxu0
        %v6995 = vadd.f32 %v6981, %v6994
        %6996 = vdwg.mxu0
        %6997 = vmatpush.bf16.msra.mxu0 %v5319
        %6998 = vmatpush.bf16.msra.mxu0 %v5315
        %6999 = vmatpush.bf16.msra.mxu0 %v5311
        %7000 = vmatpush.bf16.msra.mxu0 %v5307
        %7001 = vmatpush.bf16.msra.mxu0 %v5303
        %7002 = vmatpush.bf16.msra.mxu0 %v5299
        %7003 = vmatpush.bf16.msra.mxu0 %v5295
        %7004 = vmatpush.bf16.msra.mxu0 %v5291
        %7005 = vmatmul.bf16.gmra.mxu0 %v1566
        %v7006 = vpop.f32.mrf.mxu0
        %v7007 = vadd.f32 %v6993, %v7006
        %v7008 = vpop.f32.mrf.mxu0
        %v7009 = vadd.f32 %v6995, %v7008
        %7010 = vdwg.mxu0
        %7011 = vmatpush.bf16.msra.mxu0 %v5351
        %7012 = vmatpush.bf16.msra.mxu0 %v5347
        %7013 = vmatpush.bf16.msra.mxu0 %v5343
        %7014 = vmatpush.bf16.msra.mxu0 %v5339
        %7015 = vmatpush.bf16.msra.mxu0 %v5335
        %7016 = vmatpush.bf16.msra.mxu0 %v5331
        %7017 = vmatpush.bf16.msra.mxu0 %v5327
        %7018 = vmatpush.bf16.msra.mxu0 %v5323
        %7019 = vmatmul.bf16.gmra.mxu0 %v1567
        %v7020 = vpop.f32.mrf.mxu0
        %v7021 = vadd.f32 %v7007, %v7020
        %v7022 = vpop.f32.mrf.mxu0
        %v7023 = vadd.f32 %v7009, %v7022
        %7024 = vdwg.mxu0
        %7025 = vmatpush.bf16.msra.mxu0 %v5383
        %7026 = vmatpush.bf16.msra.mxu0 %v5379
        %7027 = vmatpush.bf16.msra.mxu0 %v5375
        %7028 = vmatpush.bf16.msra.mxu0 %v5371
        %7029 = vmatpush.bf16.msra.mxu0 %v5367
        %7030 = vmatpush.bf16.msra.mxu0 %v5363
        %7031 = vmatpush.bf16.msra.mxu0 %v5359
        %7032 = vmatpush.bf16.msra.mxu0 %v5355
        %7033 = vmatmul.bf16.gmra.mxu0 %v1568
        %v7034 = vpop.f32.mrf.mxu0
        %v7035 = vadd.f32 %v7021, %v7034
        %v7036 = vpop.f32.mrf.mxu0
        %v7037 = vadd.f32 %v7023, %v7036
        %7038 = vdwg.mxu0
        %7039 = vmatpush.bf16.msra.mxu0 %v5415
        %7040 = vmatpush.bf16.msra.mxu0 %v5411
        %7041 = vmatpush.bf16.msra.mxu0 %v5407
        %7042 = vmatpush.bf16.msra.mxu0 %v5403
        %7043 = vmatpush.bf16.msra.mxu0 %v5399
        %7044 = vmatpush.bf16.msra.mxu0 %v5395
        %7045 = vmatpush.bf16.msra.mxu0 %v5391
        %7046 = vmatpush.bf16.msra.mxu0 %v5387
        %7047 = vmatmul.bf16.gmra.mxu0 %v1569
        %v7048 = vpop.f32.mrf.mxu0
        %v7049 = vadd.f32 %v7035, %v7048
        %v7050 = vpop.f32.mrf.mxu0
        %v7051 = vadd.f32 %v7037, %v7050
        %7052 = vdwg.mxu0
        %7053 = vmatpush.bf16.msra.mxu0 %v5447
        %7054 = vmatpush.bf16.msra.mxu0 %v5443
        %7055 = vmatpush.bf16.msra.mxu0 %v5439
        %7056 = vmatpush.bf16.msra.mxu0 %v5435
        %7057 = vmatpush.bf16.msra.mxu0 %v5431
        %7058 = vmatpush.bf16.msra.mxu0 %v5427
        %7059 = vmatpush.bf16.msra.mxu0 %v5423
        %7060 = vmatpush.bf16.msra.mxu0 %v5419
        %7061 = vmatmul.bf16.gmra.mxu0 %v1570
        %v7062 = vpop.f32.mrf.mxu0
        %v7063 = vadd.f32 %v7049, %v7062
        %v7064 = vpop.f32.mrf.mxu0
        %v7065 = vadd.f32 %v7051, %v7064
        %7066 = vdwg.mxu0
        %7067 = vmatpush.bf16.msra.mxu0 %v5479
        %7068 = vmatpush.bf16.msra.mxu0 %v5475
        %7069 = vmatpush.bf16.msra.mxu0 %v5471
        %7070 = vmatpush.bf16.msra.mxu0 %v5467
        %7071 = vmatpush.bf16.msra.mxu0 %v5463
        %7072 = vmatpush.bf16.msra.mxu0 %v5459
        %7073 = vmatpush.bf16.msra.mxu0 %v5455
        %7074 = vmatpush.bf16.msra.mxu0 %v5451
        %7075 = vmatmul.bf16.gmra.mxu0 %v1571
        %v7076 = vpop.f32.mrf.mxu0
        %v7077 = vadd.f32 %v7063, %v7076
        %v7078 = vpop.f32.mrf.mxu0
        %v7079 = vadd.f32 %v7065, %v7078
        %7080 = vdwg.mxu0
        %7081 = vmatpush.bf16.msra.mxu0 %v5511
        %7082 = vmatpush.bf16.msra.mxu0 %v5507
        %7083 = vmatpush.bf16.msra.mxu0 %v5503
        %7084 = vmatpush.bf16.msra.mxu0 %v5499
        %7085 = vmatpush.bf16.msra.mxu0 %v5495
        %7086 = vmatpush.bf16.msra.mxu0 %v5491
        %7087 = vmatpush.bf16.msra.mxu0 %v5487
        %7088 = vmatpush.bf16.msra.mxu0 %v5483
        %7089 = vmatmul.bf16.gmra.mxu0 %v1572
        %v7090 = vpop.f32.mrf.mxu0
        %v7091 = vadd.f32 %v7077, %v7090
        %v7092 = vpop.f32.mrf.mxu0
        %v7093 = vadd.f32 %v7079, %v7092
        %7094 = vdwg.mxu0
        %7095 = vmatpush.bf16.msra.mxu0 %v5543
        %7096 = vmatpush.bf16.msra.mxu0 %v5539
        %7097 = vmatpush.bf16.msra.mxu0 %v5535
        %7098 = vmatpush.bf16.msra.mxu0 %v5531
        %7099 = vmatpush.bf16.msra.mxu0 %v5527
        %7100 = vmatpush.bf16.msra.mxu0 %v5523
        %7101 = vmatpush.bf16.msra.mxu0 %v5519
        %7102 = vmatpush.bf16.msra.mxu0 %v5515
        %7103 = vmatmul.bf16.gmra.mxu0 %v1573
        %v7104 = vpop.f32.mrf.mxu0
        %v7105 = vadd.f32 %v7091, %v7104
        %v7106 = vpop.f32.mrf.mxu0
        %v7107 = vadd.f32 %v7093, %v7106
        %7108 = vdwg.mxu0
        %7109 = vmatpush.bf16.msra.mxu0 %v5575
        %7110 = vmatpush.bf16.msra.mxu0 %v5571
        %7111 = vmatpush.bf16.msra.mxu0 %v5567
        %7112 = vmatpush.bf16.msra.mxu0 %v5563
        %7113 = vmatpush.bf16.msra.mxu0 %v5559
        %7114 = vmatpush.bf16.msra.mxu0 %v5555
        %7115 = vmatpush.bf16.msra.mxu0 %v5551
        %7116 = vmatpush.bf16.msra.mxu0 %v5547
        %7117 = vmatmul.bf16.gmra.mxu0 %v1574
        %v7118 = vpop.f32.mrf.mxu0
        %v7119 = vadd.f32 %v7105, %v7118
        %v7120 = vpop.f32.mrf.mxu0
        %v7121 = vadd.f32 %v7107, %v7120
        %7122 = vdwg.mxu0
        %7123 = vmatpush.bf16.msra.mxu0 %v5607
        %7124 = vmatpush.bf16.msra.mxu0 %v5603
        %7125 = vmatpush.bf16.msra.mxu0 %v5599
        %7126 = vmatpush.bf16.msra.mxu0 %v5595
        %7127 = vmatpush.bf16.msra.mxu0 %v5591
        %7128 = vmatpush.bf16.msra.mxu0 %v5587
        %7129 = vmatpush.bf16.msra.mxu0 %v5583
        %7130 = vmatpush.bf16.msra.mxu0 %v5579
        %7131 = vmatmul.bf16.gmra.mxu0 %v1575
        %v7132 = vpop.f32.mrf.mxu0
        %v7133 = vadd.f32 %v7119, %v7132
        %v7134 = vpop.f32.mrf.mxu0
        %v7135 = vadd.f32 %v7121, %v7134
        %7136 = vdwg.mxu0
        %7137 = vmatpush.bf16.msra.mxu0 %v5639
        %7138 = vmatpush.bf16.msra.mxu0 %v5635
        %7139 = vmatpush.bf16.msra.mxu0 %v5631
        %7140 = vmatpush.bf16.msra.mxu0 %v5627
        %7141 = vmatpush.bf16.msra.mxu0 %v5623
        %7142 = vmatpush.bf16.msra.mxu0 %v5619
        %7143 = vmatpush.bf16.msra.mxu0 %v5615
        %7144 = vmatpush.bf16.msra.mxu0 %v5611
        %7145 = vmatmul.bf16.gmra.mxu0 %v1576
        %v7146 = vpop.f32.mrf.mxu0
        %v7147 = vadd.f32 %v7133, %v7146
        %v7148 = vpop.f32.mrf.mxu0
        %v7149 = vadd.f32 %v7135, %v7148
        %7150 = vdwg.mxu0
        %7151 = vmatpush.bf16.msra.mxu0 %v5671
        %7152 = vmatpush.bf16.msra.mxu0 %v5667
        %7153 = vmatpush.bf16.msra.mxu0 %v5663
        %7154 = vmatpush.bf16.msra.mxu0 %v5659
        %7155 = vmatpush.bf16.msra.mxu0 %v5655
        %7156 = vmatpush.bf16.msra.mxu0 %v5651
        %7157 = vmatpush.bf16.msra.mxu0 %v5647
        %7158 = vmatpush.bf16.msra.mxu0 %v5643
        %7159 = vmatmul.bf16.gmra.mxu0 %v1577
        %v7160 = vpop.f32.mrf.mxu0
        %v7161 = vadd.f32 %v7147, %v7160
        %v7162 = vpop.f32.mrf.mxu0
        %v7163 = vadd.f32 %v7149, %v7162
        %7164 = vdwg.mxu0
        %7165 = vmatpush.bf16.msra.mxu0 %v5703
        %7166 = vmatpush.bf16.msra.mxu0 %v5699
        %7167 = vmatpush.bf16.msra.mxu0 %v5695
        %7168 = vmatpush.bf16.msra.mxu0 %v5691
        %7169 = vmatpush.bf16.msra.mxu0 %v5687
        %7170 = vmatpush.bf16.msra.mxu0 %v5683
        %7171 = vmatpush.bf16.msra.mxu0 %v5679
        %7172 = vmatpush.bf16.msra.mxu0 %v5675
        %7173 = vmatmul.bf16.gmra.mxu0 %v1578
        %v7174 = vpop.f32.mrf.mxu0
        %v7175 = vadd.f32 %v7161, %v7174
        %v7176 = vpop.f32.mrf.mxu0
        %v7177 = vadd.f32 %v7163, %v7176
        %7178 = vdwg.mxu0
        %7179 = vmatpush.bf16.msra.mxu0 %v4712
        %7180 = vmatpush.bf16.msra.mxu0 %v4708
        %7181 = vmatpush.bf16.msra.mxu0 %v4704
        %7182 = vmatpush.bf16.msra.mxu0 %v4700
        %7183 = vmatpush.bf16.msra.mxu0 %v4696
        %7184 = vmatpush.bf16.msra.mxu0 %v4692
        %7185 = vmatpush.bf16.msra.mxu0 %v4688
        %7186 = vmatpush.bf16.msra.mxu0 %v4684
        %7187 = vmatmul.bf16.gmra.mxu0 %v1547
        %v7188 = vpop.f32.mrf.mxu0
        %v7189 = vadd.f32 0.0, %v7188
        %v7190 = vpop.f32.mrf.mxu0
        %v7191 = vadd.f32 0.0, %v7190
        %7192 = vdwg.mxu0
        %7193 = vmatpush.bf16.msra.mxu0 %v4744
        %7194 = vmatpush.bf16.msra.mxu0 %v4740
        %7195 = vmatpush.bf16.msra.mxu0 %v4736
        %7196 = vmatpush.bf16.msra.mxu0 %v4732
        %7197 = vmatpush.bf16.msra.mxu0 %v4728
        %7198 = vmatpush.bf16.msra.mxu0 %v4724
        %7199 = vmatpush.bf16.msra.mxu0 %v4720
        %7200 = vmatpush.bf16.msra.mxu0 %v4716
        %7201 = vmatmul.bf16.gmra.mxu0 %v1548
        %v7202 = vpop.f32.mrf.mxu0
        %v7203 = vadd.f32 %v7189, %v7202
        %v7204 = vpop.f32.mrf.mxu0
        %v7205 = vadd.f32 %v7191, %v7204
        %7206 = vdwg.mxu0
        %7207 = vmatpush.bf16.msra.mxu0 %v4776
        %7208 = vmatpush.bf16.msra.mxu0 %v4772
        %7209 = vmatpush.bf16.msra.mxu0 %v4768
        %7210 = vmatpush.bf16.msra.mxu0 %v4764
        %7211 = vmatpush.bf16.msra.mxu0 %v4760
        %7212 = vmatpush.bf16.msra.mxu0 %v4756
        %7213 = vmatpush.bf16.msra.mxu0 %v4752
        %7214 = vmatpush.bf16.msra.mxu0 %v4748
        %7215 = vmatmul.bf16.gmra.mxu0 %v1549
        %v7216 = vpop.f32.mrf.mxu0
        %v7217 = vadd.f32 %v7203, %v7216
        %v7218 = vpop.f32.mrf.mxu0
        %v7219 = vadd.f32 %v7205, %v7218
        %7220 = vdwg.mxu0
        %7221 = vmatpush.bf16.msra.mxu0 %v4808
        %7222 = vmatpush.bf16.msra.mxu0 %v4804
        %7223 = vmatpush.bf16.msra.mxu0 %v4800
        %7224 = vmatpush.bf16.msra.mxu0 %v4796
        %7225 = vmatpush.bf16.msra.mxu0 %v4792
        %7226 = vmatpush.bf16.msra.mxu0 %v4788
        %7227 = vmatpush.bf16.msra.mxu0 %v4784
        %7228 = vmatpush.bf16.msra.mxu0 %v4780
        %7229 = vmatmul.bf16.gmra.mxu0 %v1550
        %v7230 = vpop.f32.mrf.mxu0
        %v7231 = vadd.f32 %v7217, %v7230
        %v7232 = vpop.f32.mrf.mxu0
        %v7233 = vadd.f32 %v7219, %v7232
        %7234 = vdwg.mxu0
        %7235 = vmatpush.bf16.msra.mxu0 %v4840
        %7236 = vmatpush.bf16.msra.mxu0 %v4836
        %7237 = vmatpush.bf16.msra.mxu0 %v4832
        %7238 = vmatpush.bf16.msra.mxu0 %v4828
        %7239 = vmatpush.bf16.msra.mxu0 %v4824
        %7240 = vmatpush.bf16.msra.mxu0 %v4820
        %7241 = vmatpush.bf16.msra.mxu0 %v4816
        %7242 = vmatpush.bf16.msra.mxu0 %v4812
        %7243 = vmatmul.bf16.gmra.mxu0 %v1551
        %v7244 = vpop.f32.mrf.mxu0
        %v7245 = vadd.f32 %v7231, %v7244
        %v7246 = vpop.f32.mrf.mxu0
        %v7247 = vadd.f32 %v7233, %v7246
        %7248 = vdwg.mxu0
        %7249 = vmatpush.bf16.msra.mxu0 %v4872
        %7250 = vmatpush.bf16.msra.mxu0 %v4868
        %7251 = vmatpush.bf16.msra.mxu0 %v4864
        %7252 = vmatpush.bf16.msra.mxu0 %v4860
        %7253 = vmatpush.bf16.msra.mxu0 %v4856
        %7254 = vmatpush.bf16.msra.mxu0 %v4852
        %7255 = vmatpush.bf16.msra.mxu0 %v4848
        %7256 = vmatpush.bf16.msra.mxu0 %v4844
        %7257 = vmatmul.bf16.gmra.mxu0 %v1552
        %v7258 = vpop.f32.mrf.mxu0
        %v7259 = vadd.f32 %v7245, %v7258
        %v7260 = vpop.f32.mrf.mxu0
        %v7261 = vadd.f32 %v7247, %v7260
        %7262 = vdwg.mxu0
        %7263 = vmatpush.bf16.msra.mxu0 %v4904
        %7264 = vmatpush.bf16.msra.mxu0 %v4900
        %7265 = vmatpush.bf16.msra.mxu0 %v4896
        %7266 = vmatpush.bf16.msra.mxu0 %v4892
        %7267 = vmatpush.bf16.msra.mxu0 %v4888
        %7268 = vmatpush.bf16.msra.mxu0 %v4884
        %7269 = vmatpush.bf16.msra.mxu0 %v4880
        %7270 = vmatpush.bf16.msra.mxu0 %v4876
        %7271 = vmatmul.bf16.gmra.mxu0 %v1553
        %v7272 = vpop.f32.mrf.mxu0
        %v7273 = vadd.f32 %v7259, %v7272
        %v7274 = vpop.f32.mrf.mxu0
        %v7275 = vadd.f32 %v7261, %v7274
        %7276 = vdwg.mxu0
        %7277 = vmatpush.bf16.msra.mxu0 %v4936
        %7278 = vmatpush.bf16.msra.mxu0 %v4932
        %7279 = vmatpush.bf16.msra.mxu0 %v4928
        %7280 = vmatpush.bf16.msra.mxu0 %v4924
        %7281 = vmatpush.bf16.msra.mxu0 %v4920
        %7282 = vmatpush.bf16.msra.mxu0 %v4916
        %7283 = vmatpush.bf16.msra.mxu0 %v4912
        %7284 = vmatpush.bf16.msra.mxu0 %v4908
        %7285 = vmatmul.bf16.gmra.mxu0 %v1554
        %v7286 = vpop.f32.mrf.mxu0
        %v7287 = vadd.f32 %v7273, %v7286
        %v7288 = vpop.f32.mrf.mxu0
        %v7289 = vadd.f32 %v7275, %v7288
        %7290 = vdwg.mxu0
        %7291 = vmatpush.bf16.msra.mxu0 %v4968
        %7292 = vmatpush.bf16.msra.mxu0 %v4964
        %7293 = vmatpush.bf16.msra.mxu0 %v4960
        %7294 = vmatpush.bf16.msra.mxu0 %v4956
        %7295 = vmatpush.bf16.msra.mxu0 %v4952
        %7296 = vmatpush.bf16.msra.mxu0 %v4948
        %7297 = vmatpush.bf16.msra.mxu0 %v4944
        %7298 = vmatpush.bf16.msra.mxu0 %v4940
        %7299 = vmatmul.bf16.gmra.mxu0 %v1555
        %v7300 = vpop.f32.mrf.mxu0
        %v7301 = vadd.f32 %v7287, %v7300
        %v7302 = vpop.f32.mrf.mxu0
        %v7303 = vadd.f32 %v7289, %v7302
        %7304 = vdwg.mxu0
        %7305 = vmatpush.bf16.msra.mxu0 %v5000
        %7306 = vmatpush.bf16.msra.mxu0 %v4996
        %7307 = vmatpush.bf16.msra.mxu0 %v4992
        %7308 = vmatpush.bf16.msra.mxu0 %v4988
        %7309 = vmatpush.bf16.msra.mxu0 %v4984
        %7310 = vmatpush.bf16.msra.mxu0 %v4980
        %7311 = vmatpush.bf16.msra.mxu0 %v4976
        %7312 = vmatpush.bf16.msra.mxu0 %v4972
        %7313 = vmatmul.bf16.gmra.mxu0 %v1556
        %v7314 = vpop.f32.mrf.mxu0
        %v7315 = vadd.f32 %v7301, %v7314
        %v7316 = vpop.f32.mrf.mxu0
        %v7317 = vadd.f32 %v7303, %v7316
        %7318 = vdwg.mxu0
        %7319 = vmatpush.bf16.msra.mxu0 %v5032
        %7320 = vmatpush.bf16.msra.mxu0 %v5028
        %7321 = vmatpush.bf16.msra.mxu0 %v5024
        %7322 = vmatpush.bf16.msra.mxu0 %v5020
        %7323 = vmatpush.bf16.msra.mxu0 %v5016
        %7324 = vmatpush.bf16.msra.mxu0 %v5012
        %7325 = vmatpush.bf16.msra.mxu0 %v5008
        %7326 = vmatpush.bf16.msra.mxu0 %v5004
        %7327 = vmatmul.bf16.gmra.mxu0 %v1557
        %v7328 = vpop.f32.mrf.mxu0
        %v7329 = vadd.f32 %v7315, %v7328
        %v7330 = vpop.f32.mrf.mxu0
        %v7331 = vadd.f32 %v7317, %v7330
        %7332 = vdwg.mxu0
        %7333 = vmatpush.bf16.msra.mxu0 %v5064
        %7334 = vmatpush.bf16.msra.mxu0 %v5060
        %7335 = vmatpush.bf16.msra.mxu0 %v5056
        %7336 = vmatpush.bf16.msra.mxu0 %v5052
        %7337 = vmatpush.bf16.msra.mxu0 %v5048
        %7338 = vmatpush.bf16.msra.mxu0 %v5044
        %7339 = vmatpush.bf16.msra.mxu0 %v5040
        %7340 = vmatpush.bf16.msra.mxu0 %v5036
        %7341 = vmatmul.bf16.gmra.mxu0 %v1558
        %v7342 = vpop.f32.mrf.mxu0
        %v7343 = vadd.f32 %v7329, %v7342
        %v7344 = vpop.f32.mrf.mxu0
        %v7345 = vadd.f32 %v7331, %v7344
        %7346 = vdwg.mxu0
        %7347 = vmatpush.bf16.msra.mxu0 %v5096
        %7348 = vmatpush.bf16.msra.mxu0 %v5092
        %7349 = vmatpush.bf16.msra.mxu0 %v5088
        %7350 = vmatpush.bf16.msra.mxu0 %v5084
        %7351 = vmatpush.bf16.msra.mxu0 %v5080
        %7352 = vmatpush.bf16.msra.mxu0 %v5076
        %7353 = vmatpush.bf16.msra.mxu0 %v5072
        %7354 = vmatpush.bf16.msra.mxu0 %v5068
        %7355 = vmatmul.bf16.gmra.mxu0 %v1559
        %v7356 = vpop.f32.mrf.mxu0
        %v7357 = vadd.f32 %v7343, %v7356
        %v7358 = vpop.f32.mrf.mxu0
        %v7359 = vadd.f32 %v7345, %v7358
        %7360 = vdwg.mxu0
        %7361 = vmatpush.bf16.msra.mxu0 %v5128
        %7362 = vmatpush.bf16.msra.mxu0 %v5124
        %7363 = vmatpush.bf16.msra.mxu0 %v5120
        %7364 = vmatpush.bf16.msra.mxu0 %v5116
        %7365 = vmatpush.bf16.msra.mxu0 %v5112
        %7366 = vmatpush.bf16.msra.mxu0 %v5108
        %7367 = vmatpush.bf16.msra.mxu0 %v5104
        %7368 = vmatpush.bf16.msra.mxu0 %v5100
        %7369 = vmatmul.bf16.gmra.mxu0 %v1560
        %v7370 = vpop.f32.mrf.mxu0
        %v7371 = vadd.f32 %v7357, %v7370
        %v7372 = vpop.f32.mrf.mxu0
        %v7373 = vadd.f32 %v7359, %v7372
        %7374 = vdwg.mxu0
        %7375 = vmatpush.bf16.msra.mxu0 %v5160
        %7376 = vmatpush.bf16.msra.mxu0 %v5156
        %7377 = vmatpush.bf16.msra.mxu0 %v5152
        %7378 = vmatpush.bf16.msra.mxu0 %v5148
        %7379 = vmatpush.bf16.msra.mxu0 %v5144
        %7380 = vmatpush.bf16.msra.mxu0 %v5140
        %7381 = vmatpush.bf16.msra.mxu0 %v5136
        %7382 = vmatpush.bf16.msra.mxu0 %v5132
        %7383 = vmatmul.bf16.gmra.mxu0 %v1561
        %v7384 = vpop.f32.mrf.mxu0
        %v7385 = vadd.f32 %v7371, %v7384
        %v7386 = vpop.f32.mrf.mxu0
        %v7387 = vadd.f32 %v7373, %v7386
        %7388 = vdwg.mxu0
        %7389 = vmatpush.bf16.msra.mxu0 %v5192
        %7390 = vmatpush.bf16.msra.mxu0 %v5188
        %7391 = vmatpush.bf16.msra.mxu0 %v5184
        %7392 = vmatpush.bf16.msra.mxu0 %v5180
        %7393 = vmatpush.bf16.msra.mxu0 %v5176
        %7394 = vmatpush.bf16.msra.mxu0 %v5172
        %7395 = vmatpush.bf16.msra.mxu0 %v5168
        %7396 = vmatpush.bf16.msra.mxu0 %v5164
        %7397 = vmatmul.bf16.gmra.mxu0 %v1562
        %v7398 = vpop.f32.mrf.mxu0
        %v7399 = vadd.f32 %v7385, %v7398
        %v7400 = vpop.f32.mrf.mxu0
        %v7401 = vadd.f32 %v7387, %v7400
        %7402 = vdwg.mxu0
        %7403 = vmatpush.bf16.msra.mxu0 %v5224
        %7404 = vmatpush.bf16.msra.mxu0 %v5220
        %7405 = vmatpush.bf16.msra.mxu0 %v5216
        %7406 = vmatpush.bf16.msra.mxu0 %v5212
        %7407 = vmatpush.bf16.msra.mxu0 %v5208
        %7408 = vmatpush.bf16.msra.mxu0 %v5204
        %7409 = vmatpush.bf16.msra.mxu0 %v5200
        %7410 = vmatpush.bf16.msra.mxu0 %v5196
        %7411 = vmatmul.bf16.gmra.mxu0 %v1563
        %v7412 = vpop.f32.mrf.mxu0
        %v7413 = vadd.f32 %v7399, %v7412
        %v7414 = vpop.f32.mrf.mxu0
        %v7415 = vadd.f32 %v7401, %v7414
        %7416 = vdwg.mxu0
        %7417 = vmatpush.bf16.msra.mxu0 %v5256
        %7418 = vmatpush.bf16.msra.mxu0 %v5252
        %7419 = vmatpush.bf16.msra.mxu0 %v5248
        %7420 = vmatpush.bf16.msra.mxu0 %v5244
        %7421 = vmatpush.bf16.msra.mxu0 %v5240
        %7422 = vmatpush.bf16.msra.mxu0 %v5236
        %7423 = vmatpush.bf16.msra.mxu0 %v5232
        %7424 = vmatpush.bf16.msra.mxu0 %v5228
        %7425 = vmatmul.bf16.gmra.mxu0 %v1564
        %v7426 = vpop.f32.mrf.mxu0
        %v7427 = vadd.f32 %v7413, %v7426
        %v7428 = vpop.f32.mrf.mxu0
        %v7429 = vadd.f32 %v7415, %v7428
        %7430 = vdwg.mxu0
        %7431 = vmatpush.bf16.msra.mxu0 %v5288
        %7432 = vmatpush.bf16.msra.mxu0 %v5284
        %7433 = vmatpush.bf16.msra.mxu0 %v5280
        %7434 = vmatpush.bf16.msra.mxu0 %v5276
        %7435 = vmatpush.bf16.msra.mxu0 %v5272
        %7436 = vmatpush.bf16.msra.mxu0 %v5268
        %7437 = vmatpush.bf16.msra.mxu0 %v5264
        %7438 = vmatpush.bf16.msra.mxu0 %v5260
        %7439 = vmatmul.bf16.gmra.mxu0 %v1565
        %v7440 = vpop.f32.mrf.mxu0
        %v7441 = vadd.f32 %v7427, %v7440
        %v7442 = vpop.f32.mrf.mxu0
        %v7443 = vadd.f32 %v7429, %v7442
        %7444 = vdwg.mxu0
        %7445 = vmatpush.bf16.msra.mxu0 %v5320
        %7446 = vmatpush.bf16.msra.mxu0 %v5316
        %7447 = vmatpush.bf16.msra.mxu0 %v5312
        %7448 = vmatpush.bf16.msra.mxu0 %v5308
        %7449 = vmatpush.bf16.msra.mxu0 %v5304
        %7450 = vmatpush.bf16.msra.mxu0 %v5300
        %7451 = vmatpush.bf16.msra.mxu0 %v5296
        %7452 = vmatpush.bf16.msra.mxu0 %v5292
        %7453 = vmatmul.bf16.gmra.mxu0 %v1566
        %v7454 = vpop.f32.mrf.mxu0
        %v7455 = vadd.f32 %v7441, %v7454
        %v7456 = vpop.f32.mrf.mxu0
        %v7457 = vadd.f32 %v7443, %v7456
        %7458 = vdwg.mxu0
        %7459 = vmatpush.bf16.msra.mxu0 %v5352
        %7460 = vmatpush.bf16.msra.mxu0 %v5348
        %7461 = vmatpush.bf16.msra.mxu0 %v5344
        %7462 = vmatpush.bf16.msra.mxu0 %v5340
        %7463 = vmatpush.bf16.msra.mxu0 %v5336
        %7464 = vmatpush.bf16.msra.mxu0 %v5332
        %7465 = vmatpush.bf16.msra.mxu0 %v5328
        %7466 = vmatpush.bf16.msra.mxu0 %v5324
        %7467 = vmatmul.bf16.gmra.mxu0 %v1567
        %v7468 = vpop.f32.mrf.mxu0
        %v7469 = vadd.f32 %v7455, %v7468
        %v7470 = vpop.f32.mrf.mxu0
        %v7471 = vadd.f32 %v7457, %v7470
        %7472 = vdwg.mxu0
        %7473 = vmatpush.bf16.msra.mxu0 %v5384
        %7474 = vmatpush.bf16.msra.mxu0 %v5380
        %7475 = vmatpush.bf16.msra.mxu0 %v5376
        %7476 = vmatpush.bf16.msra.mxu0 %v5372
        %7477 = vmatpush.bf16.msra.mxu0 %v5368
        %7478 = vmatpush.bf16.msra.mxu0 %v5364
        %7479 = vmatpush.bf16.msra.mxu0 %v5360
        %7480 = vmatpush.bf16.msra.mxu0 %v5356
        %7481 = vmatmul.bf16.gmra.mxu0 %v1568
        %v7482 = vpop.f32.mrf.mxu0
        %v7483 = vadd.f32 %v7469, %v7482
        %v7484 = vpop.f32.mrf.mxu0
        %v7485 = vadd.f32 %v7471, %v7484
        %7486 = vdwg.mxu0
        %7487 = vmatpush.bf16.msra.mxu0 %v5416
        %7488 = vmatpush.bf16.msra.mxu0 %v5412
        %7489 = vmatpush.bf16.msra.mxu0 %v5408
        %7490 = vmatpush.bf16.msra.mxu0 %v5404
        %7491 = vmatpush.bf16.msra.mxu0 %v5400
        %7492 = vmatpush.bf16.msra.mxu0 %v5396
        %7493 = vmatpush.bf16.msra.mxu0 %v5392
        %7494 = vmatpush.bf16.msra.mxu0 %v5388
        %7495 = vmatmul.bf16.gmra.mxu0 %v1569
        %v7496 = vpop.f32.mrf.mxu0
        %v7497 = vadd.f32 %v7483, %v7496
        %v7498 = vpop.f32.mrf.mxu0
        %v7499 = vadd.f32 %v7485, %v7498
        %7500 = vdwg.mxu0
        %7501 = vmatpush.bf16.msra.mxu0 %v5448
        %7502 = vmatpush.bf16.msra.mxu0 %v5444
        %7503 = vmatpush.bf16.msra.mxu0 %v5440
        %7504 = vmatpush.bf16.msra.mxu0 %v5436
        %7505 = vmatpush.bf16.msra.mxu0 %v5432
        %7506 = vmatpush.bf16.msra.mxu0 %v5428
        %7507 = vmatpush.bf16.msra.mxu0 %v5424
        %7508 = vmatpush.bf16.msra.mxu0 %v5420
        %7509 = vmatmul.bf16.gmra.mxu0 %v1570
        %v7510 = vpop.f32.mrf.mxu0
        %v7511 = vadd.f32 %v7497, %v7510
        %v7512 = vpop.f32.mrf.mxu0
        %v7513 = vadd.f32 %v7499, %v7512
        %7514 = vdwg.mxu0
        %7515 = vmatpush.bf16.msra.mxu0 %v5480
        %7516 = vmatpush.bf16.msra.mxu0 %v5476
        %7517 = vmatpush.bf16.msra.mxu0 %v5472
        %7518 = vmatpush.bf16.msra.mxu0 %v5468
        %7519 = vmatpush.bf16.msra.mxu0 %v5464
        %7520 = vmatpush.bf16.msra.mxu0 %v5460
        %7521 = vmatpush.bf16.msra.mxu0 %v5456
        %7522 = vmatpush.bf16.msra.mxu0 %v5452
        %7523 = vmatmul.bf16.gmra.mxu0 %v1571
        %v7524 = vpop.f32.mrf.mxu0
        %v7525 = vadd.f32 %v7511, %v7524
        %v7526 = vpop.f32.mrf.mxu0
        %v7527 = vadd.f32 %v7513, %v7526
        %7528 = vdwg.mxu0
        %7529 = vmatpush.bf16.msra.mxu0 %v5512
        %7530 = vmatpush.bf16.msra.mxu0 %v5508
        %7531 = vmatpush.bf16.msra.mxu0 %v5504
        %7532 = vmatpush.bf16.msra.mxu0 %v5500
        %7533 = vmatpush.bf16.msra.mxu0 %v5496
        %7534 = vmatpush.bf16.msra.mxu0 %v5492
        %7535 = vmatpush.bf16.msra.mxu0 %v5488
        %7536 = vmatpush.bf16.msra.mxu0 %v5484
        %7537 = vmatmul.bf16.gmra.mxu0 %v1572
        %v7538 = vpop.f32.mrf.mxu0
        %v7539 = vadd.f32 %v7525, %v7538
        %v7540 = vpop.f32.mrf.mxu0
        %v7541 = vadd.f32 %v7527, %v7540
        %7542 = vdwg.mxu0
        %7543 = vmatpush.bf16.msra.mxu0 %v5544
        %7544 = vmatpush.bf16.msra.mxu0 %v5540
        %7545 = vmatpush.bf16.msra.mxu0 %v5536
        %7546 = vmatpush.bf16.msra.mxu0 %v5532
        %7547 = vmatpush.bf16.msra.mxu0 %v5528
        %7548 = vmatpush.bf16.msra.mxu0 %v5524
        %7549 = vmatpush.bf16.msra.mxu0 %v5520
        %7550 = vmatpush.bf16.msra.mxu0 %v5516
        %7551 = vmatmul.bf16.gmra.mxu0 %v1573
        %v7552 = vpop.f32.mrf.mxu0
        %v7553 = vadd.f32 %v7539, %v7552
        %v7554 = vpop.f32.mrf.mxu0
        %v7555 = vadd.f32 %v7541, %v7554
        %7556 = vdwg.mxu0
        %7557 = vmatpush.bf16.msra.mxu0 %v5576
        %7558 = vmatpush.bf16.msra.mxu0 %v5572
        %7559 = vmatpush.bf16.msra.mxu0 %v5568
        %7560 = vmatpush.bf16.msra.mxu0 %v5564
        %7561 = vmatpush.bf16.msra.mxu0 %v5560
        %7562 = vmatpush.bf16.msra.mxu0 %v5556
        %7563 = vmatpush.bf16.msra.mxu0 %v5552
        %7564 = vmatpush.bf16.msra.mxu0 %v5548
        %7565 = vmatmul.bf16.gmra.mxu0 %v1574
        %v7566 = vpop.f32.mrf.mxu0
        %v7567 = vadd.f32 %v7553, %v7566
        %v7568 = vpop.f32.mrf.mxu0
        %v7569 = vadd.f32 %v7555, %v7568
        %7570 = vdwg.mxu0
        %7571 = vmatpush.bf16.msra.mxu0 %v5608
        %7572 = vmatpush.bf16.msra.mxu0 %v5604
        %7573 = vmatpush.bf16.msra.mxu0 %v5600
        %7574 = vmatpush.bf16.msra.mxu0 %v5596
        %7575 = vmatpush.bf16.msra.mxu0 %v5592
        %7576 = vmatpush.bf16.msra.mxu0 %v5588
        %7577 = vmatpush.bf16.msra.mxu0 %v5584
        %7578 = vmatpush.bf16.msra.mxu0 %v5580
        %7579 = vmatmul.bf16.gmra.mxu0 %v1575
        %v7580 = vpop.f32.mrf.mxu0
        %v7581 = vadd.f32 %v7567, %v7580
        %v7582 = vpop.f32.mrf.mxu0
        %v7583 = vadd.f32 %v7569, %v7582
        %7584 = vdwg.mxu0
        %7585 = vmatpush.bf16.msra.mxu0 %v5640
        %7586 = vmatpush.bf16.msra.mxu0 %v5636
        %7587 = vmatpush.bf16.msra.mxu0 %v5632
        %7588 = vmatpush.bf16.msra.mxu0 %v5628
        %7589 = vmatpush.bf16.msra.mxu0 %v5624
        %7590 = vmatpush.bf16.msra.mxu0 %v5620
        %7591 = vmatpush.bf16.msra.mxu0 %v5616
        %7592 = vmatpush.bf16.msra.mxu0 %v5612
        %7593 = vmatmul.bf16.gmra.mxu0 %v1576
        %v7594 = vpop.f32.mrf.mxu0
        %v7595 = vadd.f32 %v7581, %v7594
        %v7596 = vpop.f32.mrf.mxu0
        %v7597 = vadd.f32 %v7583, %v7596
        %7598 = vdwg.mxu0
        %7599 = vmatpush.bf16.msra.mxu0 %v5672
        %7600 = vmatpush.bf16.msra.mxu0 %v5668
        %7601 = vmatpush.bf16.msra.mxu0 %v5664
        %7602 = vmatpush.bf16.msra.mxu0 %v5660
        %7603 = vmatpush.bf16.msra.mxu0 %v5656
        %7604 = vmatpush.bf16.msra.mxu0 %v5652
        %7605 = vmatpush.bf16.msra.mxu0 %v5648
        %7606 = vmatpush.bf16.msra.mxu0 %v5644
        %7607 = vmatmul.bf16.gmra.mxu0 %v1577
        %v7608 = vpop.f32.mrf.mxu0
        %v7609 = vadd.f32 %v7595, %v7608
        %v7610 = vpop.f32.mrf.mxu0
        %v7611 = vadd.f32 %v7597, %v7610
        %7612 = vdwg.mxu0
        %7613 = vmatpush.bf16.msra.mxu0 %v5704
        %7614 = vmatpush.bf16.msra.mxu0 %v5700
        %7615 = vmatpush.bf16.msra.mxu0 %v5696
        %7616 = vmatpush.bf16.msra.mxu0 %v5692
        %7617 = vmatpush.bf16.msra.mxu0 %v5688
        %7618 = vmatpush.bf16.msra.mxu0 %v5684
        %7619 = vmatpush.bf16.msra.mxu0 %v5680
        %7620 = vmatpush.bf16.msra.mxu0 %v5676
        %7621 = vmatmul.bf16.gmra.mxu0 %v1578
        %v7622 = vpop.f32.mrf.mxu0
        %v7623 = vadd.f32 %v7609, %v7622
        %v7624 = vpop.f32.mrf.mxu0
        %v7625 = vadd.f32 %v7611, %v7624
        %7626 = vdwg.mxu0
        %7627 = vmatpush.bf16.msra.mxu0 %v4713
        %7628 = vmatpush.bf16.msra.mxu0 %v4709
        %7629 = vmatpush.bf16.msra.mxu0 %v4705
        %7630 = vmatpush.bf16.msra.mxu0 %v4701
        %7631 = vmatpush.bf16.msra.mxu0 %v4697
        %7632 = vmatpush.bf16.msra.mxu0 %v4693
        %7633 = vmatpush.bf16.msra.mxu0 %v4689
        %7634 = vmatpush.bf16.msra.mxu0 %v4685
        %7635 = vmatmul.bf16.gmra.mxu0 %v1547
        %v7636 = vpop.f32.mrf.mxu0
        %v7637 = vadd.f32 0.0, %v7636
        %v7638 = vpop.f32.mrf.mxu0
        %v7639 = vadd.f32 0.0, %v7638
        %7640 = vdwg.mxu0
        %7641 = vmatpush.bf16.msra.mxu0 %v4745
        %7642 = vmatpush.bf16.msra.mxu0 %v4741
        %7643 = vmatpush.bf16.msra.mxu0 %v4737
        %7644 = vmatpush.bf16.msra.mxu0 %v4733
        %7645 = vmatpush.bf16.msra.mxu0 %v4729
        %7646 = vmatpush.bf16.msra.mxu0 %v4725
        %7647 = vmatpush.bf16.msra.mxu0 %v4721
        %7648 = vmatpush.bf16.msra.mxu0 %v4717
        %7649 = vmatmul.bf16.gmra.mxu0 %v1548
        %v7650 = vpop.f32.mrf.mxu0
        %v7651 = vadd.f32 %v7637, %v7650
        %v7652 = vpop.f32.mrf.mxu0
        %v7653 = vadd.f32 %v7639, %v7652
        %7654 = vdwg.mxu0
        %7655 = vmatpush.bf16.msra.mxu0 %v4777
        %7656 = vmatpush.bf16.msra.mxu0 %v4773
        %7657 = vmatpush.bf16.msra.mxu0 %v4769
        %7658 = vmatpush.bf16.msra.mxu0 %v4765
        %7659 = vmatpush.bf16.msra.mxu0 %v4761
        %7660 = vmatpush.bf16.msra.mxu0 %v4757
        %7661 = vmatpush.bf16.msra.mxu0 %v4753
        %7662 = vmatpush.bf16.msra.mxu0 %v4749
        %7663 = vmatmul.bf16.gmra.mxu0 %v1549
        %v7664 = vpop.f32.mrf.mxu0
        %v7665 = vadd.f32 %v7651, %v7664
        %v7666 = vpop.f32.mrf.mxu0
        %v7667 = vadd.f32 %v7653, %v7666
        %7668 = vdwg.mxu0
        %7669 = vmatpush.bf16.msra.mxu0 %v4809
        %7670 = vmatpush.bf16.msra.mxu0 %v4805
        %7671 = vmatpush.bf16.msra.mxu0 %v4801
        %7672 = vmatpush.bf16.msra.mxu0 %v4797
        %7673 = vmatpush.bf16.msra.mxu0 %v4793
        %7674 = vmatpush.bf16.msra.mxu0 %v4789
        %7675 = vmatpush.bf16.msra.mxu0 %v4785
        %7676 = vmatpush.bf16.msra.mxu0 %v4781
        %7677 = vmatmul.bf16.gmra.mxu0 %v1550
        %v7678 = vpop.f32.mrf.mxu0
        %v7679 = vadd.f32 %v7665, %v7678
        %v7680 = vpop.f32.mrf.mxu0
        %v7681 = vadd.f32 %v7667, %v7680
        %7682 = vdwg.mxu0
        %7683 = vmatpush.bf16.msra.mxu0 %v4841
        %7684 = vmatpush.bf16.msra.mxu0 %v4837
        %7685 = vmatpush.bf16.msra.mxu0 %v4833
        %7686 = vmatpush.bf16.msra.mxu0 %v4829
        %7687 = vmatpush.bf16.msra.mxu0 %v4825
        %7688 = vmatpush.bf16.msra.mxu0 %v4821
        %7689 = vmatpush.bf16.msra.mxu0 %v4817
        %7690 = vmatpush.bf16.msra.mxu0 %v4813
        %7691 = vmatmul.bf16.gmra.mxu0 %v1551
        %v7692 = vpop.f32.mrf.mxu0
        %v7693 = vadd.f32 %v7679, %v7692
        %v7694 = vpop.f32.mrf.mxu0
        %v7695 = vadd.f32 %v7681, %v7694
        %7696 = vdwg.mxu0
        %7697 = vmatpush.bf16.msra.mxu0 %v4873
        %7698 = vmatpush.bf16.msra.mxu0 %v4869
        %7699 = vmatpush.bf16.msra.mxu0 %v4865
        %7700 = vmatpush.bf16.msra.mxu0 %v4861
        %7701 = vmatpush.bf16.msra.mxu0 %v4857
        %7702 = vmatpush.bf16.msra.mxu0 %v4853
        %7703 = vmatpush.bf16.msra.mxu0 %v4849
        %7704 = vmatpush.bf16.msra.mxu0 %v4845
        %7705 = vmatmul.bf16.gmra.mxu0 %v1552
        %v7706 = vpop.f32.mrf.mxu0
        %v7707 = vadd.f32 %v7693, %v7706
        %v7708 = vpop.f32.mrf.mxu0
        %v7709 = vadd.f32 %v7695, %v7708
        %7710 = vdwg.mxu0
        %7711 = vmatpush.bf16.msra.mxu0 %v4905
        %7712 = vmatpush.bf16.msra.mxu0 %v4901
        %7713 = vmatpush.bf16.msra.mxu0 %v4897
        %7714 = vmatpush.bf16.msra.mxu0 %v4893
        %7715 = vmatpush.bf16.msra.mxu0 %v4889
        %7716 = vmatpush.bf16.msra.mxu0 %v4885
        %7717 = vmatpush.bf16.msra.mxu0 %v4881
        %7718 = vmatpush.bf16.msra.mxu0 %v4877
        %7719 = vmatmul.bf16.gmra.mxu0 %v1553
        %v7720 = vpop.f32.mrf.mxu0
        %v7721 = vadd.f32 %v7707, %v7720
        %v7722 = vpop.f32.mrf.mxu0
        %v7723 = vadd.f32 %v7709, %v7722
        %7724 = vdwg.mxu0
        %7725 = vmatpush.bf16.msra.mxu0 %v4937
        %7726 = vmatpush.bf16.msra.mxu0 %v4933
        %7727 = vmatpush.bf16.msra.mxu0 %v4929
        %7728 = vmatpush.bf16.msra.mxu0 %v4925
        %7729 = vmatpush.bf16.msra.mxu0 %v4921
        %7730 = vmatpush.bf16.msra.mxu0 %v4917
        %7731 = vmatpush.bf16.msra.mxu0 %v4913
        %7732 = vmatpush.bf16.msra.mxu0 %v4909
        %7733 = vmatmul.bf16.gmra.mxu0 %v1554
        %v7734 = vpop.f32.mrf.mxu0
        %v7735 = vadd.f32 %v7721, %v7734
        %v7736 = vpop.f32.mrf.mxu0
        %v7737 = vadd.f32 %v7723, %v7736
        %7738 = vdwg.mxu0
        %7739 = vmatpush.bf16.msra.mxu0 %v4969
        %7740 = vmatpush.bf16.msra.mxu0 %v4965
        %7741 = vmatpush.bf16.msra.mxu0 %v4961
        %7742 = vmatpush.bf16.msra.mxu0 %v4957
        %7743 = vmatpush.bf16.msra.mxu0 %v4953
        %7744 = vmatpush.bf16.msra.mxu0 %v4949
        %7745 = vmatpush.bf16.msra.mxu0 %v4945
        %7746 = vmatpush.bf16.msra.mxu0 %v4941
        %7747 = vmatmul.bf16.gmra.mxu0 %v1555
        %v7748 = vpop.f32.mrf.mxu0
        %v7749 = vadd.f32 %v7735, %v7748
        %v7750 = vpop.f32.mrf.mxu0
        %v7751 = vadd.f32 %v7737, %v7750
        %7752 = vdwg.mxu0
        %7753 = vmatpush.bf16.msra.mxu0 %v5001
        %7754 = vmatpush.bf16.msra.mxu0 %v4997
        %7755 = vmatpush.bf16.msra.mxu0 %v4993
        %7756 = vmatpush.bf16.msra.mxu0 %v4989
        %7757 = vmatpush.bf16.msra.mxu0 %v4985
        %7758 = vmatpush.bf16.msra.mxu0 %v4981
        %7759 = vmatpush.bf16.msra.mxu0 %v4977
        %7760 = vmatpush.bf16.msra.mxu0 %v4973
        %7761 = vmatmul.bf16.gmra.mxu0 %v1556
        %v7762 = vpop.f32.mrf.mxu0
        %v7763 = vadd.f32 %v7749, %v7762
        %v7764 = vpop.f32.mrf.mxu0
        %v7765 = vadd.f32 %v7751, %v7764
        %7766 = vdwg.mxu0
        %7767 = vmatpush.bf16.msra.mxu0 %v5033
        %7768 = vmatpush.bf16.msra.mxu0 %v5029
        %7769 = vmatpush.bf16.msra.mxu0 %v5025
        %7770 = vmatpush.bf16.msra.mxu0 %v5021
        %7771 = vmatpush.bf16.msra.mxu0 %v5017
        %7772 = vmatpush.bf16.msra.mxu0 %v5013
        %7773 = vmatpush.bf16.msra.mxu0 %v5009
        %7774 = vmatpush.bf16.msra.mxu0 %v5005
        %7775 = vmatmul.bf16.gmra.mxu0 %v1557
        %v7776 = vpop.f32.mrf.mxu0
        %v7777 = vadd.f32 %v7763, %v7776
        %v7778 = vpop.f32.mrf.mxu0
        %v7779 = vadd.f32 %v7765, %v7778
        %7780 = vdwg.mxu0
        %7781 = vmatpush.bf16.msra.mxu0 %v5065
        %7782 = vmatpush.bf16.msra.mxu0 %v5061
        %7783 = vmatpush.bf16.msra.mxu0 %v5057
        %7784 = vmatpush.bf16.msra.mxu0 %v5053
        %7785 = vmatpush.bf16.msra.mxu0 %v5049
        %7786 = vmatpush.bf16.msra.mxu0 %v5045
        %7787 = vmatpush.bf16.msra.mxu0 %v5041
        %7788 = vmatpush.bf16.msra.mxu0 %v5037
        %7789 = vmatmul.bf16.gmra.mxu0 %v1558
        %v7790 = vpop.f32.mrf.mxu0
        %v7791 = vadd.f32 %v7777, %v7790
        %v7792 = vpop.f32.mrf.mxu0
        %v7793 = vadd.f32 %v7779, %v7792
        %7794 = vdwg.mxu0
        %7795 = vmatpush.bf16.msra.mxu0 %v5097
        %7796 = vmatpush.bf16.msra.mxu0 %v5093
        %7797 = vmatpush.bf16.msra.mxu0 %v5089
        %7798 = vmatpush.bf16.msra.mxu0 %v5085
        %7799 = vmatpush.bf16.msra.mxu0 %v5081
        %7800 = vmatpush.bf16.msra.mxu0 %v5077
        %7801 = vmatpush.bf16.msra.mxu0 %v5073
        %7802 = vmatpush.bf16.msra.mxu0 %v5069
        %7803 = vmatmul.bf16.gmra.mxu0 %v1559
        %v7804 = vpop.f32.mrf.mxu0
        %v7805 = vadd.f32 %v7791, %v7804
        %v7806 = vpop.f32.mrf.mxu0
        %v7807 = vadd.f32 %v7793, %v7806
        %7808 = vdwg.mxu0
        %7809 = vmatpush.bf16.msra.mxu0 %v5129
        %7810 = vmatpush.bf16.msra.mxu0 %v5125
        %7811 = vmatpush.bf16.msra.mxu0 %v5121
        %7812 = vmatpush.bf16.msra.mxu0 %v5117
        %7813 = vmatpush.bf16.msra.mxu0 %v5113
        %7814 = vmatpush.bf16.msra.mxu0 %v5109
        %7815 = vmatpush.bf16.msra.mxu0 %v5105
        %7816 = vmatpush.bf16.msra.mxu0 %v5101
        %7817 = vmatmul.bf16.gmra.mxu0 %v1560
        %v7818 = vpop.f32.mrf.mxu0
        %v7819 = vadd.f32 %v7805, %v7818
        %v7820 = vpop.f32.mrf.mxu0
        %v7821 = vadd.f32 %v7807, %v7820
        %7822 = vdwg.mxu0
        %7823 = vmatpush.bf16.msra.mxu0 %v5161
        %7824 = vmatpush.bf16.msra.mxu0 %v5157
        %7825 = vmatpush.bf16.msra.mxu0 %v5153
        %7826 = vmatpush.bf16.msra.mxu0 %v5149
        %7827 = vmatpush.bf16.msra.mxu0 %v5145
        %7828 = vmatpush.bf16.msra.mxu0 %v5141
        %7829 = vmatpush.bf16.msra.mxu0 %v5137
        %7830 = vmatpush.bf16.msra.mxu0 %v5133
        %7831 = vmatmul.bf16.gmra.mxu0 %v1561
        %v7832 = vpop.f32.mrf.mxu0
        %v7833 = vadd.f32 %v7819, %v7832
        %v7834 = vpop.f32.mrf.mxu0
        %v7835 = vadd.f32 %v7821, %v7834
        %7836 = vdwg.mxu0
        %7837 = vmatpush.bf16.msra.mxu0 %v5193
        %7838 = vmatpush.bf16.msra.mxu0 %v5189
        %7839 = vmatpush.bf16.msra.mxu0 %v5185
        %7840 = vmatpush.bf16.msra.mxu0 %v5181
        %7841 = vmatpush.bf16.msra.mxu0 %v5177
        %7842 = vmatpush.bf16.msra.mxu0 %v5173
        %7843 = vmatpush.bf16.msra.mxu0 %v5169
        %7844 = vmatpush.bf16.msra.mxu0 %v5165
        %7845 = vmatmul.bf16.gmra.mxu0 %v1562
        %v7846 = vpop.f32.mrf.mxu0
        %v7847 = vadd.f32 %v7833, %v7846
        %v7848 = vpop.f32.mrf.mxu0
        %v7849 = vadd.f32 %v7835, %v7848
        %7850 = vdwg.mxu0
        %7851 = vmatpush.bf16.msra.mxu0 %v5225
        %7852 = vmatpush.bf16.msra.mxu0 %v5221
        %7853 = vmatpush.bf16.msra.mxu0 %v5217
        %7854 = vmatpush.bf16.msra.mxu0 %v5213
        %7855 = vmatpush.bf16.msra.mxu0 %v5209
        %7856 = vmatpush.bf16.msra.mxu0 %v5205
        %7857 = vmatpush.bf16.msra.mxu0 %v5201
        %7858 = vmatpush.bf16.msra.mxu0 %v5197
        %7859 = vmatmul.bf16.gmra.mxu0 %v1563
        %v7860 = vpop.f32.mrf.mxu0
        %v7861 = vadd.f32 %v7847, %v7860
        %v7862 = vpop.f32.mrf.mxu0
        %v7863 = vadd.f32 %v7849, %v7862
        %7864 = vdwg.mxu0
        %7865 = vmatpush.bf16.msra.mxu0 %v5257
        %7866 = vmatpush.bf16.msra.mxu0 %v5253
        %7867 = vmatpush.bf16.msra.mxu0 %v5249
        %7868 = vmatpush.bf16.msra.mxu0 %v5245
        %7869 = vmatpush.bf16.msra.mxu0 %v5241
        %7870 = vmatpush.bf16.msra.mxu0 %v5237
        %7871 = vmatpush.bf16.msra.mxu0 %v5233
        %7872 = vmatpush.bf16.msra.mxu0 %v5229
        %7873 = vmatmul.bf16.gmra.mxu0 %v1564
        %v7874 = vpop.f32.mrf.mxu0
        %v7875 = vadd.f32 %v7861, %v7874
        %v7876 = vpop.f32.mrf.mxu0
        %v7877 = vadd.f32 %v7863, %v7876
        %7878 = vdwg.mxu0
        %7879 = vmatpush.bf16.msra.mxu0 %v5289
        %7880 = vmatpush.bf16.msra.mxu0 %v5285
        %7881 = vmatpush.bf16.msra.mxu0 %v5281
        %7882 = vmatpush.bf16.msra.mxu0 %v5277
        %7883 = vmatpush.bf16.msra.mxu0 %v5273
        %7884 = vmatpush.bf16.msra.mxu0 %v5269
        %7885 = vmatpush.bf16.msra.mxu0 %v5265
        %7886 = vmatpush.bf16.msra.mxu0 %v5261
        %7887 = vmatmul.bf16.gmra.mxu0 %v1565
        %v7888 = vpop.f32.mrf.mxu0
        %v7889 = vadd.f32 %v7875, %v7888
        %v7890 = vpop.f32.mrf.mxu0
        %v7891 = vadd.f32 %v7877, %v7890
        %7892 = vdwg.mxu0
        %7893 = vmatpush.bf16.msra.mxu0 %v5321
        %7894 = vmatpush.bf16.msra.mxu0 %v5317
        %7895 = vmatpush.bf16.msra.mxu0 %v5313
        %7896 = vmatpush.bf16.msra.mxu0 %v5309
        %7897 = vmatpush.bf16.msra.mxu0 %v5305
        %7898 = vmatpush.bf16.msra.mxu0 %v5301
        %7899 = vmatpush.bf16.msra.mxu0 %v5297
        %7900 = vmatpush.bf16.msra.mxu0 %v5293
        %7901 = vmatmul.bf16.gmra.mxu0 %v1566
        %v7902 = vpop.f32.mrf.mxu0
        %v7903 = vadd.f32 %v7889, %v7902
        %v7904 = vpop.f32.mrf.mxu0
        %v7905 = vadd.f32 %v7891, %v7904
        %7906 = vdwg.mxu0
        %7907 = vmatpush.bf16.msra.mxu0 %v5353
        %7908 = vmatpush.bf16.msra.mxu0 %v5349
        %7909 = vmatpush.bf16.msra.mxu0 %v5345
        %7910 = vmatpush.bf16.msra.mxu0 %v5341
        %7911 = vmatpush.bf16.msra.mxu0 %v5337
        %7912 = vmatpush.bf16.msra.mxu0 %v5333
        %7913 = vmatpush.bf16.msra.mxu0 %v5329
        %7914 = vmatpush.bf16.msra.mxu0 %v5325
        %7915 = vmatmul.bf16.gmra.mxu0 %v1567
        %v7916 = vpop.f32.mrf.mxu0
        %v7917 = vadd.f32 %v7903, %v7916
        %v7918 = vpop.f32.mrf.mxu0
        %v7919 = vadd.f32 %v7905, %v7918
        %7920 = vdwg.mxu0
        %7921 = vmatpush.bf16.msra.mxu0 %v5385
        %7922 = vmatpush.bf16.msra.mxu0 %v5381
        %7923 = vmatpush.bf16.msra.mxu0 %v5377
        %7924 = vmatpush.bf16.msra.mxu0 %v5373
        %7925 = vmatpush.bf16.msra.mxu0 %v5369
        %7926 = vmatpush.bf16.msra.mxu0 %v5365
        %7927 = vmatpush.bf16.msra.mxu0 %v5361
        %7928 = vmatpush.bf16.msra.mxu0 %v5357
        %7929 = vmatmul.bf16.gmra.mxu0 %v1568
        %v7930 = vpop.f32.mrf.mxu0
        %v7931 = vadd.f32 %v7917, %v7930
        %v7932 = vpop.f32.mrf.mxu0
        %v7933 = vadd.f32 %v7919, %v7932
        %7934 = vdwg.mxu0
        %7935 = vmatpush.bf16.msra.mxu0 %v5417
        %7936 = vmatpush.bf16.msra.mxu0 %v5413
        %7937 = vmatpush.bf16.msra.mxu0 %v5409
        %7938 = vmatpush.bf16.msra.mxu0 %v5405
        %7939 = vmatpush.bf16.msra.mxu0 %v5401
        %7940 = vmatpush.bf16.msra.mxu0 %v5397
        %7941 = vmatpush.bf16.msra.mxu0 %v5393
        %7942 = vmatpush.bf16.msra.mxu0 %v5389
        %7943 = vmatmul.bf16.gmra.mxu0 %v1569
        %v7944 = vpop.f32.mrf.mxu0
        %v7945 = vadd.f32 %v7931, %v7944
        %v7946 = vpop.f32.mrf.mxu0
        %v7947 = vadd.f32 %v7933, %v7946
        %7948 = vdwg.mxu0
        %7949 = vmatpush.bf16.msra.mxu0 %v5449
        %7950 = vmatpush.bf16.msra.mxu0 %v5445
        %7951 = vmatpush.bf16.msra.mxu0 %v5441
        %7952 = vmatpush.bf16.msra.mxu0 %v5437
        %7953 = vmatpush.bf16.msra.mxu0 %v5433
        %7954 = vmatpush.bf16.msra.mxu0 %v5429
        %7955 = vmatpush.bf16.msra.mxu0 %v5425
        %7956 = vmatpush.bf16.msra.mxu0 %v5421
        %7957 = vmatmul.bf16.gmra.mxu0 %v1570
        %v7958 = vpop.f32.mrf.mxu0
        %v7959 = vadd.f32 %v7945, %v7958
        %v7960 = vpop.f32.mrf.mxu0
        %v7961 = vadd.f32 %v7947, %v7960
        %7962 = vdwg.mxu0
        %7963 = vmatpush.bf16.msra.mxu0 %v5481
        %7964 = vmatpush.bf16.msra.mxu0 %v5477
        %7965 = vmatpush.bf16.msra.mxu0 %v5473
        %7966 = vmatpush.bf16.msra.mxu0 %v5469
        %7967 = vmatpush.bf16.msra.mxu0 %v5465
        %7968 = vmatpush.bf16.msra.mxu0 %v5461
        %7969 = vmatpush.bf16.msra.mxu0 %v5457
        %7970 = vmatpush.bf16.msra.mxu0 %v5453
        %7971 = vmatmul.bf16.gmra.mxu0 %v1571
        %v7972 = vpop.f32.mrf.mxu0
        %v7973 = vadd.f32 %v7959, %v7972
        %v7974 = vpop.f32.mrf.mxu0
        %v7975 = vadd.f32 %v7961, %v7974
        %7976 = vdwg.mxu0
        %7977 = vmatpush.bf16.msra.mxu0 %v5513
        %7978 = vmatpush.bf16.msra.mxu0 %v5509
        %7979 = vmatpush.bf16.msra.mxu0 %v5505
        %7980 = vmatpush.bf16.msra.mxu0 %v5501
        %7981 = vmatpush.bf16.msra.mxu0 %v5497
        %7982 = vmatpush.bf16.msra.mxu0 %v5493
        %7983 = vmatpush.bf16.msra.mxu0 %v5489
        %7984 = vmatpush.bf16.msra.mxu0 %v5485
        %7985 = vmatmul.bf16.gmra.mxu0 %v1572
        %v7986 = vpop.f32.mrf.mxu0
        %v7987 = vadd.f32 %v7973, %v7986
        %v7988 = vpop.f32.mrf.mxu0
        %v7989 = vadd.f32 %v7975, %v7988
        %7990 = vdwg.mxu0
        %7991 = vmatpush.bf16.msra.mxu0 %v5545
        %7992 = vmatpush.bf16.msra.mxu0 %v5541
        %7993 = vmatpush.bf16.msra.mxu0 %v5537
        %7994 = vmatpush.bf16.msra.mxu0 %v5533
        %7995 = vmatpush.bf16.msra.mxu0 %v5529
        %7996 = vmatpush.bf16.msra.mxu0 %v5525
        %7997 = vmatpush.bf16.msra.mxu0 %v5521
        %7998 = vmatpush.bf16.msra.mxu0 %v5517
        %7999 = vmatmul.bf16.gmra.mxu0 %v1573
        %v8000 = vpop.f32.mrf.mxu0
        %v8001 = vadd.f32 %v7987, %v8000
        %v8002 = vpop.f32.mrf.mxu0
        %v8003 = vadd.f32 %v7989, %v8002
        %8004 = vdwg.mxu0
        %8005 = vmatpush.bf16.msra.mxu0 %v5577
        %8006 = vmatpush.bf16.msra.mxu0 %v5573
        %8007 = vmatpush.bf16.msra.mxu0 %v5569
        %8008 = vmatpush.bf16.msra.mxu0 %v5565
        %8009 = vmatpush.bf16.msra.mxu0 %v5561
        %8010 = vmatpush.bf16.msra.mxu0 %v5557
        %8011 = vmatpush.bf16.msra.mxu0 %v5553
        %8012 = vmatpush.bf16.msra.mxu0 %v5549
        %8013 = vmatmul.bf16.gmra.mxu0 %v1574
        %v8014 = vpop.f32.mrf.mxu0
        %v8015 = vadd.f32 %v8001, %v8014
        %v8016 = vpop.f32.mrf.mxu0
        %v8017 = vadd.f32 %v8003, %v8016
        %8018 = vdwg.mxu0
        %8019 = vmatpush.bf16.msra.mxu0 %v5609
        %8020 = vmatpush.bf16.msra.mxu0 %v5605
        %8021 = vmatpush.bf16.msra.mxu0 %v5601
        %8022 = vmatpush.bf16.msra.mxu0 %v5597
        %8023 = vmatpush.bf16.msra.mxu0 %v5593
        %8024 = vmatpush.bf16.msra.mxu0 %v5589
        %8025 = vmatpush.bf16.msra.mxu0 %v5585
        %8026 = vmatpush.bf16.msra.mxu0 %v5581
        %8027 = vmatmul.bf16.gmra.mxu0 %v1575
        %v8028 = vpop.f32.mrf.mxu0
        %v8029 = vadd.f32 %v8015, %v8028
        %v8030 = vpop.f32.mrf.mxu0
        %v8031 = vadd.f32 %v8017, %v8030
        %8032 = vdwg.mxu0
        %8033 = vmatpush.bf16.msra.mxu0 %v5641
        %8034 = vmatpush.bf16.msra.mxu0 %v5637
        %8035 = vmatpush.bf16.msra.mxu0 %v5633
        %8036 = vmatpush.bf16.msra.mxu0 %v5629
        %8037 = vmatpush.bf16.msra.mxu0 %v5625
        %8038 = vmatpush.bf16.msra.mxu0 %v5621
        %8039 = vmatpush.bf16.msra.mxu0 %v5617
        %8040 = vmatpush.bf16.msra.mxu0 %v5613
        %8041 = vmatmul.bf16.gmra.mxu0 %v1576
        %v8042 = vpop.f32.mrf.mxu0
        %v8043 = vadd.f32 %v8029, %v8042
        %v8044 = vpop.f32.mrf.mxu0
        %v8045 = vadd.f32 %v8031, %v8044
        %8046 = vdwg.mxu0
        %8047 = vmatpush.bf16.msra.mxu0 %v5673
        %8048 = vmatpush.bf16.msra.mxu0 %v5669
        %8049 = vmatpush.bf16.msra.mxu0 %v5665
        %8050 = vmatpush.bf16.msra.mxu0 %v5661
        %8051 = vmatpush.bf16.msra.mxu0 %v5657
        %8052 = vmatpush.bf16.msra.mxu0 %v5653
        %8053 = vmatpush.bf16.msra.mxu0 %v5649
        %8054 = vmatpush.bf16.msra.mxu0 %v5645
        %8055 = vmatmul.bf16.gmra.mxu0 %v1577
        %v8056 = vpop.f32.mrf.mxu0
        %v8057 = vadd.f32 %v8043, %v8056
        %v8058 = vpop.f32.mrf.mxu0
        %v8059 = vadd.f32 %v8045, %v8058
        %8060 = vdwg.mxu0
        %8061 = vmatpush.bf16.msra.mxu0 %v5705
        %8062 = vmatpush.bf16.msra.mxu0 %v5701
        %8063 = vmatpush.bf16.msra.mxu0 %v5697
        %8064 = vmatpush.bf16.msra.mxu0 %v5693
        %8065 = vmatpush.bf16.msra.mxu0 %v5689
        %8066 = vmatpush.bf16.msra.mxu0 %v5685
        %8067 = vmatpush.bf16.msra.mxu0 %v5681
        %8068 = vmatpush.bf16.msra.mxu0 %v5677
        %8069 = vmatmul.bf16.gmra.mxu0 %v1578
        %v8070 = vpop.f32.mrf.mxu0
        %v8071 = vadd.f32 %v8057, %v8070
        %v8072 = vpop.f32.mrf.mxu0
        %v8073 = vadd.f32 %v8059, %v8072
        %8074 = vdwg.mxu0
        %8075 = vmatpush.bf16.msra.mxu0 %v4714
        %8076 = vmatpush.bf16.msra.mxu0 %v4710
        %8077 = vmatpush.bf16.msra.mxu0 %v4706
        %8078 = vmatpush.bf16.msra.mxu0 %v4702
        %8079 = vmatpush.bf16.msra.mxu0 %v4698
        %8080 = vmatpush.bf16.msra.mxu0 %v4694
        %8081 = vmatpush.bf16.msra.mxu0 %v4690
        %8082 = vmatpush.bf16.msra.mxu0 %v4686
        %8083 = vmatmul.bf16.gmra.mxu0 %v1547
        %v8084 = vpop.f32.mrf.mxu0
        %v8085 = vadd.f32 0.0, %v8084
        %v8086 = vpop.f32.mrf.mxu0
        %v8087 = vadd.f32 0.0, %v8086
        %8088 = vdwg.mxu0
        %8089 = vmatpush.bf16.msra.mxu0 %v4746
        %8090 = vmatpush.bf16.msra.mxu0 %v4742
        %8091 = vmatpush.bf16.msra.mxu0 %v4738
        %8092 = vmatpush.bf16.msra.mxu0 %v4734
        %8093 = vmatpush.bf16.msra.mxu0 %v4730
        %8094 = vmatpush.bf16.msra.mxu0 %v4726
        %8095 = vmatpush.bf16.msra.mxu0 %v4722
        %8096 = vmatpush.bf16.msra.mxu0 %v4718
        %8097 = vmatmul.bf16.gmra.mxu0 %v1548
        %v8098 = vpop.f32.mrf.mxu0
        %v8099 = vadd.f32 %v8085, %v8098
        %v8100 = vpop.f32.mrf.mxu0
        %v8101 = vadd.f32 %v8087, %v8100
        %8102 = vdwg.mxu0
        %8103 = vmatpush.bf16.msra.mxu0 %v4778
        %8104 = vmatpush.bf16.msra.mxu0 %v4774
        %8105 = vmatpush.bf16.msra.mxu0 %v4770
        %8106 = vmatpush.bf16.msra.mxu0 %v4766
        %8107 = vmatpush.bf16.msra.mxu0 %v4762
        %8108 = vmatpush.bf16.msra.mxu0 %v4758
        %8109 = vmatpush.bf16.msra.mxu0 %v4754
        %8110 = vmatpush.bf16.msra.mxu0 %v4750
        %8111 = vmatmul.bf16.gmra.mxu0 %v1549
        %v8112 = vpop.f32.mrf.mxu0
        %v8113 = vadd.f32 %v8099, %v8112
        %v8114 = vpop.f32.mrf.mxu0
        %v8115 = vadd.f32 %v8101, %v8114
        %8116 = vdwg.mxu0
        %8117 = vmatpush.bf16.msra.mxu0 %v4810
        %8118 = vmatpush.bf16.msra.mxu0 %v4806
        %8119 = vmatpush.bf16.msra.mxu0 %v4802
        %8120 = vmatpush.bf16.msra.mxu0 %v4798
        %8121 = vmatpush.bf16.msra.mxu0 %v4794
        %8122 = vmatpush.bf16.msra.mxu0 %v4790
        %8123 = vmatpush.bf16.msra.mxu0 %v4786
        %8124 = vmatpush.bf16.msra.mxu0 %v4782
        %8125 = vmatmul.bf16.gmra.mxu0 %v1550
        %v8126 = vpop.f32.mrf.mxu0
        %v8127 = vadd.f32 %v8113, %v8126
        %v8128 = vpop.f32.mrf.mxu0
        %v8129 = vadd.f32 %v8115, %v8128
        %8130 = vdwg.mxu0
        %8131 = vmatpush.bf16.msra.mxu0 %v4842
        %8132 = vmatpush.bf16.msra.mxu0 %v4838
        %8133 = vmatpush.bf16.msra.mxu0 %v4834
        %8134 = vmatpush.bf16.msra.mxu0 %v4830
        %8135 = vmatpush.bf16.msra.mxu0 %v4826
        %8136 = vmatpush.bf16.msra.mxu0 %v4822
        %8137 = vmatpush.bf16.msra.mxu0 %v4818
        %8138 = vmatpush.bf16.msra.mxu0 %v4814
        %8139 = vmatmul.bf16.gmra.mxu0 %v1551
        %v8140 = vpop.f32.mrf.mxu0
        %v8141 = vadd.f32 %v8127, %v8140
        %v8142 = vpop.f32.mrf.mxu0
        %v8143 = vadd.f32 %v8129, %v8142
        %8144 = vdwg.mxu0
        %8145 = vmatpush.bf16.msra.mxu0 %v4874
        %8146 = vmatpush.bf16.msra.mxu0 %v4870
        %8147 = vmatpush.bf16.msra.mxu0 %v4866
        %8148 = vmatpush.bf16.msra.mxu0 %v4862
        %8149 = vmatpush.bf16.msra.mxu0 %v4858
        %8150 = vmatpush.bf16.msra.mxu0 %v4854
        %8151 = vmatpush.bf16.msra.mxu0 %v4850
        %8152 = vmatpush.bf16.msra.mxu0 %v4846
        %8153 = vmatmul.bf16.gmra.mxu0 %v1552
        %v8154 = vpop.f32.mrf.mxu0
        %v8155 = vadd.f32 %v8141, %v8154
        %v8156 = vpop.f32.mrf.mxu0
        %v8157 = vadd.f32 %v8143, %v8156
        %8158 = vdwg.mxu0
        %8159 = vmatpush.bf16.msra.mxu0 %v4906
        %8160 = vmatpush.bf16.msra.mxu0 %v4902
        %8161 = vmatpush.bf16.msra.mxu0 %v4898
        %8162 = vmatpush.bf16.msra.mxu0 %v4894
        %8163 = vmatpush.bf16.msra.mxu0 %v4890
        %8164 = vmatpush.bf16.msra.mxu0 %v4886
        %8165 = vmatpush.bf16.msra.mxu0 %v4882
        %8166 = vmatpush.bf16.msra.mxu0 %v4878
        %8167 = vmatmul.bf16.gmra.mxu0 %v1553
        %v8168 = vpop.f32.mrf.mxu0
        %v8169 = vadd.f32 %v8155, %v8168
        %v8170 = vpop.f32.mrf.mxu0
        %v8171 = vadd.f32 %v8157, %v8170
        %8172 = vdwg.mxu0
        %8173 = vmatpush.bf16.msra.mxu0 %v4938
        %8174 = vmatpush.bf16.msra.mxu0 %v4934
        %8175 = vmatpush.bf16.msra.mxu0 %v4930
        %8176 = vmatpush.bf16.msra.mxu0 %v4926
        %8177 = vmatpush.bf16.msra.mxu0 %v4922
        %8178 = vmatpush.bf16.msra.mxu0 %v4918
        %8179 = vmatpush.bf16.msra.mxu0 %v4914
        %8180 = vmatpush.bf16.msra.mxu0 %v4910
        %8181 = vmatmul.bf16.gmra.mxu0 %v1554
        %v8182 = vpop.f32.mrf.mxu0
        %v8183 = vadd.f32 %v8169, %v8182
        %v8184 = vpop.f32.mrf.mxu0
        %v8185 = vadd.f32 %v8171, %v8184
        %8186 = vdwg.mxu0
        %8187 = vmatpush.bf16.msra.mxu0 %v4970
        %8188 = vmatpush.bf16.msra.mxu0 %v4966
        %8189 = vmatpush.bf16.msra.mxu0 %v4962
        %8190 = vmatpush.bf16.msra.mxu0 %v4958
        %8191 = vmatpush.bf16.msra.mxu0 %v4954
        %8192 = vmatpush.bf16.msra.mxu0 %v4950
        %8193 = vmatpush.bf16.msra.mxu0 %v4946
        %8194 = vmatpush.bf16.msra.mxu0 %v4942
        %8195 = vmatmul.bf16.gmra.mxu0 %v1555
        %v8196 = vpop.f32.mrf.mxu0
        %v8197 = vadd.f32 %v8183, %v8196
        %v8198 = vpop.f32.mrf.mxu0
        %v8199 = vadd.f32 %v8185, %v8198
        %8200 = vdwg.mxu0
        %8201 = vmatpush.bf16.msra.mxu0 %v5002
        %8202 = vmatpush.bf16.msra.mxu0 %v4998
        %8203 = vmatpush.bf16.msra.mxu0 %v4994
        %8204 = vmatpush.bf16.msra.mxu0 %v4990
        %8205 = vmatpush.bf16.msra.mxu0 %v4986
        %8206 = vmatpush.bf16.msra.mxu0 %v4982
        %8207 = vmatpush.bf16.msra.mxu0 %v4978
        %8208 = vmatpush.bf16.msra.mxu0 %v4974
        %8209 = vmatmul.bf16.gmra.mxu0 %v1556
        %v8210 = vpop.f32.mrf.mxu0
        %v8211 = vadd.f32 %v8197, %v8210
        %v8212 = vpop.f32.mrf.mxu0
        %v8213 = vadd.f32 %v8199, %v8212
        %8214 = vdwg.mxu0
        %8215 = vmatpush.bf16.msra.mxu0 %v5034
        %8216 = vmatpush.bf16.msra.mxu0 %v5030
        %8217 = vmatpush.bf16.msra.mxu0 %v5026
        %8218 = vmatpush.bf16.msra.mxu0 %v5022
        %8219 = vmatpush.bf16.msra.mxu0 %v5018
        %8220 = vmatpush.bf16.msra.mxu0 %v5014
        %8221 = vmatpush.bf16.msra.mxu0 %v5010
        %8222 = vmatpush.bf16.msra.mxu0 %v5006
        %8223 = vmatmul.bf16.gmra.mxu0 %v1557
        %v8224 = vpop.f32.mrf.mxu0
        %v8225 = vadd.f32 %v8211, %v8224
        %v8226 = vpop.f32.mrf.mxu0
        %v8227 = vadd.f32 %v8213, %v8226
        %8228 = vdwg.mxu0
        %8229 = vmatpush.bf16.msra.mxu0 %v5066
        %8230 = vmatpush.bf16.msra.mxu0 %v5062
        %8231 = vmatpush.bf16.msra.mxu0 %v5058
        %8232 = vmatpush.bf16.msra.mxu0 %v5054
        %8233 = vmatpush.bf16.msra.mxu0 %v5050
        %8234 = vmatpush.bf16.msra.mxu0 %v5046
        %8235 = vmatpush.bf16.msra.mxu0 %v5042
        %8236 = vmatpush.bf16.msra.mxu0 %v5038
        %8237 = vmatmul.bf16.gmra.mxu0 %v1558
        %v8238 = vpop.f32.mrf.mxu0
        %v8239 = vadd.f32 %v8225, %v8238
        %v8240 = vpop.f32.mrf.mxu0
        %v8241 = vadd.f32 %v8227, %v8240
        %8242 = vdwg.mxu0
        %8243 = vmatpush.bf16.msra.mxu0 %v5098
        %8244 = vmatpush.bf16.msra.mxu0 %v5094
        %8245 = vmatpush.bf16.msra.mxu0 %v5090
        %8246 = vmatpush.bf16.msra.mxu0 %v5086
        %8247 = vmatpush.bf16.msra.mxu0 %v5082
        %8248 = vmatpush.bf16.msra.mxu0 %v5078
        %8249 = vmatpush.bf16.msra.mxu0 %v5074
        %8250 = vmatpush.bf16.msra.mxu0 %v5070
        %8251 = vmatmul.bf16.gmra.mxu0 %v1559
        %v8252 = vpop.f32.mrf.mxu0
        %v8253 = vadd.f32 %v8239, %v8252
        %v8254 = vpop.f32.mrf.mxu0
        %v8255 = vadd.f32 %v8241, %v8254
        %8256 = vdwg.mxu0
        %8257 = vmatpush.bf16.msra.mxu0 %v5130
        %8258 = vmatpush.bf16.msra.mxu0 %v5126
        %8259 = vmatpush.bf16.msra.mxu0 %v5122
        %8260 = vmatpush.bf16.msra.mxu0 %v5118
        %8261 = vmatpush.bf16.msra.mxu0 %v5114
        %8262 = vmatpush.bf16.msra.mxu0 %v5110
        %8263 = vmatpush.bf16.msra.mxu0 %v5106
        %8264 = vmatpush.bf16.msra.mxu0 %v5102
        %8265 = vmatmul.bf16.gmra.mxu0 %v1560
        %v8266 = vpop.f32.mrf.mxu0
        %v8267 = vadd.f32 %v8253, %v8266
        %v8268 = vpop.f32.mrf.mxu0
        %v8269 = vadd.f32 %v8255, %v8268
        %8270 = vdwg.mxu0
        %8271 = vmatpush.bf16.msra.mxu0 %v5162
        %8272 = vmatpush.bf16.msra.mxu0 %v5158
        %8273 = vmatpush.bf16.msra.mxu0 %v5154
        %8274 = vmatpush.bf16.msra.mxu0 %v5150
        %8275 = vmatpush.bf16.msra.mxu0 %v5146
        %8276 = vmatpush.bf16.msra.mxu0 %v5142
        %8277 = vmatpush.bf16.msra.mxu0 %v5138
        %8278 = vmatpush.bf16.msra.mxu0 %v5134
        %8279 = vmatmul.bf16.gmra.mxu0 %v1561
        %v8280 = vpop.f32.mrf.mxu0
        %v8281 = vadd.f32 %v8267, %v8280
        %v8282 = vpop.f32.mrf.mxu0
        %v8283 = vadd.f32 %v8269, %v8282
        %8284 = vdwg.mxu0
        %8285 = vmatpush.bf16.msra.mxu0 %v5194
        %8286 = vmatpush.bf16.msra.mxu0 %v5190
        %8287 = vmatpush.bf16.msra.mxu0 %v5186
        %8288 = vmatpush.bf16.msra.mxu0 %v5182
        %8289 = vmatpush.bf16.msra.mxu0 %v5178
        %8290 = vmatpush.bf16.msra.mxu0 %v5174
        %8291 = vmatpush.bf16.msra.mxu0 %v5170
        %8292 = vmatpush.bf16.msra.mxu0 %v5166
        %8293 = vmatmul.bf16.gmra.mxu0 %v1562
        %v8294 = vpop.f32.mrf.mxu0
        %v8295 = vadd.f32 %v8281, %v8294
        %v8296 = vpop.f32.mrf.mxu0
        %v8297 = vadd.f32 %v8283, %v8296
        %8298 = vdwg.mxu0
        %8299 = vmatpush.bf16.msra.mxu0 %v5226
        %8300 = vmatpush.bf16.msra.mxu0 %v5222
        %8301 = vmatpush.bf16.msra.mxu0 %v5218
        %8302 = vmatpush.bf16.msra.mxu0 %v5214
        %8303 = vmatpush.bf16.msra.mxu0 %v5210
        %8304 = vmatpush.bf16.msra.mxu0 %v5206
        %8305 = vmatpush.bf16.msra.mxu0 %v5202
        %8306 = vmatpush.bf16.msra.mxu0 %v5198
        %8307 = vmatmul.bf16.gmra.mxu0 %v1563
        %v8308 = vpop.f32.mrf.mxu0
        %v8309 = vadd.f32 %v8295, %v8308
        %v8310 = vpop.f32.mrf.mxu0
        %v8311 = vadd.f32 %v8297, %v8310
        %8312 = vdwg.mxu0
        %8313 = vmatpush.bf16.msra.mxu0 %v5258
        %8314 = vmatpush.bf16.msra.mxu0 %v5254
        %8315 = vmatpush.bf16.msra.mxu0 %v5250
        %8316 = vmatpush.bf16.msra.mxu0 %v5246
        %8317 = vmatpush.bf16.msra.mxu0 %v5242
        %8318 = vmatpush.bf16.msra.mxu0 %v5238
        %8319 = vmatpush.bf16.msra.mxu0 %v5234
        %8320 = vmatpush.bf16.msra.mxu0 %v5230
        %8321 = vmatmul.bf16.gmra.mxu0 %v1564
        %v8322 = vpop.f32.mrf.mxu0
        %v8323 = vadd.f32 %v8309, %v8322
        %v8324 = vpop.f32.mrf.mxu0
        %v8325 = vadd.f32 %v8311, %v8324
        %8326 = vdwg.mxu0
        %8327 = vmatpush.bf16.msra.mxu0 %v5290
        %8328 = vmatpush.bf16.msra.mxu0 %v5286
        %8329 = vmatpush.bf16.msra.mxu0 %v5282
        %8330 = vmatpush.bf16.msra.mxu0 %v5278
        %8331 = vmatpush.bf16.msra.mxu0 %v5274
        %8332 = vmatpush.bf16.msra.mxu0 %v5270
        %8333 = vmatpush.bf16.msra.mxu0 %v5266
        %8334 = vmatpush.bf16.msra.mxu0 %v5262
        %8335 = vmatmul.bf16.gmra.mxu0 %v1565
        %v8336 = vpop.f32.mrf.mxu0
        %v8337 = vadd.f32 %v8323, %v8336
        %v8338 = vpop.f32.mrf.mxu0
        %v8339 = vadd.f32 %v8325, %v8338
        %8340 = vdwg.mxu0
        %8341 = vmatpush.bf16.msra.mxu0 %v5322
        %8342 = vmatpush.bf16.msra.mxu0 %v5318
        %8343 = vmatpush.bf16.msra.mxu0 %v5314
        %8344 = vmatpush.bf16.msra.mxu0 %v5310
        %8345 = vmatpush.bf16.msra.mxu0 %v5306
        %8346 = vmatpush.bf16.msra.mxu0 %v5302
        %8347 = vmatpush.bf16.msra.mxu0 %v5298
        %8348 = vmatpush.bf16.msra.mxu0 %v5294
        %8349 = vmatmul.bf16.gmra.mxu0 %v1566
        %v8350 = vpop.f32.mrf.mxu0
        %v8351 = vadd.f32 %v8337, %v8350
        %v8352 = vpop.f32.mrf.mxu0
        %v8353 = vadd.f32 %v8339, %v8352
        %8354 = vdwg.mxu0
        %8355 = vmatpush.bf16.msra.mxu0 %v5354
        %8356 = vmatpush.bf16.msra.mxu0 %v5350
        %8357 = vmatpush.bf16.msra.mxu0 %v5346
        %8358 = vmatpush.bf16.msra.mxu0 %v5342
        %8359 = vmatpush.bf16.msra.mxu0 %v5338
        %8360 = vmatpush.bf16.msra.mxu0 %v5334
        %8361 = vmatpush.bf16.msra.mxu0 %v5330
        %8362 = vmatpush.bf16.msra.mxu0 %v5326
        %8363 = vmatmul.bf16.gmra.mxu0 %v1567
        %v8364 = vpop.f32.mrf.mxu0
        %v8365 = vadd.f32 %v8351, %v8364
        %v8366 = vpop.f32.mrf.mxu0
        %v8367 = vadd.f32 %v8353, %v8366
        %8368 = vdwg.mxu0
        %8369 = vmatpush.bf16.msra.mxu0 %v5386
        %8370 = vmatpush.bf16.msra.mxu0 %v5382
        %8371 = vmatpush.bf16.msra.mxu0 %v5378
        %8372 = vmatpush.bf16.msra.mxu0 %v5374
        %8373 = vmatpush.bf16.msra.mxu0 %v5370
        %8374 = vmatpush.bf16.msra.mxu0 %v5366
        %8375 = vmatpush.bf16.msra.mxu0 %v5362
        %8376 = vmatpush.bf16.msra.mxu0 %v5358
        %8377 = vmatmul.bf16.gmra.mxu0 %v1568
        %v8378 = vpop.f32.mrf.mxu0
        %v8379 = vadd.f32 %v8365, %v8378
        %v8380 = vpop.f32.mrf.mxu0
        %v8381 = vadd.f32 %v8367, %v8380
        %8382 = vdwg.mxu0
        %8383 = vmatpush.bf16.msra.mxu0 %v5418
        %8384 = vmatpush.bf16.msra.mxu0 %v5414
        %8385 = vmatpush.bf16.msra.mxu0 %v5410
        %8386 = vmatpush.bf16.msra.mxu0 %v5406
        %8387 = vmatpush.bf16.msra.mxu0 %v5402
        %8388 = vmatpush.bf16.msra.mxu0 %v5398
        %8389 = vmatpush.bf16.msra.mxu0 %v5394
        %8390 = vmatpush.bf16.msra.mxu0 %v5390
        %8391 = vmatmul.bf16.gmra.mxu0 %v1569
        %v8392 = vpop.f32.mrf.mxu0
        %v8393 = vadd.f32 %v8379, %v8392
        %v8394 = vpop.f32.mrf.mxu0
        %v8395 = vadd.f32 %v8381, %v8394
        %8396 = vdwg.mxu0
        %8397 = vmatpush.bf16.msra.mxu0 %v5450
        %8398 = vmatpush.bf16.msra.mxu0 %v5446
        %8399 = vmatpush.bf16.msra.mxu0 %v5442
        %8400 = vmatpush.bf16.msra.mxu0 %v5438
        %8401 = vmatpush.bf16.msra.mxu0 %v5434
        %8402 = vmatpush.bf16.msra.mxu0 %v5430
        %8403 = vmatpush.bf16.msra.mxu0 %v5426
        %8404 = vmatpush.bf16.msra.mxu0 %v5422
        %8405 = vmatmul.bf16.gmra.mxu0 %v1570
        %v8406 = vpop.f32.mrf.mxu0
        %v8407 = vadd.f32 %v8393, %v8406
        %v8408 = vpop.f32.mrf.mxu0
        %v8409 = vadd.f32 %v8395, %v8408
        %8410 = vdwg.mxu0
        %8411 = vmatpush.bf16.msra.mxu0 %v5482
        %8412 = vmatpush.bf16.msra.mxu0 %v5478
        %8413 = vmatpush.bf16.msra.mxu0 %v5474
        %8414 = vmatpush.bf16.msra.mxu0 %v5470
        %8415 = vmatpush.bf16.msra.mxu0 %v5466
        %8416 = vmatpush.bf16.msra.mxu0 %v5462
        %8417 = vmatpush.bf16.msra.mxu0 %v5458
        %8418 = vmatpush.bf16.msra.mxu0 %v5454
        %8419 = vmatmul.bf16.gmra.mxu0 %v1571
        %v8420 = vpop.f32.mrf.mxu0
        %v8421 = vadd.f32 %v8407, %v8420
        %v8422 = vpop.f32.mrf.mxu0
        %v8423 = vadd.f32 %v8409, %v8422
        %8424 = vdwg.mxu0
        %8425 = vmatpush.bf16.msra.mxu0 %v5514
        %8426 = vmatpush.bf16.msra.mxu0 %v5510
        %8427 = vmatpush.bf16.msra.mxu0 %v5506
        %8428 = vmatpush.bf16.msra.mxu0 %v5502
        %8429 = vmatpush.bf16.msra.mxu0 %v5498
        %8430 = vmatpush.bf16.msra.mxu0 %v5494
        %8431 = vmatpush.bf16.msra.mxu0 %v5490
        %8432 = vmatpush.bf16.msra.mxu0 %v5486
        %8433 = vmatmul.bf16.gmra.mxu0 %v1572
        %v8434 = vpop.f32.mrf.mxu0
        %v8435 = vadd.f32 %v8421, %v8434
        %v8436 = vpop.f32.mrf.mxu0
        %v8437 = vadd.f32 %v8423, %v8436
        %8438 = vdwg.mxu0
        %8439 = vmatpush.bf16.msra.mxu0 %v5546
        %8440 = vmatpush.bf16.msra.mxu0 %v5542
        %8441 = vmatpush.bf16.msra.mxu0 %v5538
        %8442 = vmatpush.bf16.msra.mxu0 %v5534
        %8443 = vmatpush.bf16.msra.mxu0 %v5530
        %8444 = vmatpush.bf16.msra.mxu0 %v5526
        %8445 = vmatpush.bf16.msra.mxu0 %v5522
        %8446 = vmatpush.bf16.msra.mxu0 %v5518
        %8447 = vmatmul.bf16.gmra.mxu0 %v1573
        %v8448 = vpop.f32.mrf.mxu0
        %v8449 = vadd.f32 %v8435, %v8448
        %v8450 = vpop.f32.mrf.mxu0
        %v8451 = vadd.f32 %v8437, %v8450
        %8452 = vdwg.mxu0
        %8453 = vmatpush.bf16.msra.mxu0 %v5578
        %8454 = vmatpush.bf16.msra.mxu0 %v5574
        %8455 = vmatpush.bf16.msra.mxu0 %v5570
        %8456 = vmatpush.bf16.msra.mxu0 %v5566
        %8457 = vmatpush.bf16.msra.mxu0 %v5562
        %8458 = vmatpush.bf16.msra.mxu0 %v5558
        %8459 = vmatpush.bf16.msra.mxu0 %v5554
        %8460 = vmatpush.bf16.msra.mxu0 %v5550
        %8461 = vmatmul.bf16.gmra.mxu0 %v1574
        %v8462 = vpop.f32.mrf.mxu0
        %v8463 = vadd.f32 %v8449, %v8462
        %v8464 = vpop.f32.mrf.mxu0
        %v8465 = vadd.f32 %v8451, %v8464
        %8466 = vdwg.mxu0
        %8467 = vmatpush.bf16.msra.mxu0 %v5610
        %8468 = vmatpush.bf16.msra.mxu0 %v5606
        %8469 = vmatpush.bf16.msra.mxu0 %v5602
        %8470 = vmatpush.bf16.msra.mxu0 %v5598
        %8471 = vmatpush.bf16.msra.mxu0 %v5594
        %8472 = vmatpush.bf16.msra.mxu0 %v5590
        %8473 = vmatpush.bf16.msra.mxu0 %v5586
        %8474 = vmatpush.bf16.msra.mxu0 %v5582
        %8475 = vmatmul.bf16.gmra.mxu0 %v1575
        %v8476 = vpop.f32.mrf.mxu0
        %v8477 = vadd.f32 %v8463, %v8476
        %v8478 = vpop.f32.mrf.mxu0
        %v8479 = vadd.f32 %v8465, %v8478
        %8480 = vdwg.mxu0
        %8481 = vmatpush.bf16.msra.mxu0 %v5642
        %8482 = vmatpush.bf16.msra.mxu0 %v5638
        %8483 = vmatpush.bf16.msra.mxu0 %v5634
        %8484 = vmatpush.bf16.msra.mxu0 %v5630
        %8485 = vmatpush.bf16.msra.mxu0 %v5626
        %8486 = vmatpush.bf16.msra.mxu0 %v5622
        %8487 = vmatpush.bf16.msra.mxu0 %v5618
        %8488 = vmatpush.bf16.msra.mxu0 %v5614
        %8489 = vmatmul.bf16.gmra.mxu0 %v1576
        %v8490 = vpop.f32.mrf.mxu0
        %v8491 = vadd.f32 %v8477, %v8490
        %v8492 = vpop.f32.mrf.mxu0
        %v8493 = vadd.f32 %v8479, %v8492
        %8494 = vdwg.mxu0
        %8495 = vmatpush.bf16.msra.mxu0 %v5674
        %8496 = vmatpush.bf16.msra.mxu0 %v5670
        %8497 = vmatpush.bf16.msra.mxu0 %v5666
        %8498 = vmatpush.bf16.msra.mxu0 %v5662
        %8499 = vmatpush.bf16.msra.mxu0 %v5658
        %8500 = vmatpush.bf16.msra.mxu0 %v5654
        %8501 = vmatpush.bf16.msra.mxu0 %v5650
        %8502 = vmatpush.bf16.msra.mxu0 %v5646
        %8503 = vmatmul.bf16.gmra.mxu0 %v1577
        %v8504 = vpop.f32.mrf.mxu0
        %v8505 = vadd.f32 %v8491, %v8504
        %v8506 = vpop.f32.mrf.mxu0
        %v8507 = vadd.f32 %v8493, %v8506
        %8508 = vdwg.mxu0
        %8509 = vmatpush.bf16.msra.mxu0 %v5706
        %8510 = vmatpush.bf16.msra.mxu0 %v5702
        %8511 = vmatpush.bf16.msra.mxu0 %v5698
        %8512 = vmatpush.bf16.msra.mxu0 %v5694
        %8513 = vmatpush.bf16.msra.mxu0 %v5690
        %8514 = vmatpush.bf16.msra.mxu0 %v5686
        %8515 = vmatpush.bf16.msra.mxu0 %v5682
        %8516 = vmatpush.bf16.msra.mxu0 %v5678
        %8517 = vmatmul.bf16.gmra.mxu0 %v1578
        %v8518 = vpop.f32.mrf.mxu0
        %v8519 = vadd.f32 %v8505, %v8518
        %v8520 = vpop.f32.mrf.mxu0
        %v8521 = vadd.f32 %v8507, %v8520
        %8522 = vdwg.mxu0
        %v8523 = vadd.f32 %v387, %v7175
        %v8524 = vadd.f32 %v388, %v7623
        %v8525 = vadd.f32 %v389, %v8071
        %v8526 = vadd.f32 %v390, %v8519
        %v8527 = vadd.f32 %v391, %v7177
        %v8528 = vadd.f32 %v392, %v7625
        %v8529 = vadd.f32 %v393, %v8073
        %v8530 = vadd.f32 %v394, %v8521
        %8531 = vst [vmem:[#allocation2] sm:$0xff] %v8523
        %8532 = vst [vmem:[#allocation2 + $0x8] sm:$0xff] %v8524
        %8533 = vst [vmem:[#allocation2 + $0x10] sm:$0xff] %v8525
        %8534 = vst [vmem:[#allocation2 + $0x18] sm:$0xff] %v8526
        %8535 = vst [vmem:[#allocation2 + $0x20] sm:$0xff] %v8527
        %8536 = vst [vmem:[#allocation2 + $0x28] sm:$0xff] %v8528
        %8537 = vst [vmem:[#allocation2 + $0x30] sm:$0xff] %v8529
        %8538 = vst [vmem:[#allocation2 + $0x38] sm:$0xff] %v8530
        %p8539 = scmp.eq.s32.totalorder %s20, 1
        // Predicated region
        $region64: #{net_forward.5} parent=54 // pred_check
          %p8540 = pneg %p8539
        $region65: #{net_forward.5} parent=54 // pred_check_branch
          %8542 = sbr.rel (%p8540) target = $region67
        $region66: #{net_forward.5} parent=54 // pred_region
          %v8543 = vld [vmem:[#allocation2] sm:$0xff]
          %v8544 = vld [vmem:[#allocation2 + $0x8] sm:$0xff]
          %v8545 = vld [vmem:[#allocation2 + $0x10] sm:$0xff]
          %v8546 = vld [vmem:[#allocation2 + $0x18] sm:$0xff]
          %v8547 = vld [vmem:[#allocation2 + $0x20] sm:$0xff]
          %v8548 = vld [vmem:[#allocation2 + $0x28] sm:$0xff]
          %v8549 = vld [vmem:[#allocation2 + $0x30] sm:$0xff]
          %v8550 = vld [vmem:[#allocation2 + $0x38] sm:$0xff]
          %v8551 = vld [vmem:[%s362] sm:$0xf]
          %v8553 = vperm.slane %v8551, 0
          %v8554 = vperm.slane %v8551, 1
          %v8555 = vperm.slane %v8551, 2
          %v8556 = vperm.slane %v8551, 3
          %v8561 = vadd.f32 %v8543, %v8553
          %v8562 = vadd.f32 %v8544, %v8554
          %v8563 = vadd.f32 %v8545, %v8555
          %v8564 = vadd.f32 %v8546, %v8556
          %v8565 = vadd.f32 %v8547, %v8553
          %v8566 = vadd.f32 %v8548, %v8554
          %v8567 = vadd.f32 %v8549, %v8555
          %v8568 = vadd.f32 %v8550, %v8556
          %v8569 = vmax.f32 %v8561, 0.0
          %v8570 = vmax.f32 %v8562, 0.0
          %v8571 = vmax.f32 %v8563, 0.0
          %v8572 = vmax.f32 %v8564, 0.0
          %v8573 = vmax.f32 %v8565, 0.0
          %v8574 = vmax.f32 %v8566, 0.0
          %v8575 = vmax.f32 %v8567, 0.0
          %v8576 = vmax.f32 %v8568, 0.0
          %v8577 = vpack.c.bf16 %v8573, %v8569
          %v8578 = vpack.c.bf16 %v8574, %v8570
          %v8579 = vpack.c.bf16 %v8575, %v8571
          %v8580 = vpack.c.bf16 %v8576, %v8572
          %v8581 = vld [vmem:[%s368] sm:$0xf]
          %v8582 = vld [vmem:[%s368 + $0x4] sm:$0xf]
          %v8583 = vld [vmem:[%s368 + $0x8] sm:$0xf]
          %v8584 = vld [vmem:[%s368 + $0xc] sm:$0xf]
          %v8585 = vld [vmem:[%s368 + $0x10] sm:$0xf]
          %v8586 = vld [vmem:[%s368 + $0x14] sm:$0xf]
          %v8587 = vld [vmem:[%s368 + $0x18] sm:$0xf]
          %v8588 = vld [vmem:[%s368 + $0x1c] sm:$0xf]
          %v8589 = vld [vmem:[%s368 + $0x20] sm:$0xf]
          %v8590 = vld [vmem:[%s368 + $0x24] sm:$0xf]
          %v8591 = vld [vmem:[%s368 + $0x28] sm:$0xf]
          %v8592 = vld [vmem:[%s368 + $0x2c] sm:$0xf]
          %v8593 = vld [vmem:[%s368 + $0x30] sm:$0xf]
          %v8594 = vld [vmem:[%s368 + $0x34] sm:$0xf]
          %v8595 = vld [vmem:[%s368 + $0x38] sm:$0xf]
          %v8596 = vld [vmem:[%s368 + $0x3c] sm:$0xf]
          %v8597 = vld [vmem:[%s368 + $0x40] sm:$0xf]
          %v8598 = vld [vmem:[%s368 + $0x44] sm:$0xf]
          %v8599 = vld [vmem:[%s368 + $0x48] sm:$0xf]
          %v8600 = vld [vmem:[%s368 + $0x4c] sm:$0xf]
          %v8601 = vld [vmem:[%s368 + $0x50] sm:$0xf]
          %v8602 = vld [vmem:[%s368 + $0x54] sm:$0xf]
          %v8603 = vld [vmem:[%s368 + $0x58] sm:$0xf]
          %v8604 = vld [vmem:[%s368 + $0x5c] sm:$0xf]
          %v8605 = vld [vmem:[%s368 + $0x60] sm:$0xf]
          %v8606 = vld [vmem:[%s368 + $0x64] sm:$0xf]
          %v8607 = vld [vmem:[%s368 + $0x68] sm:$0xf]
          %v8608 = vld [vmem:[%s368 + $0x6c] sm:$0xf]
          %v8609 = vld [vmem:[%s368 + $0x70] sm:$0xf]
          %v8610 = vld [vmem:[%s368 + $0x74] sm:$0xf]
          %v8611 = vld [vmem:[%s368 + $0x78] sm:$0xf]
          %v8612 = vld [vmem:[%s368 + $0x7c] sm:$0xf]
          %v8613 = vld [vmem:[%s368 + $0x80] sm:$0xf]
          %v8614 = vld [vmem:[%s368 + $0x84] sm:$0xf]
          %v8615 = vld [vmem:[%s368 + $0x88] sm:$0xf]
          %v8616 = vld [vmem:[%s368 + $0x8c] sm:$0xf]
          %v8617 = vld [vmem:[%s368 + $0x90] sm:$0xf]
          %v8618 = vld [vmem:[%s368 + $0x94] sm:$0xf]
          %v8619 = vld [vmem:[%s368 + $0x98] sm:$0xf]
          %v8620 = vld [vmem:[%s368 + $0x9c] sm:$0xf]
          %v8621 = vld [vmem:[%s368 + $0xa0] sm:$0xf]
          %v8622 = vld [vmem:[%s368 + $0xa4] sm:$0xf]
          %v8623 = vld [vmem:[%s368 + $0xa8] sm:$0xf]
          %v8624 = vld [vmem:[%s368 + $0xac] sm:$0xf]
          %v8625 = vld [vmem:[%s368 + $0xb0] sm:$0xf]
          %v8626 = vld [vmem:[%s368 + $0xb4] sm:$0xf]
          %v8627 = vld [vmem:[%s368 + $0xb8] sm:$0xf]
          %v8628 = vld [vmem:[%s368 + $0xbc] sm:$0xf]
          %v8629 = vld [vmem:[%s368 + $0xc0] sm:$0xf]
          %v8630 = vld [vmem:[%s368 + $0xc4] sm:$0xf]
          %v8631 = vld [vmem:[%s368 + $0xc8] sm:$0xf]
          %v8632 = vld [vmem:[%s368 + $0xcc] sm:$0xf]
          %v8633 = vld [vmem:[%s368 + $0xd0] sm:$0xf]
          %v8634 = vld [vmem:[%s368 + $0xd4] sm:$0xf]
          %v8635 = vld [vmem:[%s368 + $0xd8] sm:$0xf]
          %v8636 = vld [vmem:[%s368 + $0xdc] sm:$0xf]
          %v8637 = vld [vmem:[%s368 + $0xe0] sm:$0xf]
          %v8638 = vld [vmem:[%s368 + $0xe4] sm:$0xf]
          %v8639 = vld [vmem:[%s368 + $0xe8] sm:$0xf]
          %v8640 = vld [vmem:[%s368 + $0xec] sm:$0xf]
          %v8641 = vld [vmem:[%s368 + $0xf0] sm:$0xf]
          %v8642 = vld [vmem:[%s368 + $0xf4] sm:$0xf]
          %v8643 = vld [vmem:[%s368 + $0xf8] sm:$0xf]
          %v8644 = vld [vmem:[%s368 + $0xfc] sm:$0xf]
          %v8709 = vunpack.c.l.b16 %v8581
          %v8710 = vunpack.c.l.b16 %v8582
          %v8711 = vunpack.c.l.b16 %v8583
          %v8712 = vunpack.c.l.b16 %v8584
          %v8713 = vunpack.c.l.b16 %v8585
          %v8714 = vunpack.c.l.b16 %v8586
          %v8715 = vunpack.c.l.b16 %v8587
          %v8716 = vunpack.c.l.b16 %v8588
          %v8717 = vunpack.c.l.b16 %v8589
          %v8718 = vunpack.c.l.b16 %v8590
          %v8719 = vunpack.c.l.b16 %v8591
          %v8720 = vunpack.c.l.b16 %v8592
          %v8721 = vunpack.c.l.b16 %v8593
          %v8722 = vunpack.c.l.b16 %v8594
          %v8723 = vunpack.c.l.b16 %v8595
          %v8724 = vunpack.c.l.b16 %v8596
          %v8725 = vunpack.c.l.b16 %v8597
          %v8726 = vunpack.c.l.b16 %v8598
          %v8727 = vunpack.c.l.b16 %v8599
          %v8728 = vunpack.c.l.b16 %v8600
          %v8729 = vunpack.c.l.b16 %v8601
          %v8730 = vunpack.c.l.b16 %v8602
          %v8731 = vunpack.c.l.b16 %v8603
          %v8732 = vunpack.c.l.b16 %v8604
          %v8733 = vunpack.c.l.b16 %v8605
          %v8734 = vunpack.c.l.b16 %v8606
          %v8735 = vunpack.c.l.b16 %v8607
          %v8736 = vunpack.c.l.b16 %v8608
          %v8737 = vunpack.c.l.b16 %v8609
          %v8738 = vunpack.c.l.b16 %v8610
          %v8739 = vunpack.c.l.b16 %v8611
          %v8740 = vunpack.c.l.b16 %v8612
          %v8741 = vunpack.c.l.b16 %v8613
          %v8742 = vunpack.c.l.b16 %v8614
          %v8743 = vunpack.c.l.b16 %v8615
          %v8744 = vunpack.c.l.b16 %v8616
          %v8745 = vunpack.c.l.b16 %v8617
          %v8746 = vunpack.c.l.b16 %v8618
          %v8747 = vunpack.c.l.b16 %v8619
          %v8748 = vunpack.c.l.b16 %v8620
          %v8749 = vunpack.c.l.b16 %v8621
          %v8750 = vunpack.c.l.b16 %v8622
          %v8751 = vunpack.c.l.b16 %v8623
          %v8752 = vunpack.c.l.b16 %v8624
          %v8753 = vunpack.c.l.b16 %v8625
          %v8754 = vunpack.c.l.b16 %v8626
          %v8755 = vunpack.c.l.b16 %v8627
          %v8756 = vunpack.c.l.b16 %v8628
          %v8757 = vunpack.c.l.b16 %v8629
          %v8758 = vunpack.c.l.b16 %v8630
          %v8759 = vunpack.c.l.b16 %v8631
          %v8760 = vunpack.c.l.b16 %v8632
          %v8761 = vunpack.c.l.b16 %v8633
          %v8762 = vunpack.c.l.b16 %v8634
          %v8763 = vunpack.c.l.b16 %v8635
          %v8764 = vunpack.c.l.b16 %v8636
          %v8765 = vunpack.c.l.b16 %v8637
          %v8766 = vunpack.c.l.b16 %v8638
          %v8767 = vunpack.c.l.b16 %v8639
          %v8768 = vunpack.c.l.b16 %v8640
          %v8769 = vunpack.c.l.b16 %v8641
          %v8770 = vunpack.c.l.b16 %v8642
          %v8771 = vunpack.c.l.b16 %v8643
          %v8772 = vunpack.c.l.b16 %v8644
          %v8773 = vpack.c.b16 %v8710, %v8709
          %v8774 = vpack.c.b16 %v8712, %v8711
          %v8775 = vpack.c.b16 %v8714, %v8713
          %v8776 = vpack.c.b16 %v8716, %v8715
          %v8777 = vpack.c.b16 %v8718, %v8717
          %v8778 = vpack.c.b16 %v8720, %v8719
          %v8779 = vpack.c.b16 %v8722, %v8721
          %v8780 = vpack.c.b16 %v8724, %v8723
          %v8781 = vpack.c.b16 %v8726, %v8725
          %v8782 = vpack.c.b16 %v8728, %v8727
          %v8783 = vpack.c.b16 %v8730, %v8729
          %v8784 = vpack.c.b16 %v8732, %v8731
          %v8785 = vpack.c.b16 %v8734, %v8733
          %v8786 = vpack.c.b16 %v8736, %v8735
          %v8787 = vpack.c.b16 %v8738, %v8737
          %v8788 = vpack.c.b16 %v8740, %v8739
          %v8789 = vpack.c.b16 %v8742, %v8741
          %v8790 = vpack.c.b16 %v8744, %v8743
          %v8791 = vpack.c.b16 %v8746, %v8745
          %v8792 = vpack.c.b16 %v8748, %v8747
          %v8793 = vpack.c.b16 %v8750, %v8749
          %v8794 = vpack.c.b16 %v8752, %v8751
          %v8795 = vpack.c.b16 %v8754, %v8753
          %v8796 = vpack.c.b16 %v8756, %v8755
          %v8797 = vpack.c.b16 %v8758, %v8757
          %v8798 = vpack.c.b16 %v8760, %v8759
          %v8799 = vpack.c.b16 %v8762, %v8761
          %v8800 = vpack.c.b16 %v8764, %v8763
          %v8801 = vpack.c.b16 %v8766, %v8765
          %v8802 = vpack.c.b16 %v8768, %v8767
          %v8803 = vpack.c.b16 %v8770, %v8769
          %v8804 = vpack.c.b16 %v8772, %v8771
          %8837 = vmatpush.bf16.msra.mxu0 %v8780
          %8838 = vmatpush.bf16.msra.mxu0 %v8779
          %8839 = vmatpush.bf16.msra.mxu0 %v8778
          %8840 = vmatpush.bf16.msra.mxu0 %v8777
          %8841 = vmatpush.bf16.msra.mxu0 %v8776
          %8842 = vmatpush.bf16.msra.mxu0 %v8775
          %8843 = vmatpush.bf16.msra.mxu0 %v8774
          %8844 = vmatpush.bf16.msra.mxu0 %v8773
          %8845 = vmatmul.bf16.gmra.mxu0 %v8577
          %v8846 = vpop.f32.mrf.mxu0
          %v8847 = vadd.f32 0.0, %v8846
          %v8848 = vpop.f32.mrf.mxu0
          %v8849 = vadd.f32 0.0, %v8848
          %8850 = vdwg.mxu0
          %8851 = vmatpush.bf16.msra.mxu0 %v8788
          %8852 = vmatpush.bf16.msra.mxu0 %v8787
          %8853 = vmatpush.bf16.msra.mxu0 %v8786
          %8854 = vmatpush.bf16.msra.mxu0 %v8785
          %8855 = vmatpush.bf16.msra.mxu0 %v8784
          %8856 = vmatpush.bf16.msra.mxu0 %v8783
          %8857 = vmatpush.bf16.msra.mxu0 %v8782
          %8858 = vmatpush.bf16.msra.mxu0 %v8781
          %8859 = vmatmul.bf16.gmra.mxu0 %v8578
          %v8860 = vpop.f32.mrf.mxu0
          %v8861 = vadd.f32 %v8847, %v8860
          %v8862 = vpop.f32.mrf.mxu0
          %v8863 = vadd.f32 %v8849, %v8862
          %8864 = vdwg.mxu0
          %8865 = vmatpush.bf16.msra.mxu0 %v8796
          %8866 = vmatpush.bf16.msra.mxu0 %v8795
          %8867 = vmatpush.bf16.msra.mxu0 %v8794
          %8868 = vmatpush.bf16.msra.mxu0 %v8793
          %8869 = vmatpush.bf16.msra.mxu0 %v8792
          %8870 = vmatpush.bf16.msra.mxu0 %v8791
          %8871 = vmatpush.bf16.msra.mxu0 %v8790
          %8872 = vmatpush.bf16.msra.mxu0 %v8789
          %8873 = vmatmul.bf16.gmra.mxu0 %v8579
          %v8874 = vpop.f32.mrf.mxu0
          %v8875 = vadd.f32 %v8861, %v8874
          %v8876 = vpop.f32.mrf.mxu0
          %v8877 = vadd.f32 %v8863, %v8876
          %8878 = vdwg.mxu0
          %8879 = vmatpush.bf16.msra.mxu0 %v8804
          %8880 = vmatpush.bf16.msra.mxu0 %v8803
          %8881 = vmatpush.bf16.msra.mxu0 %v8802
          %8882 = vmatpush.bf16.msra.mxu0 %v8801
          %8883 = vmatpush.bf16.msra.mxu0 %v8800
          %8884 = vmatpush.bf16.msra.mxu0 %v8799
          %8885 = vmatpush.bf16.msra.mxu0 %v8798
          %8886 = vmatpush.bf16.msra.mxu0 %v8797
          %8887 = vmatmul.bf16.gmra.mxu0 %v8580
          %v8888 = vpop.f32.mrf.mxu0
          %v8889 = vadd.f32 %v8875, %v8888
          %v8890 = vpop.f32.mrf.mxu0
          %v8891 = vadd.f32 %v8877, %v8890
          %8892 = vdwg.mxu0
          %8893 = vst [vmem:[%s374] sm:$0xff] %v8889
          %8894 = vst [vmem:[%s374 + $0x8] sm:$0xff] %v8891
        $region67: #{net_forward.5} parent=54 // pred_fallthru
          _
        %p8895 = scmp.lt.s32.totalorder %s19, 0
        %s8896 = scalar_select %p8895, %s19, 0
        %s8897 = smul.addr %s8896, 2
        %s8898 = smul.addr %s8897, 8
        %s8899 = scalar_lea.vmem %s4, %s8898
        // Predicated region
        $region68: #{net_forward.5} parent=54 // pred_check
          %p8900 = pneg %p151
        $region69: #{net_forward.5} parent=54 // pred_check_branch
          %8902 = sbr.rel (%p8900) target = $region71
        $region70: #{net_forward.5} parent=54 // pred_region
          _
        $region71: #{net_forward.5} parent=54 // pred_fallthru
          _
        // Predicated region
        $region72: #{net_forward.5} parent=54 // pred_check
          %p8903 = pneg %p151
        $region73: #{net_forward.5} parent=54 // pred_check_branch
          %8905 = sbr.rel (%p8903) target = $region75
        $region74: #{net_forward.5} parent=54 // pred_region
          %p8906 = scmp.lt.s32.totalorder %s19, 0
          %s8907 = scalar_select %p8906, %s19, 0
          %s8908 = smul.addr %s8907, 2
          %s8909 = smul.addr %s8908, 8
          %s8910 = scalar_lea.vmem %s4, %s8909
        $region75: #{net_forward.5} parent=54 // pred_fallthru
          _
      $region55: #{net_forward.5} parent=5 // pred_fallthru
        _
      %p8911 = scmp.le.s32.totalorder 2, %s10
      // Predicated region
      $region76: #{net_forward.5} parent=5 // pred_check
        %p8912 = pneg %p8911
      $region77: #{net_forward.5} parent=5 // pred_check_branch
        %8914 = sbr.rel (%p8912) target = $region79
      $region78: #{net_forward.5} parent=5 // pred_region
        %s8915 = ssub.s32 %s10, 2
      $region79: #{net_forward.5} parent=5 // pred_fallthru
        _
    $region6: #{net_forward.5} parent=1 // loop_footer
      %s14 = sadd.s32 1, %s10
    $region7: #{net_forward.5} parent=1 // loop_footer_branch
      %9 = sbr.rel target = $region3
    $region8: #{net_forward.5} parent=1 // loop_exit
      _

</llo_original>
